<compile_context>
chip_gen: v6e
topology: v6e:2x2x1
jax: 0.10.0
libtpu: 0.0.40
codegen_flags: <defaults>
</compile_context>

<pallas_src>
import jax
import jax.numpy as jnp
from jax.experimental import pallas as pl
from jax.experimental.pallas import tpu as pltpu


# ----------------------------- Pallas kernels ------------------------------ #

def _matmul_bias_kernel(a_ref, b_ref, bias_ref, o_ref):
    # Single full-K MXU matmul with fused bias epilogue: out = a @ b + bias.
    o_ref[...] = (
        jnp.dot(a_ref[...], b_ref[...], preferred_element_type=jnp.float32)
        + bias_ref[...]
    ).astype(o_ref.dtype)


def _fused_resblocks_kernel(x_ref,
                            w1a_ref, b1a_ref, w1b_ref, b1b_ref,
                            w2a_ref, b2a_ref, w2b_ref, b2b_ref,
                            o_ref, pad_ref):
    """Two pythae ResBlocks (x + Conv1x1(ReLU(Conv3x3(ReLU(x))))) fully in VMEM.

    x_ref:   (N, H, W, C) f32 activation (NHWC), C = 128.
    w*a_ref: (9, C, Cmid) bf16  -- 3x3 conv as 9 shifted matmuls.
    w*b_ref: (Cmid, C)   bf16  -- 1x1 conv.
    pad_ref: (N, H+2, W+16, C) f32 scratch; data lives at [:, 1:H+1, 8:8+W, :]
             (tile-aligned store), border columns 7 / 8+W stay zero.
    o_ref:   (N*H*W, C) f32, NHWC row order.
    """
    N, H, W, C = x_ref.shape
    M = N * H * W
    W_OFF = 8  # tile-aligned placement of the data inside the padded scratch

    pad_ref[...] = jnp.zeros_like(pad_ref)

    def resblock(x2, wa_ref, ba_ref, wb_ref, bb_ref):
        cmid = wa_ref.shape[2]
        # ReLU(x) written into the zero-padded scratch (aligned full-tile store).
        pad_ref[:, 1:H + 1, W_OFF:W_OFF + W, :] = (
            jnp.maximum(x2, 0.0).reshape(N, H, W, C)
        )
        # 3x3 conv (pad=1) as 9 shifted (M, C) @ (C, Cmid) matmuls.
        acc = jnp.zeros((M, cmid), jnp.float32)
        for di in range(3):
            for dj in range(3):
                a = pad_ref[:, di:di + H, W_OFF - 1 + dj:W_OFF - 1 + dj + W, :]
                a = a.reshape(M, C).astype(jnp.bfloat16)
                acc = acc + jnp.dot(a, wa_ref[di * 3 + dj],
                                    preferred_element_type=jnp.float32)
        h = jnp.maximum(acc + ba_ref[...], 0.0)           # (M, Cmid), ReLU
        t = jnp.dot(h.astype(jnp.bfloat16), wb_ref[...],  # 1x1 conv
                    preferred_element_type=jnp.float32) + bb_ref[...]
        return x2 + t                                      # residual add (f32)

    x2 = x_ref[...].reshape(M, C)
    x2 = resblock(x2, w1a_ref, b1a_ref, w1b_ref, b1b_ref)
    x2 = resblock(x2, w2a_ref, b2a_ref, w2b_ref, b2b_ref)
    o_ref[...] = x2


# ------------------------------ Pallas wrappers ----------------------------- #

def _round_up(x, m):
    return (x + m - 1) // m * m


def pallas_matmul(a, b, bias, tm, out_dtype=jnp.float32):
    """out = a @ b + bias (f32 accumulate, cast to out_dtype).

    K and N are single full-extent blocks (no K grid, no K/N padding); only M
    is tiled (and padded up to a multiple of tm when needed).
    """
    M, K = a.shape
    K2, N = b.shape
    assert K == K2
    Mp = _round_up(M, tm)
    a_p = a if Mp == M else jnp.pad(a, ((0, Mp - M), (0, 0)))
    bias2d = bias.astype(jnp.float32).reshape(1, N)

    out = pl.pallas_call(
        _matmul_bias_kernel,
        out_shape=jax.ShapeDtypeStruct((Mp, N), out_dtype),
        grid=(Mp // tm,),
        in_specs=[
            pl.BlockSpec((tm, K), lambda i: (i, 0)),
            pl.BlockSpec((K, N), lambda i: (0, 0)),
            pl.BlockSpec((1, N), lambda i: (0, 0)),
        ],
        out_specs=pl.BlockSpec((tm, N), lambda i: (i, 0)),
        compiler_params=pltpu.CompilerParams(
            dimension_semantics=("parallel",)
        ),
    )(a_p, b, bias2d)
    return out if Mp == M else out[:M]


def _im2col(x_nhwc, kh, kw, stride, pad):
    """Pure data movement (no FLOPs) — prepares rows for the Pallas matmul."""
    N, H, W, C = x_nhwc.shape
    xp = jnp.pad(x_nhwc, ((0, 0), (pad, pad), (pad, pad), (0, 0)))
    Ho = (H + 2 * pad - kh) // stride + 1
    Wo = (W + 2 * pad - kw) // stride + 1
    cols = []
    for i in range(kh):
        for j in range(kw):
            cols.append(xp[:, i:i + stride * Ho:stride, j:j + stride * Wo:stride, :])
    patches = jnp.stack(cols, axis=3)  # (N, Ho, Wo, kh*kw, C)
    return patches.reshape(N * Ho * Wo, kh * kw * C), Ho, Wo


def conv2d(x_nhwc, w_oihw, b, stride, pad, tm, out_dtype=jnp.float32):
    N = x_nhwc.shape[0]
    Cout, Cin, kh, kw = w_oihw.shape
    # bf16 activations/weights halve DMA bytes and hit the native MXU path.
    patches, Ho, Wo = _im2col(x_nhwc.astype(jnp.bfloat16), kh, kw, stride, pad)
    wmat = (jnp.transpose(w_oihw, (2, 3, 1, 0))
            .reshape(kh * kw * Cin, Cout).astype(jnp.bfloat16))
    out = pallas_matmul(patches, wmat, b, tm=tm, out_dtype=out_dtype)
    return out.reshape(N, Ho, Wo, Cout)


def _prep_resblock_weights(w1, b1, w2, b2):
    cout, cin, kh, kw = w1.shape                          # (32, 128, 3, 3)
    wa = (jnp.transpose(w1, (2, 3, 1, 0))                 # (kh, kw, cin, cout)
          .reshape(kh * kw, cin, cout).astype(jnp.bfloat16))
    ba = b1.astype(jnp.float32).reshape(1, cout)
    wb = jnp.transpose(w2[:, :, 0, 0], (1, 0)).astype(jnp.bfloat16)  # (32, 128)
    bb = b2.astype(jnp.float32).reshape(1, w2.shape[0])
    return wa, ba, wb, bb


def fused_resblocks(x_nhwc, p):
    N, H, W, C = x_nhwc.shape
    wa1, ba1, wb1, bb1 = _prep_resblock_weights(
        p["rb1_w1"], p["rb1_b1"], p["rb1_w2"], p["rb1_b2"])
    wa2, ba2, wb2, bb2 = _prep_resblock_weights(
        p["rb2_w1"], p["rb2_b1"], p["rb2_w2"], p["rb2_b2"])
    return pl.pallas_call(
        _fused_resblocks_kernel,
        out_shape=jax.ShapeDtypeStruct((N * H * W, C), jnp.float32),
        scratch_shapes=[pltpu.VMEM((N, H + 2, W + 16, C), jnp.float32)],
    )(x_nhwc, wa1, ba1, wb1, bb1, wa2, ba2, wb2, bb2)


def resnet_classifier_celeba_forward(x_nchw, p):
    x = jnp.transpose(x_nchw, (0, 2, 3, 1)).astype(jnp.float32)  # NCHW -> NHWC
    # conv0/conv1 emit bf16 (their only consumer casts to bf16 anyway);
    # conv2 stays f32 because it is the ResBlock residual trunk.
    x = conv2d(x, p["w0"], p["b0"], stride=2, pad=1, tm=256,
               out_dtype=jnp.bfloat16)                          # (N,32,32,64)
    x = conv2d(x, p["w1"], p["b1"], stride=2, pad=1, tm=256,
               out_dtype=jnp.bfloat16)                          # (N,16,16,128)
    x = conv2d(x, p["w2"], p["b2"], stride=2, pad=1, tm=128)    # (N, 8, 8,128) f32

    act = fused_resblocks(x, p)                               # (N*64, 128), NHWC rows
    N = x.shape[0]
    flat = act.reshape(N, -1)                                  # (N, 8192), NHWC order (free)

    # Fold PyTorch's NCHW-order flatten into the Linear weight layout
    # (cheap one-off weight permute instead of an activation transpose).
    wl = (jnp.transpose(p["w_emb"].reshape(40, 128, 8, 8), (2, 3, 1, 0))
          .reshape(128 * 8 * 8, 40))
    # Tiny final Linear: M padded 2->8, single full-K block, f32 for accuracy.
    logits = pallas_matmul(flat, wl, p["b_emb"], tm=8)         # (N, 40)
    return logits


# ------------------------------ params & ref ------------------------------- #

def init_params(key):
    def conv_w(k, cout, cin, kh, kw):
        fan_in = cin * kh * kw
        return jax.random.normal(k, (cout, cin, kh, kw), jnp.float32) / jnp.sqrt(float(fan_in))

    ks = jax.random.split(key, 16)
    p = {}
    p["w0"] = conv_w(ks[0], 64, 3, 4, 4)
    p["b0"] = 0.01 * jax.random.normal(ks[1], (64,), jnp.float32)
    p["w1"] = conv_w(ks[2], 128, 64, 4, 4)
    p["b1"] = 0.01 * jax.random.normal(ks[3], (128,), jnp.float32)
    p["w2"] = conv_w(ks[4], 128, 128, 3, 3)
    p["b2"] = 0.01 * jax.random.normal(ks[5], (128,), jnp.float32)
    p["rb1_w1"] = conv_w(ks[6], 32, 128, 3, 3)
    p["rb1_b1"] = 0.01 * jax.random.normal(ks[7], (32,), jnp.float32)
    p["rb1_w2"] = conv_w(ks[8], 128, 32, 1, 1)
    p["rb1_b2"] = 0.01 * jax.random.normal(ks[9], (128,), jnp.float32)
    p["rb2_w1"] = conv_w(ks[10], 32, 128, 3, 3)
    p["rb2_b1"] = 0.01 * jax.random.normal(ks[11], (32,), jnp.float32)
    p["rb2_w2"] = conv_w(ks[12], 128, 32, 1, 1)
    p["rb2_b2"] = 0.01 * jax.random.normal(ks[13], (128,), jnp.float32)
    p["w_emb"] = jax.random.normal(ks[14], (40, 128 * 8 * 8), jnp.float32) / jnp.sqrt(8192.0)
    p["b_emb"] = 0.01 * jax.random.normal(ks[15], (40,), jnp.float32)
    return p


def reference_forward(x_nchw, p):
    def conv(x, w, b, stride, pad):
        y = jax.lax.conv_general_dilated(
            x, w, (stride, stride), ((pad, pad), (pad, pad)),
            dimension_numbers=("NCHW", "OIHW", "NCHW"),
            precision=jax.lax.Precision.HIGHEST)
        return y + b[None, :, None, None]

    h = conv(x_nchw, p["w0"], p["b0"], 2, 1)
    h = conv(h, p["w1"], p["b1"], 2, 1)
    h = conv(h, p["w2"], p["b2"], 2, 1)

    def rb(h, w1, b1, w2, b2):
        t = conv(jax.nn.relu(h), w1, b1, 1, 1)
        t = conv(jax.nn.relu(t), w2, b2, 1, 0)
        return h + t

    h = rb(h, p["rb1_w1"], p["rb1_b1"], p["rb1_w2"], p["rb1_b2"])
    h = rb(h, p["rb2_w1"], p["rb2_b1"], p["rb2_w2"], p["rb2_b2"])
    flat = h.reshape(h.shape[0], -1)
    return jnp.dot(flat, p["w_emb"].T, precision=jax.lax.Precision.HIGHEST) + p["b_emb"]


# ---------------------------------- main ----------------------------------- #

if __name__ == "__main__":
    key = jax.random.PRNGKey(0)
    k_in, k_params = jax.random.split(key)

    # CelebA encoder expects (N, 3, 64, 64); use a small batch of 2.
    x = jax.random.normal(k_in, (2, 3, 64, 64), jnp.float32)
    params = init_params(k_params)

    fwd = jax.jit(resnet_classifier_celeba_forward)
    logits = fwd(x, params)
    logits = jax.block_until_ready(logits)

    assert logits.shape == (2, 40), logits.shape

    ref = reference_forward(x, params)
    max_err = float(jnp.max(jnp.abs(logits - ref)))
    assert max_err < 5e-2, f"max abs diff vs reference: {max_err}"

    print("KERNEL_OK")
</pallas_src>

<mosaic_0001>
module attributes {stable_mosaic.version = 11 : i64} {
  func.func @_matmul_bias_kernel(%arg0: i32, %arg1: memref<256x48xbf16, #tpu.memory_space<vmem>>, %arg2: memref<48x64xbf16, #tpu.memory_space<vmem>>, %arg3: memref<1x64xf32, #tpu.memory_space<vmem>>, %arg4: memref<256x64xbf16, #tpu.memory_space<vmem>>) attributes {dimension_semantics = [#tpu.dimension_semantics<parallel>], iteration_bounds = array<i64: 8>, scalar_prefetch = 0 : i64, scratch_operands = 0 : i64, tpu.core_type = #tpu.core_type<tc>, window_params = [{transform_indices = @transform_0, window_bounds = array<i64: 256, 48>}, {pipeline_mode = #tpu.pipeline_mode<synchronous>, transform_indices = @transform_1, window_bounds = array<i64: 48, 64>}, {pipeline_mode = #tpu.pipeline_mode<synchronous>, transform_indices = @transform_2, window_bounds = array<i64: 1, 64>}, {transform_indices = @transform_3, window_bounds = array<i64: 256, 64>}]} {
    %c0 = arith.constant 0 : index
    %c0_0 = arith.constant 0 : index
    %0 = vector.load %arg1[%c0, %c0_0] : memref<256x48xbf16, #tpu.memory_space<vmem>>, vector<256x48xbf16>
    %c0_1 = arith.constant 0 : index
    %c0_2 = arith.constant 0 : index
    %1 = vector.load %arg2[%c0_1, %c0_2] : memref<48x64xbf16, #tpu.memory_space<vmem>>, vector<48x64xbf16>
    %cst = arith.constant dense<0.000000e+00> : vector<256x64xf32>
    %2 = tpu.matmul %0, %1, %cst {dimension_numbers = #tpu.dot_dimension_numbers<[1], [0], [0], [1], [0, 0, 1, 1], [], []>} : vector<256x48xbf16>, vector<48x64xbf16>, vector<256x64xf32> -> vector<256x64xf32>
    %c0_3 = arith.constant 0 : index
    %c0_4 = arith.constant 0 : index
    %3 = vector.load %arg3[%c0_3, %c0_4] : memref<1x64xf32, #tpu.memory_space<vmem>>, vector<1x64xf32>
    %4 = vector.broadcast %3 : vector<1x64xf32> to vector<256x64xf32>
    %5 = arith.addf %2, %4 : vector<256x64xf32>
    %6 = arith.truncf %5 : vector<256x64xf32> to vector<256x64xbf16>
    %c0_5 = arith.constant 0 : index
    %c0_6 = arith.constant 0 : index
    %7 = vector.load %arg4[%c0_5, %c0_6] : memref<256x64xbf16, #tpu.memory_space<vmem>>, vector<256x64xbf16>
    tpu.vector_store %arg4[%c0_5, %c0_6], %6 {strides = array<i32>} : memref<256x64xbf16, #tpu.memory_space<vmem>>, vector<256x64xbf16>,
    return
  }
  func.func @transform_0(%arg0: i32) -> (i32, i32) {
    %c0_i32 = arith.constant 0 : i32
    %c0_i32_0 = arith.constant 0 : i32
    return %arg0, %c0_i32 : i32, i32
  }
  func.func @transform_1(%arg0: i32) -> (i32, i32) {
    %c0_i32 = arith.constant 0 : i32
    %c0_i32_0 = arith.constant 0 : i32
    %c0_i32_1 = arith.constant 0 : i32
    return %c0_i32, %c0_i32_0 : i32, i32
  }
  func.func @transform_2(%arg0: i32) -> (i32, i32) {
    %c0_i32 = arith.constant 0 : i32
    %c0_i32_0 = arith.constant 0 : i32
    %c0_i32_1 = arith.constant 0 : i32
    return %c0_i32, %c0_i32_0 : i32, i32
  }
  func.func @transform_3(%arg0: i32) -> (i32, i32) {
    %c0_i32 = arith.constant 0 : i32
    %c0_i32_0 = arith.constant 0 : i32
    return %arg0, %c0_i32 : i32, i32
  }
}

module attributes {stable_mosaic.version = 11 : i64} {
  func.func @_matmul_bias_kernel(%arg0: i32, %arg1: memref<256x1024xbf16, #tpu.memory_space<vmem>>, %arg2: memref<1024x128xbf16, #tpu.memory_space<vmem>>, %arg3: memref<1x128xf32, #tpu.memory_space<vmem>>, %arg4: memref<256x128xbf16, #tpu.memory_space<vmem>>) attributes {dimension_semantics = [#tpu.dimension_semantics<parallel>], iteration_bounds = array<i64: 2>, scalar_prefetch = 0 : i64, scratch_operands = 0 : i64, tpu.core_type = #tpu.core_type<tc>, window_params = [{transform_indices = @transform_0, window_bounds = array<i64: 256, 1024>}, {pipeline_mode = #tpu.pipeline_mode<synchronous>, transform_indices = @transform_1, window_bounds = array<i64: 1024, 128>}, {pipeline_mode = #tpu.pipeline_mode<synchronous>, transform_indices = @transform_2, window_bounds = array<i64: 1, 128>}, {transform_indices = @transform_3, window_bounds = array<i64: 256, 128>}]} {
    %c0 = arith.constant 0 : index
    %c0_0 = arith.constant 0 : index
    %0 = vector.load %arg1[%c0, %c0_0] : memref<256x1024xbf16, #tpu.memory_space<vmem>>, vector<256x1024xbf16>
    %c0_1 = arith.constant 0 : index
    %c0_2 = arith.constant 0 : index
    %1 = vector.load %arg2[%c0_1, %c0_2] : memref<1024x128xbf16, #tpu.memory_space<vmem>>, vector<1024x128xbf16>
    %cst = arith.constant dense<0.000000e+00> : vector<256x128xf32>
    %2 = tpu.matmul %0, %1, %cst {dimension_numbers = #tpu.dot_dimension_numbers<[1], [0], [0], [1], [0, 0, 1, 1], [], []>} : vector<256x1024xbf16>, vector<1024x128xbf16>, vector<256x128xf32> -> vector<256x128xf32>
    %c0_3 = arith.constant 0 : index
    %c0_4 = arith.constant 0 : index
    %3 = vector.load %arg3[%c0_3, %c0_4] : memref<1x128xf32, #tpu.memory_space<vmem>>, vector<1x128xf32>
    %4 = vector.broadcast %3 : vector<1x128xf32> to vector<256x128xf32>
    %5 = arith.addf %2, %4 : vector<256x128xf32>
    %6 = arith.truncf %5 : vector<256x128xf32> to vector<256x128xbf16>
    %c0_5 = arith.constant 0 : index
    %c0_6 = arith.constant 0 : index
    %7 = vector.load %arg4[%c0_5, %c0_6] : memref<256x128xbf16, #tpu.memory_space<vmem>>, vector<256x128xbf16>
    tpu.vector_store %arg4[%c0_5, %c0_6], %6 {strides = array<i32>} : memref<256x128xbf16, #tpu.memory_space<vmem>>, vector<256x128xbf16>,
    return
  }
  func.func @transform_0(%arg0: i32) -> (i32, i32) {
    %c0_i32 = arith.constant 0 : i32
    %c0_i32_0 = arith.constant 0 : i32
    return %arg0, %c0_i32 : i32, i32
  }
  func.func @transform_1(%arg0: i32) -> (i32, i32) {
    %c0_i32 = arith.constant 0 : i32
    %c0_i32_0 = arith.constant 0 : i32
    %c0_i32_1 = arith.constant 0 : i32
    return %c0_i32, %c0_i32_0 : i32, i32
  }
  func.func @transform_2(%arg0: i32) -> (i32, i32) {
    %c0_i32 = arith.constant 0 : i32
    %c0_i32_0 = arith.constant 0 : i32
    %c0_i32_1 = arith.constant 0 : i32
    return %c0_i32, %c0_i32_0 : i32, i32
  }
  func.func @transform_3(%arg0: i32) -> (i32, i32) {
    %c0_i32 = arith.constant 0 : i32
    %c0_i32_0 = arith.constant 0 : i32
    return %arg0, %c0_i32 : i32, i32
  }
}

module attributes {stable_mosaic.version = 11 : i64} {
  func.func @_matmul_bias_kernel(%arg0: i32, %arg1: memref<128x1152xbf16, #tpu.memory_space<vmem>>, %arg2: memref<1152x128xbf16, #tpu.memory_space<vmem>>, %arg3: memref<1x128xf32, #tpu.memory_space<vmem>>, %arg4: memref<128x128xf32, #tpu.memory_space<vmem>>) attributes {dimension_semantics = [#tpu.dimension_semantics<parallel>], iteration_bounds = array<i64: 1>, scalar_prefetch = 0 : i64, scratch_operands = 0 : i64, tpu.core_type = #tpu.core_type<tc>, window_params = [{transform_indices = @transform_0, window_bounds = array<i64: 128, 1152>}, {pipeline_mode = #tpu.pipeline_mode<synchronous>, transform_indices = @transform_1, window_bounds = array<i64: 1152, 128>}, {pipeline_mode = #tpu.pipeline_mode<synchronous>, transform_indices = @transform_2, window_bounds = array<i64: 1, 128>}, {transform_indices = @transform_3, window_bounds = array<i64: 128, 128>}]} {
    %c0 = arith.constant 0 : index
    %c0_0 = arith.constant 0 : index
    %0 = vector.load %arg1[%c0, %c0_0] : memref<128x1152xbf16, #tpu.memory_space<vmem>>, vector<128x1152xbf16>
    %c0_1 = arith.constant 0 : index
    %c0_2 = arith.constant 0 : index
    %1 = vector.load %arg2[%c0_1, %c0_2] : memref<1152x128xbf16, #tpu.memory_space<vmem>>, vector<1152x128xbf16>
    %cst = arith.constant dense<0.000000e+00> : vector<128x128xf32>
    %2 = tpu.matmul %0, %1, %cst {dimension_numbers = #tpu.dot_dimension_numbers<[1], [0], [0], [1], [0, 0, 1, 1], [], []>} : vector<128x1152xbf16>, vector<1152x128xbf16>, vector<128x128xf32> -> vector<128x128xf32>
    %c0_3 = arith.constant 0 : index
    %c0_4 = arith.constant 0 : index
    %3 = vector.load %arg3[%c0_3, %c0_4] : memref<1x128xf32, #tpu.memory_space<vmem>>, vector<1x128xf32>
    %4 = vector.broadcast %3 : vector<1x128xf32> to vector<128x128xf32>
    %5 = arith.addf %2, %4 : vector<128x128xf32>
    %c0_5 = arith.constant 0 : index
    %c0_6 = arith.constant 0 : index
    %6 = vector.load %arg4[%c0_5, %c0_6] : memref<128x128xf32, #tpu.memory_space<vmem>>, vector<128x128xf32>
    tpu.vector_store %arg4[%c0_5, %c0_6], %5 {strides = array<i32>} : memref<128x128xf32, #tpu.memory_space<vmem>>, vector<128x128xf32>,
    return
  }
  func.func @transform_0(%arg0: i32) -> (i32, i32) {
    %c0_i32 = arith.constant 0 : i32
    %c0_i32_0 = arith.constant 0 : i32
    return %arg0, %c0_i32 : i32, i32
  }
  func.func @transform_1(%arg0: i32) -> (i32, i32) {
    %c0_i32 = arith.constant 0 : i32
    %c0_i32_0 = arith.constant 0 : i32
    %c0_i32_1 = arith.constant 0 : i32
    return %c0_i32, %c0_i32_0 : i32, i32
  }
  func.func @transform_2(%arg0: i32) -> (i32, i32) {
    %c0_i32 = arith.constant 0 : i32
    %c0_i32_0 = arith.constant 0 : i32
    %c0_i32_1 = arith.constant 0 : i32
    return %c0_i32, %c0_i32_0 : i32, i32
  }
  func.func @transform_3(%arg0: i32) -> (i32, i32) {
    %c0_i32 = arith.constant 0 : i32
    %c0_i32_0 = arith.constant 0 : i32
    return %arg0, %c0_i32 : i32, i32
  }
}

module attributes {stable_mosaic.version = 11 : i64} {
  func.func @_fused_resblocks_kernel(%arg0: memref<2x8x8x128xf32, #tpu.memory_space<vmem>>, %arg1: memref<9x128x32xbf16, #tpu.memory_space<vmem>>, %arg2: memref<1x32xf32, #tpu.memory_space<vmem>>, %arg3: memref<32x128xbf16, #tpu.memory_space<vmem>>, %arg4: memref<1x128xf32, #tpu.memory_space<vmem>>, %arg5: memref<9x128x32xbf16, #tpu.memory_space<vmem>>, %arg6: memref<1x32xf32, #tpu.memory_space<vmem>>, %arg7: memref<32x128xbf16, #tpu.memory_space<vmem>>, %arg8: memref<1x128xf32, #tpu.memory_space<vmem>>, %arg9: memref<128x128xf32, #tpu.memory_space<vmem>>, %arg10: memref<2x10x24x128xf32, #tpu.memory_space<vmem>>) attributes {dimension_semantics = [], scalar_prefetch = 0 : i64, scratch_operands = 1 : i64, tpu.core_type = #tpu.core_type<tc>} {
    %cst = arith.constant 0.000000e+00 : f32
    %0 = vector.broadcast %cst : f32 to vector<2x10x24x128xf32>
    %c0 = arith.constant 0 : index
    %c0_0 = arith.constant 0 : index
    %c0_1 = arith.constant 0 : index
    %c0_2 = arith.constant 0 : index
    %1 = vector.load %arg10[%c0, %c0_0, %c0_1, %c0_2] : memref<2x10x24x128xf32, #tpu.memory_space<vmem>>, vector<2x10x24x128xf32>
    tpu.vector_store %arg10[%c0, %c0_0, %c0_1, %c0_2], %0 {strides = array<i32>} : memref<2x10x24x128xf32, #tpu.memory_space<vmem>>, vector<2x10x24x128xf32>,
    %c0_3 = arith.constant 0 : index
    %c0_4 = arith.constant 0 : index
    %c0_5 = arith.constant 0 : index
    %c0_6 = arith.constant 0 : index
    %2 = vector.load %arg0[%c0_3, %c0_4, %c0_5, %c0_6] : memref<2x8x8x128xf32, #tpu.memory_space<vmem>>, vector<2x8x8x128xf32>
    %3 = vector.shape_cast %2 : vector<2x8x8x128xf32> to vector<128x128xf32>
    %cst_7 = arith.constant 0.000000e+00 : f32
    %4 = vector.broadcast %cst_7 : f32 to vector<128x128xf32>
    %5 = arith.maximumf %3, %4 : vector<128x128xf32>
    %6 = vector.shape_cast %5 : vector<128x128xf32> to vector<2x8x8x128xf32>
    %c0_8 = arith.constant 0 : index
    %c1 = arith.constant 1 : index
    %c8 = arith.constant 8 : index
    %c0_9 = arith.constant 0 : index
    %7 = vector.load %arg10[%c0_8, %c1, %c8, %c0_9] : memref<2x10x24x128xf32, #tpu.memory_space<vmem>>, vector<2x8x8x128xf32>
    tpu.vector_store %arg10[%c0_8, %c1, %c8, %c0_9], %6 {strides = array<i32>} : memref<2x10x24x128xf32, #tpu.memory_space<vmem>>, vector<2x8x8x128xf32>,
    %cst_10 = arith.constant 0.000000e+00 : f32
    %8 = vector.broadcast %cst_10 : f32 to vector<128x32xf32>
    %c0_11 = arith.constant 0 : index
    %c0_12 = arith.constant 0 : index
    %c7 = arith.constant 7 : index
    %c0_13 = arith.constant 0 : index
    %9 = vector.load %arg10[%c0_11, %c0_12, %c7, %c0_13] : memref<2x10x24x128xf32, #tpu.memory_space<vmem>>, vector<2x8x8x128xf32>
    %10 = vector.shape_cast %9 : vector<2x8x8x128xf32> to vector<128x128xf32>
    %11 = arith.truncf %10 : vector<128x128xf32> to vector<128x128xbf16>
    %c0_14 = arith.constant 0 : index
    %c0_15 = arith.constant 0 : index
    %c0_16 = arith.constant 0 : index
    %12 = vector.load %arg1[%c0_14, %c0_15, %c0_16] : memref<9x128x32xbf16, #tpu.memory_space<vmem>>, vector<1x128x32xbf16>
    %13 = vector.shape_cast %12 : vector<1x128x32xbf16> to vector<128x32xbf16>
    %cst_17 = arith.constant dense<0.000000e+00> : vector<128x32xf32>
    %14 = tpu.matmul %11, %13, %cst_17 {dimension_numbers = #tpu.dot_dimension_numbers<[1], [0], [0], [1], [0, 0, 1, 1], [], []>} : vector<128x128xbf16>, vector<128x32xbf16>, vector<128x32xf32> -> vector<128x32xf32>
    %15 = arith.addf %8, %14 : vector<128x32xf32>
    %c0_18 = arith.constant 0 : index
    %c0_19 = arith.constant 0 : index
    %c8_20 = arith.constant 8 : index
    %c0_21 = arith.constant 0 : index
    %16 = vector.load %arg10[%c0_18, %c0_19, %c8_20, %c0_21] : memref<2x10x24x128xf32, #tpu.memory_space<vmem>>, vector<2x8x8x128xf32>
    %17 = vector.shape_cast %16 : vector<2x8x8x128xf32> to vector<128x128xf32>
    %18 = arith.truncf %17 : vector<128x128xf32> to vector<128x128xbf16>
    %c1_22 = arith.constant 1 : index
    %c0_23 = arith.constant 0 : index
    %c0_24 = arith.constant 0 : index
    %19 = vector.load %arg1[%c1_22, %c0_23, %c0_24] : memref<9x128x32xbf16, #tpu.memory_space<vmem>>, vector<1x128x32xbf16>
    %20 = vector.shape_cast %19 : vector<1x128x32xbf16> to vector<128x32xbf16>
    %cst_25 = arith.constant dense<0.000000e+00> : vector<128x32xf32>
    %21 = tpu.matmul %18, %20, %cst_25 {dimension_numbers = #tpu.dot_dimension_numbers<[1], [0], [0], [1], [0, 0, 1, 1], [], []>} : vector<128x128xbf16>, vector<128x32xbf16>, vector<128x32xf32> -> vector<128x32xf32>
    %22 = arith.addf %15, %21 : vector<128x32xf32>
    %c0_26 = arith.constant 0 : index
    %c0_27 = arith.constant 0 : index
    %c9 = arith.constant 9 : index
    %c0_28 = arith.constant 0 : index
    %23 = vector.load %arg10[%c0_26, %c0_27, %c9, %c0_28] : memref<2x10x24x128xf32, #tpu.memory_space<vmem>>, vector<2x8x8x128xf32>
    %24 = vector.shape_cast %23 : vector<2x8x8x128xf32> to vector<128x128xf32>
    %25 = arith.truncf %24 : vector<128x128xf32> to vector<128x128xbf16>
    %c2 = arith.constant 2 : index
    %c0_29 = arith.constant 0 : index
    %c0_30 = arith.constant 0 : index
    %26 = vector.load %arg1[%c2, %c0_29, %c0_30] : memref<9x128x32xbf16, #tpu.memory_space<vmem>>, vector<1x128x32xbf16>
    %27 = vector.shape_cast %26 : vector<1x128x32xbf16> to vector<128x32xbf16>
    %cst_31 = arith.constant dense<0.000000e+00> : vector<128x32xf32>
    %28 = tpu.matmul %25, %27, %cst_31 {dimension_numbers = #tpu.dot_dimension_numbers<[1], [0], [0], [1], [0, 0, 1, 1], [], []>} : vector<128x128xbf16>, vector<128x32xbf16>, vector<128x32xf32> -> vector<128x32xf32>
    %29 = arith.addf %22, %28 : vector<128x32xf32>
    %c0_32 = arith.constant 0 : index
    %c1_33 = arith.constant 1 : index
    %c7_34 = arith.constant 7 : index
    %c0_35 = arith.constant 0 : index
    %30 = vector.load %arg10[%c0_32, %c1_33, %c7_34, %c0_35] : memref<2x10x24x128xf32, #tpu.memory_space<vmem>>, vector<2x8x8x128xf32>
    %31 = vector.shape_cast %30 : vector<2x8x8x128xf32> to vector<128x128xf32>
    %32 = arith.truncf %31 : vector<128x128xf32> to vector<128x128xbf16>
    %c3 = arith.constant 3 : index
    %c0_36 = arith.constant 0 : index
    %c0_37 = arith.constant 0 : index
    %33 = vector.load %arg1[%c3, %c0_36, %c0_37] : memref<9x128x32xbf16, #tpu.memory_space<vmem>>, vector<1x128x32xbf16>
    %34 = vector.shape_cast %33 : vector<1x128x32xbf16> to vector<128x32xbf16>
    %cst_38 = arith.constant dense<0.000000e+00> : vector<128x32xf32>
    %35 = tpu.matmul %32, %34, %cst_38 {dimension_numbers = #tpu.dot_dimension_numbers<[1], [0], [0], [1], [0, 0, 1, 1], [], []>} : vector<128x128xbf16>, vector<128x32xbf16>, vector<128x32xf32> -> vector<128x32xf32>
    %36 = arith.addf %29, %35 : vector<128x32xf32>
    %c0_39 = arith.constant 0 : index
    %c1_40 = arith.constant 1 : index
    %c8_41 = arith.constant 8 : index
    %c0_42 = arith.constant 0 : index
    %37 = vector.load %arg10[%c0_39, %c1_40, %c8_41, %c0_42] : memref<2x10x24x128xf32, #tpu.memory_space<vmem>>, vector<2x8x8x128xf32>
    %38 = vector.shape_cast %37 : vector<2x8x8x128xf32> to vector<128x128xf32>
    %39 = arith.truncf %38 : vector<128x128xf32> to vector<128x128xbf16>
    %c4 = arith.constant 4 : index
    %c0_43 = arith.constant 0 : index
    %c0_44 = arith.constant 0 : index
    %40 = vector.load %arg1[%c4, %c0_43, %c0_44] : memref<9x128x32xbf16, #tpu.memory_space<vmem>>, vector<1x128x32xbf16>
    %41 = vector.shape_cast %40 : vector<1x128x32xbf16> to vector<128x32xbf16>
    %cst_45 = arith.constant dense<0.000000e+00> : vector<128x32xf32>
    %42 = tpu.matmul %39, %41, %cst_45 {dimension_numbers = #tpu.dot_dimension_numbers<[1], [0], [0], [1], [0, 0, 1, 1], [], []>} : vector<128x128xbf16>, vector<128x32xbf16>, vector<128x32xf32> -> vector<128x32xf32>
    %43 = arith.addf %36, %42 : vector<128x32xf32>
    %c0_46 = arith.constant 0 : index
    %c1_47 = arith.constant 1 : index
    %c9_48 = arith.constant 9 : index
    %c0_49 = arith.constant 0 : index
    %44 = vector.load %arg10[%c0_46, %c1_47, %c9_48, %c0_49] : memref<2x10x24x128xf32, #tpu.memory_space<vmem>>, vector<2x8x8x128xf32>
    %45 = vector.shape_cast %44 : vector<2x8x8x128xf32> to vector<128x128xf32>
    %46 = arith.truncf %45 : vector<128x128xf32> to vector<128x128xbf16>
    %c5 = arith.constant 5 : index
    %c0_50 = arith.constant 0 : index
    %c0_51 = arith.constant 0 : index
    %47 = vector.load %arg1[%c5, %c0_50, %c0_51] : memref<9x128x32xbf16, #tpu.memory_space<vmem>>, vector<1x128x32xbf16>
    %48 = vector.shape_cast %47 : vector<1x128x32xbf16> to vector<128x32xbf16>
    %cst_52 = arith.constant dense<0.000000e+00> : vector<128x32xf32>
    %49 = tpu.matmul %46, %48, %cst_52 {dimension_numbers = #tpu.dot_dimension_numbers<[1], [0], [0], [1], [0, 0, 1, 1], [], []>} : vector<128x128xbf16>, vector<128x32xbf16>, vector<128x32xf32> -> vector<128x32xf32>
    %50 = arith.addf %43, %49 : vector<128x32xf32>
    %c0_53 = arith.constant 0 : index
    %c2_54 = arith.constant 2 : index
    %c7_55 = arith.constant 7 : index
    %c0_56 = arith.constant 0 : index
    %51 = vector.load %arg10[%c0_53, %c2_54, %c7_55, %c0_56] : memref<2x10x24x128xf32, #tpu.memory_space<vmem>>, vector<2x8x8x128xf32>
    %52 = vector.shape_cast %51 : vector<2x8x8x128xf32> to vector<128x128xf32>
    %53 = arith.truncf %52 : vector<128x128xf32> to vector<128x128xbf16>
    %c6 = arith.constant 6 : index
    %c0_57 = arith.constant 0 : index
    %c0_58 = arith.constant 0 : index
    %54 = vector.load %arg1[%c6, %c0_57, %c0_58] : memref<9x128x32xbf16, #tpu.memory_space<vmem>>, vector<1x128x32xbf16>
    %55 = vector.shape_cast %54 : vector<1x128x32xbf16> to vector<128x32xbf16>
    %cst_59 = arith.constant dense<0.000000e+00> : vector<128x32xf32>
    %56 = tpu.matmul %53, %55, %cst_59 {dimension_numbers = #tpu.dot_dimension_numbers<[1], [0], [0], [1], [0, 0, 1, 1], [], []>} : vector<128x128xbf16>, vector<128x32xbf16>, vector<128x32xf32> -> vector<128x32xf32>
    %57 = arith.addf %50, %56 : vector<128x32xf32>
    %c0_60 = arith.constant 0 : index
    %c2_61 = arith.constant 2 : index
    %c8_62 = arith.constant 8 : index
    %c0_63 = arith.constant 0 : index
    %58 = vector.load %arg10[%c0_60, %c2_61, %c8_62, %c0_63] : memref<2x10x24x128xf32, #tpu.memory_space<vmem>>, vector<2x8x8x128xf32>
    %59 = vector.shape_cast %58 : vector<2x8x8x128xf32> to vector<128x128xf32>
    %60 = arith.truncf %59 : vector<128x128xf32> to vector<128x128xbf16>
    %c7_64 = arith.constant 7 : index
    %c0_65 = arith.constant 0 : index
    %c0_66 = arith.constant 0 : index
    %61 = vector.load %arg1[%c7_64, %c0_65, %c0_66] : memref<9x128x32xbf16, #tpu.memory_space<vmem>>, vector<1x128x32xbf16>
    %62 = vector.shape_cast %61 : vector<1x128x32xbf16> to vector<128x32xbf16>
    %cst_67 = arith.constant dense<0.000000e+00> : vector<128x32xf32>
    %63 = tpu.matmul %60, %62, %cst_67 {dimension_numbers = #tpu.dot_dimension_numbers<[1], [0], [0], [1], [0, 0, 1, 1], [], []>} : vector<128x128xbf16>, vector<128x32xbf16>, vector<128x32xf32> -> vector<128x32xf32>
    %64 = arith.addf %57, %63 : vector<128x32xf32>
    %c0_68 = arith.constant 0 : index
    %c2_69 = arith.constant 2 : index
    %c9_70 = arith.constant 9 : index
    %c0_71 = arith.constant 0 : index
    %65 = vector.load %arg10[%c0_68, %c2_69, %c9_70, %c0_71] : memref<2x10x24x128xf32, #tpu.memory_space<vmem>>, vector<2x8x8x128xf32>
    %66 = vector.shape_cast %65 : vector<2x8x8x128xf32> to vector<128x128xf32>
    %67 = arith.truncf %66 : vector<128x128xf32> to vector<128x128xbf16>
    %c8_72 = arith.constant 8 : index
    %c0_73 = arith.constant 0 : index
    %c0_74 = arith.constant 0 : index
    %68 = vector.load %arg1[%c8_72, %c0_73, %c0_74] : memref<9x128x32xbf16, #tpu.memory_space<vmem>>, vector<1x128x32xbf16>
    %69 = vector.shape_cast %68 : vector<1x128x32xbf16> to vector<128x32xbf16>
    %cst_75 = arith.constant dense<0.000000e+00> : vector<128x32xf32>
    %70 = tpu.matmul %67, %69, %cst_75 {dimension_numbers = #tpu.dot_dimension_numbers<[1], [0], [0], [1], [0, 0, 1, 1], [], []>} : vector<128x128xbf16>, vector<128x32xbf16>, vector<128x32xf32> -> vector<128x32xf32>
    %71 = arith.addf %64, %70 : vector<128x32xf32>
    %c0_76 = arith.constant 0 : index
    %c0_77 = arith.constant 0 : index
    %72 = vector.load %arg2[%c0_76, %c0_77] : memref<1x32xf32, #tpu.memory_space<vmem>>, vector<1x32xf32>
    %73 = vector.broadcast %72 : vector<1x32xf32> to vector<128x32xf32>
    %74 = arith.addf %71, %73 : vector<128x32xf32>
    %cst_78 = arith.constant 0.000000e+00 : f32
    %75 = vector.broadcast %cst_78 : f32 to vector<128x32xf32>
    %76 = arith.maximumf %74, %75 : vector<128x32xf32>
    %77 = arith.truncf %76 : vector<128x32xf32> to vector<128x32xbf16>
    %c0_79 = arith.constant 0 : index
    %c0_80 = arith.constant 0 : index
    %78 = vector.load %arg3[%c0_79, %c0_80] : memref<32x128xbf16, #tpu.memory_space<vmem>>, vector<32x128xbf16>
    %cst_81 = arith.constant dense<0.000000e+00> : vector<128x128xf32>
    %79 = tpu.matmul %77, %78, %cst_81 {dimension_numbers = #tpu.dot_dimension_numbers<[1], [0], [0], [1], [0, 0, 1, 1], [], []>} : vector<128x32xbf16>, vector<32x128xbf16>, vector<128x128xf32> -> vector<128x128xf32>
    %c0_82 = arith.constant 0 : index
    %c0_83 = arith.constant 0 : index
    %80 = vector.load %arg4[%c0_82, %c0_83] : memref<1x128xf32, #tpu.memory_space<vmem>>, vector<1x128xf32>
    %81 = vector.broadcast %80 : vector<1x128xf32> to vector<128x128xf32>
    %82 = arith.addf %79, %81 : vector<128x128xf32>
    %83 = arith.addf %3, %82 : vector<128x128xf32>
    %cst_84 = arith.constant 0.000000e+00 : f32
    %84 = vector.broadcast %cst_84 : f32 to vector<128x128xf32>
    %85 = arith.maximumf %83, %84 : vector<128x128xf32>
    %86 = vector.shape_cast %85 : vector<128x128xf32> to vector<2x8x8x128xf32>
    %c0_85 = arith.constant 0 : index
    %c1_86 = arith.constant 1 : index
    %c8_87 = arith.constant 8 : index
    %c0_88 = arith.constant 0 : index
    %87 = vector.load %arg10[%c0_85, %c1_86, %c8_87, %c0_88] : memref<2x10x24x128xf32, #tpu.memory_space<vmem>>, vector<2x8x8x128xf32>
    tpu.vector_store %arg10[%c0_85, %c1_86, %c8_87, %c0_88], %86 {strides = array<i32>} : memref<2x10x24x128xf32, #tpu.memory_space<vmem>>, vector<2x8x8x128xf32>,
    %cst_89 = arith.constant 0.000000e+00 : f32
    %88 = vector.broadcast %cst_89 : f32 to vector<128x32xf32>
    %c0_90 = arith.constant 0 : index
    %c0_91 = arith.constant 0 : index
    %c7_92 = arith.constant 7 : index
    %c0_93 = arith.constant 0 : index
    %89 = vector.load %arg10[%c0_90, %c0_91, %c7_92, %c0_93] : memref<2x10x24x128xf32, #tpu.memory_space<vmem>>, vector<2x8x8x128xf32>
    %90 = vector.shape_cast %89 : vector<2x8x8x128xf32> to vector<128x128xf32>
    %91 = arith.truncf %90 : vector<128x128xf32> to vector<128x128xbf16>
    %c0_94 = arith.constant 0 : index
    %c0_95 = arith.constant 0 : index
    %c0_96 = arith.constant 0 : index
    %92 = vector.load %arg5[%c0_94, %c0_95, %c0_96] : memref<9x128x32xbf16, #tpu.memory_space<vmem>>, vector<1x128x32xbf16>
    %93 = vector.shape_cast %92 : vector<1x128x32xbf16> to vector<128x32xbf16>
    %cst_97 = arith.constant dense<0.000000e+00> : vector<128x32xf32>
    %94 = tpu.matmul %91, %93, %cst_97 {dimension_numbers = #tpu.dot_dimension_numbers<[1], [0], [0], [1], [0, 0, 1, 1], [], []>} : vector<128x128xbf16>, vector<128x32xbf16>, vector<128x32xf32> -> vector<128x32xf32>
    %95 = arith.addf %88, %94 : vector<128x32xf32>
    %c0_98 = arith.constant 0 : index
    %c0_99 = arith.constant 0 : index
    %c8_100 = arith.constant 8 : index
    %c0_101 = arith.constant 0 : index
    %96 = vector.load %arg10[%c0_98, %c0_99, %c8_100, %c0_101] : memref<2x10x24x128xf32, #tpu.memory_space<vmem>>, vector<2x8x8x128xf32>
    %97 = vector.shape_cast %96 : vector<2x8x8x128xf32> to vector<128x128xf32>
    %98 = arith.truncf %97 : vector<128x128xf32> to vector<128x128xbf16>
    %c1_102 = arith.constant 1 : index
    %c0_103 = arith.constant 0 : index
    %c0_104 = arith.constant 0 : index
    %99 = vector.load %arg5[%c1_102, %c0_103, %c0_104] : memref<9x128x32xbf16, #tpu.memory_space<vmem>>, vector<1x128x32xbf16>
    %100 = vector.shape_cast %99 : vector<1x128x32xbf16> to vector<128x32xbf16>
    %cst_105 = arith.constant dense<0.000000e+00> : vector<128x32xf32>
    %101 = tpu.matmul %98, %100, %cst_105 {dimension_numbers = #tpu.dot_dimension_numbers<[1], [0], [0], [1], [0, 0, 1, 1], [], []>} : vector<128x128xbf16>, vector<128x32xbf16>, vector<128x32xf32> -> vector<128x32xf32>
    %102 = arith.addf %95, %101 : vector<128x32xf32>
    %c0_106 = arith.constant 0 : index
    %c0_107 = arith.constant 0 : index
    %c9_108 = arith.constant 9 : index
    %c0_109 = arith.constant 0 : index
    %103 = vector.load %arg10[%c0_106, %c0_107, %c9_108, %c0_109] : memref<2x10x24x128xf32, #tpu.memory_space<vmem>>, vector<2x8x8x128xf32>
    %104 = vector.shape_cast %103 : vector<2x8x8x128xf32> to vector<128x128xf32>
    %105 = arith.truncf %104 : vector<128x128xf32> to vector<128x128xbf16>
    %c2_110 = arith.constant 2 : index
    %c0_111 = arith.constant 0 : index
    %c0_112 = arith.constant 0 : index
    %106 = vector.load %arg5[%c2_110, %c0_111, %c0_112] : memref<9x128x32xbf16, #tpu.memory_space<vmem>>, vector<1x128x32xbf16>
    %107 = vector.shape_cast %106 : vector<1x128x32xbf16> to vector<128x32xbf16>
    %cst_113 = arith.constant dense<0.000000e+00> : vector<128x32xf32>
    %108 = tpu.matmul %105, %107, %cst_113 {dimension_numbers = #tpu.dot_dimension_numbers<[1], [0], [0], [1], [0, 0, 1, 1], [], []>} : vector<128x128xbf16>, vector<128x32xbf16>, vector<128x32xf32> -> vector<128x32xf32>
    %109 = arith.addf %102, %108 : vector<128x32xf32>
    %c0_114 = arith.constant 0 : index
    %c1_115 = arith.constant 1 : index
    %c7_116 = arith.constant 7 : index
    %c0_117 = arith.constant 0 : index
    %110 = vector.load %arg10[%c0_114, %c1_115, %c7_116, %c0_117] : memref<2x10x24x128xf32, #tpu.memory_space<vmem>>, vector<2x8x8x128xf32>
    %111 = vector.shape_cast %110 : vector<2x8x8x128xf32> to vector<128x128xf32>
    %112 = arith.truncf %111 : vector<128x128xf32> to vector<128x128xbf16>
    %c3_118 = arith.constant 3 : index
    %c0_119 = arith.constant 0 : index
    %c0_120 = arith.constant 0 : index
    %113 = vector.load %arg5[%c3_118, %c0_119, %c0_120] : memref<9x128x32xbf16, #tpu.memory_space<vmem>>, vector<1x128x32xbf16>
    %114 = vector.shape_cast %113 : vector<1x128x32xbf16> to vector<128x32xbf16>
    %cst_121 = arith.constant dense<0.000000e+00> : vector<128x32xf32>
    %115 = tpu.matmul %112, %114, %cst_121 {dimension_numbers = #tpu.dot_dimension_numbers<[1], [0], [0], [1], [0, 0, 1, 1], [], []>} : vector<128x128xbf16>, vector<128x32xbf16>, vector<128x32xf32> -> vector<128x32xf32>
    %116 = arith.addf %109, %115 : vector<128x32xf32>
    %c0_122 = arith.constant 0 : index
    %c1_123 = arith.constant 1 : index
    %c8_124 = arith.constant 8 : index
    %c0_125 = arith.constant 0 : index
    %117 = vector.load %arg10[%c0_122, %c1_123, %c8_124, %c0_125] : memref<2x10x24x128xf32, #tpu.memory_space<vmem>>, vector<2x8x8x128xf32>
    %118 = vector.shape_cast %117 : vector<2x8x8x128xf32> to vector<128x128xf32>
    %119 = arith.truncf %118 : vector<128x128xf32> to vector<128x128xbf16>
    %c4_126 = arith.constant 4 : index
    %c0_127 = arith.constant 0 : index
    %c0_128 = arith.constant 0 : index
    %120 = vector.load %arg5[%c4_126, %c0_127, %c0_128] : memref<9x128x32xbf16, #tpu.memory_space<vmem>>, vector<1x128x32xbf16>
    %121 = vector.shape_cast %120 : vector<1x128x32xbf16> to vector<128x32xbf16>
    %cst_129 = arith.constant dense<0.000000e+00> : vector<128x32xf32>
    %122 = tpu.matmul %119, %121, %cst_129 {dimension_numbers = #tpu.dot_dimension_numbers<[1], [0], [0], [1], [0, 0, 1, 1], [], []>} : vector<128x128xbf16>, vector<128x32xbf16>, vector<128x32xf32> -> vector<128x32xf32>
    %123 = arith.addf %116, %122 : vector<128x32xf32>
    %c0_130 = arith.constant 0 : index
    %c1_131 = arith.constant 1 : index
    %c9_132 = arith.constant 9 : index
    %c0_133 = arith.constant 0 : index
    %124 = vector.load %arg10[%c0_130, %c1_131, %c9_132, %c0_133] : memref<2x10x24x128xf32, #tpu.memory_space<vmem>>, vector<2x8x8x128xf32>
    %125 = vector.shape_cast %124 : vector<2x8x8x128xf32> to vector<128x128xf32>
    %126 = arith.truncf %125 : vector<128x128xf32> to vector<128x128xbf16>
    %c5_134 = arith.constant 5 : index
    %c0_135 = arith.constant 0 : index
    %c0_136 = arith.constant 0 : index
    %127 = vector.load %arg5[%c5_134, %c0_135, %c0_136] : memref<9x128x32xbf16, #tpu.memory_space<vmem>>, vector<1x128x32xbf16>
    %128 = vector.shape_cast %127 : vector<1x128x32xbf16> to vector<128x32xbf16>
    %cst_137 = arith.constant dense<0.000000e+00> : vector<128x32xf32>
    %129 = tpu.matmul %126, %128, %cst_137 {dimension_numbers = #tpu.dot_dimension_numbers<[1], [0], [0], [1], [0, 0, 1, 1], [], []>} : vector<128x128xbf16>, vector<128x32xbf16>, vector<128x32xf32> -> vector<128x32xf32>
    %130 = arith.addf %123, %129 : vector<128x32xf32>
    %c0_138 = arith.constant 0 : index
    %c2_139 = arith.constant 2 : index
    %c7_140 = arith.constant 7 : index
    %c0_141 = arith.constant 0 : index
    %131 = vector.load %arg10[%c0_138, %c2_139, %c7_140, %c0_141] : memref<2x10x24x128xf32, #tpu.memory_space<vmem>>, vector<2x8x8x128xf32>
    %132 = vector.shape_cast %131 : vector<2x8x8x128xf32> to vector<128x128xf32>
    %133 = arith.truncf %132 : vector<128x128xf32> to vector<128x128xbf16>
    %c6_142 = arith.constant 6 : index
    %c0_143 = arith.constant 0 : index
    %c0_144 = arith.constant 0 : index
    %134 = vector.load %arg5[%c6_142, %c0_143, %c0_144] : memref<9x128x32xbf16, #tpu.memory_space<vmem>>, vector<1x128x32xbf16>
    %135 = vector.shape_cast %134 : vector<1x128x32xbf16> to vector<128x32xbf16>
    %cst_145 = arith.constant dense<0.000000e+00> : vector<128x32xf32>
    %136 = tpu.matmul %133, %135, %cst_145 {dimension_numbers = #tpu.dot_dimension_numbers<[1], [0], [0], [1], [0, 0, 1, 1], [], []>} : vector<128x128xbf16>, vector<128x32xbf16>, vector<128x32xf32> -> vector<128x32xf32>
    %137 = arith.addf %130, %136 : vector<128x32xf32>
    %c0_146 = arith.constant 0 : index
    %c2_147 = arith.constant 2 : index
    %c8_148 = arith.constant 8 : index
    %c0_149 = arith.constant 0 : index
    %138 = vector.load %arg10[%c0_146, %c2_147, %c8_148, %c0_149] : memref<2x10x24x128xf32, #tpu.memory_space<vmem>>, vector<2x8x8x128xf32>
    %139 = vector.shape_cast %138 : vector<2x8x8x128xf32> to vector<128x128xf32>
    %140 = arith.truncf %139 : vector<128x128xf32> to vector<128x128xbf16>
    %c7_150 = arith.constant 7 : index
    %c0_151 = arith.constant 0 : index
    %c0_152 = arith.constant 0 : index
    %141 = vector.load %arg5[%c7_150, %c0_151, %c0_152] : memref<9x128x32xbf16, #tpu.memory_space<vmem>>, vector<1x128x32xbf16>
    %142 = vector.shape_cast %141 : vector<1x128x32xbf16> to vector<128x32xbf16>
    %cst_153 = arith.constant dense<0.000000e+00> : vector<128x32xf32>
    %143 = tpu.matmul %140, %142, %cst_153 {dimension_numbers = #tpu.dot_dimension_numbers<[1], [0], [0], [1], [0, 0, 1, 1], [], []>} : vector<128x128xbf16>, vector<128x32xbf16>, vector<128x32xf32> -> vector<128x32xf32>
    %144 = arith.addf %137, %143 : vector<128x32xf32>
    %c0_154 = arith.constant 0 : index
    %c2_155 = arith.constant 2 : index
    %c9_156 = arith.constant 9 : index
    %c0_157 = arith.constant 0 : index
    %145 = vector.load %arg10[%c0_154, %c2_155, %c9_156, %c0_157] : memref<2x10x24x128xf32, #tpu.memory_space<vmem>>, vector<2x8x8x128xf32>
    %146 = vector.shape_cast %145 : vector<2x8x8x128xf32> to vector<128x128xf32>
    %147 = arith.truncf %146 : vector<128x128xf32> to vector<128x128xbf16>
    %c8_158 = arith.constant 8 : index
    %c0_159 = arith.constant 0 : index
    %c0_160 = arith.constant 0 : index
    %148 = vector.load %arg5[%c8_158, %c0_159, %c0_160] : memref<9x128x32xbf16, #tpu.memory_space<vmem>>, vector<1x128x32xbf16>
    %149 = vector.shape_cast %148 : vector<1x128x32xbf16> to vector<128x32xbf16>
    %cst_161 = arith.constant dense<0.000000e+00> : vector<128x32xf32>
    %150 = tpu.matmul %147, %149, %cst_161 {dimension_numbers = #tpu.dot_dimension_numbers<[1], [0], [0], [1], [0, 0, 1, 1], [], []>} : vector<128x128xbf16>, vector<128x32xbf16>, vector<128x32xf32> -> vector<128x32xf32>
    %151 = arith.addf %144, %150 : vector<128x32xf32>
    %c0_162 = arith.constant 0 : index
    %c0_163 = arith.constant 0 : index
    %152 = vector.load %arg6[%c0_162, %c0_163] : memref<1x32xf32, #tpu.memory_space<vmem>>, vector<1x32xf32>
    %153 = vector.broadcast %152 : vector<1x32xf32> to vector<128x32xf32>
    %154 = arith.addf %151, %153 : vector<128x32xf32>
    %cst_164 = arith.constant 0.000000e+00 : f32
    %155 = vector.broadcast %cst_164 : f32 to vector<128x32xf32>
    %156 = arith.maximumf %154, %155 : vector<128x32xf32>
    %157 = arith.truncf %156 : vector<128x32xf32> to vector<128x32xbf16>
    %c0_165 = arith.constant 0 : index
    %c0_166 = arith.constant 0 : index
    %158 = vector.load %arg7[%c0_165, %c0_166] : memref<32x128xbf16, #tpu.memory_space<vmem>>, vector<32x128xbf16>
    %cst_167 = arith.constant dense<0.000000e+00> : vector<128x128xf32>
    %159 = tpu.matmul %157, %158, %cst_167 {dimension_numbers = #tpu.dot_dimension_numbers<[1], [0], [0], [1], [0, 0, 1, 1], [], []>} : vector<128x32xbf16>, vector<32x128xbf16>, vector<128x128xf32> -> vector<128x128xf32>
    %c0_168 = arith.constant 0 : index
    %c0_169 = arith.constant 0 : index
    %160 = vector.load %arg8[%c0_168, %c0_169] : memref<1x128xf32, #tpu.memory_space<vmem>>, vector<1x128xf32>
    %161 = vector.broadcast %160 : vector<1x128xf32> to vector<128x128xf32>
    %162 = arith.addf %159, %161 : vector<128x128xf32>
    %163 = arith.addf %83, %162 : vector<128x128xf32>
    %c0_170 = arith.constant 0 : index
    %c0_171 = arith.constant 0 : index
    %164 = vector.load %arg9[%c0_170, %c0_171] : memref<128x128xf32, #tpu.memory_space<vmem>>, vector<128x128xf32>
    tpu.vector_store %arg9[%c0_170, %c0_171], %163 {strides = array<i32>} : memref<128x128xf32, #tpu.memory_space<vmem>>, vector<128x128xf32>,
    return
  }
}

module attributes {stable_mosaic.version = 11 : i64} {
  func.func @_matmul_bias_kernel(%arg0: i32, %arg1: memref<8x8192xf32, #tpu.memory_space<vmem>>, %arg2: memref<8192x40xf32, #tpu.memory_space<vmem>>, %arg3: memref<1x40xf32, #tpu.memory_space<vmem>>, %arg4: memref<8x40xf32, #tpu.memory_space<vmem>>) attributes {dimension_semantics = [#tpu.dimension_semantics<parallel>], iteration_bounds = array<i64: 1>, scalar_prefetch = 0 : i64, scratch_operands = 0 : i64, tpu.core_type = #tpu.core_type<tc>, window_params = [{transform_indices = @transform_0, window_bounds = array<i64: 8, 8192>}, {pipeline_mode = #tpu.pipeline_mode<synchronous>, transform_indices = @transform_1, window_bounds = array<i64: 8192, 40>}, {pipeline_mode = #tpu.pipeline_mode<synchronous>, transform_indices = @transform_2, window_bounds = array<i64: 1, 40>}, {transform_indices = @transform_3, window_bounds = array<i64: 8, 40>}]} {
    %c0 = arith.constant 0 : index
    %c0_0 = arith.constant 0 : index
    %0 = vector.load %arg1[%c0, %c0_0] : memref<8x8192xf32, #tpu.memory_space<vmem>>, vector<8x8192xf32>
    %c0_1 = arith.constant 0 : index
    %c0_2 = arith.constant 0 : index
    %1 = vector.load %arg2[%c0_1, %c0_2] : memref<8192x40xf32, #tpu.memory_space<vmem>>, vector<8192x40xf32>
    %cst = arith.constant dense<0.000000e+00> : vector<8x40xf32>
    %2 = tpu.matmul %0, %1, %cst {dimension_numbers = #tpu.dot_dimension_numbers<[1], [0], [0], [1], [0, 0, 1, 1], [], []>} : vector<8x8192xf32>, vector<8192x40xf32>, vector<8x40xf32> -> vector<8x40xf32>
    %c0_3 = arith.constant 0 : index
    %c0_4 = arith.constant 0 : index
    %3 = vector.load %arg3[%c0_3, %c0_4] : memref<1x40xf32, #tpu.memory_space<vmem>>, vector<1x40xf32>
    %4 = vector.broadcast %3 : vector<1x40xf32> to vector<8x40xf32>
    %5 = arith.addf %2, %4 : vector<8x40xf32>
    %c0_5 = arith.constant 0 : index
    %c0_6 = arith.constant 0 : index
    %6 = vector.load %arg4[%c0_5, %c0_6] : memref<8x40xf32, #tpu.memory_space<vmem>>, vector<8x40xf32>
    tpu.vector_store %arg4[%c0_5, %c0_6], %5 {strides = array<i32>} : memref<8x40xf32, #tpu.memory_space<vmem>>, vector<8x40xf32>,
    return
  }
  func.func @transform_0(%arg0: i32) -> (i32, i32) {
    %c0_i32 = arith.constant 0 : i32
    %c0_i32_0 = arith.constant 0 : i32
    return %arg0, %c0_i32 : i32, i32
  }
  func.func @transform_1(%arg0: i32) -> (i32, i32) {
    %c0_i32 = arith.constant 0 : i32
    %c0_i32_0 = arith.constant 0 : i32
    %c0_i32_1 = arith.constant 0 : i32
    return %c0_i32, %c0_i32_0 : i32, i32
  }
  func.func @transform_2(%arg0: i32) -> (i32, i32) {
    %c0_i32 = arith.constant 0 : i32
    %c0_i32_0 = arith.constant 0 : i32
    %c0_i32_1 = arith.constant 0 : i32
    return %c0_i32, %c0_i32_0 : i32, i32
  }
  func.func @transform_3(%arg0: i32) -> (i32, i32) {
    %c0_i32 = arith.constant 0 : i32
    %c0_i32_0 = arith.constant 0 : i32
    return %arg0, %c0_i32 : i32, i32
  }
}

</mosaic_0001>

<llo_original>
// kernel: resnet_classifier_celeba_forward.5
$region0: #{resnet_classifier_celeba_forward.5}
  #allocation0 [shape = 'u32[]', space=smem, size = 0x4, offset = 0x4, fixed_abs, tag = 'smem constant byte address 0x4 - core index']
  #allocation1 [shape = 'u32[144,128]{1,0:T(1,128)}', space=vmem, size = 0x12000, scoped, tag = 'internal scratch']
  %s0 = inlined_call_operand.vmem [shape: bf16[2048,48], index: 0, kind: input, shape index: {}]
  %s1 = inlined_call_operand.vmem [shape: bf16[48,64], index: 1, kind: input, shape index: {}]
  %s2 = inlined_call_operand.vmem [shape: f32[1,64], index: 2, kind: input, shape index: {}]
  %s3 = inlined_call_operand.vmem [shape: bf16[2048,64], index: 3, kind: output, shape index: {}]
  %s4 = sld [smem:[#allocation0]]
  $region45: #{resnet_classifier_celeba_forward.5} parent=0
    _
  %s6 = ssub.s32 1, %s4
  %s7 = scalar_select 0, %s6, %s4
  loop: start=0, step=1, limit=10
  $region2: #{resnet_classifier_celeba_forward.5} parent=0 // loop_pre_header
    _
  $region3: #{resnet_classifier_celeba_forward.5} parent=0 // loop_header
    %s9 = sphi 0, %s13
    %p10 = scmp.ge.s32.totalorder %s9, 10
    %s19 = sphi 0, %s21
    %s22 = sphi 0, %s19
    %s23 = sphi 0, %s22
    %s39 = sphi 0, %s23
    %s43 = sphi 0, %s43
    %s45 = sphi 0, %s43
    %s46 = sphi 0, %s45
    %s60 = sphi 0, %s46
    %s64 = sphi 0, %s64
    %s66 = sphi 0, %s64
    %s67 = sphi 0, %s66
    %s81 = sphi 0, %s67
    %s87 = sphi 0, %s89
    %s90 = sphi 0, %s87
    %s91 = sphi 0, %s90
    %s107 = sphi 0, %s91
  $region4: #{resnet_classifier_celeba_forward.5} parent=0 // loop_header_branch
    %12 = sbr.rel (%p10) target = $region8
  $region5: #{resnet_classifier_celeba_forward.5} parent=0 // loop_body
    %s14 = ssub.s32 %s9, 1
    %s15 = ssub.s32 %s9, 2
    %s16 = sadd.s32 %s9, 1
    %s17 = ssub.s32 %s9, %s16
    %p18 = scmp.eq.s32.totalorder %s17, 0
    %s20 = sadd.s32 %s19, 1
    %s21 = scalar_select %p18, %s19, %s20
    %p24 = pneg %p18
    %p25 = scmp.eq.s32.totalorder %s9, 7
    %p26 = por %p24, %p25
    %p27 = scmp.ne.s32.totalorder %s19, %s22
    %p28 = scmp.eq.s32.totalorder %s9, 0
    %p29 = por %p27, %p28
    %p30 = scmp.ne.s32.totalorder %s19, %s22
    %p31 = scmp.eq.s32.totalorder %s14, 7
    %p32 = por %p30, %p31
    %p33 = scmp.ne.s32.totalorder %s22, %s23
    %p34 = scmp.eq.s32.totalorder %s14, 0
    %p35 = por %p33, %p34
    %p36 = scmp.ne.s32.totalorder %s22, %s23
    %p37 = scmp.eq.s32.totalorder %s15, 7
    %p38 = por %p36, %p37
    %p40 = scmp.ne.s32.totalorder %s23, %s39
    %p41 = scmp.eq.s32.totalorder %s15, 0
    %p42 = por %p40, %p41
    %s44 = sadd.s32 %s43, 1
    %p47 = scmp.eq.s32.totalorder %s9, 7
    %p48 = scmp.ne.s32.totalorder %s43, %s45
    %p49 = scmp.eq.s32.totalorder %s9, 0
    %p50 = por %p48, %p49
    %p51 = scmp.ne.s32.totalorder %s43, %s45
    %p52 = scmp.eq.s32.totalorder %s14, 7
    %p53 = por %p51, %p52
    %p54 = scmp.ne.s32.totalorder %s45, %s46
    %p55 = scmp.eq.s32.totalorder %s14, 0
    %p56 = por %p54, %p55
    %p57 = scmp.ne.s32.totalorder %s45, %s46
    %p58 = scmp.eq.s32.totalorder %s15, 7
    %p59 = por %p57, %p58
    %p61 = scmp.ne.s32.totalorder %s46, %s60
    %p62 = scmp.eq.s32.totalorder %s15, 0
    %p63 = por %p61, %p62
    %s65 = sadd.s32 %s64, 1
    %p68 = scmp.eq.s32.totalorder %s9, 7
    %p69 = scmp.ne.s32.totalorder %s64, %s66
    %p70 = scmp.eq.s32.totalorder %s9, 0
    %p71 = por %p69, %p70
    %p72 = scmp.ne.s32.totalorder %s64, %s66
    %p73 = scmp.eq.s32.totalorder %s14, 7
    %p74 = por %p72, %p73
    %p75 = scmp.ne.s32.totalorder %s66, %s67
    %p76 = scmp.eq.s32.totalorder %s14, 0
    %p77 = por %p75, %p76
    %p78 = scmp.ne.s32.totalorder %s66, %s67
    %p79 = scmp.eq.s32.totalorder %s15, 7
    %p80 = por %p78, %p79
    %p82 = scmp.ne.s32.totalorder %s67, %s81
    %p83 = scmp.eq.s32.totalorder %s15, 0
    %p84 = por %p82, %p83
    %s85 = ssub.s32 %s9, %s16
    %p86 = scmp.eq.s32.totalorder %s85, 0
    %s88 = sadd.s32 %s87, 1
    %s89 = scalar_select %p86, %s87, %s88
    %p92 = pneg %p86
    %p93 = scmp.eq.s32.totalorder %s9, 7
    %p94 = por %p92, %p93
    %p95 = scmp.ne.s32.totalorder %s87, %s90
    %p96 = scmp.eq.s32.totalorder %s9, 0
    %p97 = por %p95, %p96
    %p98 = scmp.ne.s32.totalorder %s87, %s90
    %p99 = scmp.eq.s32.totalorder %s14, 7
    %p100 = por %p98, %p99
    %p101 = scmp.ne.s32.totalorder %s90, %s91
    %p102 = scmp.eq.s32.totalorder %s14, 0
    %p103 = por %p101, %p102
    %p104 = scmp.ne.s32.totalorder %s90, %s91
    %p105 = scmp.eq.s32.totalorder %s15, 7
    %p106 = por %p104, %p105
    %p108 = scmp.ne.s32.totalorder %s91, %s107
    %p109 = scmp.eq.s32.totalorder %s15, 0
    %p110 = por %p108, %p109
    %p111 = scmp.le.s32.totalorder 1, %s9
    %p112 = scmp.lt.s32.totalorder %s9, 9
    %p113 = pnand %p111, %p112
    %p114 = pneg %p113
    // Predicated region
    $region9: #{resnet_classifier_celeba_forward.5} parent=5 // pred_check
      _
    $region10: #{resnet_classifier_celeba_forward.5} parent=5 // pred_check_branch
      %116 = sbr.rel (%p113) target = $region12
    $region11: #{resnet_classifier_celeba_forward.5} parent=5 // pred_region
      %s117 = ssub.s32 %s9, 1
      // Predicated region
      $region13: #{resnet_classifier_celeba_forward.5} parent=11 // pred_check
        %p118 = pneg %p56
      $region14: #{resnet_classifier_celeba_forward.5} parent=11 // pred_check_branch
        %120 = sbr.rel (%p118) target = $region16
      $region15: #{resnet_classifier_celeba_forward.5} parent=11 // pred_region
        _
      $region16: #{resnet_classifier_celeba_forward.5} parent=11 // pred_fallthru
        _
      // Predicated region
      $region17: #{resnet_classifier_celeba_forward.5} parent=11 // pred_check
        %p121 = pneg %p77
      $region18: #{resnet_classifier_celeba_forward.5} parent=11 // pred_check_branch
        %123 = sbr.rel (%p121) target = $region20
      $region19: #{resnet_classifier_celeba_forward.5} parent=11 // pred_region
        _
      $region20: #{resnet_classifier_celeba_forward.5} parent=11 // pred_fallthru
        _
    $region12: #{resnet_classifier_celeba_forward.5} parent=5 // pred_fallthru
      _
    %p124 = scmp.lt.s32.totalorder %s9, 8
    // Predicated region
    $region21: #{resnet_classifier_celeba_forward.5} parent=5 // pred_check
      %p125 = pneg %p124
    $region22: #{resnet_classifier_celeba_forward.5} parent=5 // pred_check_branch
      %127 = sbr.rel (%p125) target = $region24
    $region23: #{resnet_classifier_celeba_forward.5} parent=5 // pred_region
      // Predicated region
      $region25: #{resnet_classifier_celeba_forward.5} parent=23 // pred_check
        %p128 = pneg %p29
      $region26: #{resnet_classifier_celeba_forward.5} parent=23 // pred_check_branch
        %130 = sbr.rel (%p128) target = $region28
      $region27: #{resnet_classifier_celeba_forward.5} parent=23 // pred_region
        %s131 = smul.u32 32, %s9
        %p132 = scmp.lt.s32.totalorder %s131, 255
        %s133 = scalar_select %p132, %s131, 255
        %s134 = smul.addr %s133, 4
        %s135 = scalar_lea.vmem %s0, %s134
        %s136 = smul.u32 32, %s9
      $region28: #{resnet_classifier_celeba_forward.5} parent=23 // pred_fallthru
        _
    $region24: #{resnet_classifier_celeba_forward.5} parent=5 // pred_fallthru
      _
    %p137 = scmp.le.s32.totalorder 1, %s9
    %p138 = scmp.lt.s32.totalorder %s9, 9
    %p139 = pnand %p137, %p138
    %p140 = pneg %p139
    // Predicated region
    $region29: #{resnet_classifier_celeba_forward.5} parent=5 // pred_check
      _
    $region30: #{resnet_classifier_celeba_forward.5} parent=5 // pred_check_branch
      %142 = sbr.rel (%p139) target = $region32
    $region31: #{resnet_classifier_celeba_forward.5} parent=5 // pred_region
      %s143 = ssub.s32 %s9, 1
      %s144 = smul.u32 32, %s14
      %p145 = scmp.lt.s32.totalorder %s144, 255
      %s146 = scalar_select %p145, %s144, 255
      %s147 = smul.addr %s146, 4
      %s148 = scalar_lea.vmem %s0, %s147
      %p149 = pneg %p35
      %p150 = pneg %p32
      %p151 = pneg %p56
      %p152 = pneg %p53
      %p153 = pneg %p77
      %p154 = pneg %p74
      %p155 = pneg %p103
      %p156 = pneg %p100
      %s157 = smul.u32 32, %s14
      %p158 = scmp.lt.s32.totalorder %s157, 255
      %s159 = scalar_select %p158, %s157, 255
      %s160 = smul.addr %s159, 4
      %s161 = scalar_lea.vmem %s3, %s160
      %s162 = smul.u32 32, %s14
      %p163 = scmp.lt.s32.totalorder %s162, 255
      %s164 = scalar_select %p163, %s162, 255
      %s165 = smul.addr %s164, 4
      %s166 = scalar_lea.vmem %s0, %s165
      %s167 = smul.u32 32, %s14
      %s168 = smul.u32 32, %s14
      %p169 = scmp.lt.s32.totalorder %s168, 255
      %s170 = scalar_select %p169, %s168, 255
      %s171 = smul.addr %s170, 4
      %s172 = scalar_lea.vmem %s3, %s171
      %s173 = smul.u32 32, %s14
      %v175 = vld [vmem:[%s166] sm:$0xf]
      %v176 = vld [vmem:[%s166 + $0x4] sm:$0xf]
      %v177 = vld [vmem:[%s166 + $0x8] sm:$0xf]
      %v178 = vld [vmem:[%s166 + $0xc] sm:$0xf]
      %v179 = vld [vmem:[%s166 + $0x10] sm:$0xf]
      %v180 = vld [vmem:[%s166 + $0x14] sm:$0xf]
      %v181 = vld [vmem:[%s166 + $0x18] sm:$0xf]
      %v182 = vld [vmem:[%s166 + $0x1c] sm:$0xf]
      %v183 = vld [vmem:[%s166 + $0x20] sm:$0xf]
      %v184 = vld [vmem:[%s166 + $0x24] sm:$0xf]
      %v185 = vld [vmem:[%s166 + $0x28] sm:$0xf]
      %v186 = vld [vmem:[%s166 + $0x2c] sm:$0xf]
      %v187 = vld [vmem:[%s166 + $0x30] sm:$0xf]
      %v188 = vld [vmem:[%s166 + $0x34] sm:$0xf]
      %v189 = vld [vmem:[%s166 + $0x38] sm:$0xf]
      %v190 = vld [vmem:[%s166 + $0x3c] sm:$0xf]
      %v191 = vld [vmem:[%s166 + $0x40] sm:$0xf]
      %v192 = vld [vmem:[%s166 + $0x44] sm:$0xf]
      %v193 = vld [vmem:[%s166 + $0x48] sm:$0xf]
      %v194 = vld [vmem:[%s166 + $0x4c] sm:$0xf]
      %v195 = vld [vmem:[%s166 + $0x50] sm:$0xf]
      %v196 = vld [vmem:[%s166 + $0x54] sm:$0xf]
      %v197 = vld [vmem:[%s166 + $0x58] sm:$0xf]
      %v198 = vld [vmem:[%s166 + $0x5c] sm:$0xf]
      %v199 = vld [vmem:[%s166 + $0x60] sm:$0xf]
      %v200 = vld [vmem:[%s166 + $0x64] sm:$0xf]
      %v201 = vld [vmem:[%s166 + $0x68] sm:$0xf]
      %v202 = vld [vmem:[%s166 + $0x6c] sm:$0xf]
      %v203 = vld [vmem:[%s166 + $0x70] sm:$0xf]
      %v204 = vld [vmem:[%s166 + $0x74] sm:$0xf]
      %v205 = vld [vmem:[%s166 + $0x78] sm:$0xf]
      %v206 = vld [vmem:[%s166 + $0x7c] sm:$0xf]
      %v207 = vld [vmem:[%s1] sm:$0xf]
      %v208 = vld [vmem:[%s1 + $0x4] sm:$0xf]
      %v209 = vld [vmem:[%s1 + $0x8] sm:$0xf]
      %v210 = vld [vmem:[%s1 + $0xc] sm:$0xf]
      %v211 = vld [vmem:[%s1 + $0x10] sm:$0xf]
      %v212 = vld [vmem:[%s1 + $0x14] sm:$0xf]
      %v213 = vld [vmem:[%s2] sm:$0x1]
      %v215 = vlaneseq
      %v216 = vshrl.u32 %v215, 7
      %v217 = vsub.s32 0, %v216
      %v218 = vrot.slane %v213, %v217
      %v252 = vunpack.c.l.b16 %v175
      %v253 = vunpack.c.l.b16 %v176
      %v254 = vunpack.c.l.b16 %v177
      %v255 = vunpack.c.l.b16 %v178
      %v256 = vunpack.c.l.b16 %v179
      %v257 = vunpack.c.l.b16 %v180
      %v258 = vunpack.c.l.b16 %v181
      %v259 = vunpack.c.l.b16 %v182
      %v260 = vunpack.c.l.b16 %v183
      %v261 = vunpack.c.l.b16 %v184
      %v262 = vunpack.c.l.b16 %v185
      %v263 = vunpack.c.l.b16 %v186
      %v264 = vunpack.c.l.b16 %v187
      %v265 = vunpack.c.l.b16 %v188
      %v266 = vunpack.c.l.b16 %v189
      %v267 = vunpack.c.l.b16 %v190
      %v268 = vunpack.c.l.b16 %v191
      %v269 = vunpack.c.l.b16 %v192
      %v270 = vunpack.c.l.b16 %v193
      %v271 = vunpack.c.l.b16 %v194
      %v272 = vunpack.c.l.b16 %v195
      %v273 = vunpack.c.l.b16 %v196
      %v274 = vunpack.c.l.b16 %v197
      %v275 = vunpack.c.l.b16 %v198
      %v276 = vunpack.c.l.b16 %v199
      %v277 = vunpack.c.l.b16 %v200
      %v278 = vunpack.c.l.b16 %v201
      %v279 = vunpack.c.l.b16 %v202
      %v280 = vunpack.c.l.b16 %v203
      %v281 = vunpack.c.l.b16 %v204
      %v282 = vunpack.c.l.b16 %v205
      %v283 = vunpack.c.l.b16 %v206
      %v284 = vpack.c.b16 %v253, %v252
      %v285 = vpack.c.b16 %v255, %v254
      %v286 = vpack.c.b16 %v257, %v256
      %v287 = vpack.c.b16 %v259, %v258
      %v288 = vpack.c.b16 %v261, %v260
      %v289 = vpack.c.b16 %v263, %v262
      %v290 = vpack.c.b16 %v265, %v264
      %v291 = vpack.c.b16 %v267, %v266
      %v292 = vpack.c.b16 %v269, %v268
      %v293 = vpack.c.b16 %v271, %v270
      %v294 = vpack.c.b16 %v273, %v272
      %v295 = vpack.c.b16 %v275, %v274
      %v296 = vpack.c.b16 %v277, %v276
      %v297 = vpack.c.b16 %v279, %v278
      %v298 = vpack.c.b16 %v281, %v280
      %v299 = vpack.c.b16 %v283, %v282
      %v306 = vunpack.c.l.b16 %v207
      %v307 = vunpack.c.l.b16 %v208
      %v308 = vunpack.c.l.b16 %v209
      %v309 = vunpack.c.l.b16 %v210
      %v310 = vunpack.c.l.b16 %v211
      %v311 = vunpack.c.l.b16 %v212
      %v312 = vpack.c.b16 %v307, %v306
      %v313 = vpack.c.b16 %v309, %v308
      %v314 = vpack.c.b16 %v311, %v310
      %vm318 = vcmask 392192
      %v320 = vsel %vm318, %v284, 0
      %v323 = vsel %vm318, %v285, 0
      %v326 = vsel %vm318, %v286, 0
      %v329 = vsel %vm318, %v287, 0
      %v332 = vsel %vm318, %v288, 0
      %v335 = vsel %vm318, %v289, 0
      %v338 = vsel %vm318, %v290, 0
      %v341 = vsel %vm318, %v291, 0
      %v344 = vsel %vm318, %v292, 0
      %v347 = vsel %vm318, %v293, 0
      %v350 = vsel %vm318, %v294, 0
      %v353 = vsel %vm318, %v295, 0
      %v356 = vsel %vm318, %v296, 0
      %v359 = vsel %vm318, %v297, 0
      %v362 = vsel %vm318, %v298, 0
      %v365 = vsel %vm318, %v299, 0
      %367 = vmatprep.subr.bf16.mxu0 0
      %368 = vmatpush1.bf16.msra.mxu0 0
      %369 = vmatprep.subr.bf16.mxu0 0
      %370 = vmatpush1.bf16.msra.mxu0 0
      %371 = vmatprep.subr.bf16.mxu0 0
      %372 = vmatpush1.bf16.msra.mxu0 0
      %373 = vmatprep.subr.bf16.mxu0 0
      %374 = vmatpush1.bf16.msra.mxu0 0
      %375 = vmatprep.subr.bf16.mxu0 0
      %376 = vmatpush1.bf16.msra.mxu0 0
      %377 = vmatprep.subr.bf16.mxu0 0
      %378 = vmatpush1.bf16.msra.mxu0 %v314
      %379 = vmatprep.subr.bf16.mxu0 0
      %380 = vmatpush1.bf16.msra.mxu0 %v313
      %381 = vmatprep.subr.bf16.mxu0 0
      %382 = vmatpush1.bf16.msra.mxu0 %v312
      %383 = vmatprep.subr.bf16.mxu0 0
      %384 = vmatpush2.bf16.msra.mxu0 0
      %385 = vmatprep.subr.bf16.mxu0 0
      %386 = vmatpush2.bf16.msra.mxu0 0
      %387 = vmatprep.subr.bf16.mxu0 0
      %388 = vmatpush2.bf16.msra.mxu0 0
      %389 = vmatprep.subr.bf16.mxu0 0
      %390 = vmatpush2.bf16.msra.mxu0 0
      %391 = vmatprep.subr.bf16.mxu0 0
      %392 = vmatpush2.bf16.msra.mxu0 0
      %393 = vmatprep.subr.bf16.mxu0 0
      %394 = vmatpush2.bf16.msra.mxu0 0
      %395 = vmatprep.subr.bf16.mxu0 0
      %396 = vmatpush2.bf16.msra.mxu0 0
      %397 = vmatprep.subr.bf16.mxu0 0
      %398 = vmatpush2.bf16.msra.mxu0 0
      %399 = vmatprep.mubr.bf16.mxu0 0
      %400 = vmatmul.mubr.bf16.gmra.mxu0 %v320
      %v401 = vpop.f32.mrf.mxu0
      %v402 = vadd.f32 %v218, %v401
      %v403 = vpop.f32.mrf.mxu0
      %v404 = vpop.f32.mrf.mxu0
      %v405 = vadd.f32 %v218, %v404
      %v406 = vpop.f32.mrf.mxu0
      %407 = vmatprep.mubr.bf16.mxu0 0
      %408 = vmatmul.mubr.bf16.gmra.mxu0 %v323
      %v409 = vpop.f32.mrf.mxu0
      %v410 = vadd.f32 %v218, %v409
      %v411 = vpop.f32.mrf.mxu0
      %v412 = vpop.f32.mrf.mxu0
      %v413 = vadd.f32 %v218, %v412
      %v414 = vpop.f32.mrf.mxu0
      %415 = vmatprep.mubr.bf16.mxu0 0
      %416 = vmatmul.mubr.bf16.gmra.mxu0 %v326
      %v417 = vpop.f32.mrf.mxu0
      %v418 = vadd.f32 %v218, %v417
      %v419 = vpop.f32.mrf.mxu0
      %v420 = vpop.f32.mrf.mxu0
      %v421 = vadd.f32 %v218, %v420
      %v422 = vpop.f32.mrf.mxu0
      %423 = vmatprep.mubr.bf16.mxu0 0
      %424 = vmatmul.mubr.bf16.gmra.mxu0 %v329
      %v425 = vpop.f32.mrf.mxu0
      %v426 = vadd.f32 %v218, %v425
      %v427 = vpop.f32.mrf.mxu0
      %v428 = vpop.f32.mrf.mxu0
      %v429 = vadd.f32 %v218, %v428
      %v430 = vpop.f32.mrf.mxu0
      %431 = vmatprep.mubr.bf16.mxu0 0
      %432 = vmatmul.mubr.bf16.gmra.mxu0 %v332
      %v433 = vpop.f32.mrf.mxu0
      %v434 = vadd.f32 %v218, %v433
      %v435 = vpop.f32.mrf.mxu0
      %v436 = vpop.f32.mrf.mxu0
      %v437 = vadd.f32 %v218, %v436
      %v438 = vpop.f32.mrf.mxu0
      %439 = vmatprep.mubr.bf16.mxu0 0
      %440 = vmatmul.mubr.bf16.gmra.mxu0 %v335
      %v441 = vpop.f32.mrf.mxu0
      %v442 = vadd.f32 %v218, %v441
      %v443 = vpop.f32.mrf.mxu0
      %v444 = vpop.f32.mrf.mxu0
      %v445 = vadd.f32 %v218, %v444
      %v446 = vpop.f32.mrf.mxu0
      %447 = vmatprep.mubr.bf16.mxu0 0
      %448 = vmatmul.mubr.bf16.gmra.mxu0 %v338
      %v449 = vpop.f32.mrf.mxu0
      %v450 = vadd.f32 %v218, %v449
      %v451 = vpop.f32.mrf.mxu0
      %v452 = vpop.f32.mrf.mxu0
      %v453 = vadd.f32 %v218, %v452
      %v454 = vpop.f32.mrf.mxu0
      %455 = vmatprep.mubr.bf16.mxu0 0
      %456 = vmatmul.mubr.bf16.gmra.mxu0 %v341
      %v457 = vpop.f32.mrf.mxu0
      %v458 = vadd.f32 %v218, %v457
      %v459 = vpop.f32.mrf.mxu0
      %v460 = vpop.f32.mrf.mxu0
      %v461 = vadd.f32 %v218, %v460
      %v462 = vpop.f32.mrf.mxu0
      %463 = vmatprep.mubr.bf16.mxu0 0
      %464 = vmatmul.mubr.bf16.gmra.mxu0 %v344
      %v465 = vpop.f32.mrf.mxu0
      %v466 = vadd.f32 %v218, %v465
      %v467 = vpop.f32.mrf.mxu0
      %v468 = vpop.f32.mrf.mxu0
      %v469 = vadd.f32 %v218, %v468
      %v470 = vpop.f32.mrf.mxu0
      %471 = vmatprep.mubr.bf16.mxu0 0
      %472 = vmatmul.mubr.bf16.gmra.mxu0 %v347
      %v473 = vpop.f32.mrf.mxu0
      %v474 = vadd.f32 %v218, %v473
      %v475 = vpop.f32.mrf.mxu0
      %v476 = vpop.f32.mrf.mxu0
      %v477 = vadd.f32 %v218, %v476
      %v478 = vpop.f32.mrf.mxu0
      %479 = vmatprep.mubr.bf16.mxu0 0
      %480 = vmatmul.mubr.bf16.gmra.mxu0 %v350
      %v481 = vpop.f32.mrf.mxu0
      %v482 = vadd.f32 %v218, %v481
      %v483 = vpop.f32.mrf.mxu0
      %v484 = vpop.f32.mrf.mxu0
      %v485 = vadd.f32 %v218, %v484
      %v486 = vpop.f32.mrf.mxu0
      %487 = vmatprep.mubr.bf16.mxu0 0
      %488 = vmatmul.mubr.bf16.gmra.mxu0 %v353
      %v489 = vpop.f32.mrf.mxu0
      %v490 = vadd.f32 %v218, %v489
      %v491 = vpop.f32.mrf.mxu0
      %v492 = vpop.f32.mrf.mxu0
      %v493 = vadd.f32 %v218, %v492
      %v494 = vpop.f32.mrf.mxu0
      %495 = vmatprep.mubr.bf16.mxu0 0
      %496 = vmatmul.mubr.bf16.gmra.mxu0 %v356
      %v497 = vpop.f32.mrf.mxu0
      %v498 = vadd.f32 %v218, %v497
      %v499 = vpop.f32.mrf.mxu0
      %v500 = vpop.f32.mrf.mxu0
      %v501 = vadd.f32 %v218, %v500
      %v502 = vpop.f32.mrf.mxu0
      %503 = vmatprep.mubr.bf16.mxu0 0
      %504 = vmatmul.mubr.bf16.gmra.mxu0 %v359
      %v505 = vpop.f32.mrf.mxu0
      %v506 = vadd.f32 %v218, %v505
      %v507 = vpop.f32.mrf.mxu0
      %v508 = vpop.f32.mrf.mxu0
      %v509 = vadd.f32 %v218, %v508
      %v510 = vpop.f32.mrf.mxu0
      %511 = vmatprep.mubr.bf16.mxu0 0
      %512 = vmatmul.mubr.bf16.gmra.mxu0 %v362
      %v513 = vpop.f32.mrf.mxu0
      %v514 = vadd.f32 %v218, %v513
      %v515 = vpop.f32.mrf.mxu0
      %v516 = vpop.f32.mrf.mxu0
      %v517 = vadd.f32 %v218, %v516
      %v518 = vpop.f32.mrf.mxu0
      %519 = vmatprep.mubr.bf16.mxu0 0
      %520 = vmatmul.mubr.bf16.gmra.mxu0 %v365
      %v521 = vpop.f32.mrf.mxu0
      %v522 = vadd.f32 %v218, %v521
      %v523 = vpop.f32.mrf.mxu0
      %v524 = vpop.f32.mrf.mxu0
      %v525 = vadd.f32 %v218, %v524
      %v526 = vpop.f32.mrf.mxu0
      %527 = vdwg.mxu0
      %v528 = vpack.c.bf16 %v405, %v402
      %v529 = vpack.c.bf16 %v413, %v410
      %v530 = vpack.c.bf16 %v421, %v418
      %v531 = vpack.c.bf16 %v429, %v426
      %v532 = vpack.c.bf16 %v437, %v434
      %v533 = vpack.c.bf16 %v445, %v442
      %v534 = vpack.c.bf16 %v453, %v450
      %v535 = vpack.c.bf16 %v461, %v458
      %v536 = vpack.c.bf16 %v469, %v466
      %v537 = vpack.c.bf16 %v477, %v474
      %v538 = vpack.c.bf16 %v485, %v482
      %v539 = vpack.c.bf16 %v493, %v490
      %v540 = vpack.c.bf16 %v501, %v498
      %v541 = vpack.c.bf16 %v509, %v506
      %v542 = vpack.c.bf16 %v517, %v514
      %v543 = vpack.c.bf16 %v525, %v522
      %v560 = vunpack.c.l.b16 %v528
      %v561 = vunpack.c.h.b16 %v528
      %v562 = vunpack.c.l.b16 %v529
      %v563 = vunpack.c.h.b16 %v529
      %v564 = vunpack.c.l.b16 %v530
      %v565 = vunpack.c.h.b16 %v530
      %v566 = vunpack.c.l.b16 %v531
      %v567 = vunpack.c.h.b16 %v531
      %v568 = vunpack.c.l.b16 %v532
      %v569 = vunpack.c.h.b16 %v532
      %v570 = vunpack.c.l.b16 %v533
      %v571 = vunpack.c.h.b16 %v533
      %v572 = vunpack.c.l.b16 %v534
      %v573 = vunpack.c.h.b16 %v534
      %v574 = vunpack.c.l.b16 %v535
      %v575 = vunpack.c.h.b16 %v535
      %v576 = vunpack.c.l.b16 %v536
      %v577 = vunpack.c.h.b16 %v536
      %v578 = vunpack.c.l.b16 %v537
      %v579 = vunpack.c.h.b16 %v537
      %v580 = vunpack.c.l.b16 %v538
      %v581 = vunpack.c.h.b16 %v538
      %v582 = vunpack.c.l.b16 %v539
      %v583 = vunpack.c.h.b16 %v539
      %v584 = vunpack.c.l.b16 %v540
      %v585 = vunpack.c.h.b16 %v540
      %v586 = vunpack.c.l.b16 %v541
      %v587 = vunpack.c.h.b16 %v541
      %v588 = vunpack.c.l.b16 %v542
      %v589 = vunpack.c.h.b16 %v542
      %v590 = vunpack.c.l.b16 %v543
      %v591 = vunpack.c.h.b16 %v543
      %v592 = vpack.c.b16 %v560, %v560
      %v593 = vpack.c.b16 %v561, %v561
      %v594 = vpack.c.b16 %v562, %v562
      %v595 = vpack.c.b16 %v563, %v563
      %v596 = vpack.c.b16 %v564, %v564
      %v597 = vpack.c.b16 %v565, %v565
      %v598 = vpack.c.b16 %v566, %v566
      %v599 = vpack.c.b16 %v567, %v567
      %v600 = vpack.c.b16 %v568, %v568
      %v601 = vpack.c.b16 %v569, %v569
      %v602 = vpack.c.b16 %v570, %v570
      %v603 = vpack.c.b16 %v571, %v571
      %v604 = vpack.c.b16 %v572, %v572
      %v605 = vpack.c.b16 %v573, %v573
      %v606 = vpack.c.b16 %v574, %v574
      %v607 = vpack.c.b16 %v575, %v575
      %v608 = vpack.c.b16 %v576, %v576
      %v609 = vpack.c.b16 %v577, %v577
      %v610 = vpack.c.b16 %v578, %v578
      %v611 = vpack.c.b16 %v579, %v579
      %v612 = vpack.c.b16 %v580, %v580
      %v613 = vpack.c.b16 %v581, %v581
      %v614 = vpack.c.b16 %v582, %v582
      %v615 = vpack.c.b16 %v583, %v583
      %v616 = vpack.c.b16 %v584, %v584
      %v617 = vpack.c.b16 %v585, %v585
      %v618 = vpack.c.b16 %v586, %v586
      %v619 = vpack.c.b16 %v587, %v587
      %v620 = vpack.c.b16 %v588, %v588
      %v621 = vpack.c.b16 %v589, %v589
      %v622 = vpack.c.b16 %v590, %v590
      %v623 = vpack.c.b16 %v591, %v591
      %vm656 = vcmask 519168
      %657 = vst.msk [vmem:[%s172] sm:$0xf] %vm656, %v592
      %658 = vst.msk [vmem:[%s172 + $0x4] sm:$0xf] %vm656, %v593
      %659 = vst.msk [vmem:[%s172 + $0x8] sm:$0xf] %vm656, %v594
      %660 = vst.msk [vmem:[%s172 + $0xc] sm:$0xf] %vm656, %v595
      %661 = vst.msk [vmem:[%s172 + $0x10] sm:$0xf] %vm656, %v596
      %662 = vst.msk [vmem:[%s172 + $0x14] sm:$0xf] %vm656, %v597
      %663 = vst.msk [vmem:[%s172 + $0x18] sm:$0xf] %vm656, %v598
      %664 = vst.msk [vmem:[%s172 + $0x1c] sm:$0xf] %vm656, %v599
      %665 = vst.msk [vmem:[%s172 + $0x20] sm:$0xf] %vm656, %v600
      %666 = vst.msk [vmem:[%s172 + $0x24] sm:$0xf] %vm656, %v601
      %667 = vst.msk [vmem:[%s172 + $0x28] sm:$0xf] %vm656, %v602
      %668 = vst.msk [vmem:[%s172 + $0x2c] sm:$0xf] %vm656, %v603
      %669 = vst.msk [vmem:[%s172 + $0x30] sm:$0xf] %vm656, %v604
      %670 = vst.msk [vmem:[%s172 + $0x34] sm:$0xf] %vm656, %v605
      %671 = vst.msk [vmem:[%s172 + $0x38] sm:$0xf] %vm656, %v606
      %672 = vst.msk [vmem:[%s172 + $0x3c] sm:$0xf] %vm656, %v607
      %673 = vst.msk [vmem:[%s172 + $0x40] sm:$0xf] %vm656, %v608
      %674 = vst.msk [vmem:[%s172 + $0x44] sm:$0xf] %vm656, %v609
      %675 = vst.msk [vmem:[%s172 + $0x48] sm:$0xf] %vm656, %v610
      %676 = vst.msk [vmem:[%s172 + $0x4c] sm:$0xf] %vm656, %v611
      %677 = vst.msk [vmem:[%s172 + $0x50] sm:$0xf] %vm656, %v612
      %678 = vst.msk [vmem:[%s172 + $0x54] sm:$0xf] %vm656, %v613
      %679 = vst.msk [vmem:[%s172 + $0x58] sm:$0xf] %vm656, %v614
      %680 = vst.msk [vmem:[%s172 + $0x5c] sm:$0xf] %vm656, %v615
      %681 = vst.msk [vmem:[%s172 + $0x60] sm:$0xf] %vm656, %v616
      %682 = vst.msk [vmem:[%s172 + $0x64] sm:$0xf] %vm656, %v617
      %683 = vst.msk [vmem:[%s172 + $0x68] sm:$0xf] %vm656, %v618
      %684 = vst.msk [vmem:[%s172 + $0x6c] sm:$0xf] %vm656, %v619
      %685 = vst.msk [vmem:[%s172 + $0x70] sm:$0xf] %vm656, %v620
      %686 = vst.msk [vmem:[%s172 + $0x74] sm:$0xf] %vm656, %v621
      %687 = vst.msk [vmem:[%s172 + $0x78] sm:$0xf] %vm656, %v622
      %688 = vst.msk [vmem:[%s172 + $0x7c] sm:$0xf] %vm656, %v623
      %s689 = smul.u32 32, %s14
      %p690 = scmp.lt.s32.totalorder %s689, 255
      %s691 = scalar_select %p690, %s689, 255
      %s692 = smul.addr %s691, 4
      %s693 = scalar_lea.vmem %s3, %s692
      // Predicated region
      $region33: #{resnet_classifier_celeba_forward.5} parent=31 // pred_check
        %p694 = pneg %p100
      $region34: #{resnet_classifier_celeba_forward.5} parent=31 // pred_check_branch
        %696 = sbr.rel (%p694) target = $region36
      $region35: #{resnet_classifier_celeba_forward.5} parent=31 // pred_region
        %s697 = smul.u32 32, %s14
      $region36: #{resnet_classifier_celeba_forward.5} parent=31 // pred_fallthru
        _
    $region32: #{resnet_classifier_celeba_forward.5} parent=5 // pred_fallthru
      _
    %p698 = scmp.le.s32.totalorder 2, %s9
    // Predicated region
    $region37: #{resnet_classifier_celeba_forward.5} parent=5 // pred_check
      %p699 = pneg %p698
    $region38: #{resnet_classifier_celeba_forward.5} parent=5 // pred_check_branch
      %701 = sbr.rel (%p699) target = $region40
    $region39: #{resnet_classifier_celeba_forward.5} parent=5 // pred_region
      %s702 = ssub.s32 %s9, 2
      // Predicated region
      $region41: #{resnet_classifier_celeba_forward.5} parent=39 // pred_check
        %p703 = pneg %p106
      $region42: #{resnet_classifier_celeba_forward.5} parent=39 // pred_check_branch
        %705 = sbr.rel (%p703) target = $region44
      $region43: #{resnet_classifier_celeba_forward.5} parent=39 // pred_region
        %s706 = smul.u32 32, %s15
        %p707 = scmp.lt.s32.totalorder %s706, 255
        %s708 = scalar_select %p707, %s706, 255
        %s709 = smul.addr %s708, 4
        %s710 = scalar_lea.vmem %s3, %s709
      $region44: #{resnet_classifier_celeba_forward.5} parent=39 // pred_fallthru
        _
    $region40: #{resnet_classifier_celeba_forward.5} parent=5 // pred_fallthru
      _
  $region6: #{resnet_classifier_celeba_forward.5} parent=0 // loop_footer
    %s13 = sadd.s32 1, %s9
  $region7: #{resnet_classifier_celeba_forward.5} parent=0 // loop_footer_branch
    %8 = sbr.rel target = $region3
  $region8: #{resnet_classifier_celeba_forward.5} parent=0 // loop_exit
    _

// kernel: resnet_classifier_celeba_forward.6
$region0: #{resnet_classifier_celeba_forward.6}
  #allocation0 [shape = 'u32[]', space=smem, size = 0x4, offset = 0x4, fixed_abs, tag = 'smem constant byte address 0x4 - core index']
  #allocation1 [shape = 'u32[144,128]{1,0:T(1,128)}', space=vmem, size = 0x12000, scoped, tag = 'internal scratch']
  %s0 = inlined_call_operand.vmem [shape: bf16[512,1024], index: 0, kind: input, shape index: {}]
  %s1 = inlined_call_operand.vmem [shape: bf16[1024,128], index: 1, kind: input, shape index: {}]
  %s2 = inlined_call_operand.vmem [shape: f32[1,128], index: 2, kind: input, shape index: {}]
  %s3 = inlined_call_operand.vmem [shape: bf16[512,128], index: 3, kind: output, shape index: {}]
  %s4 = sld [smem:[#allocation0]]
  $region45: #{resnet_classifier_celeba_forward.6} parent=0
    _
  %s6 = ssub.s32 1, %s4
  %s7 = scalar_select 0, %s6, %s4
  loop: start=0, step=1, limit=4
  $region2: #{resnet_classifier_celeba_forward.6} parent=0 // loop_pre_header
    _
  $region3: #{resnet_classifier_celeba_forward.6} parent=0 // loop_header
    %s9 = sphi 0, %s13
    %p10 = scmp.ge.s32.totalorder %s9, 4
    %s19 = sphi 0, %s21
    %s22 = sphi 0, %s19
    %s23 = sphi 0, %s22
    %s39 = sphi 0, %s23
    %s43 = sphi 0, %s43
    %s45 = sphi 0, %s43
    %s46 = sphi 0, %s45
    %s60 = sphi 0, %s46
    %s64 = sphi 0, %s64
    %s66 = sphi 0, %s64
    %s67 = sphi 0, %s66
    %s81 = sphi 0, %s67
    %s87 = sphi 0, %s89
    %s90 = sphi 0, %s87
    %s91 = sphi 0, %s90
    %s107 = sphi 0, %s91
  $region4: #{resnet_classifier_celeba_forward.6} parent=0 // loop_header_branch
    %12 = sbr.rel (%p10) target = $region8
  $region5: #{resnet_classifier_celeba_forward.6} parent=0 // loop_body
    %s14 = ssub.s32 %s9, 1
    %s15 = ssub.s32 %s9, 2
    %s16 = sadd.s32 %s9, 1
    %s17 = ssub.s32 %s9, %s16
    %p18 = scmp.eq.s32.totalorder %s17, 0
    %s20 = sadd.s32 %s19, 1
    %s21 = scalar_select %p18, %s19, %s20
    %p24 = pneg %p18
    %p25 = scmp.eq.s32.totalorder %s9, 1
    %p26 = por %p24, %p25
    %p27 = scmp.ne.s32.totalorder %s19, %s22
    %p28 = scmp.eq.s32.totalorder %s9, 0
    %p29 = por %p27, %p28
    %p30 = scmp.ne.s32.totalorder %s19, %s22
    %p31 = scmp.eq.s32.totalorder %s14, 1
    %p32 = por %p30, %p31
    %p33 = scmp.ne.s32.totalorder %s22, %s23
    %p34 = scmp.eq.s32.totalorder %s14, 0
    %p35 = por %p33, %p34
    %p36 = scmp.ne.s32.totalorder %s22, %s23
    %p37 = scmp.eq.s32.totalorder %s15, 1
    %p38 = por %p36, %p37
    %p40 = scmp.ne.s32.totalorder %s23, %s39
    %p41 = scmp.eq.s32.totalorder %s15, 0
    %p42 = por %p40, %p41
    %s44 = sadd.s32 %s43, 1
    %p47 = scmp.eq.s32.totalorder %s9, 1
    %p48 = scmp.ne.s32.totalorder %s43, %s45
    %p49 = scmp.eq.s32.totalorder %s9, 0
    %p50 = por %p48, %p49
    %p51 = scmp.ne.s32.totalorder %s43, %s45
    %p52 = scmp.eq.s32.totalorder %s14, 1
    %p53 = por %p51, %p52
    %p54 = scmp.ne.s32.totalorder %s45, %s46
    %p55 = scmp.eq.s32.totalorder %s14, 0
    %p56 = por %p54, %p55
    %p57 = scmp.ne.s32.totalorder %s45, %s46
    %p58 = scmp.eq.s32.totalorder %s15, 1
    %p59 = por %p57, %p58
    %p61 = scmp.ne.s32.totalorder %s46, %s60
    %p62 = scmp.eq.s32.totalorder %s15, 0
    %p63 = por %p61, %p62
    %s65 = sadd.s32 %s64, 1
    %p68 = scmp.eq.s32.totalorder %s9, 1
    %p69 = scmp.ne.s32.totalorder %s64, %s66
    %p70 = scmp.eq.s32.totalorder %s9, 0
    %p71 = por %p69, %p70
    %p72 = scmp.ne.s32.totalorder %s64, %s66
    %p73 = scmp.eq.s32.totalorder %s14, 1
    %p74 = por %p72, %p73
    %p75 = scmp.ne.s32.totalorder %s66, %s67
    %p76 = scmp.eq.s32.totalorder %s14, 0
    %p77 = por %p75, %p76
    %p78 = scmp.ne.s32.totalorder %s66, %s67
    %p79 = scmp.eq.s32.totalorder %s15, 1
    %p80 = por %p78, %p79
    %p82 = scmp.ne.s32.totalorder %s67, %s81
    %p83 = scmp.eq.s32.totalorder %s15, 0
    %p84 = por %p82, %p83
    %s85 = ssub.s32 %s9, %s16
    %p86 = scmp.eq.s32.totalorder %s85, 0
    %s88 = sadd.s32 %s87, 1
    %s89 = scalar_select %p86, %s87, %s88
    %p92 = pneg %p86
    %p93 = scmp.eq.s32.totalorder %s9, 1
    %p94 = por %p92, %p93
    %p95 = scmp.ne.s32.totalorder %s87, %s90
    %p96 = scmp.eq.s32.totalorder %s9, 0
    %p97 = por %p95, %p96
    %p98 = scmp.ne.s32.totalorder %s87, %s90
    %p99 = scmp.eq.s32.totalorder %s14, 1
    %p100 = por %p98, %p99
    %p101 = scmp.ne.s32.totalorder %s90, %s91
    %p102 = scmp.eq.s32.totalorder %s14, 0
    %p103 = por %p101, %p102
    %p104 = scmp.ne.s32.totalorder %s90, %s91
    %p105 = scmp.eq.s32.totalorder %s15, 1
    %p106 = por %p104, %p105
    %p108 = scmp.ne.s32.totalorder %s91, %s107
    %p109 = scmp.eq.s32.totalorder %s15, 0
    %p110 = por %p108, %p109
    %p111 = scmp.le.s32.totalorder 1, %s9
    %p112 = scmp.lt.s32.totalorder %s9, 3
    %p113 = pnand %p111, %p112
    %p114 = pneg %p113
    // Predicated region
    $region9: #{resnet_classifier_celeba_forward.6} parent=5 // pred_check
      _
    $region10: #{resnet_classifier_celeba_forward.6} parent=5 // pred_check_branch
      %116 = sbr.rel (%p113) target = $region12
    $region11: #{resnet_classifier_celeba_forward.6} parent=5 // pred_region
      %s117 = ssub.s32 %s9, 1
      // Predicated region
      $region13: #{resnet_classifier_celeba_forward.6} parent=11 // pred_check
        %p118 = pneg %p56
      $region14: #{resnet_classifier_celeba_forward.6} parent=11 // pred_check_branch
        %120 = sbr.rel (%p118) target = $region16
      $region15: #{resnet_classifier_celeba_forward.6} parent=11 // pred_region
        _
      $region16: #{resnet_classifier_celeba_forward.6} parent=11 // pred_fallthru
        _
      // Predicated region
      $region17: #{resnet_classifier_celeba_forward.6} parent=11 // pred_check
        %p121 = pneg %p77
      $region18: #{resnet_classifier_celeba_forward.6} parent=11 // pred_check_branch
        %123 = sbr.rel (%p121) target = $region20
      $region19: #{resnet_classifier_celeba_forward.6} parent=11 // pred_region
        _
      $region20: #{resnet_classifier_celeba_forward.6} parent=11 // pred_fallthru
        _
    $region12: #{resnet_classifier_celeba_forward.6} parent=5 // pred_fallthru
      _
    %p124 = scmp.lt.s32.totalorder %s9, 2
    // Predicated region
    $region21: #{resnet_classifier_celeba_forward.6} parent=5 // pred_check
      %p125 = pneg %p124
    $region22: #{resnet_classifier_celeba_forward.6} parent=5 // pred_check_branch
      %127 = sbr.rel (%p125) target = $region24
    $region23: #{resnet_classifier_celeba_forward.6} parent=5 // pred_region
      // Predicated region
      $region25: #{resnet_classifier_celeba_forward.6} parent=23 // pred_check
        %p128 = pneg %p29
      $region26: #{resnet_classifier_celeba_forward.6} parent=23 // pred_check_branch
        %130 = sbr.rel (%p128) target = $region28
      $region27: #{resnet_classifier_celeba_forward.6} parent=23 // pred_region
        %s131 = smul.u32 32, %s9
        %p132 = scmp.lt.s32.totalorder %s131, 63
        %s133 = scalar_select %p132, %s131, 63
        %s134 = smul.addr %s133, 8
        %s135 = smul.addr %s134, 4
        %s136 = scalar_lea.vmem %s0, %s135
        %s137 = smul.u32 32, %s9
      $region28: #{resnet_classifier_celeba_forward.6} parent=23 // pred_fallthru
        _
    $region24: #{resnet_classifier_celeba_forward.6} parent=5 // pred_fallthru
      _
    %p138 = scmp.le.s32.totalorder 1, %s9
    %p139 = scmp.lt.s32.totalorder %s9, 3
    %p140 = pnand %p138, %p139
    %p141 = pneg %p140
    // Predicated region
    $region29: #{resnet_classifier_celeba_forward.6} parent=5 // pred_check
      _
    $region30: #{resnet_classifier_celeba_forward.6} parent=5 // pred_check_branch
      %143 = sbr.rel (%p140) target = $region32
    $region31: #{resnet_classifier_celeba_forward.6} parent=5 // pred_region
      %s144 = ssub.s32 %s9, 1
      %s145 = smul.u32 32, %s14
      %p146 = scmp.lt.s32.totalorder %s145, 63
      %s147 = scalar_select %p146, %s145, 63
      %s148 = smul.addr %s147, 8
      %s149 = smul.addr %s148, 4
      %s150 = scalar_lea.vmem %s0, %s149
      %p151 = pneg %p35
      %p152 = pneg %p32
      %p153 = pneg %p56
      %p154 = pneg %p53
      %p155 = pneg %p77
      %p156 = pneg %p74
      %p157 = pneg %p103
      %p158 = pneg %p100
      %s159 = smul.u32 32, %s14
      %p160 = scmp.lt.s32.totalorder %s159, 63
      %s161 = scalar_select %p160, %s159, 63
      %s162 = smul.addr %s161, 4
      %s163 = scalar_lea.vmem %s3, %s162
      %s164 = smul.u32 32, %s14
      %p165 = scmp.lt.s32.totalorder %s164, 63
      %s166 = scalar_select %p165, %s164, 63
      %s167 = smul.addr %s166, 8
      %s168 = smul.addr %s167, 4
      %s169 = scalar_lea.vmem %s0, %s168
      %s170 = smul.u32 32, %s14
      %s171 = smul.u32 32, %s14
      %p172 = scmp.lt.s32.totalorder %s171, 63
      %s173 = scalar_select %p172, %s171, 63
      %s174 = smul.addr %s173, 4
      %s175 = scalar_lea.vmem %s3, %s174
      %s176 = smul.u32 32, %s14
      %v178 = vld [vmem:[%s169] sm:$0xff]
      %v179 = vld [vmem:[%s169 + $0x8] sm:$0xff]
      %v180 = vld [vmem:[%s169 + $0x10] sm:$0xff]
      %v181 = vld [vmem:[%s169 + $0x18] sm:$0xff]
      %v182 = vld [vmem:[%s169 + $0x20] sm:$0xff]
      %v183 = vld [vmem:[%s169 + $0x28] sm:$0xff]
      %v184 = vld [vmem:[%s169 + $0x30] sm:$0xff]
      %v185 = vld [vmem:[%s169 + $0x38] sm:$0xff]
      %v186 = vld [vmem:[%s169 + $0x40] sm:$0xff]
      %v187 = vld [vmem:[%s169 + $0x48] sm:$0xff]
      %v188 = vld [vmem:[%s169 + $0x50] sm:$0xff]
      %v189 = vld [vmem:[%s169 + $0x58] sm:$0xff]
      %v190 = vld [vmem:[%s169 + $0x60] sm:$0xff]
      %v191 = vld [vmem:[%s169 + $0x68] sm:$0xff]
      %v192 = vld [vmem:[%s169 + $0x70] sm:$0xff]
      %v193 = vld [vmem:[%s169 + $0x78] sm:$0xff]
      %v194 = vld [vmem:[%s169 + $0x80] sm:$0xff]
      %v195 = vld [vmem:[%s169 + $0x88] sm:$0xff]
      %v196 = vld [vmem:[%s169 + $0x90] sm:$0xff]
      %v197 = vld [vmem:[%s169 + $0x98] sm:$0xff]
      %v198 = vld [vmem:[%s169 + $0xa0] sm:$0xff]
      %v199 = vld [vmem:[%s169 + $0xa8] sm:$0xff]
      %v200 = vld [vmem:[%s169 + $0xb0] sm:$0xff]
      %v201 = vld [vmem:[%s169 + $0xb8] sm:$0xff]
      %v202 = vld [vmem:[%s169 + $0xc0] sm:$0xff]
      %v203 = vld [vmem:[%s169 + $0xc8] sm:$0xff]
      %v204 = vld [vmem:[%s169 + $0xd0] sm:$0xff]
      %v205 = vld [vmem:[%s169 + $0xd8] sm:$0xff]
      %v206 = vld [vmem:[%s169 + $0xe0] sm:$0xff]
      %v207 = vld [vmem:[%s169 + $0xe8] sm:$0xff]
      %v208 = vld [vmem:[%s169 + $0xf0] sm:$0xff]
      %v209 = vld [vmem:[%s169 + $0xf8] sm:$0xff]
      %v210 = vld [vmem:[%s169 + $0x100] sm:$0xff]
      %v211 = vld [vmem:[%s169 + $0x108] sm:$0xff]
      %v212 = vld [vmem:[%s169 + $0x110] sm:$0xff]
      %v213 = vld [vmem:[%s169 + $0x118] sm:$0xff]
      %v214 = vld [vmem:[%s169 + $0x120] sm:$0xff]
      %v215 = vld [vmem:[%s169 + $0x128] sm:$0xff]
      %v216 = vld [vmem:[%s169 + $0x130] sm:$0xff]
      %v217 = vld [vmem:[%s169 + $0x138] sm:$0xff]
      %v218 = vld [vmem:[%s169 + $0x140] sm:$0xff]
      %v219 = vld [vmem:[%s169 + $0x148] sm:$0xff]
      %v220 = vld [vmem:[%s169 + $0x150] sm:$0xff]
      %v221 = vld [vmem:[%s169 + $0x158] sm:$0xff]
      %v222 = vld [vmem:[%s169 + $0x160] sm:$0xff]
      %v223 = vld [vmem:[%s169 + $0x168] sm:$0xff]
      %v224 = vld [vmem:[%s169 + $0x170] sm:$0xff]
      %v225 = vld [vmem:[%s169 + $0x178] sm:$0xff]
      %v226 = vld [vmem:[%s169 + $0x180] sm:$0xff]
      %v227 = vld [vmem:[%s169 + $0x188] sm:$0xff]
      %v228 = vld [vmem:[%s169 + $0x190] sm:$0xff]
      %v229 = vld [vmem:[%s169 + $0x198] sm:$0xff]
      %v230 = vld [vmem:[%s169 + $0x1a0] sm:$0xff]
      %v231 = vld [vmem:[%s169 + $0x1a8] sm:$0xff]
      %v232 = vld [vmem:[%s169 + $0x1b0] sm:$0xff]
      %v233 = vld [vmem:[%s169 + $0x1b8] sm:$0xff]
      %v234 = vld [vmem:[%s169 + $0x1c0] sm:$0xff]
      %v235 = vld [vmem:[%s169 + $0x1c8] sm:$0xff]
      %v236 = vld [vmem:[%s169 + $0x1d0] sm:$0xff]
      %v237 = vld [vmem:[%s169 + $0x1d8] sm:$0xff]
      %v238 = vld [vmem:[%s169 + $0x1e0] sm:$0xff]
      %v239 = vld [vmem:[%s169 + $0x1e8] sm:$0xff]
      %v240 = vld [vmem:[%s169 + $0x1f0] sm:$0xff]
      %v241 = vld [vmem:[%s169 + $0x1f8] sm:$0xff]
      %v242 = vld [vmem:[%s169 + $0x200] sm:$0xff]
      %v243 = vld [vmem:[%s169 + $0x208] sm:$0xff]
      %v244 = vld [vmem:[%s169 + $0x210] sm:$0xff]
      %v245 = vld [vmem:[%s169 + $0x218] sm:$0xff]
      %v246 = vld [vmem:[%s169 + $0x220] sm:$0xff]
      %v247 = vld [vmem:[%s169 + $0x228] sm:$0xff]
      %v248 = vld [vmem:[%s169 + $0x230] sm:$0xff]
      %v249 = vld [vmem:[%s169 + $0x238] sm:$0xff]
      %v250 = vld [vmem:[%s169 + $0x240] sm:$0xff]
      %v251 = vld [vmem:[%s169 + $0x248] sm:$0xff]
      %v252 = vld [vmem:[%s169 + $0x250] sm:$0xff]
      %v253 = vld [vmem:[%s169 + $0x258] sm:$0xff]
      %v254 = vld [vmem:[%s169 + $0x260] sm:$0xff]
      %v255 = vld [vmem:[%s169 + $0x268] sm:$0xff]
      %v256 = vld [vmem:[%s169 + $0x270] sm:$0xff]
      %v257 = vld [vmem:[%s169 + $0x278] sm:$0xff]
      %v258 = vld [vmem:[%s169 + $0x280] sm:$0xff]
      %v259 = vld [vmem:[%s169 + $0x288] sm:$0xff]
      %v260 = vld [vmem:[%s169 + $0x290] sm:$0xff]
      %v261 = vld [vmem:[%s169 + $0x298] sm:$0xff]
      %v262 = vld [vmem:[%s169 + $0x2a0] sm:$0xff]
      %v263 = vld [vmem:[%s169 + $0x2a8] sm:$0xff]
      %v264 = vld [vmem:[%s169 + $0x2b0] sm:$0xff]
      %v265 = vld [vmem:[%s169 + $0x2b8] sm:$0xff]
      %v266 = vld [vmem:[%s169 + $0x2c0] sm:$0xff]
      %v267 = vld [vmem:[%s169 + $0x2c8] sm:$0xff]
      %v268 = vld [vmem:[%s169 + $0x2d0] sm:$0xff]
      %v269 = vld [vmem:[%s169 + $0x2d8] sm:$0xff]
      %v270 = vld [vmem:[%s169 + $0x2e0] sm:$0xff]
      %v271 = vld [vmem:[%s169 + $0x2e8] sm:$0xff]
      %v272 = vld [vmem:[%s169 + $0x2f0] sm:$0xff]
      %v273 = vld [vmem:[%s169 + $0x2f8] sm:$0xff]
      %v274 = vld [vmem:[%s169 + $0x300] sm:$0xff]
      %v275 = vld [vmem:[%s169 + $0x308] sm:$0xff]
      %v276 = vld [vmem:[%s169 + $0x310] sm:$0xff]
      %v277 = vld [vmem:[%s169 + $0x318] sm:$0xff]
      %v278 = vld [vmem:[%s169 + $0x320] sm:$0xff]
      %v279 = vld [vmem:[%s169 + $0x328] sm:$0xff]
      %v280 = vld [vmem:[%s169 + $0x330] sm:$0xff]
      %v281 = vld [vmem:[%s169 + $0x338] sm:$0xff]
      %v282 = vld [vmem:[%s169 + $0x340] sm:$0xff]
      %v283 = vld [vmem:[%s169 + $0x348] sm:$0xff]
      %v284 = vld [vmem:[%s169 + $0x350] sm:$0xff]
      %v285 = vld [vmem:[%s169 + $0x358] sm:$0xff]
      %v286 = vld [vmem:[%s169 + $0x360] sm:$0xff]
      %v287 = vld [vmem:[%s169 + $0x368] sm:$0xff]
      %v288 = vld [vmem:[%s169 + $0x370] sm:$0xff]
      %v289 = vld [vmem:[%s169 + $0x378] sm:$0xff]
      %v290 = vld [vmem:[%s169 + $0x380] sm:$0xff]
      %v291 = vld [vmem:[%s169 + $0x388] sm:$0xff]
      %v292 = vld [vmem:[%s169 + $0x390] sm:$0xff]
      %v293 = vld [vmem:[%s169 + $0x398] sm:$0xff]
      %v294 = vld [vmem:[%s169 + $0x3a0] sm:$0xff]
      %v295 = vld [vmem:[%s169 + $0x3a8] sm:$0xff]
      %v296 = vld [vmem:[%s169 + $0x3b0] sm:$0xff]
      %v297 = vld [vmem:[%s169 + $0x3b8] sm:$0xff]
      %v298 = vld [vmem:[%s169 + $0x3c0] sm:$0xff]
      %v299 = vld [vmem:[%s169 + $0x3c8] sm:$0xff]
      %v300 = vld [vmem:[%s169 + $0x3d0] sm:$0xff]
      %v301 = vld [vmem:[%s169 + $0x3d8] sm:$0xff]
      %v302 = vld [vmem:[%s169 + $0x3e0] sm:$0xff]
      %v303 = vld [vmem:[%s169 + $0x3e8] sm:$0xff]
      %v304 = vld [vmem:[%s169 + $0x3f0] sm:$0xff]
      %v305 = vld [vmem:[%s169 + $0x3f8] sm:$0xff]
      %v306 = vld [vmem:[%s1] sm:$0xf]
      %v307 = vld [vmem:[%s1 + $0x4] sm:$0xf]
      %v308 = vld [vmem:[%s1 + $0x8] sm:$0xf]
      %v309 = vld [vmem:[%s1 + $0xc] sm:$0xf]
      %v310 = vld [vmem:[%s1 + $0x10] sm:$0xf]
      %v311 = vld [vmem:[%s1 + $0x14] sm:$0xf]
      %v312 = vld [vmem:[%s1 + $0x18] sm:$0xf]
      %v313 = vld [vmem:[%s1 + $0x1c] sm:$0xf]
      %v314 = vld [vmem:[%s1 + $0x20] sm:$0xf]
      %v315 = vld [vmem:[%s1 + $0x24] sm:$0xf]
      %v316 = vld [vmem:[%s1 + $0x28] sm:$0xf]
      %v317 = vld [vmem:[%s1 + $0x2c] sm:$0xf]
      %v318 = vld [vmem:[%s1 + $0x30] sm:$0xf]
      %v319 = vld [vmem:[%s1 + $0x34] sm:$0xf]
      %v320 = vld [vmem:[%s1 + $0x38] sm:$0xf]
      %v321 = vld [vmem:[%s1 + $0x3c] sm:$0xf]
      %v322 = vld [vmem:[%s1 + $0x40] sm:$0xf]
      %v323 = vld [vmem:[%s1 + $0x44] sm:$0xf]
      %v324 = vld [vmem:[%s1 + $0x48] sm:$0xf]
      %v325 = vld [vmem:[%s1 + $0x4c] sm:$0xf]
      %v326 = vld [vmem:[%s1 + $0x50] sm:$0xf]
      %v327 = vld [vmem:[%s1 + $0x54] sm:$0xf]
      %v328 = vld [vmem:[%s1 + $0x58] sm:$0xf]
      %v329 = vld [vmem:[%s1 + $0x5c] sm:$0xf]
      %v330 = vld [vmem:[%s1 + $0x60] sm:$0xf]
      %v331 = vld [vmem:[%s1 + $0x64] sm:$0xf]
      %v332 = vld [vmem:[%s1 + $0x68] sm:$0xf]
      %v333 = vld [vmem:[%s1 + $0x6c] sm:$0xf]
      %v334 = vld [vmem:[%s1 + $0x70] sm:$0xf]
      %v335 = vld [vmem:[%s1 + $0x74] sm:$0xf]
      %v336 = vld [vmem:[%s1 + $0x78] sm:$0xf]
      %v337 = vld [vmem:[%s1 + $0x7c] sm:$0xf]
      %v338 = vld [vmem:[%s1 + $0x80] sm:$0xf]
      %v339 = vld [vmem:[%s1 + $0x84] sm:$0xf]
      %v340 = vld [vmem:[%s1 + $0x88] sm:$0xf]
      %v341 = vld [vmem:[%s1 + $0x8c] sm:$0xf]
      %v342 = vld [vmem:[%s1 + $0x90] sm:$0xf]
      %v343 = vld [vmem:[%s1 + $0x94] sm:$0xf]
      %v344 = vld [vmem:[%s1 + $0x98] sm:$0xf]
      %v345 = vld [vmem:[%s1 + $0x9c] sm:$0xf]
      %v346 = vld [vmem:[%s1 + $0xa0] sm:$0xf]
      %v347 = vld [vmem:[%s1 + $0xa4] sm:$0xf]
      %v348 = vld [vmem:[%s1 + $0xa8] sm:$0xf]
      %v349 = vld [vmem:[%s1 + $0xac] sm:$0xf]
      %v350 = vld [vmem:[%s1 + $0xb0] sm:$0xf]
      %v351 = vld [vmem:[%s1 + $0xb4] sm:$0xf]
      %v352 = vld [vmem:[%s1 + $0xb8] sm:$0xf]
      %v353 = vld [vmem:[%s1 + $0xbc] sm:$0xf]
      %v354 = vld [vmem:[%s1 + $0xc0] sm:$0xf]
      %v355 = vld [vmem:[%s1 + $0xc4] sm:$0xf]
      %v356 = vld [vmem:[%s1 + $0xc8] sm:$0xf]
      %v357 = vld [vmem:[%s1 + $0xcc] sm:$0xf]
      %v358 = vld [vmem:[%s1 + $0xd0] sm:$0xf]
      %v359 = vld [vmem:[%s1 + $0xd4] sm:$0xf]
      %v360 = vld [vmem:[%s1 + $0xd8] sm:$0xf]
      %v361 = vld [vmem:[%s1 + $0xdc] sm:$0xf]
      %v362 = vld [vmem:[%s1 + $0xe0] sm:$0xf]
      %v363 = vld [vmem:[%s1 + $0xe4] sm:$0xf]
      %v364 = vld [vmem:[%s1 + $0xe8] sm:$0xf]
      %v365 = vld [vmem:[%s1 + $0xec] sm:$0xf]
      %v366 = vld [vmem:[%s1 + $0xf0] sm:$0xf]
      %v367 = vld [vmem:[%s1 + $0xf4] sm:$0xf]
      %v368 = vld [vmem:[%s1 + $0xf8] sm:$0xf]
      %v369 = vld [vmem:[%s1 + $0xfc] sm:$0xf]
      %v370 = vld [vmem:[%s1 + $0x100] sm:$0xf]
      %v371 = vld [vmem:[%s1 + $0x104] sm:$0xf]
      %v372 = vld [vmem:[%s1 + $0x108] sm:$0xf]
      %v373 = vld [vmem:[%s1 + $0x10c] sm:$0xf]
      %v374 = vld [vmem:[%s1 + $0x110] sm:$0xf]
      %v375 = vld [vmem:[%s1 + $0x114] sm:$0xf]
      %v376 = vld [vmem:[%s1 + $0x118] sm:$0xf]
      %v377 = vld [vmem:[%s1 + $0x11c] sm:$0xf]
      %v378 = vld [vmem:[%s1 + $0x120] sm:$0xf]
      %v379 = vld [vmem:[%s1 + $0x124] sm:$0xf]
      %v380 = vld [vmem:[%s1 + $0x128] sm:$0xf]
      %v381 = vld [vmem:[%s1 + $0x12c] sm:$0xf]
      %v382 = vld [vmem:[%s1 + $0x130] sm:$0xf]
      %v383 = vld [vmem:[%s1 + $0x134] sm:$0xf]
      %v384 = vld [vmem:[%s1 + $0x138] sm:$0xf]
      %v385 = vld [vmem:[%s1 + $0x13c] sm:$0xf]
      %v386 = vld [vmem:[%s1 + $0x140] sm:$0xf]
      %v387 = vld [vmem:[%s1 + $0x144] sm:$0xf]
      %v388 = vld [vmem:[%s1 + $0x148] sm:$0xf]
      %v389 = vld [vmem:[%s1 + $0x14c] sm:$0xf]
      %v390 = vld [vmem:[%s1 + $0x150] sm:$0xf]
      %v391 = vld [vmem:[%s1 + $0x154] sm:$0xf]
      %v392 = vld [vmem:[%s1 + $0x158] sm:$0xf]
      %v393 = vld [vmem:[%s1 + $0x15c] sm:$0xf]
      %v394 = vld [vmem:[%s1 + $0x160] sm:$0xf]
      %v395 = vld [vmem:[%s1 + $0x164] sm:$0xf]
      %v396 = vld [vmem:[%s1 + $0x168] sm:$0xf]
      %v397 = vld [vmem:[%s1 + $0x16c] sm:$0xf]
      %v398 = vld [vmem:[%s1 + $0x170] sm:$0xf]
      %v399 = vld [vmem:[%s1 + $0x174] sm:$0xf]
      %v400 = vld [vmem:[%s1 + $0x178] sm:$0xf]
      %v401 = vld [vmem:[%s1 + $0x17c] sm:$0xf]
      %v402 = vld [vmem:[%s1 + $0x180] sm:$0xf]
      %v403 = vld [vmem:[%s1 + $0x184] sm:$0xf]
      %v404 = vld [vmem:[%s1 + $0x188] sm:$0xf]
      %v405 = vld [vmem:[%s1 + $0x18c] sm:$0xf]
      %v406 = vld [vmem:[%s1 + $0x190] sm:$0xf]
      %v407 = vld [vmem:[%s1 + $0x194] sm:$0xf]
      %v408 = vld [vmem:[%s1 + $0x198] sm:$0xf]
      %v409 = vld [vmem:[%s1 + $0x19c] sm:$0xf]
      %v410 = vld [vmem:[%s1 + $0x1a0] sm:$0xf]
      %v411 = vld [vmem:[%s1 + $0x1a4] sm:$0xf]
      %v412 = vld [vmem:[%s1 + $0x1a8] sm:$0xf]
      %v413 = vld [vmem:[%s1 + $0x1ac] sm:$0xf]
      %v414 = vld [vmem:[%s1 + $0x1b0] sm:$0xf]
      %v415 = vld [vmem:[%s1 + $0x1b4] sm:$0xf]
      %v416 = vld [vmem:[%s1 + $0x1b8] sm:$0xf]
      %v417 = vld [vmem:[%s1 + $0x1bc] sm:$0xf]
      %v418 = vld [vmem:[%s1 + $0x1c0] sm:$0xf]
      %v419 = vld [vmem:[%s1 + $0x1c4] sm:$0xf]
      %v420 = vld [vmem:[%s1 + $0x1c8] sm:$0xf]
      %v421 = vld [vmem:[%s1 + $0x1cc] sm:$0xf]
      %v422 = vld [vmem:[%s1 + $0x1d0] sm:$0xf]
      %v423 = vld [vmem:[%s1 + $0x1d4] sm:$0xf]
      %v424 = vld [vmem:[%s1 + $0x1d8] sm:$0xf]
      %v425 = vld [vmem:[%s1 + $0x1dc] sm:$0xf]
      %v426 = vld [vmem:[%s1 + $0x1e0] sm:$0xf]
      %v427 = vld [vmem:[%s1 + $0x1e4] sm:$0xf]
      %v428 = vld [vmem:[%s1 + $0x1e8] sm:$0xf]
      %v429 = vld [vmem:[%s1 + $0x1ec] sm:$0xf]
      %v430 = vld [vmem:[%s1 + $0x1f0] sm:$0xf]
      %v431 = vld [vmem:[%s1 + $0x1f4] sm:$0xf]
      %v432 = vld [vmem:[%s1 + $0x1f8] sm:$0xf]
      %v433 = vld [vmem:[%s1 + $0x1fc] sm:$0xf]
      %v434 = vld [vmem:[%s2] sm:$0x1]
      %v436 = vlaneseq
      %v437 = vshrl.u32 %v436, 7
      %v438 = vsub.s32 0, %v437
      %v439 = vrot.slane %v434, %v438
      %v569 = vunpack.c.l.b16 %v178
      %v570 = vunpack.c.h.b16 %v178
      %v571 = vunpack.c.l.b16 %v179
      %v572 = vunpack.c.h.b16 %v179
      %v573 = vunpack.c.l.b16 %v180
      %v574 = vunpack.c.h.b16 %v180
      %v575 = vunpack.c.l.b16 %v181
      %v576 = vunpack.c.h.b16 %v181
      %v577 = vunpack.c.l.b16 %v182
      %v578 = vunpack.c.h.b16 %v182
      %v579 = vunpack.c.l.b16 %v183
      %v580 = vunpack.c.h.b16 %v183
      %v581 = vunpack.c.l.b16 %v184
      %v582 = vunpack.c.h.b16 %v184
      %v583 = vunpack.c.l.b16 %v185
      %v584 = vunpack.c.h.b16 %v185
      %v585 = vunpack.c.l.b16 %v186
      %v586 = vunpack.c.h.b16 %v186
      %v587 = vunpack.c.l.b16 %v187
      %v588 = vunpack.c.h.b16 %v187
      %v589 = vunpack.c.l.b16 %v188
      %v590 = vunpack.c.h.b16 %v188
      %v591 = vunpack.c.l.b16 %v189
      %v592 = vunpack.c.h.b16 %v189
      %v593 = vunpack.c.l.b16 %v190
      %v594 = vunpack.c.h.b16 %v190
      %v595 = vunpack.c.l.b16 %v191
      %v596 = vunpack.c.h.b16 %v191
      %v597 = vunpack.c.l.b16 %v192
      %v598 = vunpack.c.h.b16 %v192
      %v599 = vunpack.c.l.b16 %v193
      %v600 = vunpack.c.h.b16 %v193
      %v601 = vunpack.c.l.b16 %v194
      %v602 = vunpack.c.h.b16 %v194
      %v603 = vunpack.c.l.b16 %v195
      %v604 = vunpack.c.h.b16 %v195
      %v605 = vunpack.c.l.b16 %v196
      %v606 = vunpack.c.h.b16 %v196
      %v607 = vunpack.c.l.b16 %v197
      %v608 = vunpack.c.h.b16 %v197
      %v609 = vunpack.c.l.b16 %v198
      %v610 = vunpack.c.h.b16 %v198
      %v611 = vunpack.c.l.b16 %v199
      %v612 = vunpack.c.h.b16 %v199
      %v613 = vunpack.c.l.b16 %v200
      %v614 = vunpack.c.h.b16 %v200
      %v615 = vunpack.c.l.b16 %v201
      %v616 = vunpack.c.h.b16 %v201
      %v617 = vunpack.c.l.b16 %v202
      %v618 = vunpack.c.h.b16 %v202
      %v619 = vunpack.c.l.b16 %v203
      %v620 = vunpack.c.h.b16 %v203
      %v621 = vunpack.c.l.b16 %v204
      %v622 = vunpack.c.h.b16 %v204
      %v623 = vunpack.c.l.b16 %v205
      %v624 = vunpack.c.h.b16 %v205
      %v625 = vunpack.c.l.b16 %v206
      %v626 = vunpack.c.h.b16 %v206
      %v627 = vunpack.c.l.b16 %v207
      %v628 = vunpack.c.h.b16 %v207
      %v629 = vunpack.c.l.b16 %v208
      %v630 = vunpack.c.h.b16 %v208
      %v631 = vunpack.c.l.b16 %v209
      %v632 = vunpack.c.h.b16 %v209
      %v633 = vunpack.c.l.b16 %v210
      %v634 = vunpack.c.h.b16 %v210
      %v635 = vunpack.c.l.b16 %v211
      %v636 = vunpack.c.h.b16 %v211
      %v637 = vunpack.c.l.b16 %v212
      %v638 = vunpack.c.h.b16 %v212
      %v639 = vunpack.c.l.b16 %v213
      %v640 = vunpack.c.h.b16 %v213
      %v641 = vunpack.c.l.b16 %v214
      %v642 = vunpack.c.h.b16 %v214
      %v643 = vunpack.c.l.b16 %v215
      %v644 = vunpack.c.h.b16 %v215
      %v645 = vunpack.c.l.b16 %v216
      %v646 = vunpack.c.h.b16 %v216
      %v647 = vunpack.c.l.b16 %v217
      %v648 = vunpack.c.h.b16 %v217
      %v649 = vunpack.c.l.b16 %v218
      %v650 = vunpack.c.h.b16 %v218
      %v651 = vunpack.c.l.b16 %v219
      %v652 = vunpack.c.h.b16 %v219
      %v653 = vunpack.c.l.b16 %v220
      %v654 = vunpack.c.h.b16 %v220
      %v655 = vunpack.c.l.b16 %v221
      %v656 = vunpack.c.h.b16 %v221
      %v657 = vunpack.c.l.b16 %v222
      %v658 = vunpack.c.h.b16 %v222
      %v659 = vunpack.c.l.b16 %v223
      %v660 = vunpack.c.h.b16 %v223
      %v661 = vunpack.c.l.b16 %v224
      %v662 = vunpack.c.h.b16 %v224
      %v663 = vunpack.c.l.b16 %v225
      %v664 = vunpack.c.h.b16 %v225
      %v665 = vunpack.c.l.b16 %v226
      %v666 = vunpack.c.h.b16 %v226
      %v667 = vunpack.c.l.b16 %v227
      %v668 = vunpack.c.h.b16 %v227
      %v669 = vunpack.c.l.b16 %v228
      %v670 = vunpack.c.h.b16 %v228
      %v671 = vunpack.c.l.b16 %v229
      %v672 = vunpack.c.h.b16 %v229
      %v673 = vunpack.c.l.b16 %v230
      %v674 = vunpack.c.h.b16 %v230
      %v675 = vunpack.c.l.b16 %v231
      %v676 = vunpack.c.h.b16 %v231
      %v677 = vunpack.c.l.b16 %v232
      %v678 = vunpack.c.h.b16 %v232
      %v679 = vunpack.c.l.b16 %v233
      %v680 = vunpack.c.h.b16 %v233
      %v681 = vunpack.c.l.b16 %v234
      %v682 = vunpack.c.h.b16 %v234
      %v683 = vunpack.c.l.b16 %v235
      %v684 = vunpack.c.h.b16 %v235
      %v685 = vunpack.c.l.b16 %v236
      %v686 = vunpack.c.h.b16 %v236
      %v687 = vunpack.c.l.b16 %v237
      %v688 = vunpack.c.h.b16 %v237
      %v689 = vunpack.c.l.b16 %v238
      %v690 = vunpack.c.h.b16 %v238
      %v691 = vunpack.c.l.b16 %v239
      %v692 = vunpack.c.h.b16 %v239
      %v693 = vunpack.c.l.b16 %v240
      %v694 = vunpack.c.h.b16 %v240
      %v695 = vunpack.c.l.b16 %v241
      %v696 = vunpack.c.h.b16 %v241
      %v697 = vunpack.c.l.b16 %v242
      %v698 = vunpack.c.h.b16 %v242
      %v699 = vunpack.c.l.b16 %v243
      %v700 = vunpack.c.h.b16 %v243
      %v701 = vunpack.c.l.b16 %v244
      %v702 = vunpack.c.h.b16 %v244
      %v703 = vunpack.c.l.b16 %v245
      %v704 = vunpack.c.h.b16 %v245
      %v705 = vunpack.c.l.b16 %v246
      %v706 = vunpack.c.h.b16 %v246
      %v707 = vunpack.c.l.b16 %v247
      %v708 = vunpack.c.h.b16 %v247
      %v709 = vunpack.c.l.b16 %v248
      %v710 = vunpack.c.h.b16 %v248
      %v711 = vunpack.c.l.b16 %v249
      %v712 = vunpack.c.h.b16 %v249
      %v713 = vunpack.c.l.b16 %v250
      %v714 = vunpack.c.h.b16 %v250
      %v715 = vunpack.c.l.b16 %v251
      %v716 = vunpack.c.h.b16 %v251
      %v717 = vunpack.c.l.b16 %v252
      %v718 = vunpack.c.h.b16 %v252
      %v719 = vunpack.c.l.b16 %v253
      %v720 = vunpack.c.h.b16 %v253
      %v721 = vunpack.c.l.b16 %v254
      %v722 = vunpack.c.h.b16 %v254
      %v723 = vunpack.c.l.b16 %v255
      %v724 = vunpack.c.h.b16 %v255
      %v725 = vunpack.c.l.b16 %v256
      %v726 = vunpack.c.h.b16 %v256
      %v727 = vunpack.c.l.b16 %v257
      %v728 = vunpack.c.h.b16 %v257
      %v729 = vunpack.c.l.b16 %v258
      %v730 = vunpack.c.h.b16 %v258
      %v731 = vunpack.c.l.b16 %v259
      %v732 = vunpack.c.h.b16 %v259
      %v733 = vunpack.c.l.b16 %v260
      %v734 = vunpack.c.h.b16 %v260
      %v735 = vunpack.c.l.b16 %v261
      %v736 = vunpack.c.h.b16 %v261
      %v737 = vunpack.c.l.b16 %v262
      %v738 = vunpack.c.h.b16 %v262
      %v739 = vunpack.c.l.b16 %v263
      %v740 = vunpack.c.h.b16 %v263
      %v741 = vunpack.c.l.b16 %v264
      %v742 = vunpack.c.h.b16 %v264
      %v743 = vunpack.c.l.b16 %v265
      %v744 = vunpack.c.h.b16 %v265
      %v745 = vunpack.c.l.b16 %v266
      %v746 = vunpack.c.h.b16 %v266
      %v747 = vunpack.c.l.b16 %v267
      %v748 = vunpack.c.h.b16 %v267
      %v749 = vunpack.c.l.b16 %v268
      %v750 = vunpack.c.h.b16 %v268
      %v751 = vunpack.c.l.b16 %v269
      %v752 = vunpack.c.h.b16 %v269
      %v753 = vunpack.c.l.b16 %v270
      %v754 = vunpack.c.h.b16 %v270
      %v755 = vunpack.c.l.b16 %v271
      %v756 = vunpack.c.h.b16 %v271
      %v757 = vunpack.c.l.b16 %v272
      %v758 = vunpack.c.h.b16 %v272
      %v759 = vunpack.c.l.b16 %v273
      %v760 = vunpack.c.h.b16 %v273
      %v761 = vunpack.c.l.b16 %v274
      %v762 = vunpack.c.h.b16 %v274
      %v763 = vunpack.c.l.b16 %v275
      %v764 = vunpack.c.h.b16 %v275
      %v765 = vunpack.c.l.b16 %v276
      %v766 = vunpack.c.h.b16 %v276
      %v767 = vunpack.c.l.b16 %v277
      %v768 = vunpack.c.h.b16 %v277
      %v769 = vunpack.c.l.b16 %v278
      %v770 = vunpack.c.h.b16 %v278
      %v771 = vunpack.c.l.b16 %v279
      %v772 = vunpack.c.h.b16 %v279
      %v773 = vunpack.c.l.b16 %v280
      %v774 = vunpack.c.h.b16 %v280
      %v775 = vunpack.c.l.b16 %v281
      %v776 = vunpack.c.h.b16 %v281
      %v777 = vunpack.c.l.b16 %v282
      %v778 = vunpack.c.h.b16 %v282
      %v779 = vunpack.c.l.b16 %v283
      %v780 = vunpack.c.h.b16 %v283
      %v781 = vunpack.c.l.b16 %v284
      %v782 = vunpack.c.h.b16 %v284
      %v783 = vunpack.c.l.b16 %v285
      %v784 = vunpack.c.h.b16 %v285
      %v785 = vunpack.c.l.b16 %v286
      %v786 = vunpack.c.h.b16 %v286
      %v787 = vunpack.c.l.b16 %v287
      %v788 = vunpack.c.h.b16 %v287
      %v789 = vunpack.c.l.b16 %v288
      %v790 = vunpack.c.h.b16 %v288
      %v791 = vunpack.c.l.b16 %v289
      %v792 = vunpack.c.h.b16 %v289
      %v793 = vunpack.c.l.b16 %v290
      %v794 = vunpack.c.h.b16 %v290
      %v795 = vunpack.c.l.b16 %v291
      %v796 = vunpack.c.h.b16 %v291
      %v797 = vunpack.c.l.b16 %v292
      %v798 = vunpack.c.h.b16 %v292
      %v799 = vunpack.c.l.b16 %v293
      %v800 = vunpack.c.h.b16 %v293
      %v801 = vunpack.c.l.b16 %v294
      %v802 = vunpack.c.h.b16 %v294
      %v803 = vunpack.c.l.b16 %v295
      %v804 = vunpack.c.h.b16 %v295
      %v805 = vunpack.c.l.b16 %v296
      %v806 = vunpack.c.h.b16 %v296
      %v807 = vunpack.c.l.b16 %v297
      %v808 = vunpack.c.h.b16 %v297
      %v809 = vunpack.c.l.b16 %v298
      %v810 = vunpack.c.h.b16 %v298
      %v811 = vunpack.c.l.b16 %v299
      %v812 = vunpack.c.h.b16 %v299
      %v813 = vunpack.c.l.b16 %v300
      %v814 = vunpack.c.h.b16 %v300
      %v815 = vunpack.c.l.b16 %v301
      %v816 = vunpack.c.h.b16 %v301
      %v817 = vunpack.c.l.b16 %v302
      %v818 = vunpack.c.h.b16 %v302
      %v819 = vunpack.c.l.b16 %v303
      %v820 = vunpack.c.h.b16 %v303
      %v821 = vunpack.c.l.b16 %v304
      %v822 = vunpack.c.h.b16 %v304
      %v823 = vunpack.c.l.b16 %v305
      %v824 = vunpack.c.h.b16 %v305
      %v825 = vpack.c.b16 %v577, %v569
      %v826 = vpack.c.b16 %v578, %v570
      %v827 = vpack.c.b16 %v579, %v571
      %v828 = vpack.c.b16 %v580, %v572
      %v829 = vpack.c.b16 %v581, %v573
      %v830 = vpack.c.b16 %v582, %v574
      %v831 = vpack.c.b16 %v583, %v575
      %v832 = vpack.c.b16 %v584, %v576
      %v833 = vpack.c.b16 %v593, %v585
      %v834 = vpack.c.b16 %v594, %v586
      %v835 = vpack.c.b16 %v595, %v587
      %v836 = vpack.c.b16 %v596, %v588
      %v837 = vpack.c.b16 %v597, %v589
      %v838 = vpack.c.b16 %v598, %v590
      %v839 = vpack.c.b16 %v599, %v591
      %v840 = vpack.c.b16 %v600, %v592
      %v841 = vpack.c.b16 %v609, %v601
      %v842 = vpack.c.b16 %v610, %v602
      %v843 = vpack.c.b16 %v611, %v603
      %v844 = vpack.c.b16 %v612, %v604
      %v845 = vpack.c.b16 %v613, %v605
      %v846 = vpack.c.b16 %v614, %v606
      %v847 = vpack.c.b16 %v615, %v607
      %v848 = vpack.c.b16 %v616, %v608
      %v849 = vpack.c.b16 %v625, %v617
      %v850 = vpack.c.b16 %v626, %v618
      %v851 = vpack.c.b16 %v627, %v619
      %v852 = vpack.c.b16 %v628, %v620
      %v853 = vpack.c.b16 %v629, %v621
      %v854 = vpack.c.b16 %v630, %v622
      %v855 = vpack.c.b16 %v631, %v623
      %v856 = vpack.c.b16 %v632, %v624
      %v857 = vpack.c.b16 %v641, %v633
      %v858 = vpack.c.b16 %v642, %v634
      %v859 = vpack.c.b16 %v643, %v635
      %v860 = vpack.c.b16 %v644, %v636
      %v861 = vpack.c.b16 %v645, %v637
      %v862 = vpack.c.b16 %v646, %v638
      %v863 = vpack.c.b16 %v647, %v639
      %v864 = vpack.c.b16 %v648, %v640
      %v865 = vpack.c.b16 %v657, %v649
      %v866 = vpack.c.b16 %v658, %v650
      %v867 = vpack.c.b16 %v659, %v651
      %v868 = vpack.c.b16 %v660, %v652
      %v869 = vpack.c.b16 %v661, %v653
      %v870 = vpack.c.b16 %v662, %v654
      %v871 = vpack.c.b16 %v663, %v655
      %v872 = vpack.c.b16 %v664, %v656
      %v873 = vpack.c.b16 %v673, %v665
      %v874 = vpack.c.b16 %v674, %v666
      %v875 = vpack.c.b16 %v675, %v667
      %v876 = vpack.c.b16 %v676, %v668
      %v877 = vpack.c.b16 %v677, %v669
      %v878 = vpack.c.b16 %v678, %v670
      %v879 = vpack.c.b16 %v679, %v671
      %v880 = vpack.c.b16 %v680, %v672
      %v881 = vpack.c.b16 %v689, %v681
      %v882 = vpack.c.b16 %v690, %v682
      %v883 = vpack.c.b16 %v691, %v683
      %v884 = vpack.c.b16 %v692, %v684
      %v885 = vpack.c.b16 %v693, %v685
      %v886 = vpack.c.b16 %v694, %v686
      %v887 = vpack.c.b16 %v695, %v687
      %v888 = vpack.c.b16 %v696, %v688
      %v889 = vpack.c.b16 %v705, %v697
      %v890 = vpack.c.b16 %v706, %v698
      %v891 = vpack.c.b16 %v707, %v699
      %v892 = vpack.c.b16 %v708, %v700
      %v893 = vpack.c.b16 %v709, %v701
      %v894 = vpack.c.b16 %v710, %v702
      %v895 = vpack.c.b16 %v711, %v703
      %v896 = vpack.c.b16 %v712, %v704
      %v897 = vpack.c.b16 %v721, %v713
      %v898 = vpack.c.b16 %v722, %v714
      %v899 = vpack.c.b16 %v723, %v715
      %v900 = vpack.c.b16 %v724, %v716
      %v901 = vpack.c.b16 %v725, %v717
      %v902 = vpack.c.b16 %v726, %v718
      %v903 = vpack.c.b16 %v727, %v719
      %v904 = vpack.c.b16 %v728, %v720
      %v905 = vpack.c.b16 %v737, %v729
      %v906 = vpack.c.b16 %v738, %v730
      %v907 = vpack.c.b16 %v739, %v731
      %v908 = vpack.c.b16 %v740, %v732
      %v909 = vpack.c.b16 %v741, %v733
      %v910 = vpack.c.b16 %v742, %v734
      %v911 = vpack.c.b16 %v743, %v735
      %v912 = vpack.c.b16 %v744, %v736
      %v913 = vpack.c.b16 %v753, %v745
      %v914 = vpack.c.b16 %v754, %v746
      %v915 = vpack.c.b16 %v755, %v747
      %v916 = vpack.c.b16 %v756, %v748
      %v917 = vpack.c.b16 %v757, %v749
      %v918 = vpack.c.b16 %v758, %v750
      %v919 = vpack.c.b16 %v759, %v751
      %v920 = vpack.c.b16 %v760, %v752
      %v921 = vpack.c.b16 %v769, %v761
      %v922 = vpack.c.b16 %v770, %v762
      %v923 = vpack.c.b16 %v771, %v763
      %v924 = vpack.c.b16 %v772, %v764
      %v925 = vpack.c.b16 %v773, %v765
      %v926 = vpack.c.b16 %v774, %v766
      %v927 = vpack.c.b16 %v775, %v767
      %v928 = vpack.c.b16 %v776, %v768
      %v929 = vpack.c.b16 %v785, %v777
      %v930 = vpack.c.b16 %v786, %v778
      %v931 = vpack.c.b16 %v787, %v779
      %v932 = vpack.c.b16 %v788, %v780
      %v933 = vpack.c.b16 %v789, %v781
      %v934 = vpack.c.b16 %v790, %v782
      %v935 = vpack.c.b16 %v791, %v783
      %v936 = vpack.c.b16 %v792, %v784
      %v937 = vpack.c.b16 %v801, %v793
      %v938 = vpack.c.b16 %v802, %v794
      %v939 = vpack.c.b16 %v803, %v795
      %v940 = vpack.c.b16 %v804, %v796
      %v941 = vpack.c.b16 %v805, %v797
      %v942 = vpack.c.b16 %v806, %v798
      %v943 = vpack.c.b16 %v807, %v799
      %v944 = vpack.c.b16 %v808, %v800
      %v945 = vpack.c.b16 %v817, %v809
      %v946 = vpack.c.b16 %v818, %v810
      %v947 = vpack.c.b16 %v819, %v811
      %v948 = vpack.c.b16 %v820, %v812
      %v949 = vpack.c.b16 %v821, %v813
      %v950 = vpack.c.b16 %v822, %v814
      %v951 = vpack.c.b16 %v823, %v815
      %v952 = vpack.c.b16 %v824, %v816
      %v1209 = vunpack.c.l.b16 %v306
      %v1210 = vunpack.c.l.b16 %v307
      %v1211 = vunpack.c.l.b16 %v308
      %v1212 = vunpack.c.l.b16 %v309
      %v1213 = vunpack.c.l.b16 %v310
      %v1214 = vunpack.c.l.b16 %v311
      %v1215 = vunpack.c.l.b16 %v312
      %v1216 = vunpack.c.l.b16 %v313
      %v1217 = vunpack.c.l.b16 %v314
      %v1218 = vunpack.c.l.b16 %v315
      %v1219 = vunpack.c.l.b16 %v316
      %v1220 = vunpack.c.l.b16 %v317
      %v1221 = vunpack.c.l.b16 %v318
      %v1222 = vunpack.c.l.b16 %v319
      %v1223 = vunpack.c.l.b16 %v320
      %v1224 = vunpack.c.l.b16 %v321
      %v1225 = vunpack.c.l.b16 %v322
      %v1226 = vunpack.c.l.b16 %v323
      %v1227 = vunpack.c.l.b16 %v324
      %v1228 = vunpack.c.l.b16 %v325
      %v1229 = vunpack.c.l.b16 %v326
      %v1230 = vunpack.c.l.b16 %v327
      %v1231 = vunpack.c.l.b16 %v328
      %v1232 = vunpack.c.l.b16 %v329
      %v1233 = vunpack.c.l.b16 %v330
      %v1234 = vunpack.c.l.b16 %v331
      %v1235 = vunpack.c.l.b16 %v332
      %v1236 = vunpack.c.l.b16 %v333
      %v1237 = vunpack.c.l.b16 %v334
      %v1238 = vunpack.c.l.b16 %v335
      %v1239 = vunpack.c.l.b16 %v336
      %v1240 = vunpack.c.l.b16 %v337
      %v1241 = vunpack.c.l.b16 %v338
      %v1242 = vunpack.c.l.b16 %v339
      %v1243 = vunpack.c.l.b16 %v340
      %v1244 = vunpack.c.l.b16 %v341
      %v1245 = vunpack.c.l.b16 %v342
      %v1246 = vunpack.c.l.b16 %v343
      %v1247 = vunpack.c.l.b16 %v344
      %v1248 = vunpack.c.l.b16 %v345
      %v1249 = vunpack.c.l.b16 %v346
      %v1250 = vunpack.c.l.b16 %v347
      %v1251 = vunpack.c.l.b16 %v348
      %v1252 = vunpack.c.l.b16 %v349
      %v1253 = vunpack.c.l.b16 %v350
      %v1254 = vunpack.c.l.b16 %v351
      %v1255 = vunpack.c.l.b16 %v352
      %v1256 = vunpack.c.l.b16 %v353
      %v1257 = vunpack.c.l.b16 %v354
      %v1258 = vunpack.c.l.b16 %v355
      %v1259 = vunpack.c.l.b16 %v356
      %v1260 = vunpack.c.l.b16 %v357
      %v1261 = vunpack.c.l.b16 %v358
      %v1262 = vunpack.c.l.b16 %v359
      %v1263 = vunpack.c.l.b16 %v360
      %v1264 = vunpack.c.l.b16 %v361
      %v1265 = vunpack.c.l.b16 %v362
      %v1266 = vunpack.c.l.b16 %v363
      %v1267 = vunpack.c.l.b16 %v364
      %v1268 = vunpack.c.l.b16 %v365
      %v1269 = vunpack.c.l.b16 %v366
      %v1270 = vunpack.c.l.b16 %v367
      %v1271 = vunpack.c.l.b16 %v368
      %v1272 = vunpack.c.l.b16 %v369
      %v1273 = vunpack.c.l.b16 %v370
      %v1274 = vunpack.c.l.b16 %v371
      %v1275 = vunpack.c.l.b16 %v372
      %v1276 = vunpack.c.l.b16 %v373
      %v1277 = vunpack.c.l.b16 %v374
      %v1278 = vunpack.c.l.b16 %v375
      %v1279 = vunpack.c.l.b16 %v376
      %v1280 = vunpack.c.l.b16 %v377
      %v1281 = vunpack.c.l.b16 %v378
      %v1282 = vunpack.c.l.b16 %v379
      %v1283 = vunpack.c.l.b16 %v380
      %v1284 = vunpack.c.l.b16 %v381
      %v1285 = vunpack.c.l.b16 %v382
      %v1286 = vunpack.c.l.b16 %v383
      %v1287 = vunpack.c.l.b16 %v384
      %v1288 = vunpack.c.l.b16 %v385
      %v1289 = vunpack.c.l.b16 %v386
      %v1290 = vunpack.c.l.b16 %v387
      %v1291 = vunpack.c.l.b16 %v388
      %v1292 = vunpack.c.l.b16 %v389
      %v1293 = vunpack.c.l.b16 %v390
      %v1294 = vunpack.c.l.b16 %v391
      %v1295 = vunpack.c.l.b16 %v392
      %v1296 = vunpack.c.l.b16 %v393
      %v1297 = vunpack.c.l.b16 %v394
      %v1298 = vunpack.c.l.b16 %v395
      %v1299 = vunpack.c.l.b16 %v396
      %v1300 = vunpack.c.l.b16 %v397
      %v1301 = vunpack.c.l.b16 %v398
      %v1302 = vunpack.c.l.b16 %v399
      %v1303 = vunpack.c.l.b16 %v400
      %v1304 = vunpack.c.l.b16 %v401
      %v1305 = vunpack.c.l.b16 %v402
      %v1306 = vunpack.c.l.b16 %v403
      %v1307 = vunpack.c.l.b16 %v404
      %v1308 = vunpack.c.l.b16 %v405
      %v1309 = vunpack.c.l.b16 %v406
      %v1310 = vunpack.c.l.b16 %v407
      %v1311 = vunpack.c.l.b16 %v408
      %v1312 = vunpack.c.l.b16 %v409
      %v1313 = vunpack.c.l.b16 %v410
      %v1314 = vunpack.c.l.b16 %v411
      %v1315 = vunpack.c.l.b16 %v412
      %v1316 = vunpack.c.l.b16 %v413
      %v1317 = vunpack.c.l.b16 %v414
      %v1318 = vunpack.c.l.b16 %v415
      %v1319 = vunpack.c.l.b16 %v416
      %v1320 = vunpack.c.l.b16 %v417
      %v1321 = vunpack.c.l.b16 %v418
      %v1322 = vunpack.c.l.b16 %v419
      %v1323 = vunpack.c.l.b16 %v420
      %v1324 = vunpack.c.l.b16 %v421
      %v1325 = vunpack.c.l.b16 %v422
      %v1326 = vunpack.c.l.b16 %v423
      %v1327 = vunpack.c.l.b16 %v424
      %v1328 = vunpack.c.l.b16 %v425
      %v1329 = vunpack.c.l.b16 %v426
      %v1330 = vunpack.c.l.b16 %v427
      %v1331 = vunpack.c.l.b16 %v428
      %v1332 = vunpack.c.l.b16 %v429
      %v1333 = vunpack.c.l.b16 %v430
      %v1334 = vunpack.c.l.b16 %v431
      %v1335 = vunpack.c.l.b16 %v432
      %v1336 = vunpack.c.l.b16 %v433
      %v1337 = vpack.c.b16 %v1210, %v1209
      %v1338 = vpack.c.b16 %v1212, %v1211
      %v1339 = vpack.c.b16 %v1214, %v1213
      %v1340 = vpack.c.b16 %v1216, %v1215
      %v1341 = vpack.c.b16 %v1218, %v1217
      %v1342 = vpack.c.b16 %v1220, %v1219
      %v1343 = vpack.c.b16 %v1222, %v1221
      %v1344 = vpack.c.b16 %v1224, %v1223
      %v1345 = vpack.c.b16 %v1226, %v1225
      %v1346 = vpack.c.b16 %v1228, %v1227
      %v1347 = vpack.c.b16 %v1230, %v1229
      %v1348 = vpack.c.b16 %v1232, %v1231
      %v1349 = vpack.c.b16 %v1234, %v1233
      %v1350 = vpack.c.b16 %v1236, %v1235
      %v1351 = vpack.c.b16 %v1238, %v1237
      %v1352 = vpack.c.b16 %v1240, %v1239
      %v1353 = vpack.c.b16 %v1242, %v1241
      %v1354 = vpack.c.b16 %v1244, %v1243
      %v1355 = vpack.c.b16 %v1246, %v1245
      %v1356 = vpack.c.b16 %v1248, %v1247
      %v1357 = vpack.c.b16 %v1250, %v1249
      %v1358 = vpack.c.b16 %v1252, %v1251
      %v1359 = vpack.c.b16 %v1254, %v1253
      %v1360 = vpack.c.b16 %v1256, %v1255
      %v1361 = vpack.c.b16 %v1258, %v1257
      %v1362 = vpack.c.b16 %v1260, %v1259
      %v1363 = vpack.c.b16 %v1262, %v1261
      %v1364 = vpack.c.b16 %v1264, %v1263
      %v1365 = vpack.c.b16 %v1266, %v1265
      %v1366 = vpack.c.b16 %v1268, %v1267
      %v1367 = vpack.c.b16 %v1270, %v1269
      %v1368 = vpack.c.b16 %v1272, %v1271
      %v1369 = vpack.c.b16 %v1274, %v1273
      %v1370 = vpack.c.b16 %v1276, %v1275
      %v1371 = vpack.c.b16 %v1278, %v1277
      %v1372 = vpack.c.b16 %v1280, %v1279
      %v1373 = vpack.c.b16 %v1282, %v1281
      %v1374 = vpack.c.b16 %v1284, %v1283
      %v1375 = vpack.c.b16 %v1286, %v1285
      %v1376 = vpack.c.b16 %v1288, %v1287
      %v1377 = vpack.c.b16 %v1290, %v1289
      %v1378 = vpack.c.b16 %v1292, %v1291
      %v1379 = vpack.c.b16 %v1294, %v1293
      %v1380 = vpack.c.b16 %v1296, %v1295
      %v1381 = vpack.c.b16 %v1298, %v1297
      %v1382 = vpack.c.b16 %v1300, %v1299
      %v1383 = vpack.c.b16 %v1302, %v1301
      %v1384 = vpack.c.b16 %v1304, %v1303
      %v1385 = vpack.c.b16 %v1306, %v1305
      %v1386 = vpack.c.b16 %v1308, %v1307
      %v1387 = vpack.c.b16 %v1310, %v1309
      %v1388 = vpack.c.b16 %v1312, %v1311
      %v1389 = vpack.c.b16 %v1314, %v1313
      %v1390 = vpack.c.b16 %v1316, %v1315
      %v1391 = vpack.c.b16 %v1318, %v1317
      %v1392 = vpack.c.b16 %v1320, %v1319
      %v1393 = vpack.c.b16 %v1322, %v1321
      %v1394 = vpack.c.b16 %v1324, %v1323
      %v1395 = vpack.c.b16 %v1326, %v1325
      %v1396 = vpack.c.b16 %v1328, %v1327
      %v1397 = vpack.c.b16 %v1330, %v1329
      %v1398 = vpack.c.b16 %v1332, %v1331
      %v1399 = vpack.c.b16 %v1334, %v1333
      %v1400 = vpack.c.b16 %v1336, %v1335
      %1465 = vmatprep.subr.bf16.mxu0 0
      %1466 = vmatpush1.bf16.msra.mxu0 %v1344
      %1467 = vmatprep.subr.bf16.mxu0 0
      %1468 = vmatpush1.bf16.msra.mxu0 %v1343
      %1469 = vmatprep.subr.bf16.mxu0 0
      %1470 = vmatpush1.bf16.msra.mxu0 %v1342
      %1471 = vmatprep.subr.bf16.mxu0 0
      %1472 = vmatpush1.bf16.msra.mxu0 %v1341
      %1473 = vmatprep.subr.bf16.mxu0 0
      %1474 = vmatpush1.bf16.msra.mxu0 %v1340
      %1475 = vmatprep.subr.bf16.mxu0 0
      %1476 = vmatpush1.bf16.msra.mxu0 %v1339
      %1477 = vmatprep.subr.bf16.mxu0 0
      %1478 = vmatpush1.bf16.msra.mxu0 %v1338
      %1479 = vmatprep.subr.bf16.mxu0 0
      %1480 = vmatpush1.bf16.msra.mxu0 %v1337
      %1481 = vmatprep.subr.bf16.mxu0 0
      %1482 = vmatpush2.bf16.msra.mxu0 %v1352
      %1483 = vmatprep.subr.bf16.mxu0 0
      %1484 = vmatpush2.bf16.msra.mxu0 %v1351
      %1485 = vmatprep.subr.bf16.mxu0 0
      %1486 = vmatpush2.bf16.msra.mxu0 %v1350
      %1487 = vmatprep.subr.bf16.mxu0 0
      %1488 = vmatpush2.bf16.msra.mxu0 %v1349
      %1489 = vmatprep.subr.bf16.mxu0 0
      %1490 = vmatpush2.bf16.msra.mxu0 %v1348
      %1491 = vmatprep.subr.bf16.mxu0 0
      %1492 = vmatpush2.bf16.msra.mxu0 %v1347
      %1493 = vmatprep.subr.bf16.mxu0 0
      %1494 = vmatpush2.bf16.msra.mxu0 %v1346
      %1495 = vmatprep.subr.bf16.mxu0 0
      %1496 = vmatpush2.bf16.msra.mxu0 %v1345
      %1497 = vmatprep.mubr.bf16.mxu0 %v826
      %1498 = vmatmul.mubr.bf16.gmra.mxu0 %v825
      %v1499 = vpop.f32.mrf.mxu0
      %v1500 = vadd.f32 %v439, %v1499
      %v1501 = vpop.f32.mrf.mxu0
      %v1502 = vpop.f32.mrf.mxu0
      %v1503 = vadd.f32 %v439, %v1502
      %v1504 = vpop.f32.mrf.mxu0
      %1505 = vmatprep.mubr.bf16.mxu0 %v834
      %1506 = vmatmul.mubr.bf16.gmra.mxu0 %v833
      %v1507 = vpop.f32.mrf.mxu0
      %v1508 = vadd.f32 %v439, %v1507
      %v1509 = vpop.f32.mrf.mxu0
      %v1510 = vpop.f32.mrf.mxu0
      %v1511 = vadd.f32 %v439, %v1510
      %v1512 = vpop.f32.mrf.mxu0
      %1513 = vmatprep.mubr.bf16.mxu0 %v842
      %1514 = vmatmul.mubr.bf16.gmra.mxu0 %v841
      %v1515 = vpop.f32.mrf.mxu0
      %v1516 = vadd.f32 %v439, %v1515
      %v1517 = vpop.f32.mrf.mxu0
      %v1518 = vpop.f32.mrf.mxu0
      %v1519 = vadd.f32 %v439, %v1518
      %v1520 = vpop.f32.mrf.mxu0
      %1521 = vmatprep.mubr.bf16.mxu0 %v850
      %1522 = vmatmul.mubr.bf16.gmra.mxu0 %v849
      %v1523 = vpop.f32.mrf.mxu0
      %v1524 = vadd.f32 %v439, %v1523
      %v1525 = vpop.f32.mrf.mxu0
      %v1526 = vpop.f32.mrf.mxu0
      %v1527 = vadd.f32 %v439, %v1526
      %v1528 = vpop.f32.mrf.mxu0
      %1529 = vmatprep.mubr.bf16.mxu0 %v858
      %1530 = vmatmul.mubr.bf16.gmra.mxu0 %v857
      %v1531 = vpop.f32.mrf.mxu0
      %v1532 = vadd.f32 %v439, %v1531
      %v1533 = vpop.f32.mrf.mxu0
      %v1534 = vpop.f32.mrf.mxu0
      %v1535 = vadd.f32 %v439, %v1534
      %v1536 = vpop.f32.mrf.mxu0
      %1537 = vmatprep.mubr.bf16.mxu0 %v866
      %1538 = vmatmul.mubr.bf16.gmra.mxu0 %v865
      %v1539 = vpop.f32.mrf.mxu0
      %v1540 = vadd.f32 %v439, %v1539
      %v1541 = vpop.f32.mrf.mxu0
      %v1542 = vpop.f32.mrf.mxu0
      %v1543 = vadd.f32 %v439, %v1542
      %v1544 = vpop.f32.mrf.mxu0
      %1545 = vmatprep.mubr.bf16.mxu0 %v874
      %1546 = vmatmul.mubr.bf16.gmra.mxu0 %v873
      %v1547 = vpop.f32.mrf.mxu0
      %v1548 = vadd.f32 %v439, %v1547
      %v1549 = vpop.f32.mrf.mxu0
      %v1550 = vpop.f32.mrf.mxu0
      %v1551 = vadd.f32 %v439, %v1550
      %v1552 = vpop.f32.mrf.mxu0
      %1553 = vmatprep.mubr.bf16.mxu0 %v882
      %1554 = vmatmul.mubr.bf16.gmra.mxu0 %v881
      %v1555 = vpop.f32.mrf.mxu0
      %v1556 = vadd.f32 %v439, %v1555
      %v1557 = vpop.f32.mrf.mxu0
      %v1558 = vpop.f32.mrf.mxu0
      %v1559 = vadd.f32 %v439, %v1558
      %v1560 = vpop.f32.mrf.mxu0
      %1561 = vmatprep.mubr.bf16.mxu0 %v890
      %1562 = vmatmul.mubr.bf16.gmra.mxu0 %v889
      %v1563 = vpop.f32.mrf.mxu0
      %v1564 = vadd.f32 %v439, %v1563
      %v1565 = vpop.f32.mrf.mxu0
      %v1566 = vpop.f32.mrf.mxu0
      %v1567 = vadd.f32 %v439, %v1566
      %v1568 = vpop.f32.mrf.mxu0
      %1569 = vmatprep.mubr.bf16.mxu0 %v898
      %1570 = vmatmul.mubr.bf16.gmra.mxu0 %v897
      %v1571 = vpop.f32.mrf.mxu0
      %v1572 = vadd.f32 %v439, %v1571
      %v1573 = vpop.f32.mrf.mxu0
      %v1574 = vpop.f32.mrf.mxu0
      %v1575 = vadd.f32 %v439, %v1574
      %v1576 = vpop.f32.mrf.mxu0
      %1577 = vmatprep.mubr.bf16.mxu0 %v906
      %1578 = vmatmul.mubr.bf16.gmra.mxu0 %v905
      %v1579 = vpop.f32.mrf.mxu0
      %v1580 = vadd.f32 %v439, %v1579
      %v1581 = vpop.f32.mrf.mxu0
      %v1582 = vpop.f32.mrf.mxu0
      %v1583 = vadd.f32 %v439, %v1582
      %v1584 = vpop.f32.mrf.mxu0
      %1585 = vmatprep.mubr.bf16.mxu0 %v914
      %1586 = vmatmul.mubr.bf16.gmra.mxu0 %v913
      %v1587 = vpop.f32.mrf.mxu0
      %v1588 = vadd.f32 %v439, %v1587
      %v1589 = vpop.f32.mrf.mxu0
      %v1590 = vpop.f32.mrf.mxu0
      %v1591 = vadd.f32 %v439, %v1590
      %v1592 = vpop.f32.mrf.mxu0
      %1593 = vmatprep.mubr.bf16.mxu0 %v922
      %1594 = vmatmul.mubr.bf16.gmra.mxu0 %v921
      %v1595 = vpop.f32.mrf.mxu0
      %v1596 = vadd.f32 %v439, %v1595
      %v1597 = vpop.f32.mrf.mxu0
      %v1598 = vpop.f32.mrf.mxu0
      %v1599 = vadd.f32 %v439, %v1598
      %v1600 = vpop.f32.mrf.mxu0
      %1601 = vmatprep.mubr.bf16.mxu0 %v930
      %1602 = vmatmul.mubr.bf16.gmra.mxu0 %v929
      %v1603 = vpop.f32.mrf.mxu0
      %v1604 = vadd.f32 %v439, %v1603
      %v1605 = vpop.f32.mrf.mxu0
      %v1606 = vpop.f32.mrf.mxu0
      %v1607 = vadd.f32 %v439, %v1606
      %v1608 = vpop.f32.mrf.mxu0
      %1609 = vmatprep.mubr.bf16.mxu0 %v938
      %1610 = vmatmul.mubr.bf16.gmra.mxu0 %v937
      %v1611 = vpop.f32.mrf.mxu0
      %v1612 = vadd.f32 %v439, %v1611
      %v1613 = vpop.f32.mrf.mxu0
      %v1614 = vpop.f32.mrf.mxu0
      %v1615 = vadd.f32 %v439, %v1614
      %v1616 = vpop.f32.mrf.mxu0
      %1617 = vmatprep.mubr.bf16.mxu0 %v946
      %1618 = vmatmul.mubr.bf16.gmra.mxu0 %v945
      %v1619 = vpop.f32.mrf.mxu0
      %v1620 = vadd.f32 %v439, %v1619
      %v1621 = vpop.f32.mrf.mxu0
      %v1622 = vpop.f32.mrf.mxu0
      %v1623 = vadd.f32 %v439, %v1622
      %v1624 = vpop.f32.mrf.mxu0
      %1625 = vdwg.mxu0
      %1626 = vmatprep.subr.bf16.mxu0 0
      %1627 = vmatpush1.bf16.msra.mxu0 %v1360
      %1628 = vmatprep.subr.bf16.mxu0 0
      %1629 = vmatpush1.bf16.msra.mxu0 %v1359
      %1630 = vmatprep.subr.bf16.mxu0 0
      %1631 = vmatpush1.bf16.msra.mxu0 %v1358
      %1632 = vmatprep.subr.bf16.mxu0 0
      %1633 = vmatpush1.bf16.msra.mxu0 %v1357
      %1634 = vmatprep.subr.bf16.mxu0 0
      %1635 = vmatpush1.bf16.msra.mxu0 %v1356
      %1636 = vmatprep.subr.bf16.mxu0 0
      %1637 = vmatpush1.bf16.msra.mxu0 %v1355
      %1638 = vmatprep.subr.bf16.mxu0 0
      %1639 = vmatpush1.bf16.msra.mxu0 %v1354
      %1640 = vmatprep.subr.bf16.mxu0 0
      %1641 = vmatpush1.bf16.msra.mxu0 %v1353
      %1642 = vmatprep.subr.bf16.mxu0 0
      %1643 = vmatpush2.bf16.msra.mxu0 %v1368
      %1644 = vmatprep.subr.bf16.mxu0 0
      %1645 = vmatpush2.bf16.msra.mxu0 %v1367
      %1646 = vmatprep.subr.bf16.mxu0 0
      %1647 = vmatpush2.bf16.msra.mxu0 %v1366
      %1648 = vmatprep.subr.bf16.mxu0 0
      %1649 = vmatpush2.bf16.msra.mxu0 %v1365
      %1650 = vmatprep.subr.bf16.mxu0 0
      %1651 = vmatpush2.bf16.msra.mxu0 %v1364
      %1652 = vmatprep.subr.bf16.mxu0 0
      %1653 = vmatpush2.bf16.msra.mxu0 %v1363
      %1654 = vmatprep.subr.bf16.mxu0 0
      %1655 = vmatpush2.bf16.msra.mxu0 %v1362
      %1656 = vmatprep.subr.bf16.mxu0 0
      %1657 = vmatpush2.bf16.msra.mxu0 %v1361
      %1658 = vmatprep.mubr.bf16.mxu0 %v828
      %1659 = vmatmul.mubr.bf16.gmra.mxu0 %v827
      %v1660 = vpop.f32.mrf.mxu0
      %v1661 = vadd.f32 %v1500, %v1660
      %v1662 = vpop.f32.mrf.mxu0
      %v1663 = vpop.f32.mrf.mxu0
      %v1664 = vadd.f32 %v1503, %v1663
      %v1665 = vpop.f32.mrf.mxu0
      %1666 = vmatprep.mubr.bf16.mxu0 %v836
      %1667 = vmatmul.mubr.bf16.gmra.mxu0 %v835
      %v1668 = vpop.f32.mrf.mxu0
      %v1669 = vadd.f32 %v1508, %v1668
      %v1670 = vpop.f32.mrf.mxu0
      %v1671 = vpop.f32.mrf.mxu0
      %v1672 = vadd.f32 %v1511, %v1671
      %v1673 = vpop.f32.mrf.mxu0
      %1674 = vmatprep.mubr.bf16.mxu0 %v844
      %1675 = vmatmul.mubr.bf16.gmra.mxu0 %v843
      %v1676 = vpop.f32.mrf.mxu0
      %v1677 = vadd.f32 %v1516, %v1676
      %v1678 = vpop.f32.mrf.mxu0
      %v1679 = vpop.f32.mrf.mxu0
      %v1680 = vadd.f32 %v1519, %v1679
      %v1681 = vpop.f32.mrf.mxu0
      %1682 = vmatprep.mubr.bf16.mxu0 %v852
      %1683 = vmatmul.mubr.bf16.gmra.mxu0 %v851
      %v1684 = vpop.f32.mrf.mxu0
      %v1685 = vadd.f32 %v1524, %v1684
      %v1686 = vpop.f32.mrf.mxu0
      %v1687 = vpop.f32.mrf.mxu0
      %v1688 = vadd.f32 %v1527, %v1687
      %v1689 = vpop.f32.mrf.mxu0
      %1690 = vmatprep.mubr.bf16.mxu0 %v860
      %1691 = vmatmul.mubr.bf16.gmra.mxu0 %v859
      %v1692 = vpop.f32.mrf.mxu0
      %v1693 = vadd.f32 %v1532, %v1692
      %v1694 = vpop.f32.mrf.mxu0
      %v1695 = vpop.f32.mrf.mxu0
      %v1696 = vadd.f32 %v1535, %v1695
      %v1697 = vpop.f32.mrf.mxu0
      %1698 = vmatprep.mubr.bf16.mxu0 %v868
      %1699 = vmatmul.mubr.bf16.gmra.mxu0 %v867
      %v1700 = vpop.f32.mrf.mxu0
      %v1701 = vadd.f32 %v1540, %v1700
      %v1702 = vpop.f32.mrf.mxu0
      %v1703 = vpop.f32.mrf.mxu0
      %v1704 = vadd.f32 %v1543, %v1703
      %v1705 = vpop.f32.mrf.mxu0
      %1706 = vmatprep.mubr.bf16.mxu0 %v876
      %1707 = vmatmul.mubr.bf16.gmra.mxu0 %v875
      %v1708 = vpop.f32.mrf.mxu0
      %v1709 = vadd.f32 %v1548, %v1708
      %v1710 = vpop.f32.mrf.mxu0
      %v1711 = vpop.f32.mrf.mxu0
      %v1712 = vadd.f32 %v1551, %v1711
      %v1713 = vpop.f32.mrf.mxu0
      %1714 = vmatprep.mubr.bf16.mxu0 %v884
      %1715 = vmatmul.mubr.bf16.gmra.mxu0 %v883
      %v1716 = vpop.f32.mrf.mxu0
      %v1717 = vadd.f32 %v1556, %v1716
      %v1718 = vpop.f32.mrf.mxu0
      %v1719 = vpop.f32.mrf.mxu0
      %v1720 = vadd.f32 %v1559, %v1719
      %v1721 = vpop.f32.mrf.mxu0
      %1722 = vmatprep.mubr.bf16.mxu0 %v892
      %1723 = vmatmul.mubr.bf16.gmra.mxu0 %v891
      %v1724 = vpop.f32.mrf.mxu0
      %v1725 = vadd.f32 %v1564, %v1724
      %v1726 = vpop.f32.mrf.mxu0
      %v1727 = vpop.f32.mrf.mxu0
      %v1728 = vadd.f32 %v1567, %v1727
      %v1729 = vpop.f32.mrf.mxu0
      %1730 = vmatprep.mubr.bf16.mxu0 %v900
      %1731 = vmatmul.mubr.bf16.gmra.mxu0 %v899
      %v1732 = vpop.f32.mrf.mxu0
      %v1733 = vadd.f32 %v1572, %v1732
      %v1734 = vpop.f32.mrf.mxu0
      %v1735 = vpop.f32.mrf.mxu0
      %v1736 = vadd.f32 %v1575, %v1735
      %v1737 = vpop.f32.mrf.mxu0
      %1738 = vmatprep.mubr.bf16.mxu0 %v908
      %1739 = vmatmul.mubr.bf16.gmra.mxu0 %v907
      %v1740 = vpop.f32.mrf.mxu0
      %v1741 = vadd.f32 %v1580, %v1740
      %v1742 = vpop.f32.mrf.mxu0
      %v1743 = vpop.f32.mrf.mxu0
      %v1744 = vadd.f32 %v1583, %v1743
      %v1745 = vpop.f32.mrf.mxu0
      %1746 = vmatprep.mubr.bf16.mxu0 %v916
      %1747 = vmatmul.mubr.bf16.gmra.mxu0 %v915
      %v1748 = vpop.f32.mrf.mxu0
      %v1749 = vadd.f32 %v1588, %v1748
      %v1750 = vpop.f32.mrf.mxu0
      %v1751 = vpop.f32.mrf.mxu0
      %v1752 = vadd.f32 %v1591, %v1751
      %v1753 = vpop.f32.mrf.mxu0
      %1754 = vmatprep.mubr.bf16.mxu0 %v924
      %1755 = vmatmul.mubr.bf16.gmra.mxu0 %v923
      %v1756 = vpop.f32.mrf.mxu0
      %v1757 = vadd.f32 %v1596, %v1756
      %v1758 = vpop.f32.mrf.mxu0
      %v1759 = vpop.f32.mrf.mxu0
      %v1760 = vadd.f32 %v1599, %v1759
      %v1761 = vpop.f32.mrf.mxu0
      %1762 = vmatprep.mubr.bf16.mxu0 %v932
      %1763 = vmatmul.mubr.bf16.gmra.mxu0 %v931
      %v1764 = vpop.f32.mrf.mxu0
      %v1765 = vadd.f32 %v1604, %v1764
      %v1766 = vpop.f32.mrf.mxu0
      %v1767 = vpop.f32.mrf.mxu0
      %v1768 = vadd.f32 %v1607, %v1767
      %v1769 = vpop.f32.mrf.mxu0
      %1770 = vmatprep.mubr.bf16.mxu0 %v940
      %1771 = vmatmul.mubr.bf16.gmra.mxu0 %v939
      %v1772 = vpop.f32.mrf.mxu0
      %v1773 = vadd.f32 %v1612, %v1772
      %v1774 = vpop.f32.mrf.mxu0
      %v1775 = vpop.f32.mrf.mxu0
      %v1776 = vadd.f32 %v1615, %v1775
      %v1777 = vpop.f32.mrf.mxu0
      %1778 = vmatprep.mubr.bf16.mxu0 %v948
      %1779 = vmatmul.mubr.bf16.gmra.mxu0 %v947
      %v1780 = vpop.f32.mrf.mxu0
      %v1781 = vadd.f32 %v1620, %v1780
      %v1782 = vpop.f32.mrf.mxu0
      %v1783 = vpop.f32.mrf.mxu0
      %v1784 = vadd.f32 %v1623, %v1783
      %v1785 = vpop.f32.mrf.mxu0
      %1786 = vdwg.mxu0
      %1787 = vmatprep.subr.bf16.mxu0 0
      %1788 = vmatpush1.bf16.msra.mxu0 %v1376
      %1789 = vmatprep.subr.bf16.mxu0 0
      %1790 = vmatpush1.bf16.msra.mxu0 %v1375
      %1791 = vmatprep.subr.bf16.mxu0 0
      %1792 = vmatpush1.bf16.msra.mxu0 %v1374
      %1793 = vmatprep.subr.bf16.mxu0 0
      %1794 = vmatpush1.bf16.msra.mxu0 %v1373
      %1795 = vmatprep.subr.bf16.mxu0 0
      %1796 = vmatpush1.bf16.msra.mxu0 %v1372
      %1797 = vmatprep.subr.bf16.mxu0 0
      %1798 = vmatpush1.bf16.msra.mxu0 %v1371
      %1799 = vmatprep.subr.bf16.mxu0 0
      %1800 = vmatpush1.bf16.msra.mxu0 %v1370
      %1801 = vmatprep.subr.bf16.mxu0 0
      %1802 = vmatpush1.bf16.msra.mxu0 %v1369
      %1803 = vmatprep.subr.bf16.mxu0 0
      %1804 = vmatpush2.bf16.msra.mxu0 %v1384
      %1805 = vmatprep.subr.bf16.mxu0 0
      %1806 = vmatpush2.bf16.msra.mxu0 %v1383
      %1807 = vmatprep.subr.bf16.mxu0 0
      %1808 = vmatpush2.bf16.msra.mxu0 %v1382
      %1809 = vmatprep.subr.bf16.mxu0 0
      %1810 = vmatpush2.bf16.msra.mxu0 %v1381
      %1811 = vmatprep.subr.bf16.mxu0 0
      %1812 = vmatpush2.bf16.msra.mxu0 %v1380
      %1813 = vmatprep.subr.bf16.mxu0 0
      %1814 = vmatpush2.bf16.msra.mxu0 %v1379
      %1815 = vmatprep.subr.bf16.mxu0 0
      %1816 = vmatpush2.bf16.msra.mxu0 %v1378
      %1817 = vmatprep.subr.bf16.mxu0 0
      %1818 = vmatpush2.bf16.msra.mxu0 %v1377
      %1819 = vmatprep.mubr.bf16.mxu0 %v830
      %1820 = vmatmul.mubr.bf16.gmra.mxu0 %v829
      %v1821 = vpop.f32.mrf.mxu0
      %v1822 = vadd.f32 %v1661, %v1821
      %v1823 = vpop.f32.mrf.mxu0
      %v1824 = vpop.f32.mrf.mxu0
      %v1825 = vadd.f32 %v1664, %v1824
      %v1826 = vpop.f32.mrf.mxu0
      %1827 = vmatprep.mubr.bf16.mxu0 %v838
      %1828 = vmatmul.mubr.bf16.gmra.mxu0 %v837
      %v1829 = vpop.f32.mrf.mxu0
      %v1830 = vadd.f32 %v1669, %v1829
      %v1831 = vpop.f32.mrf.mxu0
      %v1832 = vpop.f32.mrf.mxu0
      %v1833 = vadd.f32 %v1672, %v1832
      %v1834 = vpop.f32.mrf.mxu0
      %1835 = vmatprep.mubr.bf16.mxu0 %v846
      %1836 = vmatmul.mubr.bf16.gmra.mxu0 %v845
      %v1837 = vpop.f32.mrf.mxu0
      %v1838 = vadd.f32 %v1677, %v1837
      %v1839 = vpop.f32.mrf.mxu0
      %v1840 = vpop.f32.mrf.mxu0
      %v1841 = vadd.f32 %v1680, %v1840
      %v1842 = vpop.f32.mrf.mxu0
      %1843 = vmatprep.mubr.bf16.mxu0 %v854
      %1844 = vmatmul.mubr.bf16.gmra.mxu0 %v853
      %v1845 = vpop.f32.mrf.mxu0
      %v1846 = vadd.f32 %v1685, %v1845
      %v1847 = vpop.f32.mrf.mxu0
      %v1848 = vpop.f32.mrf.mxu0
      %v1849 = vadd.f32 %v1688, %v1848
      %v1850 = vpop.f32.mrf.mxu0
      %1851 = vmatprep.mubr.bf16.mxu0 %v862
      %1852 = vmatmul.mubr.bf16.gmra.mxu0 %v861
      %v1853 = vpop.f32.mrf.mxu0
      %v1854 = vadd.f32 %v1693, %v1853
      %v1855 = vpop.f32.mrf.mxu0
      %v1856 = vpop.f32.mrf.mxu0
      %v1857 = vadd.f32 %v1696, %v1856
      %v1858 = vpop.f32.mrf.mxu0
      %1859 = vmatprep.mubr.bf16.mxu0 %v870
      %1860 = vmatmul.mubr.bf16.gmra.mxu0 %v869
      %v1861 = vpop.f32.mrf.mxu0
      %v1862 = vadd.f32 %v1701, %v1861
      %v1863 = vpop.f32.mrf.mxu0
      %v1864 = vpop.f32.mrf.mxu0
      %v1865 = vadd.f32 %v1704, %v1864
      %v1866 = vpop.f32.mrf.mxu0
      %1867 = vmatprep.mubr.bf16.mxu0 %v878
      %1868 = vmatmul.mubr.bf16.gmra.mxu0 %v877
      %v1869 = vpop.f32.mrf.mxu0
      %v1870 = vadd.f32 %v1709, %v1869
      %v1871 = vpop.f32.mrf.mxu0
      %v1872 = vpop.f32.mrf.mxu0
      %v1873 = vadd.f32 %v1712, %v1872
      %v1874 = vpop.f32.mrf.mxu0
      %1875 = vmatprep.mubr.bf16.mxu0 %v886
      %1876 = vmatmul.mubr.bf16.gmra.mxu0 %v885
      %v1877 = vpop.f32.mrf.mxu0
      %v1878 = vadd.f32 %v1717, %v1877
      %v1879 = vpop.f32.mrf.mxu0
      %v1880 = vpop.f32.mrf.mxu0
      %v1881 = vadd.f32 %v1720, %v1880
      %v1882 = vpop.f32.mrf.mxu0
      %1883 = vmatprep.mubr.bf16.mxu0 %v894
      %1884 = vmatmul.mubr.bf16.gmra.mxu0 %v893
      %v1885 = vpop.f32.mrf.mxu0
      %v1886 = vadd.f32 %v1725, %v1885
      %v1887 = vpop.f32.mrf.mxu0
      %v1888 = vpop.f32.mrf.mxu0
      %v1889 = vadd.f32 %v1728, %v1888
      %v1890 = vpop.f32.mrf.mxu0
      %1891 = vmatprep.mubr.bf16.mxu0 %v902
      %1892 = vmatmul.mubr.bf16.gmra.mxu0 %v901
      %v1893 = vpop.f32.mrf.mxu0
      %v1894 = vadd.f32 %v1733, %v1893
      %v1895 = vpop.f32.mrf.mxu0
      %v1896 = vpop.f32.mrf.mxu0
      %v1897 = vadd.f32 %v1736, %v1896
      %v1898 = vpop.f32.mrf.mxu0
      %1899 = vmatprep.mubr.bf16.mxu0 %v910
      %1900 = vmatmul.mubr.bf16.gmra.mxu0 %v909
      %v1901 = vpop.f32.mrf.mxu0
      %v1902 = vadd.f32 %v1741, %v1901
      %v1903 = vpop.f32.mrf.mxu0
      %v1904 = vpop.f32.mrf.mxu0
      %v1905 = vadd.f32 %v1744, %v1904
      %v1906 = vpop.f32.mrf.mxu0
      %1907 = vmatprep.mubr.bf16.mxu0 %v918
      %1908 = vmatmul.mubr.bf16.gmra.mxu0 %v917
      %v1909 = vpop.f32.mrf.mxu0
      %v1910 = vadd.f32 %v1749, %v1909
      %v1911 = vpop.f32.mrf.mxu0
      %v1912 = vpop.f32.mrf.mxu0
      %v1913 = vadd.f32 %v1752, %v1912
      %v1914 = vpop.f32.mrf.mxu0
      %1915 = vmatprep.mubr.bf16.mxu0 %v926
      %1916 = vmatmul.mubr.bf16.gmra.mxu0 %v925
      %v1917 = vpop.f32.mrf.mxu0
      %v1918 = vadd.f32 %v1757, %v1917
      %v1919 = vpop.f32.mrf.mxu0
      %v1920 = vpop.f32.mrf.mxu0
      %v1921 = vadd.f32 %v1760, %v1920
      %v1922 = vpop.f32.mrf.mxu0
      %1923 = vmatprep.mubr.bf16.mxu0 %v934
      %1924 = vmatmul.mubr.bf16.gmra.mxu0 %v933
      %v1925 = vpop.f32.mrf.mxu0
      %v1926 = vadd.f32 %v1765, %v1925
      %v1927 = vpop.f32.mrf.mxu0
      %v1928 = vpop.f32.mrf.mxu0
      %v1929 = vadd.f32 %v1768, %v1928
      %v1930 = vpop.f32.mrf.mxu0
      %1931 = vmatprep.mubr.bf16.mxu0 %v942
      %1932 = vmatmul.mubr.bf16.gmra.mxu0 %v941
      %v1933 = vpop.f32.mrf.mxu0
      %v1934 = vadd.f32 %v1773, %v1933
      %v1935 = vpop.f32.mrf.mxu0
      %v1936 = vpop.f32.mrf.mxu0
      %v1937 = vadd.f32 %v1776, %v1936
      %v1938 = vpop.f32.mrf.mxu0
      %1939 = vmatprep.mubr.bf16.mxu0 %v950
      %1940 = vmatmul.mubr.bf16.gmra.mxu0 %v949
      %v1941 = vpop.f32.mrf.mxu0
      %v1942 = vadd.f32 %v1781, %v1941
      %v1943 = vpop.f32.mrf.mxu0
      %v1944 = vpop.f32.mrf.mxu0
      %v1945 = vadd.f32 %v1784, %v1944
      %v1946 = vpop.f32.mrf.mxu0
      %1947 = vdwg.mxu0
      %1948 = vmatprep.subr.bf16.mxu0 0
      %1949 = vmatpush1.bf16.msra.mxu0 %v1392
      %1950 = vmatprep.subr.bf16.mxu0 0
      %1951 = vmatpush1.bf16.msra.mxu0 %v1391
      %1952 = vmatprep.subr.bf16.mxu0 0
      %1953 = vmatpush1.bf16.msra.mxu0 %v1390
      %1954 = vmatprep.subr.bf16.mxu0 0
      %1955 = vmatpush1.bf16.msra.mxu0 %v1389
      %1956 = vmatprep.subr.bf16.mxu0 0
      %1957 = vmatpush1.bf16.msra.mxu0 %v1388
      %1958 = vmatprep.subr.bf16.mxu0 0
      %1959 = vmatpush1.bf16.msra.mxu0 %v1387
      %1960 = vmatprep.subr.bf16.mxu0 0
      %1961 = vmatpush1.bf16.msra.mxu0 %v1386
      %1962 = vmatprep.subr.bf16.mxu0 0
      %1963 = vmatpush1.bf16.msra.mxu0 %v1385
      %1964 = vmatprep.subr.bf16.mxu0 0
      %1965 = vmatpush2.bf16.msra.mxu0 %v1400
      %1966 = vmatprep.subr.bf16.mxu0 0
      %1967 = vmatpush2.bf16.msra.mxu0 %v1399
      %1968 = vmatprep.subr.bf16.mxu0 0
      %1969 = vmatpush2.bf16.msra.mxu0 %v1398
      %1970 = vmatprep.subr.bf16.mxu0 0
      %1971 = vmatpush2.bf16.msra.mxu0 %v1397
      %1972 = vmatprep.subr.bf16.mxu0 0
      %1973 = vmatpush2.bf16.msra.mxu0 %v1396
      %1974 = vmatprep.subr.bf16.mxu0 0
      %1975 = vmatpush2.bf16.msra.mxu0 %v1395
      %1976 = vmatprep.subr.bf16.mxu0 0
      %1977 = vmatpush2.bf16.msra.mxu0 %v1394
      %1978 = vmatprep.subr.bf16.mxu0 0
      %1979 = vmatpush2.bf16.msra.mxu0 %v1393
      %1980 = vmatprep.mubr.bf16.mxu0 %v832
      %1981 = vmatmul.mubr.bf16.gmra.mxu0 %v831
      %v1982 = vpop.f32.mrf.mxu0
      %v1983 = vadd.f32 %v1822, %v1982
      %v1984 = vpop.f32.mrf.mxu0
      %v1985 = vpop.f32.mrf.mxu0
      %v1986 = vadd.f32 %v1825, %v1985
      %v1987 = vpop.f32.mrf.mxu0
      %1988 = vmatprep.mubr.bf16.mxu0 %v840
      %1989 = vmatmul.mubr.bf16.gmra.mxu0 %v839
      %v1990 = vpop.f32.mrf.mxu0
      %v1991 = vadd.f32 %v1830, %v1990
      %v1992 = vpop.f32.mrf.mxu0
      %v1993 = vpop.f32.mrf.mxu0
      %v1994 = vadd.f32 %v1833, %v1993
      %v1995 = vpop.f32.mrf.mxu0
      %1996 = vmatprep.mubr.bf16.mxu0 %v848
      %1997 = vmatmul.mubr.bf16.gmra.mxu0 %v847
      %v1998 = vpop.f32.mrf.mxu0
      %v1999 = vadd.f32 %v1838, %v1998
      %v2000 = vpop.f32.mrf.mxu0
      %v2001 = vpop.f32.mrf.mxu0
      %v2002 = vadd.f32 %v1841, %v2001
      %v2003 = vpop.f32.mrf.mxu0
      %2004 = vmatprep.mubr.bf16.mxu0 %v856
      %2005 = vmatmul.mubr.bf16.gmra.mxu0 %v855
      %v2006 = vpop.f32.mrf.mxu0
      %v2007 = vadd.f32 %v1846, %v2006
      %v2008 = vpop.f32.mrf.mxu0
      %v2009 = vpop.f32.mrf.mxu0
      %v2010 = vadd.f32 %v1849, %v2009
      %v2011 = vpop.f32.mrf.mxu0
      %2012 = vmatprep.mubr.bf16.mxu0 %v864
      %2013 = vmatmul.mubr.bf16.gmra.mxu0 %v863
      %v2014 = vpop.f32.mrf.mxu0
      %v2015 = vadd.f32 %v1854, %v2014
      %v2016 = vpop.f32.mrf.mxu0
      %v2017 = vpop.f32.mrf.mxu0
      %v2018 = vadd.f32 %v1857, %v2017
      %v2019 = vpop.f32.mrf.mxu0
      %2020 = vmatprep.mubr.bf16.mxu0 %v872
      %2021 = vmatmul.mubr.bf16.gmra.mxu0 %v871
      %v2022 = vpop.f32.mrf.mxu0
      %v2023 = vadd.f32 %v1862, %v2022
      %v2024 = vpop.f32.mrf.mxu0
      %v2025 = vpop.f32.mrf.mxu0
      %v2026 = vadd.f32 %v1865, %v2025
      %v2027 = vpop.f32.mrf.mxu0
      %2028 = vmatprep.mubr.bf16.mxu0 %v880
      %2029 = vmatmul.mubr.bf16.gmra.mxu0 %v879
      %v2030 = vpop.f32.mrf.mxu0
      %v2031 = vadd.f32 %v1870, %v2030
      %v2032 = vpop.f32.mrf.mxu0
      %v2033 = vpop.f32.mrf.mxu0
      %v2034 = vadd.f32 %v1873, %v2033
      %v2035 = vpop.f32.mrf.mxu0
      %2036 = vmatprep.mubr.bf16.mxu0 %v888
      %2037 = vmatmul.mubr.bf16.gmra.mxu0 %v887
      %v2038 = vpop.f32.mrf.mxu0
      %v2039 = vadd.f32 %v1878, %v2038
      %v2040 = vpop.f32.mrf.mxu0
      %v2041 = vpop.f32.mrf.mxu0
      %v2042 = vadd.f32 %v1881, %v2041
      %v2043 = vpop.f32.mrf.mxu0
      %2044 = vmatprep.mubr.bf16.mxu0 %v896
      %2045 = vmatmul.mubr.bf16.gmra.mxu0 %v895
      %v2046 = vpop.f32.mrf.mxu0
      %v2047 = vadd.f32 %v1886, %v2046
      %v2048 = vpop.f32.mrf.mxu0
      %v2049 = vpop.f32.mrf.mxu0
      %v2050 = vadd.f32 %v1889, %v2049
      %v2051 = vpop.f32.mrf.mxu0
      %2052 = vmatprep.mubr.bf16.mxu0 %v904
      %2053 = vmatmul.mubr.bf16.gmra.mxu0 %v903
      %v2054 = vpop.f32.mrf.mxu0
      %v2055 = vadd.f32 %v1894, %v2054
      %v2056 = vpop.f32.mrf.mxu0
      %v2057 = vpop.f32.mrf.mxu0
      %v2058 = vadd.f32 %v1897, %v2057
      %v2059 = vpop.f32.mrf.mxu0
      %2060 = vmatprep.mubr.bf16.mxu0 %v912
      %2061 = vmatmul.mubr.bf16.gmra.mxu0 %v911
      %v2062 = vpop.f32.mrf.mxu0
      %v2063 = vadd.f32 %v1902, %v2062
      %v2064 = vpop.f32.mrf.mxu0
      %v2065 = vpop.f32.mrf.mxu0
      %v2066 = vadd.f32 %v1905, %v2065
      %v2067 = vpop.f32.mrf.mxu0
      %2068 = vmatprep.mubr.bf16.mxu0 %v920
      %2069 = vmatmul.mubr.bf16.gmra.mxu0 %v919
      %v2070 = vpop.f32.mrf.mxu0
      %v2071 = vadd.f32 %v1910, %v2070
      %v2072 = vpop.f32.mrf.mxu0
      %v2073 = vpop.f32.mrf.mxu0
      %v2074 = vadd.f32 %v1913, %v2073
      %v2075 = vpop.f32.mrf.mxu0
      %2076 = vmatprep.mubr.bf16.mxu0 %v928
      %2077 = vmatmul.mubr.bf16.gmra.mxu0 %v927
      %v2078 = vpop.f32.mrf.mxu0
      %v2079 = vadd.f32 %v1918, %v2078
      %v2080 = vpop.f32.mrf.mxu0
      %v2081 = vpop.f32.mrf.mxu0
      %v2082 = vadd.f32 %v1921, %v2081
      %v2083 = vpop.f32.mrf.mxu0
      %2084 = vmatprep.mubr.bf16.mxu0 %v936
      %2085 = vmatmul.mubr.bf16.gmra.mxu0 %v935
      %v2086 = vpop.f32.mrf.mxu0
      %v2087 = vadd.f32 %v1926, %v2086
      %v2088 = vpop.f32.mrf.mxu0
      %v2089 = vpop.f32.mrf.mxu0
      %v2090 = vadd.f32 %v1929, %v2089
      %v2091 = vpop.f32.mrf.mxu0
      %2092 = vmatprep.mubr.bf16.mxu0 %v944
      %2093 = vmatmul.mubr.bf16.gmra.mxu0 %v943
      %v2094 = vpop.f32.mrf.mxu0
      %v2095 = vadd.f32 %v1934, %v2094
      %v2096 = vpop.f32.mrf.mxu0
      %v2097 = vpop.f32.mrf.mxu0
      %v2098 = vadd.f32 %v1937, %v2097
      %v2099 = vpop.f32.mrf.mxu0
      %2100 = vmatprep.mubr.bf16.mxu0 %v952
      %2101 = vmatmul.mubr.bf16.gmra.mxu0 %v951
      %v2102 = vpop.f32.mrf.mxu0
      %v2103 = vadd.f32 %v1942, %v2102
      %v2104 = vpop.f32.mrf.mxu0
      %v2105 = vpop.f32.mrf.mxu0
      %v2106 = vadd.f32 %v1945, %v2105
      %v2107 = vpop.f32.mrf.mxu0
      %2108 = vdwg.mxu0
      %v2109 = vpack.c.bf16 %v1986, %v1983
      %v2110 = vpack.c.bf16 %v1994, %v1991
      %v2111 = vpack.c.bf16 %v2002, %v1999
      %v2112 = vpack.c.bf16 %v2010, %v2007
      %v2113 = vpack.c.bf16 %v2018, %v2015
      %v2114 = vpack.c.bf16 %v2026, %v2023
      %v2115 = vpack.c.bf16 %v2034, %v2031
      %v2116 = vpack.c.bf16 %v2042, %v2039
      %v2117 = vpack.c.bf16 %v2050, %v2047
      %v2118 = vpack.c.bf16 %v2058, %v2055
      %v2119 = vpack.c.bf16 %v2066, %v2063
      %v2120 = vpack.c.bf16 %v2074, %v2071
      %v2121 = vpack.c.bf16 %v2082, %v2079
      %v2122 = vpack.c.bf16 %v2090, %v2087
      %v2123 = vpack.c.bf16 %v2098, %v2095
      %v2124 = vpack.c.bf16 %v2106, %v2103
      %v2141 = vunpack.c.l.b16 %v2109
      %v2142 = vunpack.c.h.b16 %v2109
      %v2143 = vunpack.c.l.b16 %v2110
      %v2144 = vunpack.c.h.b16 %v2110
      %v2145 = vunpack.c.l.b16 %v2111
      %v2146 = vunpack.c.h.b16 %v2111
      %v2147 = vunpack.c.l.b16 %v2112
      %v2148 = vunpack.c.h.b16 %v2112
      %v2149 = vunpack.c.l.b16 %v2113
      %v2150 = vunpack.c.h.b16 %v2113
      %v2151 = vunpack.c.l.b16 %v2114
      %v2152 = vunpack.c.h.b16 %v2114
      %v2153 = vunpack.c.l.b16 %v2115
      %v2154 = vunpack.c.h.b16 %v2115
      %v2155 = vunpack.c.l.b16 %v2116
      %v2156 = vunpack.c.h.b16 %v2116
      %v2157 = vunpack.c.l.b16 %v2117
      %v2158 = vunpack.c.h.b16 %v2117
      %v2159 = vunpack.c.l.b16 %v2118
      %v2160 = vunpack.c.h.b16 %v2118
      %v2161 = vunpack.c.l.b16 %v2119
      %v2162 = vunpack.c.h.b16 %v2119
      %v2163 = vunpack.c.l.b16 %v2120
      %v2164 = vunpack.c.h.b16 %v2120
      %v2165 = vunpack.c.l.b16 %v2121
      %v2166 = vunpack.c.h.b16 %v2121
      %v2167 = vunpack.c.l.b16 %v2122
      %v2168 = vunpack.c.h.b16 %v2122
      %v2169 = vunpack.c.l.b16 %v2123
      %v2170 = vunpack.c.h.b16 %v2123
      %v2171 = vunpack.c.l.b16 %v2124
      %v2172 = vunpack.c.h.b16 %v2124
      %v2173 = vpack.c.b16 %v2141, %v2141
      %v2174 = vpack.c.b16 %v2142, %v2142
      %v2175 = vpack.c.b16 %v2143, %v2143
      %v2176 = vpack.c.b16 %v2144, %v2144
      %v2177 = vpack.c.b16 %v2145, %v2145
      %v2178 = vpack.c.b16 %v2146, %v2146
      %v2179 = vpack.c.b16 %v2147, %v2147
      %v2180 = vpack.c.b16 %v2148, %v2148
      %v2181 = vpack.c.b16 %v2149, %v2149
      %v2182 = vpack.c.b16 %v2150, %v2150
      %v2183 = vpack.c.b16 %v2151, %v2151
      %v2184 = vpack.c.b16 %v2152, %v2152
      %v2185 = vpack.c.b16 %v2153, %v2153
      %v2186 = vpack.c.b16 %v2154, %v2154
      %v2187 = vpack.c.b16 %v2155, %v2155
      %v2188 = vpack.c.b16 %v2156, %v2156
      %v2189 = vpack.c.b16 %v2157, %v2157
      %v2190 = vpack.c.b16 %v2158, %v2158
      %v2191 = vpack.c.b16 %v2159, %v2159
      %v2192 = vpack.c.b16 %v2160, %v2160
      %v2193 = vpack.c.b16 %v2161, %v2161
      %v2194 = vpack.c.b16 %v2162, %v2162
      %v2195 = vpack.c.b16 %v2163, %v2163
      %v2196 = vpack.c.b16 %v2164, %v2164
      %v2197 = vpack.c.b16 %v2165, %v2165
      %v2198 = vpack.c.b16 %v2166, %v2166
      %v2199 = vpack.c.b16 %v2167, %v2167
      %v2200 = vpack.c.b16 %v2168, %v2168
      %v2201 = vpack.c.b16 %v2169, %v2169
      %v2202 = vpack.c.b16 %v2170, %v2170
      %v2203 = vpack.c.b16 %v2171, %v2171
      %v2204 = vpack.c.b16 %v2172, %v2172
      %2237 = vst [vmem:[%s175] sm:$0xf] %v2173
      %2238 = vst [vmem:[%s175 + $0x4] sm:$0xf] %v2174
      %2239 = vst [vmem:[%s175 + $0x8] sm:$0xf] %v2175
      %2240 = vst [vmem:[%s175 + $0xc] sm:$0xf] %v2176
      %2241 = vst [vmem:[%s175 + $0x10] sm:$0xf] %v2177
      %2242 = vst [vmem:[%s175 + $0x14] sm:$0xf] %v2178
      %2243 = vst [vmem:[%s175 + $0x18] sm:$0xf] %v2179
      %2244 = vst [vmem:[%s175 + $0x1c] sm:$0xf] %v2180
      %2245 = vst [vmem:[%s175 + $0x20] sm:$0xf] %v2181
      %2246 = vst [vmem:[%s175 + $0x24] sm:$0xf] %v2182
      %2247 = vst [vmem:[%s175 + $0x28] sm:$0xf] %v2183
      %2248 = vst [vmem:[%s175 + $0x2c] sm:$0xf] %v2184
      %2249 = vst [vmem:[%s175 + $0x30] sm:$0xf] %v2185
      %2250 = vst [vmem:[%s175 + $0x34] sm:$0xf] %v2186
      %2251 = vst [vmem:[%s175 + $0x38] sm:$0xf] %v2187
      %2252 = vst [vmem:[%s175 + $0x3c] sm:$0xf] %v2188
      %2253 = vst [vmem:[%s175 + $0x40] sm:$0xf] %v2189
      %2254 = vst [vmem:[%s175 + $0x44] sm:$0xf] %v2190
      %2255 = vst [vmem:[%s175 + $0x48] sm:$0xf] %v2191
      %2256 = vst [vmem:[%s175 + $0x4c] sm:$0xf] %v2192
      %2257 = vst [vmem:[%s175 + $0x50] sm:$0xf] %v2193
      %2258 = vst [vmem:[%s175 + $0x54] sm:$0xf] %v2194
      %2259 = vst [vmem:[%s175 + $0x58] sm:$0xf] %v2195
      %2260 = vst [vmem:[%s175 + $0x5c] sm:$0xf] %v2196
      %2261 = vst [vmem:[%s175 + $0x60] sm:$0xf] %v2197
      %2262 = vst [vmem:[%s175 + $0x64] sm:$0xf] %v2198
      %2263 = vst [vmem:[%s175 + $0x68] sm:$0xf] %v2199
      %2264 = vst [vmem:[%s175 + $0x6c] sm:$0xf] %v2200
      %2265 = vst [vmem:[%s175 + $0x70] sm:$0xf] %v2201
      %2266 = vst [vmem:[%s175 + $0x74] sm:$0xf] %v2202
      %2267 = vst [vmem:[%s175 + $0x78] sm:$0xf] %v2203
      %2268 = vst [vmem:[%s175 + $0x7c] sm:$0xf] %v2204
      %s2269 = smul.u32 32, %s14
      %p2270 = scmp.lt.s32.totalorder %s2269, 63
      %s2271 = scalar_select %p2270, %s2269, 63
      %s2272 = smul.addr %s2271, 4
      %s2273 = scalar_lea.vmem %s3, %s2272
      // Predicated region
      $region33: #{resnet_classifier_celeba_forward.6} parent=31 // pred_check
        %p2274 = pneg %p100
      $region34: #{resnet_classifier_celeba_forward.6} parent=31 // pred_check_branch
        %2276 = sbr.rel (%p2274) target = $region36
      $region35: #{resnet_classifier_celeba_forward.6} parent=31 // pred_region
        %s2277 = smul.u32 32, %s14
      $region36: #{resnet_classifier_celeba_forward.6} parent=31 // pred_fallthru
        _
    $region32: #{resnet_classifier_celeba_forward.6} parent=5 // pred_fallthru
      _
    %p2278 = scmp.le.s32.totalorder 2, %s9
    // Predicated region
    $region37: #{resnet_classifier_celeba_forward.6} parent=5 // pred_check
      %p2279 = pneg %p2278
    $region38: #{resnet_classifier_celeba_forward.6} parent=5 // pred_check_branch
      %2281 = sbr.rel (%p2279) target = $region40
    $region39: #{resnet_classifier_celeba_forward.6} parent=5 // pred_region
      %s2282 = ssub.s32 %s9, 2
      // Predicated region
      $region41: #{resnet_classifier_celeba_forward.6} parent=39 // pred_check
        %p2283 = pneg %p106
      $region42: #{resnet_classifier_celeba_forward.6} parent=39 // pred_check_branch
        %2285 = sbr.rel (%p2283) target = $region44
      $region43: #{resnet_classifier_celeba_forward.6} parent=39 // pred_region
        %s2286 = smul.u32 32, %s15
        %p2287 = scmp.lt.s32.totalorder %s2286, 63
        %s2288 = scalar_select %p2287, %s2286, 63
        %s2289 = smul.addr %s2288, 4
        %s2290 = scalar_lea.vmem %s3, %s2289
      $region44: #{resnet_classifier_celeba_forward.6} parent=39 // pred_fallthru
        _
    $region40: #{resnet_classifier_celeba_forward.6} parent=5 // pred_fallthru
      _
  $region6: #{resnet_classifier_celeba_forward.6} parent=0 // loop_footer
    %s13 = sadd.s32 1, %s9
  $region7: #{resnet_classifier_celeba_forward.6} parent=0 // loop_footer_branch
    %8 = sbr.rel target = $region3
  $region8: #{resnet_classifier_celeba_forward.6} parent=0 // loop_exit
    _

// kernel: resnet_classifier_celeba_forward.7
$region0: #{resnet_classifier_celeba_forward.7}
  #allocation0 [shape = 'u32[]', space=smem, size = 0x4, offset = 0x4, fixed_abs, tag = 'smem constant byte address 0x4 - core index']
  #allocation1 [shape = 'u32[144,128]{1,0:T(1,128)}', space=vmem, size = 0x12000, scoped, tag = 'internal scratch']
  %s0 = inlined_call_operand.vmem [shape: bf16[128,1152], index: 0, kind: input, shape index: {}]
  %s1 = inlined_call_operand.vmem [shape: bf16[1152,128], index: 1, kind: input, shape index: {}]
  %s2 = inlined_call_operand.vmem [shape: f32[1,128], index: 2, kind: input, shape index: {}]
  %s3 = inlined_call_operand.vmem [shape: f32[128,128], index: 3, kind: output, shape index: {}]
  %s4 = sld [smem:[#allocation0]]
  $region22: #{resnet_classifier_celeba_forward.7} parent=0
    _
  %s6 = ssub.s32 1, %s4
  %s7 = scalar_select 0, %s6, %s4
  // Predicated region
  $region2: #{resnet_classifier_celeba_forward.7} parent=0 // pred_check
    _
  $region3: #{resnet_classifier_celeba_forward.7} parent=0 // pred_check_branch
    %9 = sbr.rel (0) target = $region5
  $region4: #{resnet_classifier_celeba_forward.7} parent=0 // pred_region
    _
  $region5: #{resnet_classifier_celeba_forward.7} parent=0 // pred_fallthru
    _
  // Predicated region
  $region6: #{resnet_classifier_celeba_forward.7} parent=0 // pred_check
    _
  $region7: #{resnet_classifier_celeba_forward.7} parent=0 // pred_check_branch
    %11 = sbr.rel (0) target = $region9
  $region8: #{resnet_classifier_celeba_forward.7} parent=0 // pred_region
    _
  $region9: #{resnet_classifier_celeba_forward.7} parent=0 // pred_fallthru
    _
  // Predicated region
  $region10: #{resnet_classifier_celeba_forward.7} parent=0 // pred_check
    _
  $region11: #{resnet_classifier_celeba_forward.7} parent=0 // pred_check_branch
    %13 = sbr.rel (0) target = $region13
  $region12: #{resnet_classifier_celeba_forward.7} parent=0 // pred_region
    _
  $region13: #{resnet_classifier_celeba_forward.7} parent=0 // pred_fallthru
    _
  %v15 = vld [vmem:[%s0] sm:$0xff]
  %v16 = vld [vmem:[%s0 + $0x8] sm:$0xff]
  %v17 = vld [vmem:[%s0 + $0x10] sm:$0xff]
  %v18 = vld [vmem:[%s0 + $0x18] sm:$0xff]
  %v19 = vld [vmem:[%s0 + $0x20] sm:$0xf]
  %v20 = vld [vmem:[%s0 + $0x24] sm:$0xff]
  %v21 = vld [vmem:[%s0 + $0x2c] sm:$0xff]
  %v22 = vld [vmem:[%s0 + $0x34] sm:$0xff]
  %v23 = vld [vmem:[%s0 + $0x3c] sm:$0xff]
  %v24 = vld [vmem:[%s0 + $0x44] sm:$0xf]
  %v25 = vld [vmem:[%s0 + $0x48] sm:$0xff]
  %v26 = vld [vmem:[%s0 + $0x50] sm:$0xff]
  %v27 = vld [vmem:[%s0 + $0x58] sm:$0xff]
  %v28 = vld [vmem:[%s0 + $0x60] sm:$0xff]
  %v29 = vld [vmem:[%s0 + $0x68] sm:$0xf]
  %v30 = vld [vmem:[%s0 + $0x6c] sm:$0xff]
  %v31 = vld [vmem:[%s0 + $0x74] sm:$0xff]
  %v32 = vld [vmem:[%s0 + $0x7c] sm:$0xff]
  %v33 = vld [vmem:[%s0 + $0x84] sm:$0xff]
  %v34 = vld [vmem:[%s0 + $0x8c] sm:$0xf]
  %v35 = vld [vmem:[%s0 + $0x90] sm:$0xff]
  %v36 = vld [vmem:[%s0 + $0x98] sm:$0xff]
  %v37 = vld [vmem:[%s0 + $0xa0] sm:$0xff]
  %v38 = vld [vmem:[%s0 + $0xa8] sm:$0xff]
  %v39 = vld [vmem:[%s0 + $0xb0] sm:$0xf]
  %v40 = vld [vmem:[%s0 + $0xb4] sm:$0xff]
  %v41 = vld [vmem:[%s0 + $0xbc] sm:$0xff]
  %v42 = vld [vmem:[%s0 + $0xc4] sm:$0xff]
  %v43 = vld [vmem:[%s0 + $0xcc] sm:$0xff]
  %v44 = vld [vmem:[%s0 + $0xd4] sm:$0xf]
  %v45 = vld [vmem:[%s0 + $0xd8] sm:$0xff]
  %v46 = vld [vmem:[%s0 + $0xe0] sm:$0xff]
  %v47 = vld [vmem:[%s0 + $0xe8] sm:$0xff]
  %v48 = vld [vmem:[%s0 + $0xf0] sm:$0xff]
  %v49 = vld [vmem:[%s0 + $0xf8] sm:$0xf]
  %v50 = vld [vmem:[%s0 + $0xfc] sm:$0xff]
  %v51 = vld [vmem:[%s0 + $0x104] sm:$0xff]
  %v52 = vld [vmem:[%s0 + $0x10c] sm:$0xff]
  %v53 = vld [vmem:[%s0 + $0x114] sm:$0xff]
  %v54 = vld [vmem:[%s0 + $0x11c] sm:$0xf]
  %v55 = vld [vmem:[%s0 + $0x120] sm:$0xff]
  %v56 = vld [vmem:[%s0 + $0x128] sm:$0xff]
  %v57 = vld [vmem:[%s0 + $0x130] sm:$0xff]
  %v58 = vld [vmem:[%s0 + $0x138] sm:$0xff]
  %v59 = vld [vmem:[%s0 + $0x140] sm:$0xf]
  %v60 = vld [vmem:[%s0 + $0x144] sm:$0xff]
  %v61 = vld [vmem:[%s0 + $0x14c] sm:$0xff]
  %v62 = vld [vmem:[%s0 + $0x154] sm:$0xff]
  %v63 = vld [vmem:[%s0 + $0x15c] sm:$0xff]
  %v64 = vld [vmem:[%s0 + $0x164] sm:$0xf]
  %v65 = vld [vmem:[%s0 + $0x168] sm:$0xff]
  %v66 = vld [vmem:[%s0 + $0x170] sm:$0xff]
  %v67 = vld [vmem:[%s0 + $0x178] sm:$0xff]
  %v68 = vld [vmem:[%s0 + $0x180] sm:$0xff]
  %v69 = vld [vmem:[%s0 + $0x188] sm:$0xf]
  %v70 = vld [vmem:[%s0 + $0x18c] sm:$0xff]
  %v71 = vld [vmem:[%s0 + $0x194] sm:$0xff]
  %v72 = vld [vmem:[%s0 + $0x19c] sm:$0xff]
  %v73 = vld [vmem:[%s0 + $0x1a4] sm:$0xff]
  %v74 = vld [vmem:[%s0 + $0x1ac] sm:$0xf]
  %v75 = vld [vmem:[%s0 + $0x1b0] sm:$0xff]
  %v76 = vld [vmem:[%s0 + $0x1b8] sm:$0xff]
  %v77 = vld [vmem:[%s0 + $0x1c0] sm:$0xff]
  %v78 = vld [vmem:[%s0 + $0x1c8] sm:$0xff]
  %v79 = vld [vmem:[%s0 + $0x1d0] sm:$0xf]
  %v80 = vld [vmem:[%s0 + $0x1d4] sm:$0xff]
  %v81 = vld [vmem:[%s0 + $0x1dc] sm:$0xff]
  %v82 = vld [vmem:[%s0 + $0x1e4] sm:$0xff]
  %v83 = vld [vmem:[%s0 + $0x1ec] sm:$0xff]
  %v84 = vld [vmem:[%s0 + $0x1f4] sm:$0xf]
  %v85 = vld [vmem:[%s0 + $0x1f8] sm:$0xff]
  %v86 = vld [vmem:[%s0 + $0x200] sm:$0xff]
  %v87 = vld [vmem:[%s0 + $0x208] sm:$0xff]
  %v88 = vld [vmem:[%s0 + $0x210] sm:$0xff]
  %v89 = vld [vmem:[%s0 + $0x218] sm:$0xf]
  %v90 = vld [vmem:[%s0 + $0x21c] sm:$0xff]
  %v91 = vld [vmem:[%s0 + $0x224] sm:$0xff]
  %v92 = vld [vmem:[%s0 + $0x22c] sm:$0xff]
  %v93 = vld [vmem:[%s0 + $0x234] sm:$0xff]
  %v94 = vld [vmem:[%s0 + $0x23c] sm:$0xf]
  %v95 = vld [vmem:[%s1] sm:$0xf]
  %v96 = vld [vmem:[%s1 + $0x4] sm:$0xf]
  %v97 = vld [vmem:[%s1 + $0x8] sm:$0xf]
  %v98 = vld [vmem:[%s1 + $0xc] sm:$0xf]
  %v99 = vld [vmem:[%s1 + $0x10] sm:$0xf]
  %v100 = vld [vmem:[%s1 + $0x14] sm:$0xf]
  %v101 = vld [vmem:[%s1 + $0x18] sm:$0xf]
  %v102 = vld [vmem:[%s1 + $0x1c] sm:$0xf]
  %v103 = vld [vmem:[%s1 + $0x20] sm:$0xf]
  %v104 = vld [vmem:[%s1 + $0x24] sm:$0xf]
  %v105 = vld [vmem:[%s1 + $0x28] sm:$0xf]
  %v106 = vld [vmem:[%s1 + $0x2c] sm:$0xf]
  %v107 = vld [vmem:[%s1 + $0x30] sm:$0xf]
  %v108 = vld [vmem:[%s1 + $0x34] sm:$0xf]
  %v109 = vld [vmem:[%s1 + $0x38] sm:$0xf]
  %v110 = vld [vmem:[%s1 + $0x3c] sm:$0xf]
  %v111 = vld [vmem:[%s1 + $0x40] sm:$0xf]
  %v112 = vld [vmem:[%s1 + $0x44] sm:$0xf]
  %v113 = vld [vmem:[%s1 + $0x48] sm:$0xf]
  %v114 = vld [vmem:[%s1 + $0x4c] sm:$0xf]
  %v115 = vld [vmem:[%s1 + $0x50] sm:$0xf]
  %v116 = vld [vmem:[%s1 + $0x54] sm:$0xf]
  %v117 = vld [vmem:[%s1 + $0x58] sm:$0xf]
  %v118 = vld [vmem:[%s1 + $0x5c] sm:$0xf]
  %v119 = vld [vmem:[%s1 + $0x60] sm:$0xf]
  %v120 = vld [vmem:[%s1 + $0x64] sm:$0xf]
  %v121 = vld [vmem:[%s1 + $0x68] sm:$0xf]
  %v122 = vld [vmem:[%s1 + $0x6c] sm:$0xf]
  %v123 = vld [vmem:[%s1 + $0x70] sm:$0xf]
  %v124 = vld [vmem:[%s1 + $0x74] sm:$0xf]
  %v125 = vld [vmem:[%s1 + $0x78] sm:$0xf]
  %v126 = vld [vmem:[%s1 + $0x7c] sm:$0xf]
  %v127 = vld [vmem:[%s1 + $0x80] sm:$0xf]
  %v128 = vld [vmem:[%s1 + $0x84] sm:$0xf]
  %v129 = vld [vmem:[%s1 + $0x88] sm:$0xf]
  %v130 = vld [vmem:[%s1 + $0x8c] sm:$0xf]
  %v131 = vld [vmem:[%s1 + $0x90] sm:$0xf]
  %v132 = vld [vmem:[%s1 + $0x94] sm:$0xf]
  %v133 = vld [vmem:[%s1 + $0x98] sm:$0xf]
  %v134 = vld [vmem:[%s1 + $0x9c] sm:$0xf]
  %v135 = vld [vmem:[%s1 + $0xa0] sm:$0xf]
  %v136 = vld [vmem:[%s1 + $0xa4] sm:$0xf]
  %v137 = vld [vmem:[%s1 + $0xa8] sm:$0xf]
  %v138 = vld [vmem:[%s1 + $0xac] sm:$0xf]
  %v139 = vld [vmem:[%s1 + $0xb0] sm:$0xf]
  %v140 = vld [vmem:[%s1 + $0xb4] sm:$0xf]
  %v141 = vld [vmem:[%s1 + $0xb8] sm:$0xf]
  %v142 = vld [vmem:[%s1 + $0xbc] sm:$0xf]
  %v143 = vld [vmem:[%s1 + $0xc0] sm:$0xf]
  %v144 = vld [vmem:[%s1 + $0xc4] sm:$0xf]
  %v145 = vld [vmem:[%s1 + $0xc8] sm:$0xf]
  %v146 = vld [vmem:[%s1 + $0xcc] sm:$0xf]
  %v147 = vld [vmem:[%s1 + $0xd0] sm:$0xf]
  %v148 = vld [vmem:[%s1 + $0xd4] sm:$0xf]
  %v149 = vld [vmem:[%s1 + $0xd8] sm:$0xf]
  %v150 = vld [vmem:[%s1 + $0xdc] sm:$0xf]
  %v151 = vld [vmem:[%s1 + $0xe0] sm:$0xf]
  %v152 = vld [vmem:[%s1 + $0xe4] sm:$0xf]
  %v153 = vld [vmem:[%s1 + $0xe8] sm:$0xf]
  %v154 = vld [vmem:[%s1 + $0xec] sm:$0xf]
  %v155 = vld [vmem:[%s1 + $0xf0] sm:$0xf]
  %v156 = vld [vmem:[%s1 + $0xf4] sm:$0xf]
  %v157 = vld [vmem:[%s1 + $0xf8] sm:$0xf]
  %v158 = vld [vmem:[%s1 + $0xfc] sm:$0xf]
  %v159 = vld [vmem:[%s1 + $0x100] sm:$0xf]
  %v160 = vld [vmem:[%s1 + $0x104] sm:$0xf]
  %v161 = vld [vmem:[%s1 + $0x108] sm:$0xf]
  %v162 = vld [vmem:[%s1 + $0x10c] sm:$0xf]
  %v163 = vld [vmem:[%s1 + $0x110] sm:$0xf]
  %v164 = vld [vmem:[%s1 + $0x114] sm:$0xf]
  %v165 = vld [vmem:[%s1 + $0x118] sm:$0xf]
  %v166 = vld [vmem:[%s1 + $0x11c] sm:$0xf]
  %v167 = vld [vmem:[%s1 + $0x120] sm:$0xf]
  %v168 = vld [vmem:[%s1 + $0x124] sm:$0xf]
  %v169 = vld [vmem:[%s1 + $0x128] sm:$0xf]
  %v170 = vld [vmem:[%s1 + $0x12c] sm:$0xf]
  %v171 = vld [vmem:[%s1 + $0x130] sm:$0xf]
  %v172 = vld [vmem:[%s1 + $0x134] sm:$0xf]
  %v173 = vld [vmem:[%s1 + $0x138] sm:$0xf]
  %v174 = vld [vmem:[%s1 + $0x13c] sm:$0xf]
  %v175 = vld [vmem:[%s1 + $0x140] sm:$0xf]
  %v176 = vld [vmem:[%s1 + $0x144] sm:$0xf]
  %v177 = vld [vmem:[%s1 + $0x148] sm:$0xf]
  %v178 = vld [vmem:[%s1 + $0x14c] sm:$0xf]
  %v179 = vld [vmem:[%s1 + $0x150] sm:$0xf]
  %v180 = vld [vmem:[%s1 + $0x154] sm:$0xf]
  %v181 = vld [vmem:[%s1 + $0x158] sm:$0xf]
  %v182 = vld [vmem:[%s1 + $0x15c] sm:$0xf]
  %v183 = vld [vmem:[%s1 + $0x160] sm:$0xf]
  %v184 = vld [vmem:[%s1 + $0x164] sm:$0xf]
  %v185 = vld [vmem:[%s1 + $0x168] sm:$0xf]
  %v186 = vld [vmem:[%s1 + $0x16c] sm:$0xf]
  %v187 = vld [vmem:[%s1 + $0x170] sm:$0xf]
  %v188 = vld [vmem:[%s1 + $0x174] sm:$0xf]
  %v189 = vld [vmem:[%s1 + $0x178] sm:$0xf]
  %v190 = vld [vmem:[%s1 + $0x17c] sm:$0xf]
  %v191 = vld [vmem:[%s1 + $0x180] sm:$0xf]
  %v192 = vld [vmem:[%s1 + $0x184] sm:$0xf]
  %v193 = vld [vmem:[%s1 + $0x188] sm:$0xf]
  %v194 = vld [vmem:[%s1 + $0x18c] sm:$0xf]
  %v195 = vld [vmem:[%s1 + $0x190] sm:$0xf]
  %v196 = vld [vmem:[%s1 + $0x194] sm:$0xf]
  %v197 = vld [vmem:[%s1 + $0x198] sm:$0xf]
  %v198 = vld [vmem:[%s1 + $0x19c] sm:$0xf]
  %v199 = vld [vmem:[%s1 + $0x1a0] sm:$0xf]
  %v200 = vld [vmem:[%s1 + $0x1a4] sm:$0xf]
  %v201 = vld [vmem:[%s1 + $0x1a8] sm:$0xf]
  %v202 = vld [vmem:[%s1 + $0x1ac] sm:$0xf]
  %v203 = vld [vmem:[%s1 + $0x1b0] sm:$0xf]
  %v204 = vld [vmem:[%s1 + $0x1b4] sm:$0xf]
  %v205 = vld [vmem:[%s1 + $0x1b8] sm:$0xf]
  %v206 = vld [vmem:[%s1 + $0x1bc] sm:$0xf]
  %v207 = vld [vmem:[%s1 + $0x1c0] sm:$0xf]
  %v208 = vld [vmem:[%s1 + $0x1c4] sm:$0xf]
  %v209 = vld [vmem:[%s1 + $0x1c8] sm:$0xf]
  %v210 = vld [vmem:[%s1 + $0x1cc] sm:$0xf]
  %v211 = vld [vmem:[%s1 + $0x1d0] sm:$0xf]
  %v212 = vld [vmem:[%s1 + $0x1d4] sm:$0xf]
  %v213 = vld [vmem:[%s1 + $0x1d8] sm:$0xf]
  %v214 = vld [vmem:[%s1 + $0x1dc] sm:$0xf]
  %v215 = vld [vmem:[%s1 + $0x1e0] sm:$0xf]
  %v216 = vld [vmem:[%s1 + $0x1e4] sm:$0xf]
  %v217 = vld [vmem:[%s1 + $0x1e8] sm:$0xf]
  %v218 = vld [vmem:[%s1 + $0x1ec] sm:$0xf]
  %v219 = vld [vmem:[%s1 + $0x1f0] sm:$0xf]
  %v220 = vld [vmem:[%s1 + $0x1f4] sm:$0xf]
  %v221 = vld [vmem:[%s1 + $0x1f8] sm:$0xf]
  %v222 = vld [vmem:[%s1 + $0x1fc] sm:$0xf]
  %v223 = vld [vmem:[%s1 + $0x200] sm:$0xf]
  %v224 = vld [vmem:[%s1 + $0x204] sm:$0xf]
  %v225 = vld [vmem:[%s1 + $0x208] sm:$0xf]
  %v226 = vld [vmem:[%s1 + $0x20c] sm:$0xf]
  %v227 = vld [vmem:[%s1 + $0x210] sm:$0xf]
  %v228 = vld [vmem:[%s1 + $0x214] sm:$0xf]
  %v229 = vld [vmem:[%s1 + $0x218] sm:$0xf]
  %v230 = vld [vmem:[%s1 + $0x21c] sm:$0xf]
  %v231 = vld [vmem:[%s1 + $0x220] sm:$0xf]
  %v232 = vld [vmem:[%s1 + $0x224] sm:$0xf]
  %v233 = vld [vmem:[%s1 + $0x228] sm:$0xf]
  %v234 = vld [vmem:[%s1 + $0x22c] sm:$0xf]
  %v235 = vld [vmem:[%s1 + $0x230] sm:$0xf]
  %v236 = vld [vmem:[%s1 + $0x234] sm:$0xf]
  %v237 = vld [vmem:[%s1 + $0x238] sm:$0xf]
  %v238 = vld [vmem:[%s1 + $0x23c] sm:$0xf]
  %v239 = vld [vmem:[%s2] sm:$0x1]
  %v241 = vlaneseq
  %v242 = vshrl.u32 %v241, 7
  %v243 = vsub.s32 0, %v242
  %v244 = vrot.slane %v239, %v243
  %v326 = vunpack.c.l.b16 %v15
  %v327 = vunpack.c.h.b16 %v15
  %v328 = vunpack.c.l.b16 %v16
  %v329 = vunpack.c.h.b16 %v16
  %v330 = vunpack.c.l.b16 %v17
  %v331 = vunpack.c.h.b16 %v17
  %v332 = vunpack.c.l.b16 %v18
  %v333 = vunpack.c.h.b16 %v18
  %v334 = vunpack.c.l.b16 %v19
  %v335 = vunpack.c.l.b16 %v20
  %v336 = vunpack.c.h.b16 %v20
  %v337 = vunpack.c.l.b16 %v21
  %v338 = vunpack.c.h.b16 %v21
  %v339 = vunpack.c.l.b16 %v22
  %v340 = vunpack.c.h.b16 %v22
  %v341 = vunpack.c.l.b16 %v23
  %v342 = vunpack.c.h.b16 %v23
  %v343 = vunpack.c.l.b16 %v24
  %v344 = vunpack.c.l.b16 %v25
  %v345 = vunpack.c.h.b16 %v25
  %v346 = vunpack.c.l.b16 %v26
  %v347 = vunpack.c.h.b16 %v26
  %v348 = vunpack.c.l.b16 %v27
  %v349 = vunpack.c.h.b16 %v27
  %v350 = vunpack.c.l.b16 %v28
  %v351 = vunpack.c.h.b16 %v28
  %v352 = vunpack.c.l.b16 %v29
  %v353 = vunpack.c.l.b16 %v30
  %v354 = vunpack.c.h.b16 %v30
  %v355 = vunpack.c.l.b16 %v31
  %v356 = vunpack.c.h.b16 %v31
  %v357 = vunpack.c.l.b16 %v32
  %v358 = vunpack.c.h.b16 %v32
  %v359 = vunpack.c.l.b16 %v33
  %v360 = vunpack.c.h.b16 %v33
  %v361 = vunpack.c.l.b16 %v34
  %v362 = vunpack.c.l.b16 %v35
  %v363 = vunpack.c.h.b16 %v35
  %v364 = vunpack.c.l.b16 %v36
  %v365 = vunpack.c.h.b16 %v36
  %v366 = vunpack.c.l.b16 %v37
  %v367 = vunpack.c.h.b16 %v37
  %v368 = vunpack.c.l.b16 %v38
  %v369 = vunpack.c.h.b16 %v38
  %v370 = vunpack.c.l.b16 %v39
  %v371 = vunpack.c.l.b16 %v40
  %v372 = vunpack.c.h.b16 %v40
  %v373 = vunpack.c.l.b16 %v41
  %v374 = vunpack.c.h.b16 %v41
  %v375 = vunpack.c.l.b16 %v42
  %v376 = vunpack.c.h.b16 %v42
  %v377 = vunpack.c.l.b16 %v43
  %v378 = vunpack.c.h.b16 %v43
  %v379 = vunpack.c.l.b16 %v44
  %v380 = vunpack.c.l.b16 %v45
  %v381 = vunpack.c.h.b16 %v45
  %v382 = vunpack.c.l.b16 %v46
  %v383 = vunpack.c.h.b16 %v46
  %v384 = vunpack.c.l.b16 %v47
  %v385 = vunpack.c.h.b16 %v47
  %v386 = vunpack.c.l.b16 %v48
  %v387 = vunpack.c.h.b16 %v48
  %v388 = vunpack.c.l.b16 %v49
  %v389 = vunpack.c.l.b16 %v50
  %v390 = vunpack.c.h.b16 %v50
  %v391 = vunpack.c.l.b16 %v51
  %v392 = vunpack.c.h.b16 %v51
  %v393 = vunpack.c.l.b16 %v52
  %v394 = vunpack.c.h.b16 %v52
  %v395 = vunpack.c.l.b16 %v53
  %v396 = vunpack.c.h.b16 %v53
  %v397 = vunpack.c.l.b16 %v54
  %v398 = vunpack.c.l.b16 %v55
  %v399 = vunpack.c.h.b16 %v55
  %v400 = vunpack.c.l.b16 %v56
  %v401 = vunpack.c.h.b16 %v56
  %v402 = vunpack.c.l.b16 %v57
  %v403 = vunpack.c.h.b16 %v57
  %v404 = vunpack.c.l.b16 %v58
  %v405 = vunpack.c.h.b16 %v58
  %v406 = vunpack.c.l.b16 %v59
  %v407 = vunpack.c.l.b16 %v60
  %v408 = vunpack.c.h.b16 %v60
  %v409 = vunpack.c.l.b16 %v61
  %v410 = vunpack.c.h.b16 %v61
  %v411 = vunpack.c.l.b16 %v62
  %v412 = vunpack.c.h.b16 %v62
  %v413 = vunpack.c.l.b16 %v63
  %v414 = vunpack.c.h.b16 %v63
  %v415 = vunpack.c.l.b16 %v64
  %v416 = vunpack.c.l.b16 %v65
  %v417 = vunpack.c.h.b16 %v65
  %v418 = vunpack.c.l.b16 %v66
  %v419 = vunpack.c.h.b16 %v66
  %v420 = vunpack.c.l.b16 %v67
  %v421 = vunpack.c.h.b16 %v67
  %v422 = vunpack.c.l.b16 %v68
  %v423 = vunpack.c.h.b16 %v68
  %v424 = vunpack.c.l.b16 %v69
  %v425 = vunpack.c.l.b16 %v70
  %v426 = vunpack.c.h.b16 %v70
  %v427 = vunpack.c.l.b16 %v71
  %v428 = vunpack.c.h.b16 %v71
  %v429 = vunpack.c.l.b16 %v72
  %v430 = vunpack.c.h.b16 %v72
  %v431 = vunpack.c.l.b16 %v73
  %v432 = vunpack.c.h.b16 %v73
  %v433 = vunpack.c.l.b16 %v74
  %v434 = vunpack.c.l.b16 %v75
  %v435 = vunpack.c.h.b16 %v75
  %v436 = vunpack.c.l.b16 %v76
  %v437 = vunpack.c.h.b16 %v76
  %v438 = vunpack.c.l.b16 %v77
  %v439 = vunpack.c.h.b16 %v77
  %v440 = vunpack.c.l.b16 %v78
  %v441 = vunpack.c.h.b16 %v78
  %v442 = vunpack.c.l.b16 %v79
  %v443 = vunpack.c.l.b16 %v80
  %v444 = vunpack.c.h.b16 %v80
  %v445 = vunpack.c.l.b16 %v81
  %v446 = vunpack.c.h.b16 %v81
  %v447 = vunpack.c.l.b16 %v82
  %v448 = vunpack.c.h.b16 %v82
  %v449 = vunpack.c.l.b16 %v83
  %v450 = vunpack.c.h.b16 %v83
  %v451 = vunpack.c.l.b16 %v84
  %v452 = vunpack.c.l.b16 %v85
  %v453 = vunpack.c.h.b16 %v85
  %v454 = vunpack.c.l.b16 %v86
  %v455 = vunpack.c.h.b16 %v86
  %v456 = vunpack.c.l.b16 %v87
  %v457 = vunpack.c.h.b16 %v87
  %v458 = vunpack.c.l.b16 %v88
  %v459 = vunpack.c.h.b16 %v88
  %v460 = vunpack.c.l.b16 %v89
  %v461 = vunpack.c.l.b16 %v90
  %v462 = vunpack.c.h.b16 %v90
  %v463 = vunpack.c.l.b16 %v91
  %v464 = vunpack.c.h.b16 %v91
  %v465 = vunpack.c.l.b16 %v92
  %v466 = vunpack.c.h.b16 %v92
  %v467 = vunpack.c.l.b16 %v93
  %v468 = vunpack.c.h.b16 %v93
  %v469 = vunpack.c.l.b16 %v94
  %v470 = vpack.c.b16 %v335, %v326
  %v471 = vpack.c.b16 %v336, %v327
  %v472 = vpack.c.b16 %v337, %v328
  %v473 = vpack.c.b16 %v338, %v329
  %v474 = vpack.c.b16 %v339, %v330
  %v475 = vpack.c.b16 %v340, %v331
  %v476 = vpack.c.b16 %v341, %v332
  %v477 = vpack.c.b16 %v342, %v333
  %v478 = vpack.c.b16 %v343, %v334
  %v479 = vpack.c.b16 %v353, %v344
  %v480 = vpack.c.b16 %v354, %v345
  %v481 = vpack.c.b16 %v355, %v346
  %v482 = vpack.c.b16 %v356, %v347
  %v483 = vpack.c.b16 %v357, %v348
  %v484 = vpack.c.b16 %v358, %v349
  %v485 = vpack.c.b16 %v359, %v350
  %v486 = vpack.c.b16 %v360, %v351
  %v487 = vpack.c.b16 %v361, %v352
  %v488 = vpack.c.b16 %v371, %v362
  %v489 = vpack.c.b16 %v372, %v363
  %v490 = vpack.c.b16 %v373, %v364
  %v491 = vpack.c.b16 %v374, %v365
  %v492 = vpack.c.b16 %v375, %v366
  %v493 = vpack.c.b16 %v376, %v367
  %v494 = vpack.c.b16 %v377, %v368
  %v495 = vpack.c.b16 %v378, %v369
  %v496 = vpack.c.b16 %v379, %v370
  %v497 = vpack.c.b16 %v389, %v380
  %v498 = vpack.c.b16 %v390, %v381
  %v499 = vpack.c.b16 %v391, %v382
  %v500 = vpack.c.b16 %v392, %v383
  %v501 = vpack.c.b16 %v393, %v384
  %v502 = vpack.c.b16 %v394, %v385
  %v503 = vpack.c.b16 %v395, %v386
  %v504 = vpack.c.b16 %v396, %v387
  %v505 = vpack.c.b16 %v397, %v388
  %v506 = vpack.c.b16 %v407, %v398
  %v507 = vpack.c.b16 %v408, %v399
  %v508 = vpack.c.b16 %v409, %v400
  %v509 = vpack.c.b16 %v410, %v401
  %v510 = vpack.c.b16 %v411, %v402
  %v511 = vpack.c.b16 %v412, %v403
  %v512 = vpack.c.b16 %v413, %v404
  %v513 = vpack.c.b16 %v414, %v405
  %v514 = vpack.c.b16 %v415, %v406
  %v515 = vpack.c.b16 %v425, %v416
  %v516 = vpack.c.b16 %v426, %v417
  %v517 = vpack.c.b16 %v427, %v418
  %v518 = vpack.c.b16 %v428, %v419
  %v519 = vpack.c.b16 %v429, %v420
  %v520 = vpack.c.b16 %v430, %v421
  %v521 = vpack.c.b16 %v431, %v422
  %v522 = vpack.c.b16 %v432, %v423
  %v523 = vpack.c.b16 %v433, %v424
  %v524 = vpack.c.b16 %v443, %v434
  %v525 = vpack.c.b16 %v444, %v435
  %v526 = vpack.c.b16 %v445, %v436
  %v527 = vpack.c.b16 %v446, %v437
  %v528 = vpack.c.b16 %v447, %v438
  %v529 = vpack.c.b16 %v448, %v439
  %v530 = vpack.c.b16 %v449, %v440
  %v531 = vpack.c.b16 %v450, %v441
  %v532 = vpack.c.b16 %v451, %v442
  %v533 = vpack.c.b16 %v461, %v452
  %v534 = vpack.c.b16 %v462, %v453
  %v535 = vpack.c.b16 %v463, %v454
  %v536 = vpack.c.b16 %v464, %v455
  %v537 = vpack.c.b16 %v465, %v456
  %v538 = vpack.c.b16 %v466, %v457
  %v539 = vpack.c.b16 %v467, %v458
  %v540 = vpack.c.b16 %v468, %v459
  %v541 = vpack.c.b16 %v469, %v460
  %v758 = vunpack.c.l.b16 %v95
  %v759 = vunpack.c.l.b16 %v96
  %v760 = vunpack.c.l.b16 %v97
  %v761 = vunpack.c.l.b16 %v98
  %v762 = vunpack.c.l.b16 %v99
  %v763 = vunpack.c.l.b16 %v100
  %v764 = vunpack.c.l.b16 %v101
  %v765 = vunpack.c.l.b16 %v102
  %v766 = vunpack.c.l.b16 %v103
  %v767 = vunpack.c.l.b16 %v104
  %v768 = vunpack.c.l.b16 %v105
  %v769 = vunpack.c.l.b16 %v106
  %v770 = vunpack.c.l.b16 %v107
  %v771 = vunpack.c.l.b16 %v108
  %v772 = vunpack.c.l.b16 %v109
  %v773 = vunpack.c.l.b16 %v110
  %v774 = vunpack.c.l.b16 %v111
  %v775 = vunpack.c.l.b16 %v112
  %v776 = vunpack.c.l.b16 %v113
  %v777 = vunpack.c.l.b16 %v114
  %v778 = vunpack.c.l.b16 %v115
  %v779 = vunpack.c.l.b16 %v116
  %v780 = vunpack.c.l.b16 %v117
  %v781 = vunpack.c.l.b16 %v118
  %v782 = vunpack.c.l.b16 %v119
  %v783 = vunpack.c.l.b16 %v120
  %v784 = vunpack.c.l.b16 %v121
  %v785 = vunpack.c.l.b16 %v122
  %v786 = vunpack.c.l.b16 %v123
  %v787 = vunpack.c.l.b16 %v124
  %v788 = vunpack.c.l.b16 %v125
  %v789 = vunpack.c.l.b16 %v126
  %v790 = vunpack.c.l.b16 %v127
  %v791 = vunpack.c.l.b16 %v128
  %v792 = vunpack.c.l.b16 %v129
  %v793 = vunpack.c.l.b16 %v130
  %v794 = vunpack.c.l.b16 %v131
  %v795 = vunpack.c.l.b16 %v132
  %v796 = vunpack.c.l.b16 %v133
  %v797 = vunpack.c.l.b16 %v134
  %v798 = vunpack.c.l.b16 %v135
  %v799 = vunpack.c.l.b16 %v136
  %v800 = vunpack.c.l.b16 %v137
  %v801 = vunpack.c.l.b16 %v138
  %v802 = vunpack.c.l.b16 %v139
  %v803 = vunpack.c.l.b16 %v140
  %v804 = vunpack.c.l.b16 %v141
  %v805 = vunpack.c.l.b16 %v142
  %v806 = vunpack.c.l.b16 %v143
  %v807 = vunpack.c.l.b16 %v144
  %v808 = vunpack.c.l.b16 %v145
  %v809 = vunpack.c.l.b16 %v146
  %v810 = vunpack.c.l.b16 %v147
  %v811 = vunpack.c.l.b16 %v148
  %v812 = vunpack.c.l.b16 %v149
  %v813 = vunpack.c.l.b16 %v150
  %v814 = vunpack.c.l.b16 %v151
  %v815 = vunpack.c.l.b16 %v152
  %v816 = vunpack.c.l.b16 %v153
  %v817 = vunpack.c.l.b16 %v154
  %v818 = vunpack.c.l.b16 %v155
  %v819 = vunpack.c.l.b16 %v156
  %v820 = vunpack.c.l.b16 %v157
  %v821 = vunpack.c.l.b16 %v158
  %v822 = vunpack.c.l.b16 %v159
  %v823 = vunpack.c.l.b16 %v160
  %v824 = vunpack.c.l.b16 %v161
  %v825 = vunpack.c.l.b16 %v162
  %v826 = vunpack.c.l.b16 %v163
  %v827 = vunpack.c.l.b16 %v164
  %v828 = vunpack.c.l.b16 %v165
  %v829 = vunpack.c.l.b16 %v166
  %v830 = vunpack.c.l.b16 %v167
  %v831 = vunpack.c.l.b16 %v168
  %v832 = vunpack.c.l.b16 %v169
  %v833 = vunpack.c.l.b16 %v170
  %v834 = vunpack.c.l.b16 %v171
  %v835 = vunpack.c.l.b16 %v172
  %v836 = vunpack.c.l.b16 %v173
  %v837 = vunpack.c.l.b16 %v174
  %v838 = vunpack.c.l.b16 %v175
  %v839 = vunpack.c.l.b16 %v176
  %v840 = vunpack.c.l.b16 %v177
  %v841 = vunpack.c.l.b16 %v178
  %v842 = vunpack.c.l.b16 %v179
  %v843 = vunpack.c.l.b16 %v180
  %v844 = vunpack.c.l.b16 %v181
  %v845 = vunpack.c.l.b16 %v182
  %v846 = vunpack.c.l.b16 %v183
  %v847 = vunpack.c.l.b16 %v184
  %v848 = vunpack.c.l.b16 %v185
  %v849 = vunpack.c.l.b16 %v186
  %v850 = vunpack.c.l.b16 %v187
  %v851 = vunpack.c.l.b16 %v188
  %v852 = vunpack.c.l.b16 %v189
  %v853 = vunpack.c.l.b16 %v190
  %v854 = vunpack.c.l.b16 %v191
  %v855 = vunpack.c.l.b16 %v192
  %v856 = vunpack.c.l.b16 %v193
  %v857 = vunpack.c.l.b16 %v194
  %v858 = vunpack.c.l.b16 %v195
  %v859 = vunpack.c.l.b16 %v196
  %v860 = vunpack.c.l.b16 %v197
  %v861 = vunpack.c.l.b16 %v198
  %v862 = vunpack.c.l.b16 %v199
  %v863 = vunpack.c.l.b16 %v200
  %v864 = vunpack.c.l.b16 %v201
  %v865 = vunpack.c.l.b16 %v202
  %v866 = vunpack.c.l.b16 %v203
  %v867 = vunpack.c.l.b16 %v204
  %v868 = vunpack.c.l.b16 %v205
  %v869 = vunpack.c.l.b16 %v206
  %v870 = vunpack.c.l.b16 %v207
  %v871 = vunpack.c.l.b16 %v208
  %v872 = vunpack.c.l.b16 %v209
  %v873 = vunpack.c.l.b16 %v210
  %v874 = vunpack.c.l.b16 %v211
  %v875 = vunpack.c.l.b16 %v212
  %v876 = vunpack.c.l.b16 %v213
  %v877 = vunpack.c.l.b16 %v214
  %v878 = vunpack.c.l.b16 %v215
  %v879 = vunpack.c.l.b16 %v216
  %v880 = vunpack.c.l.b16 %v217
  %v881 = vunpack.c.l.b16 %v218
  %v882 = vunpack.c.l.b16 %v219
  %v883 = vunpack.c.l.b16 %v220
  %v884 = vunpack.c.l.b16 %v221
  %v885 = vunpack.c.l.b16 %v222
  %v886 = vunpack.c.l.b16 %v223
  %v887 = vunpack.c.l.b16 %v224
  %v888 = vunpack.c.l.b16 %v225
  %v889 = vunpack.c.l.b16 %v226
  %v890 = vunpack.c.l.b16 %v227
  %v891 = vunpack.c.l.b16 %v228
  %v892 = vunpack.c.l.b16 %v229
  %v893 = vunpack.c.l.b16 %v230
  %v894 = vunpack.c.l.b16 %v231
  %v895 = vunpack.c.l.b16 %v232
  %v896 = vunpack.c.l.b16 %v233
  %v897 = vunpack.c.l.b16 %v234
  %v898 = vunpack.c.l.b16 %v235
  %v899 = vunpack.c.l.b16 %v236
  %v900 = vunpack.c.l.b16 %v237
  %v901 = vunpack.c.l.b16 %v238
  %v902 = vpack.c.b16 %v759, %v758
  %v903 = vpack.c.b16 %v761, %v760
  %v904 = vpack.c.b16 %v763, %v762
  %v905 = vpack.c.b16 %v765, %v764
  %v906 = vpack.c.b16 %v767, %v766
  %v907 = vpack.c.b16 %v769, %v768
  %v908 = vpack.c.b16 %v771, %v770
  %v909 = vpack.c.b16 %v773, %v772
  %v910 = vpack.c.b16 %v775, %v774
  %v911 = vpack.c.b16 %v777, %v776
  %v912 = vpack.c.b16 %v779, %v778
  %v913 = vpack.c.b16 %v781, %v780
  %v914 = vpack.c.b16 %v783, %v782
  %v915 = vpack.c.b16 %v785, %v784
  %v916 = vpack.c.b16 %v787, %v786
  %v917 = vpack.c.b16 %v789, %v788
  %v918 = vpack.c.b16 %v791, %v790
  %v919 = vpack.c.b16 %v793, %v792
  %v920 = vpack.c.b16 %v795, %v794
  %v921 = vpack.c.b16 %v797, %v796
  %v922 = vpack.c.b16 %v799, %v798
  %v923 = vpack.c.b16 %v801, %v800
  %v924 = vpack.c.b16 %v803, %v802
  %v925 = vpack.c.b16 %v805, %v804
  %v926 = vpack.c.b16 %v807, %v806
  %v927 = vpack.c.b16 %v809, %v808
  %v928 = vpack.c.b16 %v811, %v810
  %v929 = vpack.c.b16 %v813, %v812
  %v930 = vpack.c.b16 %v815, %v814
  %v931 = vpack.c.b16 %v817, %v816
  %v932 = vpack.c.b16 %v819, %v818
  %v933 = vpack.c.b16 %v821, %v820
  %v934 = vpack.c.b16 %v823, %v822
  %v935 = vpack.c.b16 %v825, %v824
  %v936 = vpack.c.b16 %v827, %v826
  %v937 = vpack.c.b16 %v829, %v828
  %v938 = vpack.c.b16 %v831, %v830
  %v939 = vpack.c.b16 %v833, %v832
  %v940 = vpack.c.b16 %v835, %v834
  %v941 = vpack.c.b16 %v837, %v836
  %v942 = vpack.c.b16 %v839, %v838
  %v943 = vpack.c.b16 %v841, %v840
  %v944 = vpack.c.b16 %v843, %v842
  %v945 = vpack.c.b16 %v845, %v844
  %v946 = vpack.c.b16 %v847, %v846
  %v947 = vpack.c.b16 %v849, %v848
  %v948 = vpack.c.b16 %v851, %v850
  %v949 = vpack.c.b16 %v853, %v852
  %v950 = vpack.c.b16 %v855, %v854
  %v951 = vpack.c.b16 %v857, %v856
  %v952 = vpack.c.b16 %v859, %v858
  %v953 = vpack.c.b16 %v861, %v860
  %v954 = vpack.c.b16 %v863, %v862
  %v955 = vpack.c.b16 %v865, %v864
  %v956 = vpack.c.b16 %v867, %v866
  %v957 = vpack.c.b16 %v869, %v868
  %v958 = vpack.c.b16 %v871, %v870
  %v959 = vpack.c.b16 %v873, %v872
  %v960 = vpack.c.b16 %v875, %v874
  %v961 = vpack.c.b16 %v877, %v876
  %v962 = vpack.c.b16 %v879, %v878
  %v963 = vpack.c.b16 %v881, %v880
  %v964 = vpack.c.b16 %v883, %v882
  %v965 = vpack.c.b16 %v885, %v884
  %v966 = vpack.c.b16 %v887, %v886
  %v967 = vpack.c.b16 %v889, %v888
  %v968 = vpack.c.b16 %v891, %v890
  %v969 = vpack.c.b16 %v893, %v892
  %v970 = vpack.c.b16 %v895, %v894
  %v971 = vpack.c.b16 %v897, %v896
  %v972 = vpack.c.b16 %v899, %v898
  %v973 = vpack.c.b16 %v901, %v900
  %1046 = vmatprep.subr.bf16.mxu0 0
  %1047 = vmatpush1.bf16.msra.mxu0 %v909
  %1048 = vmatprep.subr.bf16.mxu0 0
  %1049 = vmatpush1.bf16.msra.mxu0 %v908
  %1050 = vmatprep.subr.bf16.mxu0 0
  %1051 = vmatpush1.bf16.msra.mxu0 %v907
  %1052 = vmatprep.subr.bf16.mxu0 0
  %1053 = vmatpush1.bf16.msra.mxu0 %v906
  %1054 = vmatprep.subr.bf16.mxu0 0
  %1055 = vmatpush1.bf16.msra.mxu0 %v905
  %1056 = vmatprep.subr.bf16.mxu0 0
  %1057 = vmatpush1.bf16.msra.mxu0 %v904
  %1058 = vmatprep.subr.bf16.mxu0 0
  %1059 = vmatpush1.bf16.msra.mxu0 %v903
  %1060 = vmatprep.subr.bf16.mxu0 0
  %1061 = vmatpush1.bf16.msra.mxu0 %v902
  %1062 = vmatprep.subr.bf16.mxu0 0
  %1063 = vmatpush2.bf16.msra.mxu0 %v917
  %1064 = vmatprep.subr.bf16.mxu0 0
  %1065 = vmatpush2.bf16.msra.mxu0 %v916
  %1066 = vmatprep.subr.bf16.mxu0 0
  %1067 = vmatpush2.bf16.msra.mxu0 %v915
  %1068 = vmatprep.subr.bf16.mxu0 0
  %1069 = vmatpush2.bf16.msra.mxu0 %v914
  %1070 = vmatprep.subr.bf16.mxu0 0
  %1071 = vmatpush2.bf16.msra.mxu0 %v913
  %1072 = vmatprep.subr.bf16.mxu0 0
  %1073 = vmatpush2.bf16.msra.mxu0 %v912
  %1074 = vmatprep.subr.bf16.mxu0 0
  %1075 = vmatpush2.bf16.msra.mxu0 %v911
  %1076 = vmatprep.subr.bf16.mxu0 0
  %1077 = vmatpush2.bf16.msra.mxu0 %v910
  %1078 = vmatprep.mubr.bf16.mxu0 %v471
  %1079 = vmatmul.mubr.bf16.gmra.mxu0 %v470
  %v1080 = vpop.f32.mrf.mxu0
  %v1081 = vadd.f32 %v244, %v1080
  %v1082 = vpop.f32.mrf.mxu0
  %v1083 = vpop.f32.mrf.mxu0
  %v1084 = vadd.f32 %v244, %v1083
  %v1085 = vpop.f32.mrf.mxu0
  %1086 = vmatprep.mubr.bf16.mxu0 %v480
  %1087 = vmatmul.mubr.bf16.gmra.mxu0 %v479
  %v1088 = vpop.f32.mrf.mxu0
  %v1089 = vadd.f32 %v244, %v1088
  %v1090 = vpop.f32.mrf.mxu0
  %v1091 = vpop.f32.mrf.mxu0
  %v1092 = vadd.f32 %v244, %v1091
  %v1093 = vpop.f32.mrf.mxu0
  %1094 = vmatprep.mubr.bf16.mxu0 %v489
  %1095 = vmatmul.mubr.bf16.gmra.mxu0 %v488
  %v1096 = vpop.f32.mrf.mxu0
  %v1097 = vadd.f32 %v244, %v1096
  %v1098 = vpop.f32.mrf.mxu0
  %v1099 = vpop.f32.mrf.mxu0
  %v1100 = vadd.f32 %v244, %v1099
  %v1101 = vpop.f32.mrf.mxu0
  %1102 = vmatprep.mubr.bf16.mxu0 %v498
  %1103 = vmatmul.mubr.bf16.gmra.mxu0 %v497
  %v1104 = vpop.f32.mrf.mxu0
  %v1105 = vadd.f32 %v244, %v1104
  %v1106 = vpop.f32.mrf.mxu0
  %v1107 = vpop.f32.mrf.mxu0
  %v1108 = vadd.f32 %v244, %v1107
  %v1109 = vpop.f32.mrf.mxu0
  %1110 = vmatprep.mubr.bf16.mxu0 %v507
  %1111 = vmatmul.mubr.bf16.gmra.mxu0 %v506
  %v1112 = vpop.f32.mrf.mxu0
  %v1113 = vadd.f32 %v244, %v1112
  %v1114 = vpop.f32.mrf.mxu0
  %v1115 = vpop.f32.mrf.mxu0
  %v1116 = vadd.f32 %v244, %v1115
  %v1117 = vpop.f32.mrf.mxu0
  %1118 = vmatprep.mubr.bf16.mxu0 %v516
  %1119 = vmatmul.mubr.bf16.gmra.mxu0 %v515
  %v1120 = vpop.f32.mrf.mxu0
  %v1121 = vadd.f32 %v244, %v1120
  %v1122 = vpop.f32.mrf.mxu0
  %v1123 = vpop.f32.mrf.mxu0
  %v1124 = vadd.f32 %v244, %v1123
  %v1125 = vpop.f32.mrf.mxu0
  %1126 = vmatprep.mubr.bf16.mxu0 %v525
  %1127 = vmatmul.mubr.bf16.gmra.mxu0 %v524
  %v1128 = vpop.f32.mrf.mxu0
  %v1129 = vadd.f32 %v244, %v1128
  %v1130 = vpop.f32.mrf.mxu0
  %v1131 = vpop.f32.mrf.mxu0
  %v1132 = vadd.f32 %v244, %v1131
  %v1133 = vpop.f32.mrf.mxu0
  %1134 = vmatprep.mubr.bf16.mxu0 %v534
  %1135 = vmatmul.mubr.bf16.gmra.mxu0 %v533
  %v1136 = vpop.f32.mrf.mxu0
  %v1137 = vadd.f32 %v244, %v1136
  %v1138 = vpop.f32.mrf.mxu0
  %v1139 = vpop.f32.mrf.mxu0
  %v1140 = vadd.f32 %v244, %v1139
  %v1141 = vpop.f32.mrf.mxu0
  %1142 = vdwg.mxu0
  %1143 = vmatprep.subr.bf16.mxu0 0
  %1144 = vmatpush1.bf16.msra.mxu0 %v925
  %1145 = vmatprep.subr.bf16.mxu0 0
  %1146 = vmatpush1.bf16.msra.mxu0 %v924
  %1147 = vmatprep.subr.bf16.mxu0 0
  %1148 = vmatpush1.bf16.msra.mxu0 %v923
  %1149 = vmatprep.subr.bf16.mxu0 0
  %1150 = vmatpush1.bf16.msra.mxu0 %v922
  %1151 = vmatprep.subr.bf16.mxu0 0
  %1152 = vmatpush1.bf16.msra.mxu0 %v921
  %1153 = vmatprep.subr.bf16.mxu0 0
  %1154 = vmatpush1.bf16.msra.mxu0 %v920
  %1155 = vmatprep.subr.bf16.mxu0 0
  %1156 = vmatpush1.bf16.msra.mxu0 %v919
  %1157 = vmatprep.subr.bf16.mxu0 0
  %1158 = vmatpush1.bf16.msra.mxu0 %v918
  %1159 = vmatprep.subr.bf16.mxu0 0
  %1160 = vmatpush2.bf16.msra.mxu0 %v933
  %1161 = vmatprep.subr.bf16.mxu0 0
  %1162 = vmatpush2.bf16.msra.mxu0 %v932
  %1163 = vmatprep.subr.bf16.mxu0 0
  %1164 = vmatpush2.bf16.msra.mxu0 %v931
  %1165 = vmatprep.subr.bf16.mxu0 0
  %1166 = vmatpush2.bf16.msra.mxu0 %v930
  %1167 = vmatprep.subr.bf16.mxu0 0
  %1168 = vmatpush2.bf16.msra.mxu0 %v929
  %1169 = vmatprep.subr.bf16.mxu0 0
  %1170 = vmatpush2.bf16.msra.mxu0 %v928
  %1171 = vmatprep.subr.bf16.mxu0 0
  %1172 = vmatpush2.bf16.msra.mxu0 %v927
  %1173 = vmatprep.subr.bf16.mxu0 0
  %1174 = vmatpush2.bf16.msra.mxu0 %v926
  %1175 = vmatprep.mubr.bf16.mxu0 %v473
  %1176 = vmatmul.mubr.bf16.gmra.mxu0 %v472
  %v1177 = vpop.f32.mrf.mxu0
  %v1178 = vadd.f32 %v1081, %v1177
  %v1179 = vpop.f32.mrf.mxu0
  %v1180 = vpop.f32.mrf.mxu0
  %v1181 = vadd.f32 %v1084, %v1180
  %v1182 = vpop.f32.mrf.mxu0
  %1183 = vmatprep.mubr.bf16.mxu0 %v482
  %1184 = vmatmul.mubr.bf16.gmra.mxu0 %v481
  %v1185 = vpop.f32.mrf.mxu0
  %v1186 = vadd.f32 %v1089, %v1185
  %v1187 = vpop.f32.mrf.mxu0
  %v1188 = vpop.f32.mrf.mxu0
  %v1189 = vadd.f32 %v1092, %v1188
  %v1190 = vpop.f32.mrf.mxu0
  %1191 = vmatprep.mubr.bf16.mxu0 %v491
  %1192 = vmatmul.mubr.bf16.gmra.mxu0 %v490
  %v1193 = vpop.f32.mrf.mxu0
  %v1194 = vadd.f32 %v1097, %v1193
  %v1195 = vpop.f32.mrf.mxu0
  %v1196 = vpop.f32.mrf.mxu0
  %v1197 = vadd.f32 %v1100, %v1196
  %v1198 = vpop.f32.mrf.mxu0
  %1199 = vmatprep.mubr.bf16.mxu0 %v500
  %1200 = vmatmul.mubr.bf16.gmra.mxu0 %v499
  %v1201 = vpop.f32.mrf.mxu0
  %v1202 = vadd.f32 %v1105, %v1201
  %v1203 = vpop.f32.mrf.mxu0
  %v1204 = vpop.f32.mrf.mxu0
  %v1205 = vadd.f32 %v1108, %v1204
  %v1206 = vpop.f32.mrf.mxu0
  %1207 = vmatprep.mubr.bf16.mxu0 %v509
  %1208 = vmatmul.mubr.bf16.gmra.mxu0 %v508
  %v1209 = vpop.f32.mrf.mxu0
  %v1210 = vadd.f32 %v1113, %v1209
  %v1211 = vpop.f32.mrf.mxu0
  %v1212 = vpop.f32.mrf.mxu0
  %v1213 = vadd.f32 %v1116, %v1212
  %v1214 = vpop.f32.mrf.mxu0
  %1215 = vmatprep.mubr.bf16.mxu0 %v518
  %1216 = vmatmul.mubr.bf16.gmra.mxu0 %v517
  %v1217 = vpop.f32.mrf.mxu0
  %v1218 = vadd.f32 %v1121, %v1217
  %v1219 = vpop.f32.mrf.mxu0
  %v1220 = vpop.f32.mrf.mxu0
  %v1221 = vadd.f32 %v1124, %v1220
  %v1222 = vpop.f32.mrf.mxu0
  %1223 = vmatprep.mubr.bf16.mxu0 %v527
  %1224 = vmatmul.mubr.bf16.gmra.mxu0 %v526
  %v1225 = vpop.f32.mrf.mxu0
  %v1226 = vadd.f32 %v1129, %v1225
  %v1227 = vpop.f32.mrf.mxu0
  %v1228 = vpop.f32.mrf.mxu0
  %v1229 = vadd.f32 %v1132, %v1228
  %v1230 = vpop.f32.mrf.mxu0
  %1231 = vmatprep.mubr.bf16.mxu0 %v536
  %1232 = vmatmul.mubr.bf16.gmra.mxu0 %v535
  %v1233 = vpop.f32.mrf.mxu0
  %v1234 = vadd.f32 %v1137, %v1233
  %v1235 = vpop.f32.mrf.mxu0
  %v1236 = vpop.f32.mrf.mxu0
  %v1237 = vadd.f32 %v1140, %v1236
  %v1238 = vpop.f32.mrf.mxu0
  %1239 = vdwg.mxu0
  %1240 = vmatprep.subr.bf16.mxu0 0
  %1241 = vmatpush1.bf16.msra.mxu0 %v941
  %1242 = vmatprep.subr.bf16.mxu0 0
  %1243 = vmatpush1.bf16.msra.mxu0 %v940
  %1244 = vmatprep.subr.bf16.mxu0 0
  %1245 = vmatpush1.bf16.msra.mxu0 %v939
  %1246 = vmatprep.subr.bf16.mxu0 0
  %1247 = vmatpush1.bf16.msra.mxu0 %v938
  %1248 = vmatprep.subr.bf16.mxu0 0
  %1249 = vmatpush1.bf16.msra.mxu0 %v937
  %1250 = vmatprep.subr.bf16.mxu0 0
  %1251 = vmatpush1.bf16.msra.mxu0 %v936
  %1252 = vmatprep.subr.bf16.mxu0 0
  %1253 = vmatpush1.bf16.msra.mxu0 %v935
  %1254 = vmatprep.subr.bf16.mxu0 0
  %1255 = vmatpush1.bf16.msra.mxu0 %v934
  %1256 = vmatprep.subr.bf16.mxu0 0
  %1257 = vmatpush2.bf16.msra.mxu0 %v949
  %1258 = vmatprep.subr.bf16.mxu0 0
  %1259 = vmatpush2.bf16.msra.mxu0 %v948
  %1260 = vmatprep.subr.bf16.mxu0 0
  %1261 = vmatpush2.bf16.msra.mxu0 %v947
  %1262 = vmatprep.subr.bf16.mxu0 0
  %1263 = vmatpush2.bf16.msra.mxu0 %v946
  %1264 = vmatprep.subr.bf16.mxu0 0
  %1265 = vmatpush2.bf16.msra.mxu0 %v945
  %1266 = vmatprep.subr.bf16.mxu0 0
  %1267 = vmatpush2.bf16.msra.mxu0 %v944
  %1268 = vmatprep.subr.bf16.mxu0 0
  %1269 = vmatpush2.bf16.msra.mxu0 %v943
  %1270 = vmatprep.subr.bf16.mxu0 0
  %1271 = vmatpush2.bf16.msra.mxu0 %v942
  %1272 = vmatprep.mubr.bf16.mxu0 %v475
  %1273 = vmatmul.mubr.bf16.gmra.mxu0 %v474
  %v1274 = vpop.f32.mrf.mxu0
  %v1275 = vadd.f32 %v1178, %v1274
  %v1276 = vpop.f32.mrf.mxu0
  %v1277 = vpop.f32.mrf.mxu0
  %v1278 = vadd.f32 %v1181, %v1277
  %v1279 = vpop.f32.mrf.mxu0
  %1280 = vmatprep.mubr.bf16.mxu0 %v484
  %1281 = vmatmul.mubr.bf16.gmra.mxu0 %v483
  %v1282 = vpop.f32.mrf.mxu0
  %v1283 = vadd.f32 %v1186, %v1282
  %v1284 = vpop.f32.mrf.mxu0
  %v1285 = vpop.f32.mrf.mxu0
  %v1286 = vadd.f32 %v1189, %v1285
  %v1287 = vpop.f32.mrf.mxu0
  %1288 = vmatprep.mubr.bf16.mxu0 %v493
  %1289 = vmatmul.mubr.bf16.gmra.mxu0 %v492
  %v1290 = vpop.f32.mrf.mxu0
  %v1291 = vadd.f32 %v1194, %v1290
  %v1292 = vpop.f32.mrf.mxu0
  %v1293 = vpop.f32.mrf.mxu0
  %v1294 = vadd.f32 %v1197, %v1293
  %v1295 = vpop.f32.mrf.mxu0
  %1296 = vmatprep.mubr.bf16.mxu0 %v502
  %1297 = vmatmul.mubr.bf16.gmra.mxu0 %v501
  %v1298 = vpop.f32.mrf.mxu0
  %v1299 = vadd.f32 %v1202, %v1298
  %v1300 = vpop.f32.mrf.mxu0
  %v1301 = vpop.f32.mrf.mxu0
  %v1302 = vadd.f32 %v1205, %v1301
  %v1303 = vpop.f32.mrf.mxu0
  %1304 = vmatprep.mubr.bf16.mxu0 %v511
  %1305 = vmatmul.mubr.bf16.gmra.mxu0 %v510
  %v1306 = vpop.f32.mrf.mxu0
  %v1307 = vadd.f32 %v1210, %v1306
  %v1308 = vpop.f32.mrf.mxu0
  %v1309 = vpop.f32.mrf.mxu0
  %v1310 = vadd.f32 %v1213, %v1309
  %v1311 = vpop.f32.mrf.mxu0
  %1312 = vmatprep.mubr.bf16.mxu0 %v520
  %1313 = vmatmul.mubr.bf16.gmra.mxu0 %v519
  %v1314 = vpop.f32.mrf.mxu0
  %v1315 = vadd.f32 %v1218, %v1314
  %v1316 = vpop.f32.mrf.mxu0
  %v1317 = vpop.f32.mrf.mxu0
  %v1318 = vadd.f32 %v1221, %v1317
  %v1319 = vpop.f32.mrf.mxu0
  %1320 = vmatprep.mubr.bf16.mxu0 %v529
  %1321 = vmatmul.mubr.bf16.gmra.mxu0 %v528
  %v1322 = vpop.f32.mrf.mxu0
  %v1323 = vadd.f32 %v1226, %v1322
  %v1324 = vpop.f32.mrf.mxu0
  %v1325 = vpop.f32.mrf.mxu0
  %v1326 = vadd.f32 %v1229, %v1325
  %v1327 = vpop.f32.mrf.mxu0
  %1328 = vmatprep.mubr.bf16.mxu0 %v538
  %1329 = vmatmul.mubr.bf16.gmra.mxu0 %v537
  %v1330 = vpop.f32.mrf.mxu0
  %v1331 = vadd.f32 %v1234, %v1330
  %v1332 = vpop.f32.mrf.mxu0
  %v1333 = vpop.f32.mrf.mxu0
  %v1334 = vadd.f32 %v1237, %v1333
  %v1335 = vpop.f32.mrf.mxu0
  %1336 = vdwg.mxu0
  %1337 = vmatprep.subr.bf16.mxu0 0
  %1338 = vmatpush1.bf16.msra.mxu0 %v957
  %1339 = vmatprep.subr.bf16.mxu0 0
  %1340 = vmatpush1.bf16.msra.mxu0 %v956
  %1341 = vmatprep.subr.bf16.mxu0 0
  %1342 = vmatpush1.bf16.msra.mxu0 %v955
  %1343 = vmatprep.subr.bf16.mxu0 0
  %1344 = vmatpush1.bf16.msra.mxu0 %v954
  %1345 = vmatprep.subr.bf16.mxu0 0
  %1346 = vmatpush1.bf16.msra.mxu0 %v953
  %1347 = vmatprep.subr.bf16.mxu0 0
  %1348 = vmatpush1.bf16.msra.mxu0 %v952
  %1349 = vmatprep.subr.bf16.mxu0 0
  %1350 = vmatpush1.bf16.msra.mxu0 %v951
  %1351 = vmatprep.subr.bf16.mxu0 0
  %1352 = vmatpush1.bf16.msra.mxu0 %v950
  %1353 = vmatprep.subr.bf16.mxu0 0
  %1354 = vmatpush2.bf16.msra.mxu0 %v965
  %1355 = vmatprep.subr.bf16.mxu0 0
  %1356 = vmatpush2.bf16.msra.mxu0 %v964
  %1357 = vmatprep.subr.bf16.mxu0 0
  %1358 = vmatpush2.bf16.msra.mxu0 %v963
  %1359 = vmatprep.subr.bf16.mxu0 0
  %1360 = vmatpush2.bf16.msra.mxu0 %v962
  %1361 = vmatprep.subr.bf16.mxu0 0
  %1362 = vmatpush2.bf16.msra.mxu0 %v961
  %1363 = vmatprep.subr.bf16.mxu0 0
  %1364 = vmatpush2.bf16.msra.mxu0 %v960
  %1365 = vmatprep.subr.bf16.mxu0 0
  %1366 = vmatpush2.bf16.msra.mxu0 %v959
  %1367 = vmatprep.subr.bf16.mxu0 0
  %1368 = vmatpush2.bf16.msra.mxu0 %v958
  %1369 = vmatprep.mubr.bf16.mxu0 %v477
  %1370 = vmatmul.mubr.bf16.gmra.mxu0 %v476
  %v1371 = vpop.f32.mrf.mxu0
  %v1372 = vadd.f32 %v1275, %v1371
  %v1373 = vpop.f32.mrf.mxu0
  %v1374 = vpop.f32.mrf.mxu0
  %v1375 = vadd.f32 %v1278, %v1374
  %v1376 = vpop.f32.mrf.mxu0
  %1377 = vmatprep.mubr.bf16.mxu0 %v486
  %1378 = vmatmul.mubr.bf16.gmra.mxu0 %v485
  %v1379 = vpop.f32.mrf.mxu0
  %v1380 = vadd.f32 %v1283, %v1379
  %v1381 = vpop.f32.mrf.mxu0
  %v1382 = vpop.f32.mrf.mxu0
  %v1383 = vadd.f32 %v1286, %v1382
  %v1384 = vpop.f32.mrf.mxu0
  %1385 = vmatprep.mubr.bf16.mxu0 %v495
  %1386 = vmatmul.mubr.bf16.gmra.mxu0 %v494
  %v1387 = vpop.f32.mrf.mxu0
  %v1388 = vadd.f32 %v1291, %v1387
  %v1389 = vpop.f32.mrf.mxu0
  %v1390 = vpop.f32.mrf.mxu0
  %v1391 = vadd.f32 %v1294, %v1390
  %v1392 = vpop.f32.mrf.mxu0
  %1393 = vmatprep.mubr.bf16.mxu0 %v504
  %1394 = vmatmul.mubr.bf16.gmra.mxu0 %v503
  %v1395 = vpop.f32.mrf.mxu0
  %v1396 = vadd.f32 %v1299, %v1395
  %v1397 = vpop.f32.mrf.mxu0
  %v1398 = vpop.f32.mrf.mxu0
  %v1399 = vadd.f32 %v1302, %v1398
  %v1400 = vpop.f32.mrf.mxu0
  %1401 = vmatprep.mubr.bf16.mxu0 %v513
  %1402 = vmatmul.mubr.bf16.gmra.mxu0 %v512
  %v1403 = vpop.f32.mrf.mxu0
  %v1404 = vadd.f32 %v1307, %v1403
  %v1405 = vpop.f32.mrf.mxu0
  %v1406 = vpop.f32.mrf.mxu0
  %v1407 = vadd.f32 %v1310, %v1406
  %v1408 = vpop.f32.mrf.mxu0
  %1409 = vmatprep.mubr.bf16.mxu0 %v522
  %1410 = vmatmul.mubr.bf16.gmra.mxu0 %v521
  %v1411 = vpop.f32.mrf.mxu0
  %v1412 = vadd.f32 %v1315, %v1411
  %v1413 = vpop.f32.mrf.mxu0
  %v1414 = vpop.f32.mrf.mxu0
  %v1415 = vadd.f32 %v1318, %v1414
  %v1416 = vpop.f32.mrf.mxu0
  %1417 = vmatprep.mubr.bf16.mxu0 %v531
  %1418 = vmatmul.mubr.bf16.gmra.mxu0 %v530
  %v1419 = vpop.f32.mrf.mxu0
  %v1420 = vadd.f32 %v1323, %v1419
  %v1421 = vpop.f32.mrf.mxu0
  %v1422 = vpop.f32.mrf.mxu0
  %v1423 = vadd.f32 %v1326, %v1422
  %v1424 = vpop.f32.mrf.mxu0
  %1425 = vmatprep.mubr.bf16.mxu0 %v540
  %1426 = vmatmul.mubr.bf16.gmra.mxu0 %v539
  %v1427 = vpop.f32.mrf.mxu0
  %v1428 = vadd.f32 %v1331, %v1427
  %v1429 = vpop.f32.mrf.mxu0
  %v1430 = vpop.f32.mrf.mxu0
  %v1431 = vadd.f32 %v1334, %v1430
  %v1432 = vpop.f32.mrf.mxu0
  %1433 = vdwg.mxu0
  %1434 = vmatprep.subr.bf16.mxu0 0
  %1435 = vmatpush1.bf16.msra.mxu0 %v973
  %1436 = vmatprep.subr.bf16.mxu0 0
  %1437 = vmatpush1.bf16.msra.mxu0 %v972
  %1438 = vmatprep.subr.bf16.mxu0 0
  %1439 = vmatpush1.bf16.msra.mxu0 %v971
  %1440 = vmatprep.subr.bf16.mxu0 0
  %1441 = vmatpush1.bf16.msra.mxu0 %v970
  %1442 = vmatprep.subr.bf16.mxu0 0
  %1443 = vmatpush1.bf16.msra.mxu0 %v969
  %1444 = vmatprep.subr.bf16.mxu0 0
  %1445 = vmatpush1.bf16.msra.mxu0 %v968
  %1446 = vmatprep.subr.bf16.mxu0 0
  %1447 = vmatpush1.bf16.msra.mxu0 %v967
  %1448 = vmatprep.subr.bf16.mxu0 0
  %1449 = vmatpush1.bf16.msra.mxu0 %v966
  %1450 = vmatprep.subr.bf16.mxu0 0
  %1451 = vmatpush2.bf16.msra.mxu0 0
  %1452 = vmatprep.subr.bf16.mxu0 0
  %1453 = vmatpush2.bf16.msra.mxu0 0
  %1454 = vmatprep.subr.bf16.mxu0 0
  %1455 = vmatpush2.bf16.msra.mxu0 0
  %1456 = vmatprep.subr.bf16.mxu0 0
  %1457 = vmatpush2.bf16.msra.mxu0 0
  %1458 = vmatprep.subr.bf16.mxu0 0
  %1459 = vmatpush2.bf16.msra.mxu0 0
  %1460 = vmatprep.subr.bf16.mxu0 0
  %1461 = vmatpush2.bf16.msra.mxu0 0
  %1462 = vmatprep.subr.bf16.mxu0 0
  %1463 = vmatpush2.bf16.msra.mxu0 0
  %1464 = vmatprep.subr.bf16.mxu0 0
  %1465 = vmatpush2.bf16.msra.mxu0 0
  %1466 = vmatprep.mubr.bf16.mxu0 0
  %1467 = vmatmul.mubr.bf16.gmra.mxu0 %v478
  %v1468 = vpop.f32.mrf.mxu0
  %v1469 = vadd.f32 %v1372, %v1468
  %v1470 = vpop.f32.mrf.mxu0
  %v1471 = vpop.f32.mrf.mxu0
  %v1472 = vadd.f32 %v1375, %v1471
  %v1473 = vpop.f32.mrf.mxu0
  %1474 = vmatprep.mubr.bf16.mxu0 0
  %1475 = vmatmul.mubr.bf16.gmra.mxu0 %v487
  %v1476 = vpop.f32.mrf.mxu0
  %v1477 = vadd.f32 %v1380, %v1476
  %v1478 = vpop.f32.mrf.mxu0
  %v1479 = vpop.f32.mrf.mxu0
  %v1480 = vadd.f32 %v1383, %v1479
  %v1481 = vpop.f32.mrf.mxu0
  %1482 = vmatprep.mubr.bf16.mxu0 0
  %1483 = vmatmul.mubr.bf16.gmra.mxu0 %v496
  %v1484 = vpop.f32.mrf.mxu0
  %v1485 = vadd.f32 %v1388, %v1484
  %v1486 = vpop.f32.mrf.mxu0
  %v1487 = vpop.f32.mrf.mxu0
  %v1488 = vadd.f32 %v1391, %v1487
  %v1489 = vpop.f32.mrf.mxu0
  %1490 = vmatprep.mubr.bf16.mxu0 0
  %1491 = vmatmul.mubr.bf16.gmra.mxu0 %v505
  %v1492 = vpop.f32.mrf.mxu0
  %v1493 = vadd.f32 %v1396, %v1492
  %v1494 = vpop.f32.mrf.mxu0
  %v1495 = vpop.f32.mrf.mxu0
  %v1496 = vadd.f32 %v1399, %v1495
  %v1497 = vpop.f32.mrf.mxu0
  %1498 = vmatprep.mubr.bf16.mxu0 0
  %1499 = vmatmul.mubr.bf16.gmra.mxu0 %v514
  %v1500 = vpop.f32.mrf.mxu0
  %v1501 = vadd.f32 %v1404, %v1500
  %v1502 = vpop.f32.mrf.mxu0
  %v1503 = vpop.f32.mrf.mxu0
  %v1504 = vadd.f32 %v1407, %v1503
  %v1505 = vpop.f32.mrf.mxu0
  %1506 = vmatprep.mubr.bf16.mxu0 0
  %1507 = vmatmul.mubr.bf16.gmra.mxu0 %v523
  %v1508 = vpop.f32.mrf.mxu0
  %v1509 = vadd.f32 %v1412, %v1508
  %v1510 = vpop.f32.mrf.mxu0
  %v1511 = vpop.f32.mrf.mxu0
  %v1512 = vadd.f32 %v1415, %v1511
  %v1513 = vpop.f32.mrf.mxu0
  %1514 = vmatprep.mubr.bf16.mxu0 0
  %1515 = vmatmul.mubr.bf16.gmra.mxu0 %v532
  %v1516 = vpop.f32.mrf.mxu0
  %v1517 = vadd.f32 %v1420, %v1516
  %v1518 = vpop.f32.mrf.mxu0
  %v1519 = vpop.f32.mrf.mxu0
  %v1520 = vadd.f32 %v1423, %v1519
  %v1521 = vpop.f32.mrf.mxu0
  %1522 = vmatprep.mubr.bf16.mxu0 0
  %1523 = vmatmul.mubr.bf16.gmra.mxu0 %v541
  %v1524 = vpop.f32.mrf.mxu0
  %v1525 = vadd.f32 %v1428, %v1524
  %v1526 = vpop.f32.mrf.mxu0
  %v1527 = vpop.f32.mrf.mxu0
  %v1528 = vadd.f32 %v1431, %v1527
  %v1529 = vpop.f32.mrf.mxu0
  %1530 = vdwg.mxu0
  %1531 = vst [vmem:[%s3] sm:$0xff] %v1469
  %1532 = vst [vmem:[%s3 + $0x8] sm:$0xff] %v1472
  %1533 = vst [vmem:[%s3 + $0x10] sm:$0xff] %v1477
  %1534 = vst [vmem:[%s3 + $0x18] sm:$0xff] %v1480
  %1535 = vst [vmem:[%s3 + $0x20] sm:$0xff] %v1485
  %1536 = vst [vmem:[%s3 + $0x28] sm:$0xff] %v1488
  %1537 = vst [vmem:[%s3 + $0x30] sm:$0xff] %v1493
  %1538 = vst [vmem:[%s3 + $0x38] sm:$0xff] %v1496
  %1539 = vst [vmem:[%s3 + $0x40] sm:$0xff] %v1501
  %1540 = vst [vmem:[%s3 + $0x48] sm:$0xff] %v1504
  %1541 = vst [vmem:[%s3 + $0x50] sm:$0xff] %v1509
  %1542 = vst [vmem:[%s3 + $0x58] sm:$0xff] %v1512
  %1543 = vst [vmem:[%s3 + $0x60] sm:$0xff] %v1517
  %1544 = vst [vmem:[%s3 + $0x68] sm:$0xff] %v1520
  %1545 = vst [vmem:[%s3 + $0x70] sm:$0xff] %v1525
  %1546 = vst [vmem:[%s3 + $0x78] sm:$0xff] %v1528
  // Predicated region
  $region14: #{resnet_classifier_celeba_forward.7} parent=0 // pred_check
    _
  $region15: #{resnet_classifier_celeba_forward.7} parent=0 // pred_check_branch
    %1548 = sbr.rel (0) target = $region17
  $region16: #{resnet_classifier_celeba_forward.7} parent=0 // pred_region
    _
  $region17: #{resnet_classifier_celeba_forward.7} parent=0 // pred_fallthru
    _
  // Predicated region
  $region18: #{resnet_classifier_celeba_forward.7} parent=0 // pred_check
    _
  $region19: #{resnet_classifier_celeba_forward.7} parent=0 // pred_check_branch
    %1550 = sbr.rel (0) target = $region21
  $region20: #{resnet_classifier_celeba_forward.7} parent=0 // pred_region
    _
  $region21: #{resnet_classifier_celeba_forward.7} parent=0 // pred_fallthru
    _

// kernel: resnet_classifier_celeba_forward.8
$region0: #{resnet_classifier_celeba_forward.8}
  #allocation0 [shape = 'u32[]', space=smem, size = 0x4, offset = 0x4, fixed_abs, tag = 'smem constant byte address 0x4 - core index']
  #allocation1 [shape = 'u32[144,128]{1,0:T(1,128)}', space=vmem, size = 0x12000, scoped, tag = 'internal scratch']
  #allocation2 [shape = 'f32[2,10,24,128]{3,2,1,0:T(8,128)}', space=vmem, size = 0x3c000, scoped, tag = 'scratch operand']
  %s0 = inlined_call_operand.vmem [shape: f32[2,8,8,128], index: 0, kind: input, shape index: {}]
  %s1 = inlined_call_operand.vmem [shape: bf16[9,128,32], index: 1, kind: input, shape index: {}]
  %s2 = inlined_call_operand.vmem [shape: f32[1,32], index: 2, kind: input, shape index: {}]
  %s3 = inlined_call_operand.vmem [shape: bf16[32,128], index: 3, kind: input, shape index: {}]
  %s4 = inlined_call_operand.vmem [shape: f32[1,128], index: 4, kind: input, shape index: {}]
  %s5 = inlined_call_operand.vmem [shape: bf16[9,128,32], index: 5, kind: input, shape index: {}]
  %s6 = inlined_call_operand.vmem [shape: f32[1,32], index: 6, kind: input, shape index: {}]
  %s7 = inlined_call_operand.vmem [shape: bf16[32,128], index: 7, kind: input, shape index: {}]
  %s8 = inlined_call_operand.vmem [shape: f32[1,128], index: 8, kind: input, shape index: {}]
  %s9 = inlined_call_operand.vmem [shape: f32[128,128], index: 9, kind: output, shape index: {}]
  %s10 = sld [smem:[#allocation0]]
  $region46: #{resnet_classifier_celeba_forward.8} parent=0
    _
  %s12 = ssub.s32 1, %s10
  %s13 = scalar_select 0, %s12, %s10
  // Predicated region
  $region2: #{resnet_classifier_celeba_forward.8} parent=0 // pred_check
    _
  $region3: #{resnet_classifier_celeba_forward.8} parent=0 // pred_check_branch
    %15 = sbr.rel (0) target = $region5
  $region4: #{resnet_classifier_celeba_forward.8} parent=0 // pred_region
    _
  $region5: #{resnet_classifier_celeba_forward.8} parent=0 // pred_fallthru
    _
  // Predicated region
  $region6: #{resnet_classifier_celeba_forward.8} parent=0 // pred_check
    _
  $region7: #{resnet_classifier_celeba_forward.8} parent=0 // pred_check_branch
    %17 = sbr.rel (0) target = $region9
  $region8: #{resnet_classifier_celeba_forward.8} parent=0 // pred_region
    _
  $region9: #{resnet_classifier_celeba_forward.8} parent=0 // pred_fallthru
    _
  // Predicated region
  $region10: #{resnet_classifier_celeba_forward.8} parent=0 // pred_check
    _
  $region11: #{resnet_classifier_celeba_forward.8} parent=0 // pred_check_branch
    %19 = sbr.rel (0) target = $region13
  $region12: #{resnet_classifier_celeba_forward.8} parent=0 // pred_region
    _
  $region13: #{resnet_classifier_celeba_forward.8} parent=0 // pred_fallthru
    _
  // Predicated region
  $region14: #{resnet_classifier_celeba_forward.8} parent=0 // pred_check
    _
  $region15: #{resnet_classifier_celeba_forward.8} parent=0 // pred_check_branch
    %21 = sbr.rel (0) target = $region17
  $region16: #{resnet_classifier_celeba_forward.8} parent=0 // pred_region
    _
  $region17: #{resnet_classifier_celeba_forward.8} parent=0 // pred_fallthru
    _
  // Predicated region
  $region18: #{resnet_classifier_celeba_forward.8} parent=0 // pred_check
    _
  $region19: #{resnet_classifier_celeba_forward.8} parent=0 // pred_check_branch
    %23 = sbr.rel (0) target = $region21
  $region20: #{resnet_classifier_celeba_forward.8} parent=0 // pred_region
    _
  $region21: #{resnet_classifier_celeba_forward.8} parent=0 // pred_fallthru
    _
  // Predicated region
  $region22: #{resnet_classifier_celeba_forward.8} parent=0 // pred_check
    _
  $region23: #{resnet_classifier_celeba_forward.8} parent=0 // pred_check_branch
    %25 = sbr.rel (0) target = $region25
  $region24: #{resnet_classifier_celeba_forward.8} parent=0 // pred_region
    _
  $region25: #{resnet_classifier_celeba_forward.8} parent=0 // pred_fallthru
    _
  // Predicated region
  $region26: #{resnet_classifier_celeba_forward.8} parent=0 // pred_check
    _
  $region27: #{resnet_classifier_celeba_forward.8} parent=0 // pred_check_branch
    %27 = sbr.rel (0) target = $region29
  $region28: #{resnet_classifier_celeba_forward.8} parent=0 // pred_region
    _
  $region29: #{resnet_classifier_celeba_forward.8} parent=0 // pred_fallthru
    _
  // Predicated region
  $region30: #{resnet_classifier_celeba_forward.8} parent=0 // pred_check
    _
  $region31: #{resnet_classifier_celeba_forward.8} parent=0 // pred_check_branch
    %29 = sbr.rel (0) target = $region33
  $region32: #{resnet_classifier_celeba_forward.8} parent=0 // pred_region
    _
  $region33: #{resnet_classifier_celeba_forward.8} parent=0 // pred_fallthru
    _
  // Predicated region
  $region34: #{resnet_classifier_celeba_forward.8} parent=0 // pred_check
    _
  $region35: #{resnet_classifier_celeba_forward.8} parent=0 // pred_check_branch
    %31 = sbr.rel (0) target = $region37
  $region36: #{resnet_classifier_celeba_forward.8} parent=0 // pred_region
    _
  $region37: #{resnet_classifier_celeba_forward.8} parent=0 // pred_fallthru
    _
  %33 = vst [vmem:[#allocation2] sm:$0xff] 0.0
  %34 = vst [vmem:[#allocation2 + $0x8] sm:$0xff] 0.0
  %35 = vst [vmem:[#allocation2 + $0x10] sm:$0xff] 0.0
  %36 = vst [vmem:[#allocation2 + $0x18] sm:$0xff] 0.0
  %37 = vst [vmem:[#allocation2 + $0x20] sm:$0xff] 0.0
  %38 = vst [vmem:[#allocation2 + $0x28] sm:$0xff] 0.0
  %39 = vst [vmem:[#allocation2 + $0x30] sm:$0xff] 0.0
  %40 = vst [vmem:[#allocation2 + $0x38] sm:$0xff] 0.0
  %41 = vst [vmem:[#allocation2 + $0x40] sm:$0xff] 0.0
  %42 = vst [vmem:[#allocation2 + $0x48] sm:$0xff] 0.0
  %43 = vst [vmem:[#allocation2 + $0x50] sm:$0xff] 0.0
  %44 = vst [vmem:[#allocation2 + $0x58] sm:$0xff] 0.0
  %45 = vst [vmem:[#allocation2 + $0x60] sm:$0xff] 0.0
  %46 = vst [vmem:[#allocation2 + $0x68] sm:$0xff] 0.0
  %47 = vst [vmem:[#allocation2 + $0x70] sm:$0xff] 0.0
  %48 = vst [vmem:[#allocation2 + $0x78] sm:$0xff] 0.0
  %49 = vst [vmem:[#allocation2 + $0x80] sm:$0xff] 0.0
  %50 = vst [vmem:[#allocation2 + $0x88] sm:$0xff] 0.0
  %51 = vst [vmem:[#allocation2 + $0x90] sm:$0xff] 0.0
  %52 = vst [vmem:[#allocation2 + $0x98] sm:$0xff] 0.0
  %53 = vst [vmem:[#allocation2 + $0xa0] sm:$0xff] 0.0
  %54 = vst [vmem:[#allocation2 + $0xa8] sm:$0xff] 0.0
  %55 = vst [vmem:[#allocation2 + $0xb0] sm:$0xff] 0.0
  %56 = vst [vmem:[#allocation2 + $0xb8] sm:$0xff] 0.0
  %57 = vst [vmem:[#allocation2 + $0xc0] sm:$0xff] 0.0
  %58 = vst [vmem:[#allocation2 + $0xc8] sm:$0xff] 0.0
  %59 = vst [vmem:[#allocation2 + $0xd0] sm:$0xff] 0.0
  %60 = vst [vmem:[#allocation2 + $0xd8] sm:$0xff] 0.0
  %61 = vst [vmem:[#allocation2 + $0xe0] sm:$0xff] 0.0
  %62 = vst [vmem:[#allocation2 + $0xe8] sm:$0xff] 0.0
  %63 = vst [vmem:[#allocation2 + $0xf0] sm:$0xff] 0.0
  %64 = vst [vmem:[#allocation2 + $0xf8] sm:$0xff] 0.0
  %65 = vst [vmem:[#allocation2 + $0x100] sm:$0xff] 0.0
  %66 = vst [vmem:[#allocation2 + $0x108] sm:$0xff] 0.0
  %67 = vst [vmem:[#allocation2 + $0x110] sm:$0xff] 0.0
  %68 = vst [vmem:[#allocation2 + $0x118] sm:$0xff] 0.0
  %69 = vst [vmem:[#allocation2 + $0x120] sm:$0xff] 0.0
  %70 = vst [vmem:[#allocation2 + $0x128] sm:$0xff] 0.0
  %71 = vst [vmem:[#allocation2 + $0x130] sm:$0xff] 0.0
  %72 = vst [vmem:[#allocation2 + $0x138] sm:$0xff] 0.0
  %73 = vst [vmem:[#allocation2 + $0x140] sm:$0xff] 0.0
  %74 = vst [vmem:[#allocation2 + $0x148] sm:$0xff] 0.0
  %75 = vst [vmem:[#allocation2 + $0x150] sm:$0xff] 0.0
  %76 = vst [vmem:[#allocation2 + $0x158] sm:$0xff] 0.0
  %77 = vst [vmem:[#allocation2 + $0x160] sm:$0xff] 0.0
  %78 = vst [vmem:[#allocation2 + $0x168] sm:$0xff] 0.0
  %79 = vst [vmem:[#allocation2 + $0x170] sm:$0xff] 0.0
  %80 = vst [vmem:[#allocation2 + $0x178] sm:$0xff] 0.0
  %81 = vst [vmem:[#allocation2 + $0x180] sm:$0xff] 0.0
  %82 = vst [vmem:[#allocation2 + $0x188] sm:$0xff] 0.0
  %83 = vst [vmem:[#allocation2 + $0x190] sm:$0xff] 0.0
  %84 = vst [vmem:[#allocation2 + $0x198] sm:$0xff] 0.0
  %85 = vst [vmem:[#allocation2 + $0x1a0] sm:$0xff] 0.0
  %86 = vst [vmem:[#allocation2 + $0x1a8] sm:$0xff] 0.0
  %87 = vst [vmem:[#allocation2 + $0x1b0] sm:$0xff] 0.0
  %88 = vst [vmem:[#allocation2 + $0x1b8] sm:$0xff] 0.0
  %89 = vst [vmem:[#allocation2 + $0x1c0] sm:$0xff] 0.0
  %90 = vst [vmem:[#allocation2 + $0x1c8] sm:$0xff] 0.0
  %91 = vst [vmem:[#allocation2 + $0x1d0] sm:$0xff] 0.0
  %92 = vst [vmem:[#allocation2 + $0x1d8] sm:$0xff] 0.0
  %v93 = vld [vmem:[%s0] sm:$0xff]
  %v94 = vld [vmem:[%s0 + $0x8] sm:$0xff]
  %v95 = vld [vmem:[%s0 + $0x10] sm:$0xff]
  %v96 = vld [vmem:[%s0 + $0x18] sm:$0xff]
  %v97 = vld [vmem:[%s0 + $0x20] sm:$0xff]
  %v98 = vld [vmem:[%s0 + $0x28] sm:$0xff]
  %v99 = vld [vmem:[%s0 + $0x30] sm:$0xff]
  %v100 = vld [vmem:[%s0 + $0x38] sm:$0xff]
  %v101 = vld [vmem:[%s0 + $0x40] sm:$0xff]
  %v102 = vld [vmem:[%s0 + $0x48] sm:$0xff]
  %v103 = vld [vmem:[%s0 + $0x50] sm:$0xff]
  %v104 = vld [vmem:[%s0 + $0x58] sm:$0xff]
  %v105 = vld [vmem:[%s0 + $0x60] sm:$0xff]
  %v106 = vld [vmem:[%s0 + $0x68] sm:$0xff]
  %v107 = vld [vmem:[%s0 + $0x70] sm:$0xff]
  %v108 = vld [vmem:[%s0 + $0x78] sm:$0xff]
  %v109 = vmax.f32 %v93, 0.0
  %v110 = vmax.f32 %v94, 0.0
  %v111 = vmax.f32 %v95, 0.0
  %v112 = vmax.f32 %v96, 0.0
  %v113 = vmax.f32 %v97, 0.0
  %v114 = vmax.f32 %v98, 0.0
  %v115 = vmax.f32 %v99, 0.0
  %v116 = vmax.f32 %v100, 0.0
  %v117 = vmax.f32 %v101, 0.0
  %v118 = vmax.f32 %v102, 0.0
  %v119 = vmax.f32 %v103, 0.0
  %v120 = vmax.f32 %v104, 0.0
  %v121 = vmax.f32 %v105, 0.0
  %v122 = vmax.f32 %v106, 0.0
  %v123 = vmax.f32 %v107, 0.0
  %v124 = vmax.f32 %v108, 0.0
  %s125 = scalar_lea.vmem [#allocation2], 24
  %126 = vst [vmem:[%s125 + $0x8] sm:$0xff] %v109
  %127 = vst [vmem:[%s125 + $0x20] sm:$0xff] %v110
  %128 = vst [vmem:[%s125 + $0x38] sm:$0xff] %v111
  %129 = vst [vmem:[%s125 + $0x50] sm:$0xff] %v112
  %130 = vst [vmem:[%s125 + $0x68] sm:$0xff] %v113
  %131 = vst [vmem:[%s125 + $0x80] sm:$0xff] %v114
  %132 = vst [vmem:[%s125 + $0x98] sm:$0xff] %v115
  %133 = vst [vmem:[%s125 + $0xb0] sm:$0xff] %v116
  %134 = vst [vmem:[%s125 + $0xf8] sm:$0xff] %v117
  %135 = vst [vmem:[%s125 + $0x110] sm:$0xff] %v118
  %136 = vst [vmem:[%s125 + $0x128] sm:$0xff] %v119
  %137 = vst [vmem:[%s125 + $0x140] sm:$0xff] %v120
  %138 = vst [vmem:[%s125 + $0x158] sm:$0xff] %v121
  %139 = vst [vmem:[%s125 + $0x170] sm:$0xff] %v122
  %140 = vst [vmem:[%s125 + $0x188] sm:$0xff] %v123
  %141 = vst [vmem:[%s125 + $0x1a0] sm:$0xff] %v124
  %v142 = vld [vmem:[#allocation2 + $0x7] sm:$0xff]
  %v143 = vld [vmem:[#allocation2 + $0x1f] sm:$0xff]
  %v144 = vld [vmem:[#allocation2 + $0x37] sm:$0xff]
  %v145 = vld [vmem:[#allocation2 + $0x4f] sm:$0xff]
  %v146 = vld [vmem:[#allocation2 + $0x67] sm:$0xff]
  %v147 = vld [vmem:[#allocation2 + $0x7f] sm:$0xff]
  %v148 = vld [vmem:[#allocation2 + $0x97] sm:$0xff]
  %v149 = vld [vmem:[#allocation2 + $0xaf] sm:$0xff]
  %v150 = vld [vmem:[#allocation2 + $0xf7] sm:$0xff]
  %v151 = vld [vmem:[#allocation2 + $0x10f] sm:$0xff]
  %v152 = vld [vmem:[#allocation2 + $0x127] sm:$0xff]
  %v153 = vld [vmem:[#allocation2 + $0x13f] sm:$0xff]
  %v154 = vld [vmem:[#allocation2 + $0x157] sm:$0xff]
  %v155 = vld [vmem:[#allocation2 + $0x16f] sm:$0xff]
  %v156 = vld [vmem:[#allocation2 + $0x187] sm:$0xff]
  %v157 = vld [vmem:[#allocation2 + $0x19f] sm:$0xff]
  %v158 = vpack.c.bf16 %v143, %v142
  %v159 = vpack.c.bf16 %v145, %v144
  %v160 = vpack.c.bf16 %v147, %v146
  %v161 = vpack.c.bf16 %v149, %v148
  %v162 = vpack.c.bf16 %v151, %v150
  %v163 = vpack.c.bf16 %v153, %v152
  %v164 = vpack.c.bf16 %v155, %v154
  %v165 = vpack.c.bf16 %v157, %v156
  %v166 = vld [vmem:[%s1] sm:$0xf]
  %v167 = vld [vmem:[%s1 + $0x4] sm:$0xf]
  %v168 = vld [vmem:[%s1 + $0x8] sm:$0xf]
  %v169 = vld [vmem:[%s1 + $0xc] sm:$0xf]
  %v170 = vld [vmem:[%s1 + $0x10] sm:$0xf]
  %v171 = vld [vmem:[%s1 + $0x14] sm:$0xf]
  %v172 = vld [vmem:[%s1 + $0x18] sm:$0xf]
  %v173 = vld [vmem:[%s1 + $0x1c] sm:$0xf]
  %v174 = vld [vmem:[%s1 + $0x20] sm:$0xf]
  %v175 = vld [vmem:[%s1 + $0x24] sm:$0xf]
  %v176 = vld [vmem:[%s1 + $0x28] sm:$0xf]
  %v177 = vld [vmem:[%s1 + $0x2c] sm:$0xf]
  %v178 = vld [vmem:[%s1 + $0x30] sm:$0xf]
  %v179 = vld [vmem:[%s1 + $0x34] sm:$0xf]
  %v180 = vld [vmem:[%s1 + $0x38] sm:$0xf]
  %v181 = vld [vmem:[%s1 + $0x3c] sm:$0xf]
  %v182 = vld [vmem:[#allocation2 + $0x8] sm:$0xff]
  %v183 = vld [vmem:[#allocation2 + $0x20] sm:$0xff]
  %v184 = vld [vmem:[#allocation2 + $0x38] sm:$0xff]
  %v185 = vld [vmem:[#allocation2 + $0x50] sm:$0xff]
  %v186 = vld [vmem:[#allocation2 + $0x68] sm:$0xff]
  %v187 = vld [vmem:[#allocation2 + $0x80] sm:$0xff]
  %v188 = vld [vmem:[#allocation2 + $0x98] sm:$0xff]
  %v189 = vld [vmem:[#allocation2 + $0xb0] sm:$0xff]
  %v190 = vld [vmem:[#allocation2 + $0xf8] sm:$0xff]
  %v191 = vld [vmem:[#allocation2 + $0x110] sm:$0xff]
  %v192 = vld [vmem:[#allocation2 + $0x128] sm:$0xff]
  %v193 = vld [vmem:[#allocation2 + $0x140] sm:$0xff]
  %v194 = vld [vmem:[#allocation2 + $0x158] sm:$0xff]
  %v195 = vld [vmem:[#allocation2 + $0x170] sm:$0xff]
  %v196 = vld [vmem:[#allocation2 + $0x188] sm:$0xff]
  %v197 = vld [vmem:[#allocation2 + $0x1a0] sm:$0xff]
  %v198 = vpack.c.bf16 %v183, %v182
  %v199 = vpack.c.bf16 %v185, %v184
  %v200 = vpack.c.bf16 %v187, %v186
  %v201 = vpack.c.bf16 %v189, %v188
  %v202 = vpack.c.bf16 %v191, %v190
  %v203 = vpack.c.bf16 %v193, %v192
  %v204 = vpack.c.bf16 %v195, %v194
  %v205 = vpack.c.bf16 %v197, %v196
  %s206 = scalar_lea.vmem %s1, 64
  %v207 = vld [vmem:[%s206] sm:$0xf]
  %v208 = vld [vmem:[%s206 + $0x4] sm:$0xf]
  %v209 = vld [vmem:[%s206 + $0x8] sm:$0xf]
  %v210 = vld [vmem:[%s206 + $0xc] sm:$0xf]
  %v211 = vld [vmem:[%s206 + $0x10] sm:$0xf]
  %v212 = vld [vmem:[%s206 + $0x14] sm:$0xf]
  %v213 = vld [vmem:[%s206 + $0x18] sm:$0xf]
  %v214 = vld [vmem:[%s206 + $0x1c] sm:$0xf]
  %v215 = vld [vmem:[%s206 + $0x20] sm:$0xf]
  %v216 = vld [vmem:[%s206 + $0x24] sm:$0xf]
  %v217 = vld [vmem:[%s206 + $0x28] sm:$0xf]
  %v218 = vld [vmem:[%s206 + $0x2c] sm:$0xf]
  %v219 = vld [vmem:[%s206 + $0x30] sm:$0xf]
  %v220 = vld [vmem:[%s206 + $0x34] sm:$0xf]
  %v221 = vld [vmem:[%s206 + $0x38] sm:$0xf]
  %v222 = vld [vmem:[%s206 + $0x3c] sm:$0xf]
  %v239 = vunpack.c.l.b16 %v207
  %v240 = vunpack.c.l.b16 %v208
  %v241 = vunpack.c.l.b16 %v209
  %v242 = vunpack.c.l.b16 %v210
  %v243 = vunpack.c.l.b16 %v211
  %v244 = vunpack.c.l.b16 %v212
  %v245 = vunpack.c.l.b16 %v213
  %v246 = vunpack.c.l.b16 %v214
  %v247 = vunpack.c.l.b16 %v215
  %v248 = vunpack.c.l.b16 %v216
  %v249 = vunpack.c.l.b16 %v217
  %v250 = vunpack.c.l.b16 %v218
  %v251 = vunpack.c.l.b16 %v219
  %v252 = vunpack.c.l.b16 %v220
  %v253 = vunpack.c.l.b16 %v221
  %v254 = vunpack.c.l.b16 %v222
  %v255 = vpack.c.b16 %v240, %v239
  %v256 = vpack.c.b16 %v242, %v241
  %v257 = vpack.c.b16 %v244, %v243
  %v258 = vpack.c.b16 %v246, %v245
  %v259 = vpack.c.b16 %v248, %v247
  %v260 = vpack.c.b16 %v250, %v249
  %v261 = vpack.c.b16 %v252, %v251
  %v262 = vpack.c.b16 %v254, %v253
  %271 = vmatprep.subr.bf16.mxu0 0
  %272 = vmatpush1.bf16.msra.mxu0 %v262
  %273 = vmatprep.subr.bf16.mxu0 0
  %274 = vmatpush1.bf16.msra.mxu0 %v261
  %275 = vmatprep.subr.bf16.mxu0 0
  %276 = vmatpush1.bf16.msra.mxu0 %v260
  %277 = vmatprep.subr.bf16.mxu0 0
  %278 = vmatpush1.bf16.msra.mxu0 %v259
  %279 = vmatprep.subr.bf16.mxu0 0
  %280 = vmatpush1.bf16.msra.mxu0 %v258
  %281 = vmatprep.subr.bf16.mxu0 0
  %282 = vmatpush1.bf16.msra.mxu0 %v257
  %283 = vmatprep.subr.bf16.mxu0 0
  %284 = vmatpush1.bf16.msra.mxu0 %v256
  %285 = vmatprep.subr.bf16.mxu0 0
  %286 = vmatpush1.bf16.msra.mxu0 %v255
  %287 = vmatprep.subr.bf16.mxu0 0
  %288 = vmatpush2.bf16.msra.mxu0 0
  %289 = vmatprep.subr.bf16.mxu0 0
  %290 = vmatpush2.bf16.msra.mxu0 0
  %291 = vmatprep.subr.bf16.mxu0 0
  %292 = vmatpush2.bf16.msra.mxu0 0
  %293 = vmatprep.subr.bf16.mxu0 0
  %294 = vmatpush2.bf16.msra.mxu0 0
  %295 = vmatprep.subr.bf16.mxu0 0
  %296 = vmatpush2.bf16.msra.mxu0 0
  %297 = vmatprep.subr.bf16.mxu0 0
  %298 = vmatpush2.bf16.msra.mxu0 0
  %299 = vmatprep.subr.bf16.mxu0 0
  %300 = vmatpush2.bf16.msra.mxu0 0
  %301 = vmatprep.subr.bf16.mxu0 0
  %302 = vmatpush2.bf16.msra.mxu0 0
  %303 = vmatprep.mubr.bf16.mxu0 0
  %304 = vmatmul.mubr.bf16.gmra.mxu0 %v198
  %v305 = vpop.f32.mrf.mxu0
  %v306 = vadd.f32 0.0, %v305
  %v307 = vpop.f32.mrf.mxu0
  %v308 = vpop.f32.mrf.mxu0
  %v309 = vadd.f32 0.0, %v308
  %v310 = vpop.f32.mrf.mxu0
  %311 = vmatprep.mubr.bf16.mxu0 0
  %312 = vmatmul.mubr.bf16.gmra.mxu0 %v199
  %v313 = vpop.f32.mrf.mxu0
  %v314 = vadd.f32 0.0, %v313
  %v315 = vpop.f32.mrf.mxu0
  %v316 = vpop.f32.mrf.mxu0
  %v317 = vadd.f32 0.0, %v316
  %v318 = vpop.f32.mrf.mxu0
  %319 = vmatprep.mubr.bf16.mxu0 0
  %320 = vmatmul.mubr.bf16.gmra.mxu0 %v200
  %v321 = vpop.f32.mrf.mxu0
  %v322 = vadd.f32 0.0, %v321
  %v323 = vpop.f32.mrf.mxu0
  %v324 = vpop.f32.mrf.mxu0
  %v325 = vadd.f32 0.0, %v324
  %v326 = vpop.f32.mrf.mxu0
  %327 = vmatprep.mubr.bf16.mxu0 0
  %328 = vmatmul.mubr.bf16.gmra.mxu0 %v201
  %v329 = vpop.f32.mrf.mxu0
  %v330 = vadd.f32 0.0, %v329
  %v331 = vpop.f32.mrf.mxu0
  %v332 = vpop.f32.mrf.mxu0
  %v333 = vadd.f32 0.0, %v332
  %v334 = vpop.f32.mrf.mxu0
  %335 = vmatprep.mubr.bf16.mxu0 0
  %336 = vmatmul.mubr.bf16.gmra.mxu0 %v202
  %v337 = vpop.f32.mrf.mxu0
  %v338 = vadd.f32 0.0, %v337
  %v339 = vpop.f32.mrf.mxu0
  %v340 = vpop.f32.mrf.mxu0
  %v341 = vadd.f32 0.0, %v340
  %v342 = vpop.f32.mrf.mxu0
  %343 = vmatprep.mubr.bf16.mxu0 0
  %344 = vmatmul.mubr.bf16.gmra.mxu0 %v203
  %v345 = vpop.f32.mrf.mxu0
  %v346 = vadd.f32 0.0, %v345
  %v347 = vpop.f32.mrf.mxu0
  %v348 = vpop.f32.mrf.mxu0
  %v349 = vadd.f32 0.0, %v348
  %v350 = vpop.f32.mrf.mxu0
  %351 = vmatprep.mubr.bf16.mxu0 0
  %352 = vmatmul.mubr.bf16.gmra.mxu0 %v204
  %v353 = vpop.f32.mrf.mxu0
  %v354 = vadd.f32 0.0, %v353
  %v355 = vpop.f32.mrf.mxu0
  %v356 = vpop.f32.mrf.mxu0
  %v357 = vadd.f32 0.0, %v356
  %v358 = vpop.f32.mrf.mxu0
  %359 = vmatprep.mubr.bf16.mxu0 0
  %360 = vmatmul.mubr.bf16.gmra.mxu0 %v205
  %v361 = vpop.f32.mrf.mxu0
  %v362 = vadd.f32 0.0, %v361
  %v363 = vpop.f32.mrf.mxu0
  %v364 = vpop.f32.mrf.mxu0
  %v365 = vadd.f32 0.0, %v364
  %v366 = vpop.f32.mrf.mxu0
  %367 = vdwg.mxu0
  %v384 = vunpack.c.l.b16 %v166
  %v385 = vunpack.c.l.b16 %v167
  %v386 = vunpack.c.l.b16 %v168
  %v387 = vunpack.c.l.b16 %v169
  %v388 = vunpack.c.l.b16 %v170
  %v389 = vunpack.c.l.b16 %v171
  %v390 = vunpack.c.l.b16 %v172
  %v391 = vunpack.c.l.b16 %v173
  %v392 = vunpack.c.l.b16 %v174
  %v393 = vunpack.c.l.b16 %v175
  %v394 = vunpack.c.l.b16 %v176
  %v395 = vunpack.c.l.b16 %v177
  %v396 = vunpack.c.l.b16 %v178
  %v397 = vunpack.c.l.b16 %v179
  %v398 = vunpack.c.l.b16 %v180
  %v399 = vunpack.c.l.b16 %v181
  %v400 = vpack.c.b16 %v385, %v384
  %v401 = vpack.c.b16 %v387, %v386
  %v402 = vpack.c.b16 %v389, %v388
  %v403 = vpack.c.b16 %v391, %v390
  %v404 = vpack.c.b16 %v393, %v392
  %v405 = vpack.c.b16 %v395, %v394
  %v406 = vpack.c.b16 %v397, %v396
  %v407 = vpack.c.b16 %v399, %v398
  %416 = vmatprep.subr.bf16.mxu0 0
  %417 = vmatpush1.bf16.msra.mxu0 %v407
  %418 = vmatprep.subr.bf16.mxu0 0
  %419 = vmatpush1.bf16.msra.mxu0 %v406
  %420 = vmatprep.subr.bf16.mxu0 0
  %421 = vmatpush1.bf16.msra.mxu0 %v405
  %422 = vmatprep.subr.bf16.mxu0 0
  %423 = vmatpush1.bf16.msra.mxu0 %v404
  %424 = vmatprep.subr.bf16.mxu0 0
  %425 = vmatpush1.bf16.msra.mxu0 %v403
  %426 = vmatprep.subr.bf16.mxu0 0
  %427 = vmatpush1.bf16.msra.mxu0 %v402
  %428 = vmatprep.subr.bf16.mxu0 0
  %429 = vmatpush1.bf16.msra.mxu0 %v401
  %430 = vmatprep.subr.bf16.mxu0 0
  %431 = vmatpush1.bf16.msra.mxu0 %v400
  %432 = vmatprep.subr.bf16.mxu0 0
  %433 = vmatpush2.bf16.msra.mxu0 0
  %434 = vmatprep.subr.bf16.mxu0 0
  %435 = vmatpush2.bf16.msra.mxu0 0
  %436 = vmatprep.subr.bf16.mxu0 0
  %437 = vmatpush2.bf16.msra.mxu0 0
  %438 = vmatprep.subr.bf16.mxu0 0
  %439 = vmatpush2.bf16.msra.mxu0 0
  %440 = vmatprep.subr.bf16.mxu0 0
  %441 = vmatpush2.bf16.msra.mxu0 0
  %442 = vmatprep.subr.bf16.mxu0 0
  %443 = vmatpush2.bf16.msra.mxu0 0
  %444 = vmatprep.subr.bf16.mxu0 0
  %445 = vmatpush2.bf16.msra.mxu0 0
  %446 = vmatprep.subr.bf16.mxu0 0
  %447 = vmatpush2.bf16.msra.mxu0 0
  %448 = vmatprep.mubr.bf16.mxu0 0
  %449 = vmatmul.mubr.bf16.gmra.mxu0 %v158
  %v450 = vpop.f32.mrf.mxu0
  %v451 = vadd.f32 %v306, %v450
  %v452 = vpop.f32.mrf.mxu0
  %v453 = vpop.f32.mrf.mxu0
  %v454 = vadd.f32 %v309, %v453
  %v455 = vpop.f32.mrf.mxu0
  %456 = vmatprep.mubr.bf16.mxu0 0
  %457 = vmatmul.mubr.bf16.gmra.mxu0 %v159
  %v458 = vpop.f32.mrf.mxu0
  %v459 = vadd.f32 %v314, %v458
  %v460 = vpop.f32.mrf.mxu0
  %v461 = vpop.f32.mrf.mxu0
  %v462 = vadd.f32 %v317, %v461
  %v463 = vpop.f32.mrf.mxu0
  %464 = vmatprep.mubr.bf16.mxu0 0
  %465 = vmatmul.mubr.bf16.gmra.mxu0 %v160
  %v466 = vpop.f32.mrf.mxu0
  %v467 = vadd.f32 %v322, %v466
  %v468 = vpop.f32.mrf.mxu0
  %v469 = vpop.f32.mrf.mxu0
  %v470 = vadd.f32 %v325, %v469
  %v471 = vpop.f32.mrf.mxu0
  %472 = vmatprep.mubr.bf16.mxu0 0
  %473 = vmatmul.mubr.bf16.gmra.mxu0 %v161
  %v474 = vpop.f32.mrf.mxu0
  %v475 = vadd.f32 %v330, %v474
  %v476 = vpop.f32.mrf.mxu0
  %v477 = vpop.f32.mrf.mxu0
  %v478 = vadd.f32 %v333, %v477
  %v479 = vpop.f32.mrf.mxu0
  %480 = vmatprep.mubr.bf16.mxu0 0
  %481 = vmatmul.mubr.bf16.gmra.mxu0 %v162
  %v482 = vpop.f32.mrf.mxu0
  %v483 = vadd.f32 %v338, %v482
  %v484 = vpop.f32.mrf.mxu0
  %v485 = vpop.f32.mrf.mxu0
  %v486 = vadd.f32 %v341, %v485
  %v487 = vpop.f32.mrf.mxu0
  %488 = vmatprep.mubr.bf16.mxu0 0
  %489 = vmatmul.mubr.bf16.gmra.mxu0 %v163
  %v490 = vpop.f32.mrf.mxu0
  %v491 = vadd.f32 %v346, %v490
  %v492 = vpop.f32.mrf.mxu0
  %v493 = vpop.f32.mrf.mxu0
  %v494 = vadd.f32 %v349, %v493
  %v495 = vpop.f32.mrf.mxu0
  %496 = vmatprep.mubr.bf16.mxu0 0
  %497 = vmatmul.mubr.bf16.gmra.mxu0 %v164
  %v498 = vpop.f32.mrf.mxu0
  %v499 = vadd.f32 %v354, %v498
  %v500 = vpop.f32.mrf.mxu0
  %v501 = vpop.f32.mrf.mxu0
  %v502 = vadd.f32 %v357, %v501
  %v503 = vpop.f32.mrf.mxu0
  %504 = vmatprep.mubr.bf16.mxu0 0
  %505 = vmatmul.mubr.bf16.gmra.mxu0 %v165
  %v506 = vpop.f32.mrf.mxu0
  %v507 = vadd.f32 %v362, %v506
  %v508 = vpop.f32.mrf.mxu0
  %v509 = vpop.f32.mrf.mxu0
  %v510 = vadd.f32 %v365, %v509
  %v511 = vpop.f32.mrf.mxu0
  %512 = vdwg.mxu0
  %v513 = vld [vmem:[#allocation2 + $0x9] sm:$0xff]
  %v514 = vld [vmem:[#allocation2 + $0x21] sm:$0xff]
  %v515 = vld [vmem:[#allocation2 + $0x39] sm:$0xff]
  %v516 = vld [vmem:[#allocation2 + $0x51] sm:$0xff]
  %v517 = vld [vmem:[#allocation2 + $0x69] sm:$0xff]
  %v518 = vld [vmem:[#allocation2 + $0x81] sm:$0xff]
  %v519 = vld [vmem:[#allocation2 + $0x99] sm:$0xff]
  %v520 = vld [vmem:[#allocation2 + $0xb1] sm:$0xff]
  %v521 = vld [vmem:[#allocation2 + $0xf9] sm:$0xff]
  %v522 = vld [vmem:[#allocation2 + $0x111] sm:$0xff]
  %v523 = vld [vmem:[#allocation2 + $0x129] sm:$0xff]
  %v524 = vld [vmem:[#allocation2 + $0x141] sm:$0xff]
  %v525 = vld [vmem:[#allocation2 + $0x159] sm:$0xff]
  %v526 = vld [vmem:[#allocation2 + $0x171] sm:$0xff]
  %v527 = vld [vmem:[#allocation2 + $0x189] sm:$0xff]
  %v528 = vld [vmem:[#allocation2 + $0x1a1] sm:$0xff]
  %v529 = vpack.c.bf16 %v514, %v513
  %v530 = vpack.c.bf16 %v516, %v515
  %v531 = vpack.c.bf16 %v518, %v517
  %v532 = vpack.c.bf16 %v520, %v519
  %v533 = vpack.c.bf16 %v522, %v521
  %v534 = vpack.c.bf16 %v524, %v523
  %v535 = vpack.c.bf16 %v526, %v525
  %v536 = vpack.c.bf16 %v528, %v527
  %s537 = scalar_lea.vmem %s1, 128
  %v538 = vld [vmem:[%s537] sm:$0xf]
  %v539 = vld [vmem:[%s537 + $0x4] sm:$0xf]
  %v540 = vld [vmem:[%s537 + $0x8] sm:$0xf]
  %v541 = vld [vmem:[%s537 + $0xc] sm:$0xf]
  %v542 = vld [vmem:[%s537 + $0x10] sm:$0xf]
  %v543 = vld [vmem:[%s537 + $0x14] sm:$0xf]
  %v544 = vld [vmem:[%s537 + $0x18] sm:$0xf]
  %v545 = vld [vmem:[%s537 + $0x1c] sm:$0xf]
  %v546 = vld [vmem:[%s537 + $0x20] sm:$0xf]
  %v547 = vld [vmem:[%s537 + $0x24] sm:$0xf]
  %v548 = vld [vmem:[%s537 + $0x28] sm:$0xf]
  %v549 = vld [vmem:[%s537 + $0x2c] sm:$0xf]
  %v550 = vld [vmem:[%s537 + $0x30] sm:$0xf]
  %v551 = vld [vmem:[%s537 + $0x34] sm:$0xf]
  %v552 = vld [vmem:[%s537 + $0x38] sm:$0xf]
  %v553 = vld [vmem:[%s537 + $0x3c] sm:$0xf]
  %v570 = vunpack.c.l.b16 %v538
  %v571 = vunpack.c.l.b16 %v539
  %v572 = vunpack.c.l.b16 %v540
  %v573 = vunpack.c.l.b16 %v541
  %v574 = vunpack.c.l.b16 %v542
  %v575 = vunpack.c.l.b16 %v543
  %v576 = vunpack.c.l.b16 %v544
  %v577 = vunpack.c.l.b16 %v545
  %v578 = vunpack.c.l.b16 %v546
  %v579 = vunpack.c.l.b16 %v547
  %v580 = vunpack.c.l.b16 %v548
  %v581 = vunpack.c.l.b16 %v549
  %v582 = vunpack.c.l.b16 %v550
  %v583 = vunpack.c.l.b16 %v551
  %v584 = vunpack.c.l.b16 %v552
  %v585 = vunpack.c.l.b16 %v553
  %v586 = vpack.c.b16 %v571, %v570
  %v587 = vpack.c.b16 %v573, %v572
  %v588 = vpack.c.b16 %v575, %v574
  %v589 = vpack.c.b16 %v577, %v576
  %v590 = vpack.c.b16 %v579, %v578
  %v591 = vpack.c.b16 %v581, %v580
  %v592 = vpack.c.b16 %v583, %v582
  %v593 = vpack.c.b16 %v585, %v584
  %602 = vmatprep.subr.bf16.mxu0 0
  %603 = vmatpush1.bf16.msra.mxu0 %v593
  %604 = vmatprep.subr.bf16.mxu0 0
  %605 = vmatpush1.bf16.msra.mxu0 %v592
  %606 = vmatprep.subr.bf16.mxu0 0
  %607 = vmatpush1.bf16.msra.mxu0 %v591
  %608 = vmatprep.subr.bf16.mxu0 0
  %609 = vmatpush1.bf16.msra.mxu0 %v590
  %610 = vmatprep.subr.bf16.mxu0 0
  %611 = vmatpush1.bf16.msra.mxu0 %v589
  %612 = vmatprep.subr.bf16.mxu0 0
  %613 = vmatpush1.bf16.msra.mxu0 %v588
  %614 = vmatprep.subr.bf16.mxu0 0
  %615 = vmatpush1.bf16.msra.mxu0 %v587
  %616 = vmatprep.subr.bf16.mxu0 0
  %617 = vmatpush1.bf16.msra.mxu0 %v586
  %618 = vmatprep.subr.bf16.mxu0 0
  %619 = vmatpush2.bf16.msra.mxu0 0
  %620 = vmatprep.subr.bf16.mxu0 0
  %621 = vmatpush2.bf16.msra.mxu0 0
  %622 = vmatprep.subr.bf16.mxu0 0
  %623 = vmatpush2.bf16.msra.mxu0 0
  %624 = vmatprep.subr.bf16.mxu0 0
  %625 = vmatpush2.bf16.msra.mxu0 0
  %626 = vmatprep.subr.bf16.mxu0 0
  %627 = vmatpush2.bf16.msra.mxu0 0
  %628 = vmatprep.subr.bf16.mxu0 0
  %629 = vmatpush2.bf16.msra.mxu0 0
  %630 = vmatprep.subr.bf16.mxu0 0
  %631 = vmatpush2.bf16.msra.mxu0 0
  %632 = vmatprep.subr.bf16.mxu0 0
  %633 = vmatpush2.bf16.msra.mxu0 0
  %634 = vmatprep.mubr.bf16.mxu0 0
  %635 = vmatmul.mubr.bf16.gmra.mxu0 %v529
  %v636 = vpop.f32.mrf.mxu0
  %v637 = vadd.f32 0.0, %v636
  %v638 = vpop.f32.mrf.mxu0
  %v639 = vpop.f32.mrf.mxu0
  %v640 = vadd.f32 0.0, %v639
  %v641 = vpop.f32.mrf.mxu0
  %642 = vmatprep.mubr.bf16.mxu0 0
  %643 = vmatmul.mubr.bf16.gmra.mxu0 %v530
  %v644 = vpop.f32.mrf.mxu0
  %v645 = vadd.f32 0.0, %v644
  %v646 = vpop.f32.mrf.mxu0
  %v647 = vpop.f32.mrf.mxu0
  %v648 = vadd.f32 0.0, %v647
  %v649 = vpop.f32.mrf.mxu0
  %650 = vmatprep.mubr.bf16.mxu0 0
  %651 = vmatmul.mubr.bf16.gmra.mxu0 %v531
  %v652 = vpop.f32.mrf.mxu0
  %v653 = vadd.f32 0.0, %v652
  %v654 = vpop.f32.mrf.mxu0
  %v655 = vpop.f32.mrf.mxu0
  %v656 = vadd.f32 0.0, %v655
  %v657 = vpop.f32.mrf.mxu0
  %658 = vmatprep.mubr.bf16.mxu0 0
  %659 = vmatmul.mubr.bf16.gmra.mxu0 %v532
  %v660 = vpop.f32.mrf.mxu0
  %v661 = vadd.f32 0.0, %v660
  %v662 = vpop.f32.mrf.mxu0
  %v663 = vpop.f32.mrf.mxu0
  %v664 = vadd.f32 0.0, %v663
  %v665 = vpop.f32.mrf.mxu0
  %666 = vmatprep.mubr.bf16.mxu0 0
  %667 = vmatmul.mubr.bf16.gmra.mxu0 %v533
  %v668 = vpop.f32.mrf.mxu0
  %v669 = vadd.f32 0.0, %v668
  %v670 = vpop.f32.mrf.mxu0
  %v671 = vpop.f32.mrf.mxu0
  %v672 = vadd.f32 0.0, %v671
  %v673 = vpop.f32.mrf.mxu0
  %674 = vmatprep.mubr.bf16.mxu0 0
  %675 = vmatmul.mubr.bf16.gmra.mxu0 %v534
  %v676 = vpop.f32.mrf.mxu0
  %v677 = vadd.f32 0.0, %v676
  %v678 = vpop.f32.mrf.mxu0
  %v679 = vpop.f32.mrf.mxu0
  %v680 = vadd.f32 0.0, %v679
  %v681 = vpop.f32.mrf.mxu0
  %682 = vmatprep.mubr.bf16.mxu0 0
  %683 = vmatmul.mubr.bf16.gmra.mxu0 %v535
  %v684 = vpop.f32.mrf.mxu0
  %v685 = vadd.f32 0.0, %v684
  %v686 = vpop.f32.mrf.mxu0
  %v687 = vpop.f32.mrf.mxu0
  %v688 = vadd.f32 0.0, %v687
  %v689 = vpop.f32.mrf.mxu0
  %690 = vmatprep.mubr.bf16.mxu0 0
  %691 = vmatmul.mubr.bf16.gmra.mxu0 %v536
  %v692 = vpop.f32.mrf.mxu0
  %v693 = vadd.f32 0.0, %v692
  %v694 = vpop.f32.mrf.mxu0
  %v695 = vpop.f32.mrf.mxu0
  %v696 = vadd.f32 0.0, %v695
  %v697 = vpop.f32.mrf.mxu0
  %698 = vdwg.mxu0
  %v699 = vadd.f32 %v451, %v637
  %v700 = vadd.f32 %v454, %v640
  %v701 = vadd.f32 %v459, %v645
  %v702 = vadd.f32 %v462, %v648
  %v703 = vadd.f32 %v467, %v653
  %v704 = vadd.f32 %v470, %v656
  %v705 = vadd.f32 %v475, %v661
  %v706 = vadd.f32 %v478, %v664
  %v707 = vadd.f32 %v483, %v669
  %v708 = vadd.f32 %v486, %v672
  %v709 = vadd.f32 %v491, %v677
  %v710 = vadd.f32 %v494, %v680
  %v711 = vadd.f32 %v499, %v685
  %v712 = vadd.f32 %v502, %v688
  %v713 = vadd.f32 %v507, %v693
  %v714 = vadd.f32 %v510, %v696
  %v715 = vld [vmem:[%s125 + $0x7] sm:$0xff]
  %v716 = vld [vmem:[%s125 + $0x1f] sm:$0xff]
  %v717 = vld [vmem:[%s125 + $0x37] sm:$0xff]
  %v718 = vld [vmem:[%s125 + $0x4f] sm:$0xff]
  %v719 = vld [vmem:[%s125 + $0x67] sm:$0xff]
  %v720 = vld [vmem:[%s125 + $0x7f] sm:$0xff]
  %v721 = vld [vmem:[%s125 + $0x97] sm:$0xff]
  %v722 = vld [vmem:[%s125 + $0xaf] sm:$0xff]
  %v723 = vld [vmem:[%s125 + $0xf7] sm:$0xff]
  %v724 = vld [vmem:[%s125 + $0x10f] sm:$0xff]
  %v725 = vld [vmem:[%s125 + $0x127] sm:$0xff]
  %v726 = vld [vmem:[%s125 + $0x13f] sm:$0xff]
  %v727 = vld [vmem:[%s125 + $0x157] sm:$0xff]
  %v728 = vld [vmem:[%s125 + $0x16f] sm:$0xff]
  %v729 = vld [vmem:[%s125 + $0x187] sm:$0xff]
  %v730 = vld [vmem:[%s125 + $0x19f] sm:$0xff]
  %v731 = vpack.c.bf16 %v716, %v715
  %v732 = vpack.c.bf16 %v718, %v717
  %v733 = vpack.c.bf16 %v720, %v719
  %v734 = vpack.c.bf16 %v722, %v721
  %v735 = vpack.c.bf16 %v724, %v723
  %v736 = vpack.c.bf16 %v726, %v725
  %v737 = vpack.c.bf16 %v728, %v727
  %v738 = vpack.c.bf16 %v730, %v729
  %s739 = scalar_lea.vmem %s1, 192
  %v740 = vld [vmem:[%s739] sm:$0xf]
  %v741 = vld [vmem:[%s739 + $0x4] sm:$0xf]
  %v742 = vld [vmem:[%s739 + $0x8] sm:$0xf]
  %v743 = vld [vmem:[%s739 + $0xc] sm:$0xf]
  %v744 = vld [vmem:[%s739 + $0x10] sm:$0xf]
  %v745 = vld [vmem:[%s739 + $0x14] sm:$0xf]
  %v746 = vld [vmem:[%s739 + $0x18] sm:$0xf]
  %v747 = vld [vmem:[%s739 + $0x1c] sm:$0xf]
  %v748 = vld [vmem:[%s739 + $0x20] sm:$0xf]
  %v749 = vld [vmem:[%s739 + $0x24] sm:$0xf]
  %v750 = vld [vmem:[%s739 + $0x28] sm:$0xf]
  %v751 = vld [vmem:[%s739 + $0x2c] sm:$0xf]
  %v752 = vld [vmem:[%s739 + $0x30] sm:$0xf]
  %v753 = vld [vmem:[%s739 + $0x34] sm:$0xf]
  %v754 = vld [vmem:[%s739 + $0x38] sm:$0xf]
  %v755 = vld [vmem:[%s739 + $0x3c] sm:$0xf]
  %v772 = vunpack.c.l.b16 %v740
  %v773 = vunpack.c.l.b16 %v741
  %v774 = vunpack.c.l.b16 %v742
  %v775 = vunpack.c.l.b16 %v743
  %v776 = vunpack.c.l.b16 %v744
  %v777 = vunpack.c.l.b16 %v745
  %v778 = vunpack.c.l.b16 %v746
  %v779 = vunpack.c.l.b16 %v747
  %v780 = vunpack.c.l.b16 %v748
  %v781 = vunpack.c.l.b16 %v749
  %v782 = vunpack.c.l.b16 %v750
  %v783 = vunpack.c.l.b16 %v751
  %v784 = vunpack.c.l.b16 %v752
  %v785 = vunpack.c.l.b16 %v753
  %v786 = vunpack.c.l.b16 %v754
  %v787 = vunpack.c.l.b16 %v755
  %v788 = vpack.c.b16 %v773, %v772
  %v789 = vpack.c.b16 %v775, %v774
  %v790 = vpack.c.b16 %v777, %v776
  %v791 = vpack.c.b16 %v779, %v778
  %v792 = vpack.c.b16 %v781, %v780
  %v793 = vpack.c.b16 %v783, %v782
  %v794 = vpack.c.b16 %v785, %v784
  %v795 = vpack.c.b16 %v787, %v786
  %804 = vmatprep.subr.bf16.mxu0 0
  %805 = vmatpush1.bf16.msra.mxu0 %v795
  %806 = vmatprep.subr.bf16.mxu0 0
  %807 = vmatpush1.bf16.msra.mxu0 %v794
  %808 = vmatprep.subr.bf16.mxu0 0
  %809 = vmatpush1.bf16.msra.mxu0 %v793
  %810 = vmatprep.subr.bf16.mxu0 0
  %811 = vmatpush1.bf16.msra.mxu0 %v792
  %812 = vmatprep.subr.bf16.mxu0 0
  %813 = vmatpush1.bf16.msra.mxu0 %v791
  %814 = vmatprep.subr.bf16.mxu0 0
  %815 = vmatpush1.bf16.msra.mxu0 %v790
  %816 = vmatprep.subr.bf16.mxu0 0
  %817 = vmatpush1.bf16.msra.mxu0 %v789
  %818 = vmatprep.subr.bf16.mxu0 0
  %819 = vmatpush1.bf16.msra.mxu0 %v788
  %820 = vmatprep.subr.bf16.mxu0 0
  %821 = vmatpush2.bf16.msra.mxu0 0
  %822 = vmatprep.subr.bf16.mxu0 0
  %823 = vmatpush2.bf16.msra.mxu0 0
  %824 = vmatprep.subr.bf16.mxu0 0
  %825 = vmatpush2.bf16.msra.mxu0 0
  %826 = vmatprep.subr.bf16.mxu0 0
  %827 = vmatpush2.bf16.msra.mxu0 0
  %828 = vmatprep.subr.bf16.mxu0 0
  %829 = vmatpush2.bf16.msra.mxu0 0
  %830 = vmatprep.subr.bf16.mxu0 0
  %831 = vmatpush2.bf16.msra.mxu0 0
  %832 = vmatprep.subr.bf16.mxu0 0
  %833 = vmatpush2.bf16.msra.mxu0 0
  %834 = vmatprep.subr.bf16.mxu0 0
  %835 = vmatpush2.bf16.msra.mxu0 0
  %836 = vmatprep.mubr.bf16.mxu0 0
  %837 = vmatmul.mubr.bf16.gmra.mxu0 %v731
  %v838 = vpop.f32.mrf.mxu0
  %v839 = vadd.f32 0.0, %v838
  %v840 = vpop.f32.mrf.mxu0
  %v841 = vpop.f32.mrf.mxu0
  %v842 = vadd.f32 0.0, %v841
  %v843 = vpop.f32.mrf.mxu0
  %844 = vmatprep.mubr.bf16.mxu0 0
  %845 = vmatmul.mubr.bf16.gmra.mxu0 %v732
  %v846 = vpop.f32.mrf.mxu0
  %v847 = vadd.f32 0.0, %v846
  %v848 = vpop.f32.mrf.mxu0
  %v849 = vpop.f32.mrf.mxu0
  %v850 = vadd.f32 0.0, %v849
  %v851 = vpop.f32.mrf.mxu0
  %852 = vmatprep.mubr.bf16.mxu0 0
  %853 = vmatmul.mubr.bf16.gmra.mxu0 %v733
  %v854 = vpop.f32.mrf.mxu0
  %v855 = vadd.f32 0.0, %v854
  %v856 = vpop.f32.mrf.mxu0
  %v857 = vpop.f32.mrf.mxu0
  %v858 = vadd.f32 0.0, %v857
  %v859 = vpop.f32.mrf.mxu0
  %860 = vmatprep.mubr.bf16.mxu0 0
  %861 = vmatmul.mubr.bf16.gmra.mxu0 %v734
  %v862 = vpop.f32.mrf.mxu0
  %v863 = vadd.f32 0.0, %v862
  %v864 = vpop.f32.mrf.mxu0
  %v865 = vpop.f32.mrf.mxu0
  %v866 = vadd.f32 0.0, %v865
  %v867 = vpop.f32.mrf.mxu0
  %868 = vmatprep.mubr.bf16.mxu0 0
  %869 = vmatmul.mubr.bf16.gmra.mxu0 %v735
  %v870 = vpop.f32.mrf.mxu0
  %v871 = vadd.f32 0.0, %v870
  %v872 = vpop.f32.mrf.mxu0
  %v873 = vpop.f32.mrf.mxu0
  %v874 = vadd.f32 0.0, %v873
  %v875 = vpop.f32.mrf.mxu0
  %876 = vmatprep.mubr.bf16.mxu0 0
  %877 = vmatmul.mubr.bf16.gmra.mxu0 %v736
  %v878 = vpop.f32.mrf.mxu0
  %v879 = vadd.f32 0.0, %v878
  %v880 = vpop.f32.mrf.mxu0
  %v881 = vpop.f32.mrf.mxu0
  %v882 = vadd.f32 0.0, %v881
  %v883 = vpop.f32.mrf.mxu0
  %884 = vmatprep.mubr.bf16.mxu0 0
  %885 = vmatmul.mubr.bf16.gmra.mxu0 %v737
  %v886 = vpop.f32.mrf.mxu0
  %v887 = vadd.f32 0.0, %v886
  %v888 = vpop.f32.mrf.mxu0
  %v889 = vpop.f32.mrf.mxu0
  %v890 = vadd.f32 0.0, %v889
  %v891 = vpop.f32.mrf.mxu0
  %892 = vmatprep.mubr.bf16.mxu0 0
  %893 = vmatmul.mubr.bf16.gmra.mxu0 %v738
  %v894 = vpop.f32.mrf.mxu0
  %v895 = vadd.f32 0.0, %v894
  %v896 = vpop.f32.mrf.mxu0
  %v897 = vpop.f32.mrf.mxu0
  %v898 = vadd.f32 0.0, %v897
  %v899 = vpop.f32.mrf.mxu0
  %900 = vdwg.mxu0
  %v901 = vadd.f32 %v699, %v839
  %v902 = vadd.f32 %v700, %v842
  %v903 = vadd.f32 %v701, %v847
  %v904 = vadd.f32 %v702, %v850
  %v905 = vadd.f32 %v703, %v855
  %v906 = vadd.f32 %v704, %v858
  %v907 = vadd.f32 %v705, %v863
  %v908 = vadd.f32 %v706, %v866
  %v909 = vadd.f32 %v707, %v871
  %v910 = vadd.f32 %v708, %v874
  %v911 = vadd.f32 %v709, %v879
  %v912 = vadd.f32 %v710, %v882
  %v913 = vadd.f32 %v711, %v887
  %v914 = vadd.f32 %v712, %v890
  %v915 = vadd.f32 %v713, %v895
  %v916 = vadd.f32 %v714, %v898
  %v917 = vld [vmem:[%s125 + $0x8] sm:$0xff]
  %v918 = vld [vmem:[%s125 + $0x20] sm:$0xff]
  %v919 = vld [vmem:[%s125 + $0x38] sm:$0xff]
  %v920 = vld [vmem:[%s125 + $0x50] sm:$0xff]
  %v921 = vld [vmem:[%s125 + $0x68] sm:$0xff]
  %v922 = vld [vmem:[%s125 + $0x80] sm:$0xff]
  %v923 = vld [vmem:[%s125 + $0x98] sm:$0xff]
  %v924 = vld [vmem:[%s125 + $0xb0] sm:$0xff]
  %v925 = vld [vmem:[%s125 + $0xf8] sm:$0xff]
  %v926 = vld [vmem:[%s125 + $0x110] sm:$0xff]
  %v927 = vld [vmem:[%s125 + $0x128] sm:$0xff]
  %v928 = vld [vmem:[%s125 + $0x140] sm:$0xff]
  %v929 = vld [vmem:[%s125 + $0x158] sm:$0xff]
  %v930 = vld [vmem:[%s125 + $0x170] sm:$0xff]
  %v931 = vld [vmem:[%s125 + $0x188] sm:$0xff]
  %v932 = vld [vmem:[%s125 + $0x1a0] sm:$0xff]
  %v933 = vpack.c.bf16 %v918, %v917
  %v934 = vpack.c.bf16 %v920, %v919
  %v935 = vpack.c.bf16 %v922, %v921
  %v936 = vpack.c.bf16 %v924, %v923
  %v937 = vpack.c.bf16 %v926, %v925
  %v938 = vpack.c.bf16 %v928, %v927
  %v939 = vpack.c.bf16 %v930, %v929
  %v940 = vpack.c.bf16 %v932, %v931
  %s941 = scalar_lea.vmem %s1, 256
  %v942 = vld [vmem:[%s941] sm:$0xf]
  %v943 = vld [vmem:[%s941 + $0x4] sm:$0xf]
  %v944 = vld [vmem:[%s941 + $0x8] sm:$0xf]
  %v945 = vld [vmem:[%s941 + $0xc] sm:$0xf]
  %v946 = vld [vmem:[%s941 + $0x10] sm:$0xf]
  %v947 = vld [vmem:[%s941 + $0x14] sm:$0xf]
  %v948 = vld [vmem:[%s941 + $0x18] sm:$0xf]
  %v949 = vld [vmem:[%s941 + $0x1c] sm:$0xf]
  %v950 = vld [vmem:[%s941 + $0x20] sm:$0xf]
  %v951 = vld [vmem:[%s941 + $0x24] sm:$0xf]
  %v952 = vld [vmem:[%s941 + $0x28] sm:$0xf]
  %v953 = vld [vmem:[%s941 + $0x2c] sm:$0xf]
  %v954 = vld [vmem:[%s941 + $0x30] sm:$0xf]
  %v955 = vld [vmem:[%s941 + $0x34] sm:$0xf]
  %v956 = vld [vmem:[%s941 + $0x38] sm:$0xf]
  %v957 = vld [vmem:[%s941 + $0x3c] sm:$0xf]
  %v974 = vunpack.c.l.b16 %v942
  %v975 = vunpack.c.l.b16 %v943
  %v976 = vunpack.c.l.b16 %v944
  %v977 = vunpack.c.l.b16 %v945
  %v978 = vunpack.c.l.b16 %v946
  %v979 = vunpack.c.l.b16 %v947
  %v980 = vunpack.c.l.b16 %v948
  %v981 = vunpack.c.l.b16 %v949
  %v982 = vunpack.c.l.b16 %v950
  %v983 = vunpack.c.l.b16 %v951
  %v984 = vunpack.c.l.b16 %v952
  %v985 = vunpack.c.l.b16 %v953
  %v986 = vunpack.c.l.b16 %v954
  %v987 = vunpack.c.l.b16 %v955
  %v988 = vunpack.c.l.b16 %v956
  %v989 = vunpack.c.l.b16 %v957
  %v990 = vpack.c.b16 %v975, %v974
  %v991 = vpack.c.b16 %v977, %v976
  %v992 = vpack.c.b16 %v979, %v978
  %v993 = vpack.c.b16 %v981, %v980
  %v994 = vpack.c.b16 %v983, %v982
  %v995 = vpack.c.b16 %v985, %v984
  %v996 = vpack.c.b16 %v987, %v986
  %v997 = vpack.c.b16 %v989, %v988
  %1006 = vmatprep.subr.bf16.mxu0 0
  %1007 = vmatpush1.bf16.msra.mxu0 %v997
  %1008 = vmatprep.subr.bf16.mxu0 0
  %1009 = vmatpush1.bf16.msra.mxu0 %v996
  %1010 = vmatprep.subr.bf16.mxu0 0
  %1011 = vmatpush1.bf16.msra.mxu0 %v995
  %1012 = vmatprep.subr.bf16.mxu0 0
  %1013 = vmatpush1.bf16.msra.mxu0 %v994
  %1014 = vmatprep.subr.bf16.mxu0 0
  %1015 = vmatpush1.bf16.msra.mxu0 %v993
  %1016 = vmatprep.subr.bf16.mxu0 0
  %1017 = vmatpush1.bf16.msra.mxu0 %v992
  %1018 = vmatprep.subr.bf16.mxu0 0
  %1019 = vmatpush1.bf16.msra.mxu0 %v991
  %1020 = vmatprep.subr.bf16.mxu0 0
  %1021 = vmatpush1.bf16.msra.mxu0 %v990
  %1022 = vmatprep.subr.bf16.mxu0 0
  %1023 = vmatpush2.bf16.msra.mxu0 0
  %1024 = vmatprep.subr.bf16.mxu0 0
  %1025 = vmatpush2.bf16.msra.mxu0 0
  %1026 = vmatprep.subr.bf16.mxu0 0
  %1027 = vmatpush2.bf16.msra.mxu0 0
  %1028 = vmatprep.subr.bf16.mxu0 0
  %1029 = vmatpush2.bf16.msra.mxu0 0
  %1030 = vmatprep.subr.bf16.mxu0 0
  %1031 = vmatpush2.bf16.msra.mxu0 0
  %1032 = vmatprep.subr.bf16.mxu0 0
  %1033 = vmatpush2.bf16.msra.mxu0 0
  %1034 = vmatprep.subr.bf16.mxu0 0
  %1035 = vmatpush2.bf16.msra.mxu0 0
  %1036 = vmatprep.subr.bf16.mxu0 0
  %1037 = vmatpush2.bf16.msra.mxu0 0
  %1038 = vmatprep.mubr.bf16.mxu0 0
  %1039 = vmatmul.mubr.bf16.gmra.mxu0 %v933
  %v1040 = vpop.f32.mrf.mxu0
  %v1041 = vadd.f32 0.0, %v1040
  %v1042 = vpop.f32.mrf.mxu0
  %v1043 = vpop.f32.mrf.mxu0
  %v1044 = vadd.f32 0.0, %v1043
  %v1045 = vpop.f32.mrf.mxu0
  %1046 = vmatprep.mubr.bf16.mxu0 0
  %1047 = vmatmul.mubr.bf16.gmra.mxu0 %v934
  %v1048 = vpop.f32.mrf.mxu0
  %v1049 = vadd.f32 0.0, %v1048
  %v1050 = vpop.f32.mrf.mxu0
  %v1051 = vpop.f32.mrf.mxu0
  %v1052 = vadd.f32 0.0, %v1051
  %v1053 = vpop.f32.mrf.mxu0
  %1054 = vmatprep.mubr.bf16.mxu0 0
  %1055 = vmatmul.mubr.bf16.gmra.mxu0 %v935
  %v1056 = vpop.f32.mrf.mxu0
  %v1057 = vadd.f32 0.0, %v1056
  %v1058 = vpop.f32.mrf.mxu0
  %v1059 = vpop.f32.mrf.mxu0
  %v1060 = vadd.f32 0.0, %v1059
  %v1061 = vpop.f32.mrf.mxu0
  %1062 = vmatprep.mubr.bf16.mxu0 0
  %1063 = vmatmul.mubr.bf16.gmra.mxu0 %v936
  %v1064 = vpop.f32.mrf.mxu0
  %v1065 = vadd.f32 0.0, %v1064
  %v1066 = vpop.f32.mrf.mxu0
  %v1067 = vpop.f32.mrf.mxu0
  %v1068 = vadd.f32 0.0, %v1067
  %v1069 = vpop.f32.mrf.mxu0
  %1070 = vmatprep.mubr.bf16.mxu0 0
  %1071 = vmatmul.mubr.bf16.gmra.mxu0 %v937
  %v1072 = vpop.f32.mrf.mxu0
  %v1073 = vadd.f32 0.0, %v1072
  %v1074 = vpop.f32.mrf.mxu0
  %v1075 = vpop.f32.mrf.mxu0
  %v1076 = vadd.f32 0.0, %v1075
  %v1077 = vpop.f32.mrf.mxu0
  %1078 = vmatprep.mubr.bf16.mxu0 0
  %1079 = vmatmul.mubr.bf16.gmra.mxu0 %v938
  %v1080 = vpop.f32.mrf.mxu0
  %v1081 = vadd.f32 0.0, %v1080
  %v1082 = vpop.f32.mrf.mxu0
  %v1083 = vpop.f32.mrf.mxu0
  %v1084 = vadd.f32 0.0, %v1083
  %v1085 = vpop.f32.mrf.mxu0
  %1086 = vmatprep.mubr.bf16.mxu0 0
  %1087 = vmatmul.mubr.bf16.gmra.mxu0 %v939
  %v1088 = vpop.f32.mrf.mxu0
  %v1089 = vadd.f32 0.0, %v1088
  %v1090 = vpop.f32.mrf.mxu0
  %v1091 = vpop.f32.mrf.mxu0
  %v1092 = vadd.f32 0.0, %v1091
  %v1093 = vpop.f32.mrf.mxu0
  %1094 = vmatprep.mubr.bf16.mxu0 0
  %1095 = vmatmul.mubr.bf16.gmra.mxu0 %v940
  %v1096 = vpop.f32.mrf.mxu0
  %v1097 = vadd.f32 0.0, %v1096
  %v1098 = vpop.f32.mrf.mxu0
  %v1099 = vpop.f32.mrf.mxu0
  %v1100 = vadd.f32 0.0, %v1099
  %v1101 = vpop.f32.mrf.mxu0
  %1102 = vdwg.mxu0
  %v1103 = vadd.f32 %v901, %v1041
  %v1104 = vadd.f32 %v902, %v1044
  %v1105 = vadd.f32 %v903, %v1049
  %v1106 = vadd.f32 %v904, %v1052
  %v1107 = vadd.f32 %v905, %v1057
  %v1108 = vadd.f32 %v906, %v1060
  %v1109 = vadd.f32 %v907, %v1065
  %v1110 = vadd.f32 %v908, %v1068
  %v1111 = vadd.f32 %v909, %v1073
  %v1112 = vadd.f32 %v910, %v1076
  %v1113 = vadd.f32 %v911, %v1081
  %v1114 = vadd.f32 %v912, %v1084
  %v1115 = vadd.f32 %v913, %v1089
  %v1116 = vadd.f32 %v914, %v1092
  %v1117 = vadd.f32 %v915, %v1097
  %v1118 = vadd.f32 %v916, %v1100
  %v1119 = vld [vmem:[%s125 + $0x9] sm:$0xff]
  %v1120 = vld [vmem:[%s125 + $0x21] sm:$0xff]
  %v1121 = vld [vmem:[%s125 + $0x39] sm:$0xff]
  %v1122 = vld [vmem:[%s125 + $0x51] sm:$0xff]
  %v1123 = vld [vmem:[%s125 + $0x69] sm:$0xff]
  %v1124 = vld [vmem:[%s125 + $0x81] sm:$0xff]
  %v1125 = vld [vmem:[%s125 + $0x99] sm:$0xff]
  %v1126 = vld [vmem:[%s125 + $0xb1] sm:$0xff]
  %v1127 = vld [vmem:[%s125 + $0xf9] sm:$0xff]
  %v1128 = vld [vmem:[%s125 + $0x111] sm:$0xff]
  %v1129 = vld [vmem:[%s125 + $0x129] sm:$0xff]
  %v1130 = vld [vmem:[%s125 + $0x141] sm:$0xff]
  %v1131 = vld [vmem:[%s125 + $0x159] sm:$0xff]
  %v1132 = vld [vmem:[%s125 + $0x171] sm:$0xff]
  %v1133 = vld [vmem:[%s125 + $0x189] sm:$0xff]
  %v1134 = vld [vmem:[%s125 + $0x1a1] sm:$0xff]
  %v1135 = vpack.c.bf16 %v1120, %v1119
  %v1136 = vpack.c.bf16 %v1122, %v1121
  %v1137 = vpack.c.bf16 %v1124, %v1123
  %v1138 = vpack.c.bf16 %v1126, %v1125
  %v1139 = vpack.c.bf16 %v1128, %v1127
  %v1140 = vpack.c.bf16 %v1130, %v1129
  %v1141 = vpack.c.bf16 %v1132, %v1131
  %v1142 = vpack.c.bf16 %v1134, %v1133
  %s1143 = scalar_lea.vmem %s1, 320
  %v1144 = vld [vmem:[%s1143] sm:$0xf]
  %v1145 = vld [vmem:[%s1143 + $0x4] sm:$0xf]
  %v1146 = vld [vmem:[%s1143 + $0x8] sm:$0xf]
  %v1147 = vld [vmem:[%s1143 + $0xc] sm:$0xf]
  %v1148 = vld [vmem:[%s1143 + $0x10] sm:$0xf]
  %v1149 = vld [vmem:[%s1143 + $0x14] sm:$0xf]
  %v1150 = vld [vmem:[%s1143 + $0x18] sm:$0xf]
  %v1151 = vld [vmem:[%s1143 + $0x1c] sm:$0xf]
  %v1152 = vld [vmem:[%s1143 + $0x20] sm:$0xf]
  %v1153 = vld [vmem:[%s1143 + $0x24] sm:$0xf]
  %v1154 = vld [vmem:[%s1143 + $0x28] sm:$0xf]
  %v1155 = vld [vmem:[%s1143 + $0x2c] sm:$0xf]
  %v1156 = vld [vmem:[%s1143 + $0x30] sm:$0xf]
  %v1157 = vld [vmem:[%s1143 + $0x34] sm:$0xf]
  %v1158 = vld [vmem:[%s1143 + $0x38] sm:$0xf]
  %v1159 = vld [vmem:[%s1143 + $0x3c] sm:$0xf]
  %v1176 = vunpack.c.l.b16 %v1144
  %v1177 = vunpack.c.l.b16 %v1145
  %v1178 = vunpack.c.l.b16 %v1146
  %v1179 = vunpack.c.l.b16 %v1147
  %v1180 = vunpack.c.l.b16 %v1148
  %v1181 = vunpack.c.l.b16 %v1149
  %v1182 = vunpack.c.l.b16 %v1150
  %v1183 = vunpack.c.l.b16 %v1151
  %v1184 = vunpack.c.l.b16 %v1152
  %v1185 = vunpack.c.l.b16 %v1153
  %v1186 = vunpack.c.l.b16 %v1154
  %v1187 = vunpack.c.l.b16 %v1155
  %v1188 = vunpack.c.l.b16 %v1156
  %v1189 = vunpack.c.l.b16 %v1157
  %v1190 = vunpack.c.l.b16 %v1158
  %v1191 = vunpack.c.l.b16 %v1159
  %v1192 = vpack.c.b16 %v1177, %v1176
  %v1193 = vpack.c.b16 %v1179, %v1178
  %v1194 = vpack.c.b16 %v1181, %v1180
  %v1195 = vpack.c.b16 %v1183, %v1182
  %v1196 = vpack.c.b16 %v1185, %v1184
  %v1197 = vpack.c.b16 %v1187, %v1186
  %v1198 = vpack.c.b16 %v1189, %v1188
  %v1199 = vpack.c.b16 %v1191, %v1190
  %1208 = vmatprep.subr.bf16.mxu0 0
  %1209 = vmatpush1.bf16.msra.mxu0 %v1199
  %1210 = vmatprep.subr.bf16.mxu0 0
  %1211 = vmatpush1.bf16.msra.mxu0 %v1198
  %1212 = vmatprep.subr.bf16.mxu0 0
  %1213 = vmatpush1.bf16.msra.mxu0 %v1197
  %1214 = vmatprep.subr.bf16.mxu0 0
  %1215 = vmatpush1.bf16.msra.mxu0 %v1196
  %1216 = vmatprep.subr.bf16.mxu0 0
  %1217 = vmatpush1.bf16.msra.mxu0 %v1195
  %1218 = vmatprep.subr.bf16.mxu0 0
  %1219 = vmatpush1.bf16.msra.mxu0 %v1194
  %1220 = vmatprep.subr.bf16.mxu0 0
  %1221 = vmatpush1.bf16.msra.mxu0 %v1193
  %1222 = vmatprep.subr.bf16.mxu0 0
  %1223 = vmatpush1.bf16.msra.mxu0 %v1192
  %1224 = vmatprep.subr.bf16.mxu0 0
  %1225 = vmatpush2.bf16.msra.mxu0 0
  %1226 = vmatprep.subr.bf16.mxu0 0
  %1227 = vmatpush2.bf16.msra.mxu0 0
  %1228 = vmatprep.subr.bf16.mxu0 0
  %1229 = vmatpush2.bf16.msra.mxu0 0
  %1230 = vmatprep.subr.bf16.mxu0 0
  %1231 = vmatpush2.bf16.msra.mxu0 0
  %1232 = vmatprep.subr.bf16.mxu0 0
  %1233 = vmatpush2.bf16.msra.mxu0 0
  %1234 = vmatprep.subr.bf16.mxu0 0
  %1235 = vmatpush2.bf16.msra.mxu0 0
  %1236 = vmatprep.subr.bf16.mxu0 0
  %1237 = vmatpush2.bf16.msra.mxu0 0
  %1238 = vmatprep.subr.bf16.mxu0 0
  %1239 = vmatpush2.bf16.msra.mxu0 0
  %1240 = vmatprep.mubr.bf16.mxu0 0
  %1241 = vmatmul.mubr.bf16.gmra.mxu0 %v1135
  %v1242 = vpop.f32.mrf.mxu0
  %v1243 = vadd.f32 0.0, %v1242
  %v1244 = vpop.f32.mrf.mxu0
  %v1245 = vpop.f32.mrf.mxu0
  %v1246 = vadd.f32 0.0, %v1245
  %v1247 = vpop.f32.mrf.mxu0
  %1248 = vmatprep.mubr.bf16.mxu0 0
  %1249 = vmatmul.mubr.bf16.gmra.mxu0 %v1136
  %v1250 = vpop.f32.mrf.mxu0
  %v1251 = vadd.f32 0.0, %v1250
  %v1252 = vpop.f32.mrf.mxu0
  %v1253 = vpop.f32.mrf.mxu0
  %v1254 = vadd.f32 0.0, %v1253
  %v1255 = vpop.f32.mrf.mxu0
  %1256 = vmatprep.mubr.bf16.mxu0 0
  %1257 = vmatmul.mubr.bf16.gmra.mxu0 %v1137
  %v1258 = vpop.f32.mrf.mxu0
  %v1259 = vadd.f32 0.0, %v1258
  %v1260 = vpop.f32.mrf.mxu0
  %v1261 = vpop.f32.mrf.mxu0
  %v1262 = vadd.f32 0.0, %v1261
  %v1263 = vpop.f32.mrf.mxu0
  %1264 = vmatprep.mubr.bf16.mxu0 0
  %1265 = vmatmul.mubr.bf16.gmra.mxu0 %v1138
  %v1266 = vpop.f32.mrf.mxu0
  %v1267 = vadd.f32 0.0, %v1266
  %v1268 = vpop.f32.mrf.mxu0
  %v1269 = vpop.f32.mrf.mxu0
  %v1270 = vadd.f32 0.0, %v1269
  %v1271 = vpop.f32.mrf.mxu0
  %1272 = vmatprep.mubr.bf16.mxu0 0
  %1273 = vmatmul.mubr.bf16.gmra.mxu0 %v1139
  %v1274 = vpop.f32.mrf.mxu0
  %v1275 = vadd.f32 0.0, %v1274
  %v1276 = vpop.f32.mrf.mxu0
  %v1277 = vpop.f32.mrf.mxu0
  %v1278 = vadd.f32 0.0, %v1277
  %v1279 = vpop.f32.mrf.mxu0
  %1280 = vmatprep.mubr.bf16.mxu0 0
  %1281 = vmatmul.mubr.bf16.gmra.mxu0 %v1140
  %v1282 = vpop.f32.mrf.mxu0
  %v1283 = vadd.f32 0.0, %v1282
  %v1284 = vpop.f32.mrf.mxu0
  %v1285 = vpop.f32.mrf.mxu0
  %v1286 = vadd.f32 0.0, %v1285
  %v1287 = vpop.f32.mrf.mxu0
  %1288 = vmatprep.mubr.bf16.mxu0 0
  %1289 = vmatmul.mubr.bf16.gmra.mxu0 %v1141
  %v1290 = vpop.f32.mrf.mxu0
  %v1291 = vadd.f32 0.0, %v1290
  %v1292 = vpop.f32.mrf.mxu0
  %v1293 = vpop.f32.mrf.mxu0
  %v1294 = vadd.f32 0.0, %v1293
  %v1295 = vpop.f32.mrf.mxu0
  %1296 = vmatprep.mubr.bf16.mxu0 0
  %1297 = vmatmul.mubr.bf16.gmra.mxu0 %v1142
  %v1298 = vpop.f32.mrf.mxu0
  %v1299 = vadd.f32 0.0, %v1298
  %v1300 = vpop.f32.mrf.mxu0
  %v1301 = vpop.f32.mrf.mxu0
  %v1302 = vadd.f32 0.0, %v1301
  %v1303 = vpop.f32.mrf.mxu0
  %1304 = vdwg.mxu0
  %v1305 = vadd.f32 %v1103, %v1243
  %v1306 = vadd.f32 %v1104, %v1246
  %v1307 = vadd.f32 %v1105, %v1251
  %v1308 = vadd.f32 %v1106, %v1254
  %v1309 = vadd.f32 %v1107, %v1259
  %v1310 = vadd.f32 %v1108, %v1262
  %v1311 = vadd.f32 %v1109, %v1267
  %v1312 = vadd.f32 %v1110, %v1270
  %v1313 = vadd.f32 %v1111, %v1275
  %v1314 = vadd.f32 %v1112, %v1278
  %v1315 = vadd.f32 %v1113, %v1283
  %v1316 = vadd.f32 %v1114, %v1286
  %v1317 = vadd.f32 %v1115, %v1291
  %v1318 = vadd.f32 %v1116, %v1294
  %v1319 = vadd.f32 %v1117, %v1299
  %v1320 = vadd.f32 %v1118, %v1302
  %s1321 = scalar_lea.vmem [#allocation2], 48
  %v1322 = vld [vmem:[%s1321 + $0x7] sm:$0xff]
  %v1323 = vld [vmem:[%s1321 + $0x1f] sm:$0xff]
  %v1324 = vld [vmem:[%s1321 + $0x37] sm:$0xff]
  %v1325 = vld [vmem:[%s1321 + $0x4f] sm:$0xff]
  %v1326 = vld [vmem:[%s1321 + $0x67] sm:$0xff]
  %v1327 = vld [vmem:[%s1321 + $0x7f] sm:$0xff]
  %v1328 = vld [vmem:[%s1321 + $0x97] sm:$0xff]
  %v1329 = vld [vmem:[%s1321 + $0xaf] sm:$0xff]
  %v1330 = vld [vmem:[%s1321 + $0xf7] sm:$0xff]
  %v1331 = vld [vmem:[%s1321 + $0x10f] sm:$0xff]
  %v1332 = vld [vmem:[%s1321 + $0x127] sm:$0xff]
  %v1333 = vld [vmem:[%s1321 + $0x13f] sm:$0xff]
  %v1334 = vld [vmem:[%s1321 + $0x157] sm:$0xff]
  %v1335 = vld [vmem:[%s1321 + $0x16f] sm:$0xff]
  %v1336 = vld [vmem:[%s1321 + $0x187] sm:$0xff]
  %v1337 = vld [vmem:[%s1321 + $0x19f] sm:$0xff]
  %v1338 = vpack.c.bf16 %v1323, %v1322
  %v1339 = vpack.c.bf16 %v1325, %v1324
  %v1340 = vpack.c.bf16 %v1327, %v1326
  %v1341 = vpack.c.bf16 %v1329, %v1328
  %v1342 = vpack.c.bf16 %v1331, %v1330
  %v1343 = vpack.c.bf16 %v1333, %v1332
  %v1344 = vpack.c.bf16 %v1335, %v1334
  %v1345 = vpack.c.bf16 %v1337, %v1336
  %s1346 = scalar_lea.vmem %s1, 384
  %v1347 = vld [vmem:[%s1346] sm:$0xf]
  %v1348 = vld [vmem:[%s1346 + $0x4] sm:$0xf]
  %v1349 = vld [vmem:[%s1346 + $0x8] sm:$0xf]
  %v1350 = vld [vmem:[%s1346 + $0xc] sm:$0xf]
  %v1351 = vld [vmem:[%s1346 + $0x10] sm:$0xf]
  %v1352 = vld [vmem:[%s1346 + $0x14] sm:$0xf]
  %v1353 = vld [vmem:[%s1346 + $0x18] sm:$0xf]
  %v1354 = vld [vmem:[%s1346 + $0x1c] sm:$0xf]
  %v1355 = vld [vmem:[%s1346 + $0x20] sm:$0xf]
  %v1356 = vld [vmem:[%s1346 + $0x24] sm:$0xf]
  %v1357 = vld [vmem:[%s1346 + $0x28] sm:$0xf]
  %v1358 = vld [vmem:[%s1346 + $0x2c] sm:$0xf]
  %v1359 = vld [vmem:[%s1346 + $0x30] sm:$0xf]
  %v1360 = vld [vmem:[%s1346 + $0x34] sm:$0xf]
  %v1361 = vld [vmem:[%s1346 + $0x38] sm:$0xf]
  %v1362 = vld [vmem:[%s1346 + $0x3c] sm:$0xf]
  %v1379 = vunpack.c.l.b16 %v1347
  %v1380 = vunpack.c.l.b16 %v1348
  %v1381 = vunpack.c.l.b16 %v1349
  %v1382 = vunpack.c.l.b16 %v1350
  %v1383 = vunpack.c.l.b16 %v1351
  %v1384 = vunpack.c.l.b16 %v1352
  %v1385 = vunpack.c.l.b16 %v1353
  %v1386 = vunpack.c.l.b16 %v1354
  %v1387 = vunpack.c.l.b16 %v1355
  %v1388 = vunpack.c.l.b16 %v1356
  %v1389 = vunpack.c.l.b16 %v1357
  %v1390 = vunpack.c.l.b16 %v1358
  %v1391 = vunpack.c.l.b16 %v1359
  %v1392 = vunpack.c.l.b16 %v1360
  %v1393 = vunpack.c.l.b16 %v1361
  %v1394 = vunpack.c.l.b16 %v1362
  %v1395 = vpack.c.b16 %v1380, %v1379
  %v1396 = vpack.c.b16 %v1382, %v1381
  %v1397 = vpack.c.b16 %v1384, %v1383
  %v1398 = vpack.c.b16 %v1386, %v1385
  %v1399 = vpack.c.b16 %v1388, %v1387
  %v1400 = vpack.c.b16 %v1390, %v1389
  %v1401 = vpack.c.b16 %v1392, %v1391
  %v1402 = vpack.c.b16 %v1394, %v1393
  %1411 = vmatprep.subr.bf16.mxu0 0
  %1412 = vmatpush1.bf16.msra.mxu0 %v1402
  %1413 = vmatprep.subr.bf16.mxu0 0
  %1414 = vmatpush1.bf16.msra.mxu0 %v1401
  %1415 = vmatprep.subr.bf16.mxu0 0
  %1416 = vmatpush1.bf16.msra.mxu0 %v1400
  %1417 = vmatprep.subr.bf16.mxu0 0
  %1418 = vmatpush1.bf16.msra.mxu0 %v1399
  %1419 = vmatprep.subr.bf16.mxu0 0
  %1420 = vmatpush1.bf16.msra.mxu0 %v1398
  %1421 = vmatprep.subr.bf16.mxu0 0
  %1422 = vmatpush1.bf16.msra.mxu0 %v1397
  %1423 = vmatprep.subr.bf16.mxu0 0
  %1424 = vmatpush1.bf16.msra.mxu0 %v1396
  %1425 = vmatprep.subr.bf16.mxu0 0
  %1426 = vmatpush1.bf16.msra.mxu0 %v1395
  %1427 = vmatprep.subr.bf16.mxu0 0
  %1428 = vmatpush2.bf16.msra.mxu0 0
  %1429 = vmatprep.subr.bf16.mxu0 0
  %1430 = vmatpush2.bf16.msra.mxu0 0
  %1431 = vmatprep.subr.bf16.mxu0 0
  %1432 = vmatpush2.bf16.msra.mxu0 0
  %1433 = vmatprep.subr.bf16.mxu0 0
  %1434 = vmatpush2.bf16.msra.mxu0 0
  %1435 = vmatprep.subr.bf16.mxu0 0
  %1436 = vmatpush2.bf16.msra.mxu0 0
  %1437 = vmatprep.subr.bf16.mxu0 0
  %1438 = vmatpush2.bf16.msra.mxu0 0
  %1439 = vmatprep.subr.bf16.mxu0 0
  %1440 = vmatpush2.bf16.msra.mxu0 0
  %1441 = vmatprep.subr.bf16.mxu0 0
  %1442 = vmatpush2.bf16.msra.mxu0 0
  %1443 = vmatprep.mubr.bf16.mxu0 0
  %1444 = vmatmul.mubr.bf16.gmra.mxu0 %v1338
  %v1445 = vpop.f32.mrf.mxu0
  %v1446 = vadd.f32 0.0, %v1445
  %v1447 = vpop.f32.mrf.mxu0
  %v1448 = vpop.f32.mrf.mxu0
  %v1449 = vadd.f32 0.0, %v1448
  %v1450 = vpop.f32.mrf.mxu0
  %1451 = vmatprep.mubr.bf16.mxu0 0
  %1452 = vmatmul.mubr.bf16.gmra.mxu0 %v1339
  %v1453 = vpop.f32.mrf.mxu0
  %v1454 = vadd.f32 0.0, %v1453
  %v1455 = vpop.f32.mrf.mxu0
  %v1456 = vpop.f32.mrf.mxu0
  %v1457 = vadd.f32 0.0, %v1456
  %v1458 = vpop.f32.mrf.mxu0
  %1459 = vmatprep.mubr.bf16.mxu0 0
  %1460 = vmatmul.mubr.bf16.gmra.mxu0 %v1340
  %v1461 = vpop.f32.mrf.mxu0
  %v1462 = vadd.f32 0.0, %v1461
  %v1463 = vpop.f32.mrf.mxu0
  %v1464 = vpop.f32.mrf.mxu0
  %v1465 = vadd.f32 0.0, %v1464
  %v1466 = vpop.f32.mrf.mxu0
  %1467 = vmatprep.mubr.bf16.mxu0 0
  %1468 = vmatmul.mubr.bf16.gmra.mxu0 %v1341
  %v1469 = vpop.f32.mrf.mxu0
  %v1470 = vadd.f32 0.0, %v1469
  %v1471 = vpop.f32.mrf.mxu0
  %v1472 = vpop.f32.mrf.mxu0
  %v1473 = vadd.f32 0.0, %v1472
  %v1474 = vpop.f32.mrf.mxu0
  %1475 = vmatprep.mubr.bf16.mxu0 0
  %1476 = vmatmul.mubr.bf16.gmra.mxu0 %v1342
  %v1477 = vpop.f32.mrf.mxu0
  %v1478 = vadd.f32 0.0, %v1477
  %v1479 = vpop.f32.mrf.mxu0
  %v1480 = vpop.f32.mrf.mxu0
  %v1481 = vadd.f32 0.0, %v1480
  %v1482 = vpop.f32.mrf.mxu0
  %1483 = vmatprep.mubr.bf16.mxu0 0
  %1484 = vmatmul.mubr.bf16.gmra.mxu0 %v1343
  %v1485 = vpop.f32.mrf.mxu0
  %v1486 = vadd.f32 0.0, %v1485
  %v1487 = vpop.f32.mrf.mxu0
  %v1488 = vpop.f32.mrf.mxu0
  %v1489 = vadd.f32 0.0, %v1488
  %v1490 = vpop.f32.mrf.mxu0
  %1491 = vmatprep.mubr.bf16.mxu0 0
  %1492 = vmatmul.mubr.bf16.gmra.mxu0 %v1344
  %v1493 = vpop.f32.mrf.mxu0
  %v1494 = vadd.f32 0.0, %v1493
  %v1495 = vpop.f32.mrf.mxu0
  %v1496 = vpop.f32.mrf.mxu0
  %v1497 = vadd.f32 0.0, %v1496
  %v1498 = vpop.f32.mrf.mxu0
  %1499 = vmatprep.mubr.bf16.mxu0 0
  %1500 = vmatmul.mubr.bf16.gmra.mxu0 %v1345
  %v1501 = vpop.f32.mrf.mxu0
  %v1502 = vadd.f32 0.0, %v1501
  %v1503 = vpop.f32.mrf.mxu0
  %v1504 = vpop.f32.mrf.mxu0
  %v1505 = vadd.f32 0.0, %v1504
  %v1506 = vpop.f32.mrf.mxu0
  %1507 = vdwg.mxu0
  %v1508 = vadd.f32 %v1305, %v1446
  %v1509 = vadd.f32 %v1306, %v1449
  %v1510 = vadd.f32 %v1307, %v1454
  %v1511 = vadd.f32 %v1308, %v1457
  %v1512 = vadd.f32 %v1309, %v1462
  %v1513 = vadd.f32 %v1310, %v1465
  %v1514 = vadd.f32 %v1311, %v1470
  %v1515 = vadd.f32 %v1312, %v1473
  %v1516 = vadd.f32 %v1313, %v1478
  %v1517 = vadd.f32 %v1314, %v1481
  %v1518 = vadd.f32 %v1315, %v1486
  %v1519 = vadd.f32 %v1316, %v1489
  %v1520 = vadd.f32 %v1317, %v1494
  %v1521 = vadd.f32 %v1318, %v1497
  %v1522 = vadd.f32 %v1319, %v1502
  %v1523 = vadd.f32 %v1320, %v1505
  %v1524 = vld [vmem:[%s1321 + $0x8] sm:$0xff]
  %v1525 = vld [vmem:[%s1321 + $0x20] sm:$0xff]
  %v1526 = vld [vmem:[%s1321 + $0x38] sm:$0xff]
  %v1527 = vld [vmem:[%s1321 + $0x50] sm:$0xff]
  %v1528 = vld [vmem:[%s1321 + $0x68] sm:$0xff]
  %v1529 = vld [vmem:[%s1321 + $0x80] sm:$0xff]
  %v1530 = vld [vmem:[%s1321 + $0x98] sm:$0xff]
  %v1531 = vld [vmem:[%s1321 + $0xb0] sm:$0xff]
  %v1532 = vld [vmem:[%s1321 + $0xf8] sm:$0xff]
  %v1533 = vld [vmem:[%s1321 + $0x110] sm:$0xff]
  %v1534 = vld [vmem:[%s1321 + $0x128] sm:$0xff]
  %v1535 = vld [vmem:[%s1321 + $0x140] sm:$0xff]
  %v1536 = vld [vmem:[%s1321 + $0x158] sm:$0xff]
  %v1537 = vld [vmem:[%s1321 + $0x170] sm:$0xff]
  %v1538 = vld [vmem:[%s1321 + $0x188] sm:$0xff]
  %v1539 = vld [vmem:[%s1321 + $0x1a0] sm:$0xff]
  %v1540 = vpack.c.bf16 %v1525, %v1524
  %v1541 = vpack.c.bf16 %v1527, %v1526
  %v1542 = vpack.c.bf16 %v1529, %v1528
  %v1543 = vpack.c.bf16 %v1531, %v1530
  %v1544 = vpack.c.bf16 %v1533, %v1532
  %v1545 = vpack.c.bf16 %v1535, %v1534
  %v1546 = vpack.c.bf16 %v1537, %v1536
  %v1547 = vpack.c.bf16 %v1539, %v1538
  %s1548 = scalar_lea.vmem %s1, 448
  %v1549 = vld [vmem:[%s1548] sm:$0xf]
  %v1550 = vld [vmem:[%s1548 + $0x4] sm:$0xf]
  %v1551 = vld [vmem:[%s1548 + $0x8] sm:$0xf]
  %v1552 = vld [vmem:[%s1548 + $0xc] sm:$0xf]
  %v1553 = vld [vmem:[%s1548 + $0x10] sm:$0xf]
  %v1554 = vld [vmem:[%s1548 + $0x14] sm:$0xf]
  %v1555 = vld [vmem:[%s1548 + $0x18] sm:$0xf]
  %v1556 = vld [vmem:[%s1548 + $0x1c] sm:$0xf]
  %v1557 = vld [vmem:[%s1548 + $0x20] sm:$0xf]
  %v1558 = vld [vmem:[%s1548 + $0x24] sm:$0xf]
  %v1559 = vld [vmem:[%s1548 + $0x28] sm:$0xf]
  %v1560 = vld [vmem:[%s1548 + $0x2c] sm:$0xf]
  %v1561 = vld [vmem:[%s1548 + $0x30] sm:$0xf]
  %v1562 = vld [vmem:[%s1548 + $0x34] sm:$0xf]
  %v1563 = vld [vmem:[%s1548 + $0x38] sm:$0xf]
  %v1564 = vld [vmem:[%s1548 + $0x3c] sm:$0xf]
  %v1581 = vunpack.c.l.b16 %v1549
  %v1582 = vunpack.c.l.b16 %v1550
  %v1583 = vunpack.c.l.b16 %v1551
  %v1584 = vunpack.c.l.b16 %v1552
  %v1585 = vunpack.c.l.b16 %v1553
  %v1586 = vunpack.c.l.b16 %v1554
  %v1587 = vunpack.c.l.b16 %v1555
  %v1588 = vunpack.c.l.b16 %v1556
  %v1589 = vunpack.c.l.b16 %v1557
  %v1590 = vunpack.c.l.b16 %v1558
  %v1591 = vunpack.c.l.b16 %v1559
  %v1592 = vunpack.c.l.b16 %v1560
  %v1593 = vunpack.c.l.b16 %v1561
  %v1594 = vunpack.c.l.b16 %v1562
  %v1595 = vunpack.c.l.b16 %v1563
  %v1596 = vunpack.c.l.b16 %v1564
  %v1597 = vpack.c.b16 %v1582, %v1581
  %v1598 = vpack.c.b16 %v1584, %v1583
  %v1599 = vpack.c.b16 %v1586, %v1585
  %v1600 = vpack.c.b16 %v1588, %v1587
  %v1601 = vpack.c.b16 %v1590, %v1589
  %v1602 = vpack.c.b16 %v1592, %v1591
  %v1603 = vpack.c.b16 %v1594, %v1593
  %v1604 = vpack.c.b16 %v1596, %v1595
  %1613 = vmatprep.subr.bf16.mxu0 0
  %1614 = vmatpush1.bf16.msra.mxu0 %v1604
  %1615 = vmatprep.subr.bf16.mxu0 0
  %1616 = vmatpush1.bf16.msra.mxu0 %v1603
  %1617 = vmatprep.subr.bf16.mxu0 0
  %1618 = vmatpush1.bf16.msra.mxu0 %v1602
  %1619 = vmatprep.subr.bf16.mxu0 0
  %1620 = vmatpush1.bf16.msra.mxu0 %v1601
  %1621 = vmatprep.subr.bf16.mxu0 0
  %1622 = vmatpush1.bf16.msra.mxu0 %v1600
  %1623 = vmatprep.subr.bf16.mxu0 0
  %1624 = vmatpush1.bf16.msra.mxu0 %v1599
  %1625 = vmatprep.subr.bf16.mxu0 0
  %1626 = vmatpush1.bf16.msra.mxu0 %v1598
  %1627 = vmatprep.subr.bf16.mxu0 0
  %1628 = vmatpush1.bf16.msra.mxu0 %v1597
  %1629 = vmatprep.subr.bf16.mxu0 0
  %1630 = vmatpush2.bf16.msra.mxu0 0
  %1631 = vmatprep.subr.bf16.mxu0 0
  %1632 = vmatpush2.bf16.msra.mxu0 0
  %1633 = vmatprep.subr.bf16.mxu0 0
  %1634 = vmatpush2.bf16.msra.mxu0 0
  %1635 = vmatprep.subr.bf16.mxu0 0
  %1636 = vmatpush2.bf16.msra.mxu0 0
  %1637 = vmatprep.subr.bf16.mxu0 0
  %1638 = vmatpush2.bf16.msra.mxu0 0
  %1639 = vmatprep.subr.bf16.mxu0 0
  %1640 = vmatpush2.bf16.msra.mxu0 0
  %1641 = vmatprep.subr.bf16.mxu0 0
  %1642 = vmatpush2.bf16.msra.mxu0 0
  %1643 = vmatprep.subr.bf16.mxu0 0
  %1644 = vmatpush2.bf16.msra.mxu0 0
  %1645 = vmatprep.mubr.bf16.mxu0 0
  %1646 = vmatmul.mubr.bf16.gmra.mxu0 %v1540
  %v1647 = vpop.f32.mrf.mxu0
  %v1648 = vadd.f32 0.0, %v1647
  %v1649 = vpop.f32.mrf.mxu0
  %v1650 = vpop.f32.mrf.mxu0
  %v1651 = vadd.f32 0.0, %v1650
  %v1652 = vpop.f32.mrf.mxu0
  %1653 = vmatprep.mubr.bf16.mxu0 0
  %1654 = vmatmul.mubr.bf16.gmra.mxu0 %v1541
  %v1655 = vpop.f32.mrf.mxu0
  %v1656 = vadd.f32 0.0, %v1655
  %v1657 = vpop.f32.mrf.mxu0
  %v1658 = vpop.f32.mrf.mxu0
  %v1659 = vadd.f32 0.0, %v1658
  %v1660 = vpop.f32.mrf.mxu0
  %1661 = vmatprep.mubr.bf16.mxu0 0
  %1662 = vmatmul.mubr.bf16.gmra.mxu0 %v1542
  %v1663 = vpop.f32.mrf.mxu0
  %v1664 = vadd.f32 0.0, %v1663
  %v1665 = vpop.f32.mrf.mxu0
  %v1666 = vpop.f32.mrf.mxu0
  %v1667 = vadd.f32 0.0, %v1666
  %v1668 = vpop.f32.mrf.mxu0
  %1669 = vmatprep.mubr.bf16.mxu0 0
  %1670 = vmatmul.mubr.bf16.gmra.mxu0 %v1543
  %v1671 = vpop.f32.mrf.mxu0
  %v1672 = vadd.f32 0.0, %v1671
  %v1673 = vpop.f32.mrf.mxu0
  %v1674 = vpop.f32.mrf.mxu0
  %v1675 = vadd.f32 0.0, %v1674
  %v1676 = vpop.f32.mrf.mxu0
  %1677 = vmatprep.mubr.bf16.mxu0 0
  %1678 = vmatmul.mubr.bf16.gmra.mxu0 %v1544
  %v1679 = vpop.f32.mrf.mxu0
  %v1680 = vadd.f32 0.0, %v1679
  %v1681 = vpop.f32.mrf.mxu0
  %v1682 = vpop.f32.mrf.mxu0
  %v1683 = vadd.f32 0.0, %v1682
  %v1684 = vpop.f32.mrf.mxu0
  %1685 = vmatprep.mubr.bf16.mxu0 0
  %1686 = vmatmul.mubr.bf16.gmra.mxu0 %v1545
  %v1687 = vpop.f32.mrf.mxu0
  %v1688 = vadd.f32 0.0, %v1687
  %v1689 = vpop.f32.mrf.mxu0
  %v1690 = vpop.f32.mrf.mxu0
  %v1691 = vadd.f32 0.0, %v1690
  %v1692 = vpop.f32.mrf.mxu0
  %1693 = vmatprep.mubr.bf16.mxu0 0
  %1694 = vmatmul.mubr.bf16.gmra.mxu0 %v1546
  %v1695 = vpop.f32.mrf.mxu0
  %v1696 = vadd.f32 0.0, %v1695
  %v1697 = vpop.f32.mrf.mxu0
  %v1698 = vpop.f32.mrf.mxu0
  %v1699 = vadd.f32 0.0, %v1698
  %v1700 = vpop.f32.mrf.mxu0
  %1701 = vmatprep.mubr.bf16.mxu0 0
  %1702 = vmatmul.mubr.bf16.gmra.mxu0 %v1547
  %v1703 = vpop.f32.mrf.mxu0
  %v1704 = vadd.f32 0.0, %v1703
  %v1705 = vpop.f32.mrf.mxu0
  %v1706 = vpop.f32.mrf.mxu0
  %v1707 = vadd.f32 0.0, %v1706
  %v1708 = vpop.f32.mrf.mxu0
  %1709 = vdwg.mxu0
  %v1710 = vadd.f32 %v1508, %v1648
  %v1711 = vadd.f32 %v1509, %v1651
  %v1712 = vadd.f32 %v1510, %v1656
  %v1713 = vadd.f32 %v1511, %v1659
  %v1714 = vadd.f32 %v1512, %v1664
  %v1715 = vadd.f32 %v1513, %v1667
  %v1716 = vadd.f32 %v1514, %v1672
  %v1717 = vadd.f32 %v1515, %v1675
  %v1718 = vadd.f32 %v1516, %v1680
  %v1719 = vadd.f32 %v1517, %v1683
  %v1720 = vadd.f32 %v1518, %v1688
  %v1721 = vadd.f32 %v1519, %v1691
  %v1722 = vadd.f32 %v1520, %v1696
  %v1723 = vadd.f32 %v1521, %v1699
  %v1724 = vadd.f32 %v1522, %v1704
  %v1725 = vadd.f32 %v1523, %v1707
  %v1726 = vld [vmem:[%s1321 + $0x9] sm:$0xff]
  %v1727 = vld [vmem:[%s1321 + $0x21] sm:$0xff]
  %v1728 = vld [vmem:[%s1321 + $0x39] sm:$0xff]
  %v1729 = vld [vmem:[%s1321 + $0x51] sm:$0xff]
  %v1730 = vld [vmem:[%s1321 + $0x69] sm:$0xff]
  %v1731 = vld [vmem:[%s1321 + $0x81] sm:$0xff]
  %v1732 = vld [vmem:[%s1321 + $0x99] sm:$0xff]
  %v1733 = vld [vmem:[%s1321 + $0xb1] sm:$0xff]
  %v1734 = vld [vmem:[%s1321 + $0xf9] sm:$0xff]
  %v1735 = vld [vmem:[%s1321 + $0x111] sm:$0xff]
  %v1736 = vld [vmem:[%s1321 + $0x129] sm:$0xff]
  %v1737 = vld [vmem:[%s1321 + $0x141] sm:$0xff]
  %v1738 = vld [vmem:[%s1321 + $0x159] sm:$0xff]
  %v1739 = vld [vmem:[%s1321 + $0x171] sm:$0xff]
  %v1740 = vld [vmem:[%s1321 + $0x189] sm:$0xff]
  %v1741 = vld [vmem:[%s1321 + $0x1a1] sm:$0xff]
  %v1742 = vpack.c.bf16 %v1727, %v1726
  %v1743 = vpack.c.bf16 %v1729, %v1728
  %v1744 = vpack.c.bf16 %v1731, %v1730
  %v1745 = vpack.c.bf16 %v1733, %v1732
  %v1746 = vpack.c.bf16 %v1735, %v1734
  %v1747 = vpack.c.bf16 %v1737, %v1736
  %v1748 = vpack.c.bf16 %v1739, %v1738
  %v1749 = vpack.c.bf16 %v1741, %v1740
  %s1750 = scalar_lea.vmem %s1, 512
  %v1751 = vld [vmem:[%s1750] sm:$0xf]
  %v1752 = vld [vmem:[%s1750 + $0x4] sm:$0xf]
  %v1753 = vld [vmem:[%s1750 + $0x8] sm:$0xf]
  %v1754 = vld [vmem:[%s1750 + $0xc] sm:$0xf]
  %v1755 = vld [vmem:[%s1750 + $0x10] sm:$0xf]
  %v1756 = vld [vmem:[%s1750 + $0x14] sm:$0xf]
  %v1757 = vld [vmem:[%s1750 + $0x18] sm:$0xf]
  %v1758 = vld [vmem:[%s1750 + $0x1c] sm:$0xf]
  %v1759 = vld [vmem:[%s1750 + $0x20] sm:$0xf]
  %v1760 = vld [vmem:[%s1750 + $0x24] sm:$0xf]
  %v1761 = vld [vmem:[%s1750 + $0x28] sm:$0xf]
  %v1762 = vld [vmem:[%s1750 + $0x2c] sm:$0xf]
  %v1763 = vld [vmem:[%s1750 + $0x30] sm:$0xf]
  %v1764 = vld [vmem:[%s1750 + $0x34] sm:$0xf]
  %v1765 = vld [vmem:[%s1750 + $0x38] sm:$0xf]
  %v1766 = vld [vmem:[%s1750 + $0x3c] sm:$0xf]
  %v1783 = vunpack.c.l.b16 %v1751
  %v1784 = vunpack.c.l.b16 %v1752
  %v1785 = vunpack.c.l.b16 %v1753
  %v1786 = vunpack.c.l.b16 %v1754
  %v1787 = vunpack.c.l.b16 %v1755
  %v1788 = vunpack.c.l.b16 %v1756
  %v1789 = vunpack.c.l.b16 %v1757
  %v1790 = vunpack.c.l.b16 %v1758
  %v1791 = vunpack.c.l.b16 %v1759
  %v1792 = vunpack.c.l.b16 %v1760
  %v1793 = vunpack.c.l.b16 %v1761
  %v1794 = vunpack.c.l.b16 %v1762
  %v1795 = vunpack.c.l.b16 %v1763
  %v1796 = vunpack.c.l.b16 %v1764
  %v1797 = vunpack.c.l.b16 %v1765
  %v1798 = vunpack.c.l.b16 %v1766
  %v1799 = vpack.c.b16 %v1784, %v1783
  %v1800 = vpack.c.b16 %v1786, %v1785
  %v1801 = vpack.c.b16 %v1788, %v1787
  %v1802 = vpack.c.b16 %v1790, %v1789
  %v1803 = vpack.c.b16 %v1792, %v1791
  %v1804 = vpack.c.b16 %v1794, %v1793
  %v1805 = vpack.c.b16 %v1796, %v1795
  %v1806 = vpack.c.b16 %v1798, %v1797
  %1815 = vmatprep.subr.bf16.mxu0 0
  %1816 = vmatpush1.bf16.msra.mxu0 %v1806
  %1817 = vmatprep.subr.bf16.mxu0 0
  %1818 = vmatpush1.bf16.msra.mxu0 %v1805
  %1819 = vmatprep.subr.bf16.mxu0 0
  %1820 = vmatpush1.bf16.msra.mxu0 %v1804
  %1821 = vmatprep.subr.bf16.mxu0 0
  %1822 = vmatpush1.bf16.msra.mxu0 %v1803
  %1823 = vmatprep.subr.bf16.mxu0 0
  %1824 = vmatpush1.bf16.msra.mxu0 %v1802
  %1825 = vmatprep.subr.bf16.mxu0 0
  %1826 = vmatpush1.bf16.msra.mxu0 %v1801
  %1827 = vmatprep.subr.bf16.mxu0 0
  %1828 = vmatpush1.bf16.msra.mxu0 %v1800
  %1829 = vmatprep.subr.bf16.mxu0 0
  %1830 = vmatpush1.bf16.msra.mxu0 %v1799
  %1831 = vmatprep.subr.bf16.mxu0 0
  %1832 = vmatpush2.bf16.msra.mxu0 0
  %1833 = vmatprep.subr.bf16.mxu0 0
  %1834 = vmatpush2.bf16.msra.mxu0 0
  %1835 = vmatprep.subr.bf16.mxu0 0
  %1836 = vmatpush2.bf16.msra.mxu0 0
  %1837 = vmatprep.subr.bf16.mxu0 0
  %1838 = vmatpush2.bf16.msra.mxu0 0
  %1839 = vmatprep.subr.bf16.mxu0 0
  %1840 = vmatpush2.bf16.msra.mxu0 0
  %1841 = vmatprep.subr.bf16.mxu0 0
  %1842 = vmatpush2.bf16.msra.mxu0 0
  %1843 = vmatprep.subr.bf16.mxu0 0
  %1844 = vmatpush2.bf16.msra.mxu0 0
  %1845 = vmatprep.subr.bf16.mxu0 0
  %1846 = vmatpush2.bf16.msra.mxu0 0
  %1847 = vmatprep.mubr.bf16.mxu0 0
  %1848 = vmatmul.mubr.bf16.gmra.mxu0 %v1742
  %v1849 = vpop.f32.mrf.mxu0
  %v1850 = vadd.f32 0.0, %v1849
  %v1851 = vpop.f32.mrf.mxu0
  %v1852 = vpop.f32.mrf.mxu0
  %v1853 = vadd.f32 0.0, %v1852
  %v1854 = vpop.f32.mrf.mxu0
  %1855 = vmatprep.mubr.bf16.mxu0 0
  %1856 = vmatmul.mubr.bf16.gmra.mxu0 %v1743
  %v1857 = vpop.f32.mrf.mxu0
  %v1858 = vadd.f32 0.0, %v1857
  %v1859 = vpop.f32.mrf.mxu0
  %v1860 = vpop.f32.mrf.mxu0
  %v1861 = vadd.f32 0.0, %v1860
  %v1862 = vpop.f32.mrf.mxu0
  %1863 = vmatprep.mubr.bf16.mxu0 0
  %1864 = vmatmul.mubr.bf16.gmra.mxu0 %v1744
  %v1865 = vpop.f32.mrf.mxu0
  %v1866 = vadd.f32 0.0, %v1865
  %v1867 = vpop.f32.mrf.mxu0
  %v1868 = vpop.f32.mrf.mxu0
  %v1869 = vadd.f32 0.0, %v1868
  %v1870 = vpop.f32.mrf.mxu0
  %1871 = vmatprep.mubr.bf16.mxu0 0
  %1872 = vmatmul.mubr.bf16.gmra.mxu0 %v1745
  %v1873 = vpop.f32.mrf.mxu0
  %v1874 = vadd.f32 0.0, %v1873
  %v1875 = vpop.f32.mrf.mxu0
  %v1876 = vpop.f32.mrf.mxu0
  %v1877 = vadd.f32 0.0, %v1876
  %v1878 = vpop.f32.mrf.mxu0
  %1879 = vmatprep.mubr.bf16.mxu0 0
  %1880 = vmatmul.mubr.bf16.gmra.mxu0 %v1746
  %v1881 = vpop.f32.mrf.mxu0
  %v1882 = vadd.f32 0.0, %v1881
  %v1883 = vpop.f32.mrf.mxu0
  %v1884 = vpop.f32.mrf.mxu0
  %v1885 = vadd.f32 0.0, %v1884
  %v1886 = vpop.f32.mrf.mxu0
  %1887 = vmatprep.mubr.bf16.mxu0 0
  %1888 = vmatmul.mubr.bf16.gmra.mxu0 %v1747
  %v1889 = vpop.f32.mrf.mxu0
  %v1890 = vadd.f32 0.0, %v1889
  %v1891 = vpop.f32.mrf.mxu0
  %v1892 = vpop.f32.mrf.mxu0
  %v1893 = vadd.f32 0.0, %v1892
  %v1894 = vpop.f32.mrf.mxu0
  %1895 = vmatprep.mubr.bf16.mxu0 0
  %1896 = vmatmul.mubr.bf16.gmra.mxu0 %v1748
  %v1897 = vpop.f32.mrf.mxu0
  %v1898 = vadd.f32 0.0, %v1897
  %v1899 = vpop.f32.mrf.mxu0
  %v1900 = vpop.f32.mrf.mxu0
  %v1901 = vadd.f32 0.0, %v1900
  %v1902 = vpop.f32.mrf.mxu0
  %1903 = vmatprep.mubr.bf16.mxu0 0
  %1904 = vmatmul.mubr.bf16.gmra.mxu0 %v1749
  %v1905 = vpop.f32.mrf.mxu0
  %v1906 = vadd.f32 0.0, %v1905
  %v1907 = vpop.f32.mrf.mxu0
  %v1908 = vpop.f32.mrf.mxu0
  %v1909 = vadd.f32 0.0, %v1908
  %v1910 = vpop.f32.mrf.mxu0
  %1911 = vdwg.mxu0
  %v1912 = vadd.f32 %v1710, %v1850
  %v1913 = vadd.f32 %v1711, %v1853
  %v1914 = vadd.f32 %v1712, %v1858
  %v1915 = vadd.f32 %v1713, %v1861
  %v1916 = vadd.f32 %v1714, %v1866
  %v1917 = vadd.f32 %v1715, %v1869
  %v1918 = vadd.f32 %v1716, %v1874
  %v1919 = vadd.f32 %v1717, %v1877
  %v1920 = vadd.f32 %v1718, %v1882
  %v1921 = vadd.f32 %v1719, %v1885
  %v1922 = vadd.f32 %v1720, %v1890
  %v1923 = vadd.f32 %v1721, %v1893
  %v1924 = vadd.f32 %v1722, %v1898
  %v1925 = vadd.f32 %v1723, %v1901
  %v1926 = vadd.f32 %v1724, %v1906
  %v1927 = vadd.f32 %v1725, %v1909
  %v1928 = vld [vmem:[%s2] sm:$0x1]
  %v1930 = vlaneseq
  %v1931 = vshrl.u32 %v1930, 7
  %v1932 = vsub.s32 0, %v1931
  %v1933 = vrot.slane %v1928, %v1932
  %v1935 = vadd.f32 %v1912, %v1933
  %v1936 = vadd.f32 %v1913, %v1933
  %v1937 = vadd.f32 %v1914, %v1933
  %v1938 = vadd.f32 %v1915, %v1933
  %v1939 = vadd.f32 %v1916, %v1933
  %v1940 = vadd.f32 %v1917, %v1933
  %v1941 = vadd.f32 %v1918, %v1933
  %v1942 = vadd.f32 %v1919, %v1933
  %v1943 = vadd.f32 %v1920, %v1933
  %v1944 = vadd.f32 %v1921, %v1933
  %v1945 = vadd.f32 %v1922, %v1933
  %v1946 = vadd.f32 %v1923, %v1933
  %v1947 = vadd.f32 %v1924, %v1933
  %v1948 = vadd.f32 %v1925, %v1933
  %v1949 = vadd.f32 %v1926, %v1933
  %v1950 = vadd.f32 %v1927, %v1933
  %v1951 = vmax.f32 %v1935, 0.0
  %v1952 = vmax.f32 %v1936, 0.0
  %v1953 = vmax.f32 %v1937, 0.0
  %v1954 = vmax.f32 %v1938, 0.0
  %v1955 = vmax.f32 %v1939, 0.0
  %v1956 = vmax.f32 %v1940, 0.0
  %v1957 = vmax.f32 %v1941, 0.0
  %v1958 = vmax.f32 %v1942, 0.0
  %v1959 = vmax.f32 %v1943, 0.0
  %v1960 = vmax.f32 %v1944, 0.0
  %v1961 = vmax.f32 %v1945, 0.0
  %v1962 = vmax.f32 %v1946, 0.0
  %v1963 = vmax.f32 %v1947, 0.0
  %v1964 = vmax.f32 %v1948, 0.0
  %v1965 = vmax.f32 %v1949, 0.0
  %v1966 = vmax.f32 %v1950, 0.0
  %v1967 = vpack.c.bf16 %v1952, %v1951
  %v1968 = vpack.c.bf16 %v1954, %v1953
  %v1969 = vpack.c.bf16 %v1956, %v1955
  %v1970 = vpack.c.bf16 %v1958, %v1957
  %v1971 = vpack.c.bf16 %v1960, %v1959
  %v1972 = vpack.c.bf16 %v1962, %v1961
  %v1973 = vpack.c.bf16 %v1964, %v1963
  %v1974 = vpack.c.bf16 %v1966, %v1965
  %v1975 = vld [vmem:[%s3] sm:$0xf]
  %v1976 = vld [vmem:[%s3 + $0x4] sm:$0xf]
  %v1977 = vld [vmem:[%s3 + $0x8] sm:$0xf]
  %v1978 = vld [vmem:[%s3 + $0xc] sm:$0xf]
  %v1979 = vld [vmem:[%s4] sm:$0x1]
  %v1981 = vlaneseq
  %v1982 = vshrl.u32 %v1981, 7
  %v1983 = vsub.s32 0, %v1982
  %v1984 = vrot.slane %v1979, %v1983
  %v1990 = vunpack.c.l.b16 %v1975
  %v1991 = vunpack.c.l.b16 %v1976
  %v1992 = vunpack.c.l.b16 %v1977
  %v1993 = vunpack.c.l.b16 %v1978
  %v1994 = vpack.c.b16 %v1991, %v1990
  %v1995 = vpack.c.b16 %v1993, %v1992
  %vm1998 = vcmask 261120
  %v2000 = vsel %vm1998, %v1967, 0
  %v2003 = vsel %vm1998, %v1968, 0
  %v2006 = vsel %vm1998, %v1969, 0
  %v2009 = vsel %vm1998, %v1970, 0
  %v2012 = vsel %vm1998, %v1971, 0
  %v2015 = vsel %vm1998, %v1972, 0
  %v2018 = vsel %vm1998, %v1973, 0
  %v2021 = vsel %vm1998, %v1974, 0
  %2023 = vmatprep.subr.bf16.mxu0 0
  %2024 = vmatpush1.bf16.msra.mxu0 0
  %2025 = vmatprep.subr.bf16.mxu0 0
  %2026 = vmatpush1.bf16.msra.mxu0 0
  %2027 = vmatprep.subr.bf16.mxu0 0
  %2028 = vmatpush1.bf16.msra.mxu0 0
  %2029 = vmatprep.subr.bf16.mxu0 0
  %2030 = vmatpush1.bf16.msra.mxu0 0
  %2031 = vmatprep.subr.bf16.mxu0 0
  %2032 = vmatpush1.bf16.msra.mxu0 0
  %2033 = vmatprep.subr.bf16.mxu0 0
  %2034 = vmatpush1.bf16.msra.mxu0 0
  %2035 = vmatprep.subr.bf16.mxu0 0
  %2036 = vmatpush1.bf16.msra.mxu0 %v1995
  %2037 = vmatprep.subr.bf16.mxu0 0
  %2038 = vmatpush1.bf16.msra.mxu0 %v1994
  %2039 = vmatprep.subr.bf16.mxu0 0
  %2040 = vmatpush2.bf16.msra.mxu0 0
  %2041 = vmatprep.subr.bf16.mxu0 0
  %2042 = vmatpush2.bf16.msra.mxu0 0
  %2043 = vmatprep.subr.bf16.mxu0 0
  %2044 = vmatpush2.bf16.msra.mxu0 0
  %2045 = vmatprep.subr.bf16.mxu0 0
  %2046 = vmatpush2.bf16.msra.mxu0 0
  %2047 = vmatprep.subr.bf16.mxu0 0
  %2048 = vmatpush2.bf16.msra.mxu0 0
  %2049 = vmatprep.subr.bf16.mxu0 0
  %2050 = vmatpush2.bf16.msra.mxu0 0
  %2051 = vmatprep.subr.bf16.mxu0 0
  %2052 = vmatpush2.bf16.msra.mxu0 0
  %2053 = vmatprep.subr.bf16.mxu0 0
  %2054 = vmatpush2.bf16.msra.mxu0 0
  %2055 = vmatprep.mubr.bf16.mxu0 0
  %2056 = vmatmul.mubr.bf16.gmra.mxu0 %v2000
  %v2057 = vpop.f32.mrf.mxu0
  %v2058 = vadd.f32 %v1984, %v2057
  %v2059 = vpop.f32.mrf.mxu0
  %v2060 = vpop.f32.mrf.mxu0
  %v2061 = vadd.f32 %v1984, %v2060
  %v2062 = vpop.f32.mrf.mxu0
  %2063 = vmatprep.mubr.bf16.mxu0 0
  %2064 = vmatmul.mubr.bf16.gmra.mxu0 %v2003
  %v2065 = vpop.f32.mrf.mxu0
  %v2066 = vadd.f32 %v1984, %v2065
  %v2067 = vpop.f32.mrf.mxu0
  %v2068 = vpop.f32.mrf.mxu0
  %v2069 = vadd.f32 %v1984, %v2068
  %v2070 = vpop.f32.mrf.mxu0
  %2071 = vmatprep.mubr.bf16.mxu0 0
  %2072 = vmatmul.mubr.bf16.gmra.mxu0 %v2006
  %v2073 = vpop.f32.mrf.mxu0
  %v2074 = vadd.f32 %v1984, %v2073
  %v2075 = vpop.f32.mrf.mxu0
  %v2076 = vpop.f32.mrf.mxu0
  %v2077 = vadd.f32 %v1984, %v2076
  %v2078 = vpop.f32.mrf.mxu0
  %2079 = vmatprep.mubr.bf16.mxu0 0
  %2080 = vmatmul.mubr.bf16.gmra.mxu0 %v2009
  %v2081 = vpop.f32.mrf.mxu0
  %v2082 = vadd.f32 %v1984, %v2081
  %v2083 = vpop.f32.mrf.mxu0
  %v2084 = vpop.f32.mrf.mxu0
  %v2085 = vadd.f32 %v1984, %v2084
  %v2086 = vpop.f32.mrf.mxu0
  %2087 = vmatprep.mubr.bf16.mxu0 0
  %2088 = vmatmul.mubr.bf16.gmra.mxu0 %v2012
  %v2089 = vpop.f32.mrf.mxu0
  %v2090 = vadd.f32 %v1984, %v2089
  %v2091 = vpop.f32.mrf.mxu0
  %v2092 = vpop.f32.mrf.mxu0
  %v2093 = vadd.f32 %v1984, %v2092
  %v2094 = vpop.f32.mrf.mxu0
  %2095 = vmatprep.mubr.bf16.mxu0 0
  %2096 = vmatmul.mubr.bf16.gmra.mxu0 %v2015
  %v2097 = vpop.f32.mrf.mxu0
  %v2098 = vadd.f32 %v1984, %v2097
  %v2099 = vpop.f32.mrf.mxu0
  %v2100 = vpop.f32.mrf.mxu0
  %v2101 = vadd.f32 %v1984, %v2100
  %v2102 = vpop.f32.mrf.mxu0
  %2103 = vmatprep.mubr.bf16.mxu0 0
  %2104 = vmatmul.mubr.bf16.gmra.mxu0 %v2018
  %v2105 = vpop.f32.mrf.mxu0
  %v2106 = vadd.f32 %v1984, %v2105
  %v2107 = vpop.f32.mrf.mxu0
  %v2108 = vpop.f32.mrf.mxu0
  %v2109 = vadd.f32 %v1984, %v2108
  %v2110 = vpop.f32.mrf.mxu0
  %2111 = vmatprep.mubr.bf16.mxu0 0
  %2112 = vmatmul.mubr.bf16.gmra.mxu0 %v2021
  %v2113 = vpop.f32.mrf.mxu0
  %v2114 = vadd.f32 %v1984, %v2113
  %v2115 = vpop.f32.mrf.mxu0
  %v2116 = vpop.f32.mrf.mxu0
  %v2117 = vadd.f32 %v1984, %v2116
  %v2118 = vpop.f32.mrf.mxu0
  %2119 = vdwg.mxu0
  %v2120 = vadd.f32 %v93, %v2058
  %v2121 = vadd.f32 %v94, %v2061
  %v2122 = vadd.f32 %v95, %v2066
  %v2123 = vadd.f32 %v96, %v2069
  %v2124 = vadd.f32 %v97, %v2074
  %v2125 = vadd.f32 %v98, %v2077
  %v2126 = vadd.f32 %v99, %v2082
  %v2127 = vadd.f32 %v100, %v2085
  %v2128 = vadd.f32 %v101, %v2090
  %v2129 = vadd.f32 %v102, %v2093
  %v2130 = vadd.f32 %v103, %v2098
  %v2131 = vadd.f32 %v104, %v2101
  %v2132 = vadd.f32 %v105, %v2106
  %v2133 = vadd.f32 %v106, %v2109
  %v2134 = vadd.f32 %v107, %v2114
  %v2135 = vadd.f32 %v108, %v2117
  %v2136 = vmax.f32 %v2120, 0.0
  %v2137 = vmax.f32 %v2121, 0.0
  %v2138 = vmax.f32 %v2122, 0.0
  %v2139 = vmax.f32 %v2123, 0.0
  %v2140 = vmax.f32 %v2124, 0.0
  %v2141 = vmax.f32 %v2125, 0.0
  %v2142 = vmax.f32 %v2126, 0.0
  %v2143 = vmax.f32 %v2127, 0.0
  %v2144 = vmax.f32 %v2128, 0.0
  %v2145 = vmax.f32 %v2129, 0.0
  %v2146 = vmax.f32 %v2130, 0.0
  %v2147 = vmax.f32 %v2131, 0.0
  %v2148 = vmax.f32 %v2132, 0.0
  %v2149 = vmax.f32 %v2133, 0.0
  %v2150 = vmax.f32 %v2134, 0.0
  %v2151 = vmax.f32 %v2135, 0.0
  %2152 = vst [vmem:[%s125 + $0x8] sm:$0xff] %v2136
  %2153 = vst [vmem:[%s125 + $0x20] sm:$0xff] %v2137
  %2154 = vst [vmem:[%s125 + $0x38] sm:$0xff] %v2138
  %2155 = vst [vmem:[%s125 + $0x50] sm:$0xff] %v2139
  %2156 = vst [vmem:[%s125 + $0x68] sm:$0xff] %v2140
  %2157 = vst [vmem:[%s125 + $0x80] sm:$0xff] %v2141
  %2158 = vst [vmem:[%s125 + $0x98] sm:$0xff] %v2142
  %2159 = vst [vmem:[%s125 + $0xb0] sm:$0xff] %v2143
  %2160 = vst [vmem:[%s125 + $0xf8] sm:$0xff] %v2144
  %2161 = vst [vmem:[%s125 + $0x110] sm:$0xff] %v2145
  %2162 = vst [vmem:[%s125 + $0x128] sm:$0xff] %v2146
  %2163 = vst [vmem:[%s125 + $0x140] sm:$0xff] %v2147
  %2164 = vst [vmem:[%s125 + $0x158] sm:$0xff] %v2148
  %2165 = vst [vmem:[%s125 + $0x170] sm:$0xff] %v2149
  %2166 = vst [vmem:[%s125 + $0x188] sm:$0xff] %v2150
  %2167 = vst [vmem:[%s125 + $0x1a0] sm:$0xff] %v2151
  %v2168 = vld [vmem:[#allocation2 + $0x7] sm:$0xff]
  %v2169 = vld [vmem:[#allocation2 + $0x1f] sm:$0xff]
  %v2170 = vld [vmem:[#allocation2 + $0x37] sm:$0xff]
  %v2171 = vld [vmem:[#allocation2 + $0x4f] sm:$0xff]
  %v2172 = vld [vmem:[#allocation2 + $0x67] sm:$0xff]
  %v2173 = vld [vmem:[#allocation2 + $0x7f] sm:$0xff]
  %v2174 = vld [vmem:[#allocation2 + $0x97] sm:$0xff]
  %v2175 = vld [vmem:[#allocation2 + $0xaf] sm:$0xff]
  %v2176 = vld [vmem:[#allocation2 + $0xf7] sm:$0xff]
  %v2177 = vld [vmem:[#allocation2 + $0x10f] sm:$0xff]
  %v2178 = vld [vmem:[#allocation2 + $0x127] sm:$0xff]
  %v2179 = vld [vmem:[#allocation2 + $0x13f] sm:$0xff]
  %v2180 = vld [vmem:[#allocation2 + $0x157] sm:$0xff]
  %v2181 = vld [vmem:[#allocation2 + $0x16f] sm:$0xff]
  %v2182 = vld [vmem:[#allocation2 + $0x187] sm:$0xff]
  %v2183 = vld [vmem:[#allocation2 + $0x19f] sm:$0xff]
  %v2184 = vpack.c.bf16 %v2169, %v2168
  %v2185 = vpack.c.bf16 %v2171, %v2170
  %v2186 = vpack.c.bf16 %v2173, %v2172
  %v2187 = vpack.c.bf16 %v2175, %v2174
  %v2188 = vpack.c.bf16 %v2177, %v2176
  %v2189 = vpack.c.bf16 %v2179, %v2178
  %v2190 = vpack.c.bf16 %v2181, %v2180
  %v2191 = vpack.c.bf16 %v2183, %v2182
  %v2192 = vld [vmem:[%s5] sm:$0xf]
  %v2193 = vld [vmem:[%s5 + $0x4] sm:$0xf]
  %v2194 = vld [vmem:[%s5 + $0x8] sm:$0xf]
  %v2195 = vld [vmem:[%s5 + $0xc] sm:$0xf]
  %v2196 = vld [vmem:[%s5 + $0x10] sm:$0xf]
  %v2197 = vld [vmem:[%s5 + $0x14] sm:$0xf]
  %v2198 = vld [vmem:[%s5 + $0x18] sm:$0xf]
  %v2199 = vld [vmem:[%s5 + $0x1c] sm:$0xf]
  %v2200 = vld [vmem:[%s5 + $0x20] sm:$0xf]
  %v2201 = vld [vmem:[%s5 + $0x24] sm:$0xf]
  %v2202 = vld [vmem:[%s5 + $0x28] sm:$0xf]
  %v2203 = vld [vmem:[%s5 + $0x2c] sm:$0xf]
  %v2204 = vld [vmem:[%s5 + $0x30] sm:$0xf]
  %v2205 = vld [vmem:[%s5 + $0x34] sm:$0xf]
  %v2206 = vld [vmem:[%s5 + $0x38] sm:$0xf]
  %v2207 = vld [vmem:[%s5 + $0x3c] sm:$0xf]
  %v2208 = vld [vmem:[#allocation2 + $0x8] sm:$0xff]
  %v2209 = vld [vmem:[#allocation2 + $0x20] sm:$0xff]
  %v2210 = vld [vmem:[#allocation2 + $0x38] sm:$0xff]
  %v2211 = vld [vmem:[#allocation2 + $0x50] sm:$0xff]
  %v2212 = vld [vmem:[#allocation2 + $0x68] sm:$0xff]
  %v2213 = vld [vmem:[#allocation2 + $0x80] sm:$0xff]
  %v2214 = vld [vmem:[#allocation2 + $0x98] sm:$0xff]
  %v2215 = vld [vmem:[#allocation2 + $0xb0] sm:$0xff]
  %v2216 = vld [vmem:[#allocation2 + $0xf8] sm:$0xff]
  %v2217 = vld [vmem:[#allocation2 + $0x110] sm:$0xff]
  %v2218 = vld [vmem:[#allocation2 + $0x128] sm:$0xff]
  %v2219 = vld [vmem:[#allocation2 + $0x140] sm:$0xff]
  %v2220 = vld [vmem:[#allocation2 + $0x158] sm:$0xff]
  %v2221 = vld [vmem:[#allocation2 + $0x170] sm:$0xff]
  %v2222 = vld [vmem:[#allocation2 + $0x188] sm:$0xff]
  %v2223 = vld [vmem:[#allocation2 + $0x1a0] sm:$0xff]
  %v2224 = vpack.c.bf16 %v2209, %v2208
  %v2225 = vpack.c.bf16 %v2211, %v2210
  %v2226 = vpack.c.bf16 %v2213, %v2212
  %v2227 = vpack.c.bf16 %v2215, %v2214
  %v2228 = vpack.c.bf16 %v2217, %v2216
  %v2229 = vpack.c.bf16 %v2219, %v2218
  %v2230 = vpack.c.bf16 %v2221, %v2220
  %v2231 = vpack.c.bf16 %v2223, %v2222
  %s2232 = scalar_lea.vmem %s5, 64
  %v2233 = vld [vmem:[%s2232] sm:$0xf]
  %v2234 = vld [vmem:[%s2232 + $0x4] sm:$0xf]
  %v2235 = vld [vmem:[%s2232 + $0x8] sm:$0xf]
  %v2236 = vld [vmem:[%s2232 + $0xc] sm:$0xf]
  %v2237 = vld [vmem:[%s2232 + $0x10] sm:$0xf]
  %v2238 = vld [vmem:[%s2232 + $0x14] sm:$0xf]
  %v2239 = vld [vmem:[%s2232 + $0x18] sm:$0xf]
  %v2240 = vld [vmem:[%s2232 + $0x1c] sm:$0xf]
  %v2241 = vld [vmem:[%s2232 + $0x20] sm:$0xf]
  %v2242 = vld [vmem:[%s2232 + $0x24] sm:$0xf]
  %v2243 = vld [vmem:[%s2232 + $0x28] sm:$0xf]
  %v2244 = vld [vmem:[%s2232 + $0x2c] sm:$0xf]
  %v2245 = vld [vmem:[%s2232 + $0x30] sm:$0xf]
  %v2246 = vld [vmem:[%s2232 + $0x34] sm:$0xf]
  %v2247 = vld [vmem:[%s2232 + $0x38] sm:$0xf]
  %v2248 = vld [vmem:[%s2232 + $0x3c] sm:$0xf]
  %v2265 = vunpack.c.l.b16 %v2233
  %v2266 = vunpack.c.l.b16 %v2234
  %v2267 = vunpack.c.l.b16 %v2235
  %v2268 = vunpack.c.l.b16 %v2236
  %v2269 = vunpack.c.l.b16 %v2237
  %v2270 = vunpack.c.l.b16 %v2238
  %v2271 = vunpack.c.l.b16 %v2239
  %v2272 = vunpack.c.l.b16 %v2240
  %v2273 = vunpack.c.l.b16 %v2241
  %v2274 = vunpack.c.l.b16 %v2242
  %v2275 = vunpack.c.l.b16 %v2243
  %v2276 = vunpack.c.l.b16 %v2244
  %v2277 = vunpack.c.l.b16 %v2245
  %v2278 = vunpack.c.l.b16 %v2246
  %v2279 = vunpack.c.l.b16 %v2247
  %v2280 = vunpack.c.l.b16 %v2248
  %v2281 = vpack.c.b16 %v2266, %v2265
  %v2282 = vpack.c.b16 %v2268, %v2267
  %v2283 = vpack.c.b16 %v2270, %v2269
  %v2284 = vpack.c.b16 %v2272, %v2271
  %v2285 = vpack.c.b16 %v2274, %v2273
  %v2286 = vpack.c.b16 %v2276, %v2275
  %v2287 = vpack.c.b16 %v2278, %v2277
  %v2288 = vpack.c.b16 %v2280, %v2279
  %2297 = vmatprep.subr.bf16.mxu0 0
  %2298 = vmatpush1.bf16.msra.mxu0 %v2288
  %2299 = vmatprep.subr.bf16.mxu0 0
  %2300 = vmatpush1.bf16.msra.mxu0 %v2287
  %2301 = vmatprep.subr.bf16.mxu0 0
  %2302 = vmatpush1.bf16.msra.mxu0 %v2286
  %2303 = vmatprep.subr.bf16.mxu0 0
  %2304 = vmatpush1.bf16.msra.mxu0 %v2285
  %2305 = vmatprep.subr.bf16.mxu0 0
  %2306 = vmatpush1.bf16.msra.mxu0 %v2284
  %2307 = vmatprep.subr.bf16.mxu0 0
  %2308 = vmatpush1.bf16.msra.mxu0 %v2283
  %2309 = vmatprep.subr.bf16.mxu0 0
  %2310 = vmatpush1.bf16.msra.mxu0 %v2282
  %2311 = vmatprep.subr.bf16.mxu0 0
  %2312 = vmatpush1.bf16.msra.mxu0 %v2281
  %2313 = vmatprep.subr.bf16.mxu0 0
  %2314 = vmatpush2.bf16.msra.mxu0 0
  %2315 = vmatprep.subr.bf16.mxu0 0
  %2316 = vmatpush2.bf16.msra.mxu0 0
  %2317 = vmatprep.subr.bf16.mxu0 0
  %2318 = vmatpush2.bf16.msra.mxu0 0
  %2319 = vmatprep.subr.bf16.mxu0 0
  %2320 = vmatpush2.bf16.msra.mxu0 0
  %2321 = vmatprep.subr.bf16.mxu0 0
  %2322 = vmatpush2.bf16.msra.mxu0 0
  %2323 = vmatprep.subr.bf16.mxu0 0
  %2324 = vmatpush2.bf16.msra.mxu0 0
  %2325 = vmatprep.subr.bf16.mxu0 0
  %2326 = vmatpush2.bf16.msra.mxu0 0
  %2327 = vmatprep.subr.bf16.mxu0 0
  %2328 = vmatpush2.bf16.msra.mxu0 0
  %2329 = vmatprep.mubr.bf16.mxu0 0
  %2330 = vmatmul.mubr.bf16.gmra.mxu0 %v2224
  %v2331 = vpop.f32.mrf.mxu0
  %v2332 = vadd.f32 0.0, %v2331
  %v2333 = vpop.f32.mrf.mxu0
  %v2334 = vpop.f32.mrf.mxu0
  %v2335 = vadd.f32 0.0, %v2334
  %v2336 = vpop.f32.mrf.mxu0
  %2337 = vmatprep.mubr.bf16.mxu0 0
  %2338 = vmatmul.mubr.bf16.gmra.mxu0 %v2225
  %v2339 = vpop.f32.mrf.mxu0
  %v2340 = vadd.f32 0.0, %v2339
  %v2341 = vpop.f32.mrf.mxu0
  %v2342 = vpop.f32.mrf.mxu0
  %v2343 = vadd.f32 0.0, %v2342
  %v2344 = vpop.f32.mrf.mxu0
  %2345 = vmatprep.mubr.bf16.mxu0 0
  %2346 = vmatmul.mubr.bf16.gmra.mxu0 %v2226
  %v2347 = vpop.f32.mrf.mxu0
  %v2348 = vadd.f32 0.0, %v2347
  %v2349 = vpop.f32.mrf.mxu0
  %v2350 = vpop.f32.mrf.mxu0
  %v2351 = vadd.f32 0.0, %v2350
  %v2352 = vpop.f32.mrf.mxu0
  %2353 = vmatprep.mubr.bf16.mxu0 0
  %2354 = vmatmul.mubr.bf16.gmra.mxu0 %v2227
  %v2355 = vpop.f32.mrf.mxu0
  %v2356 = vadd.f32 0.0, %v2355
  %v2357 = vpop.f32.mrf.mxu0
  %v2358 = vpop.f32.mrf.mxu0
  %v2359 = vadd.f32 0.0, %v2358
  %v2360 = vpop.f32.mrf.mxu0
  %2361 = vmatprep.mubr.bf16.mxu0 0
  %2362 = vmatmul.mubr.bf16.gmra.mxu0 %v2228
  %v2363 = vpop.f32.mrf.mxu0
  %v2364 = vadd.f32 0.0, %v2363
  %v2365 = vpop.f32.mrf.mxu0
  %v2366 = vpop.f32.mrf.mxu0
  %v2367 = vadd.f32 0.0, %v2366
  %v2368 = vpop.f32.mrf.mxu0
  %2369 = vmatprep.mubr.bf16.mxu0 0
  %2370 = vmatmul.mubr.bf16.gmra.mxu0 %v2229
  %v2371 = vpop.f32.mrf.mxu0
  %v2372 = vadd.f32 0.0, %v2371
  %v2373 = vpop.f32.mrf.mxu0
  %v2374 = vpop.f32.mrf.mxu0
  %v2375 = vadd.f32 0.0, %v2374
  %v2376 = vpop.f32.mrf.mxu0
  %2377 = vmatprep.mubr.bf16.mxu0 0
  %2378 = vmatmul.mubr.bf16.gmra.mxu0 %v2230
  %v2379 = vpop.f32.mrf.mxu0
  %v2380 = vadd.f32 0.0, %v2379
  %v2381 = vpop.f32.mrf.mxu0
  %v2382 = vpop.f32.mrf.mxu0
  %v2383 = vadd.f32 0.0, %v2382
  %v2384 = vpop.f32.mrf.mxu0
  %2385 = vmatprep.mubr.bf16.mxu0 0
  %2386 = vmatmul.mubr.bf16.gmra.mxu0 %v2231
  %v2387 = vpop.f32.mrf.mxu0
  %v2388 = vadd.f32 0.0, %v2387
  %v2389 = vpop.f32.mrf.mxu0
  %v2390 = vpop.f32.mrf.mxu0
  %v2391 = vadd.f32 0.0, %v2390
  %v2392 = vpop.f32.mrf.mxu0
  %2393 = vdwg.mxu0
  %v2410 = vunpack.c.l.b16 %v2192
  %v2411 = vunpack.c.l.b16 %v2193
  %v2412 = vunpack.c.l.b16 %v2194
  %v2413 = vunpack.c.l.b16 %v2195
  %v2414 = vunpack.c.l.b16 %v2196
  %v2415 = vunpack.c.l.b16 %v2197
  %v2416 = vunpack.c.l.b16 %v2198
  %v2417 = vunpack.c.l.b16 %v2199
  %v2418 = vunpack.c.l.b16 %v2200
  %v2419 = vunpack.c.l.b16 %v2201
  %v2420 = vunpack.c.l.b16 %v2202
  %v2421 = vunpack.c.l.b16 %v2203
  %v2422 = vunpack.c.l.b16 %v2204
  %v2423 = vunpack.c.l.b16 %v2205
  %v2424 = vunpack.c.l.b16 %v2206
  %v2425 = vunpack.c.l.b16 %v2207
  %v2426 = vpack.c.b16 %v2411, %v2410
  %v2427 = vpack.c.b16 %v2413, %v2412
  %v2428 = vpack.c.b16 %v2415, %v2414
  %v2429 = vpack.c.b16 %v2417, %v2416
  %v2430 = vpack.c.b16 %v2419, %v2418
  %v2431 = vpack.c.b16 %v2421, %v2420
  %v2432 = vpack.c.b16 %v2423, %v2422
  %v2433 = vpack.c.b16 %v2425, %v2424
  %2442 = vmatprep.subr.bf16.mxu0 0
  %2443 = vmatpush1.bf16.msra.mxu0 %v2433
  %2444 = vmatprep.subr.bf16.mxu0 0
  %2445 = vmatpush1.bf16.msra.mxu0 %v2432
  %2446 = vmatprep.subr.bf16.mxu0 0
  %2447 = vmatpush1.bf16.msra.mxu0 %v2431
  %2448 = vmatprep.subr.bf16.mxu0 0
  %2449 = vmatpush1.bf16.msra.mxu0 %v2430
  %2450 = vmatprep.subr.bf16.mxu0 0
  %2451 = vmatpush1.bf16.msra.mxu0 %v2429
  %2452 = vmatprep.subr.bf16.mxu0 0
  %2453 = vmatpush1.bf16.msra.mxu0 %v2428
  %2454 = vmatprep.subr.bf16.mxu0 0
  %2455 = vmatpush1.bf16.msra.mxu0 %v2427
  %2456 = vmatprep.subr.bf16.mxu0 0
  %2457 = vmatpush1.bf16.msra.mxu0 %v2426
  %2458 = vmatprep.subr.bf16.mxu0 0
  %2459 = vmatpush2.bf16.msra.mxu0 0
  %2460 = vmatprep.subr.bf16.mxu0 0
  %2461 = vmatpush2.bf16.msra.mxu0 0
  %2462 = vmatprep.subr.bf16.mxu0 0
  %2463 = vmatpush2.bf16.msra.mxu0 0
  %2464 = vmatprep.subr.bf16.mxu0 0
  %2465 = vmatpush2.bf16.msra.mxu0 0
  %2466 = vmatprep.subr.bf16.mxu0 0
  %2467 = vmatpush2.bf16.msra.mxu0 0
  %2468 = vmatprep.subr.bf16.mxu0 0
  %2469 = vmatpush2.bf16.msra.mxu0 0
  %2470 = vmatprep.subr.bf16.mxu0 0
  %2471 = vmatpush2.bf16.msra.mxu0 0
  %2472 = vmatprep.subr.bf16.mxu0 0
  %2473 = vmatpush2.bf16.msra.mxu0 0
  %2474 = vmatprep.mubr.bf16.mxu0 0
  %2475 = vmatmul.mubr.bf16.gmra.mxu0 %v2184
  %v2476 = vpop.f32.mrf.mxu0
  %v2477 = vadd.f32 %v2332, %v2476
  %v2478 = vpop.f32.mrf.mxu0
  %v2479 = vpop.f32.mrf.mxu0
  %v2480 = vadd.f32 %v2335, %v2479
  %v2481 = vpop.f32.mrf.mxu0
  %2482 = vmatprep.mubr.bf16.mxu0 0
  %2483 = vmatmul.mubr.bf16.gmra.mxu0 %v2185
  %v2484 = vpop.f32.mrf.mxu0
  %v2485 = vadd.f32 %v2340, %v2484
  %v2486 = vpop.f32.mrf.mxu0
  %v2487 = vpop.f32.mrf.mxu0
  %v2488 = vadd.f32 %v2343, %v2487
  %v2489 = vpop.f32.mrf.mxu0
  %2490 = vmatprep.mubr.bf16.mxu0 0
  %2491 = vmatmul.mubr.bf16.gmra.mxu0 %v2186
  %v2492 = vpop.f32.mrf.mxu0
  %v2493 = vadd.f32 %v2348, %v2492
  %v2494 = vpop.f32.mrf.mxu0
  %v2495 = vpop.f32.mrf.mxu0
  %v2496 = vadd.f32 %v2351, %v2495
  %v2497 = vpop.f32.mrf.mxu0
  %2498 = vmatprep.mubr.bf16.mxu0 0
  %2499 = vmatmul.mubr.bf16.gmra.mxu0 %v2187
  %v2500 = vpop.f32.mrf.mxu0
  %v2501 = vadd.f32 %v2356, %v2500
  %v2502 = vpop.f32.mrf.mxu0
  %v2503 = vpop.f32.mrf.mxu0
  %v2504 = vadd.f32 %v2359, %v2503
  %v2505 = vpop.f32.mrf.mxu0
  %2506 = vmatprep.mubr.bf16.mxu0 0
  %2507 = vmatmul.mubr.bf16.gmra.mxu0 %v2188
  %v2508 = vpop.f32.mrf.mxu0
  %v2509 = vadd.f32 %v2364, %v2508
  %v2510 = vpop.f32.mrf.mxu0
  %v2511 = vpop.f32.mrf.mxu0
  %v2512 = vadd.f32 %v2367, %v2511
  %v2513 = vpop.f32.mrf.mxu0
  %2514 = vmatprep.mubr.bf16.mxu0 0
  %2515 = vmatmul.mubr.bf16.gmra.mxu0 %v2189
  %v2516 = vpop.f32.mrf.mxu0
  %v2517 = vadd.f32 %v2372, %v2516
  %v2518 = vpop.f32.mrf.mxu0
  %v2519 = vpop.f32.mrf.mxu0
  %v2520 = vadd.f32 %v2375, %v2519
  %v2521 = vpop.f32.mrf.mxu0
  %2522 = vmatprep.mubr.bf16.mxu0 0
  %2523 = vmatmul.mubr.bf16.gmra.mxu0 %v2190
  %v2524 = vpop.f32.mrf.mxu0
  %v2525 = vadd.f32 %v2380, %v2524
  %v2526 = vpop.f32.mrf.mxu0
  %v2527 = vpop.f32.mrf.mxu0
  %v2528 = vadd.f32 %v2383, %v2527
  %v2529 = vpop.f32.mrf.mxu0
  %2530 = vmatprep.mubr.bf16.mxu0 0
  %2531 = vmatmul.mubr.bf16.gmra.mxu0 %v2191
  %v2532 = vpop.f32.mrf.mxu0
  %v2533 = vadd.f32 %v2388, %v2532
  %v2534 = vpop.f32.mrf.mxu0
  %v2535 = vpop.f32.mrf.mxu0
  %v2536 = vadd.f32 %v2391, %v2535
  %v2537 = vpop.f32.mrf.mxu0
  %2538 = vdwg.mxu0
  %v2539 = vld [vmem:[#allocation2 + $0x9] sm:$0xff]
  %v2540 = vld [vmem:[#allocation2 + $0x21] sm:$0xff]
  %v2541 = vld [vmem:[#allocation2 + $0x39] sm:$0xff]
  %v2542 = vld [vmem:[#allocation2 + $0x51] sm:$0xff]
  %v2543 = vld [vmem:[#allocation2 + $0x69] sm:$0xff]
  %v2544 = vld [vmem:[#allocation2 + $0x81] sm:$0xff]
  %v2545 = vld [vmem:[#allocation2 + $0x99] sm:$0xff]
  %v2546 = vld [vmem:[#allocation2 + $0xb1] sm:$0xff]
  %v2547 = vld [vmem:[#allocation2 + $0xf9] sm:$0xff]
  %v2548 = vld [vmem:[#allocation2 + $0x111] sm:$0xff]
  %v2549 = vld [vmem:[#allocation2 + $0x129] sm:$0xff]
  %v2550 = vld [vmem:[#allocation2 + $0x141] sm:$0xff]
  %v2551 = vld [vmem:[#allocation2 + $0x159] sm:$0xff]
  %v2552 = vld [vmem:[#allocation2 + $0x171] sm:$0xff]
  %v2553 = vld [vmem:[#allocation2 + $0x189] sm:$0xff]
  %v2554 = vld [vmem:[#allocation2 + $0x1a1] sm:$0xff]
  %v2555 = vpack.c.bf16 %v2540, %v2539
  %v2556 = vpack.c.bf16 %v2542, %v2541
  %v2557 = vpack.c.bf16 %v2544, %v2543
  %v2558 = vpack.c.bf16 %v2546, %v2545
  %v2559 = vpack.c.bf16 %v2548, %v2547
  %v2560 = vpack.c.bf16 %v2550, %v2549
  %v2561 = vpack.c.bf16 %v2552, %v2551
  %v2562 = vpack.c.bf16 %v2554, %v2553
  %s2563 = scalar_lea.vmem %s5, 128
  %v2564 = vld [vmem:[%s2563] sm:$0xf]
  %v2565 = vld [vmem:[%s2563 + $0x4] sm:$0xf]
  %v2566 = vld [vmem:[%s2563 + $0x8] sm:$0xf]
  %v2567 = vld [vmem:[%s2563 + $0xc] sm:$0xf]
  %v2568 = vld [vmem:[%s2563 + $0x10] sm:$0xf]
  %v2569 = vld [vmem:[%s2563 + $0x14] sm:$0xf]
  %v2570 = vld [vmem:[%s2563 + $0x18] sm:$0xf]
  %v2571 = vld [vmem:[%s2563 + $0x1c] sm:$0xf]
  %v2572 = vld [vmem:[%s2563 + $0x20] sm:$0xf]
  %v2573 = vld [vmem:[%s2563 + $0x24] sm:$0xf]
  %v2574 = vld [vmem:[%s2563 + $0x28] sm:$0xf]
  %v2575 = vld [vmem:[%s2563 + $0x2c] sm:$0xf]
  %v2576 = vld [vmem:[%s2563 + $0x30] sm:$0xf]
  %v2577 = vld [vmem:[%s2563 + $0x34] sm:$0xf]
  %v2578 = vld [vmem:[%s2563 + $0x38] sm:$0xf]
  %v2579 = vld [vmem:[%s2563 + $0x3c] sm:$0xf]
  %v2596 = vunpack.c.l.b16 %v2564
  %v2597 = vunpack.c.l.b16 %v2565
  %v2598 = vunpack.c.l.b16 %v2566
  %v2599 = vunpack.c.l.b16 %v2567
  %v2600 = vunpack.c.l.b16 %v2568
  %v2601 = vunpack.c.l.b16 %v2569
  %v2602 = vunpack.c.l.b16 %v2570
  %v2603 = vunpack.c.l.b16 %v2571
  %v2604 = vunpack.c.l.b16 %v2572
  %v2605 = vunpack.c.l.b16 %v2573
  %v2606 = vunpack.c.l.b16 %v2574
  %v2607 = vunpack.c.l.b16 %v2575
  %v2608 = vunpack.c.l.b16 %v2576
  %v2609 = vunpack.c.l.b16 %v2577
  %v2610 = vunpack.c.l.b16 %v2578
  %v2611 = vunpack.c.l.b16 %v2579
  %v2612 = vpack.c.b16 %v2597, %v2596
  %v2613 = vpack.c.b16 %v2599, %v2598
  %v2614 = vpack.c.b16 %v2601, %v2600
  %v2615 = vpack.c.b16 %v2603, %v2602
  %v2616 = vpack.c.b16 %v2605, %v2604
  %v2617 = vpack.c.b16 %v2607, %v2606
  %v2618 = vpack.c.b16 %v2609, %v2608
  %v2619 = vpack.c.b16 %v2611, %v2610
  %2628 = vmatprep.subr.bf16.mxu0 0
  %2629 = vmatpush1.bf16.msra.mxu0 %v2619
  %2630 = vmatprep.subr.bf16.mxu0 0
  %2631 = vmatpush1.bf16.msra.mxu0 %v2618
  %2632 = vmatprep.subr.bf16.mxu0 0
  %2633 = vmatpush1.bf16.msra.mxu0 %v2617
  %2634 = vmatprep.subr.bf16.mxu0 0
  %2635 = vmatpush1.bf16.msra.mxu0 %v2616
  %2636 = vmatprep.subr.bf16.mxu0 0
  %2637 = vmatpush1.bf16.msra.mxu0 %v2615
  %2638 = vmatprep.subr.bf16.mxu0 0
  %2639 = vmatpush1.bf16.msra.mxu0 %v2614
  %2640 = vmatprep.subr.bf16.mxu0 0
  %2641 = vmatpush1.bf16.msra.mxu0 %v2613
  %2642 = vmatprep.subr.bf16.mxu0 0
  %2643 = vmatpush1.bf16.msra.mxu0 %v2612
  %2644 = vmatprep.subr.bf16.mxu0 0
  %2645 = vmatpush2.bf16.msra.mxu0 0
  %2646 = vmatprep.subr.bf16.mxu0 0
  %2647 = vmatpush2.bf16.msra.mxu0 0
  %2648 = vmatprep.subr.bf16.mxu0 0
  %2649 = vmatpush2.bf16.msra.mxu0 0
  %2650 = vmatprep.subr.bf16.mxu0 0
  %2651 = vmatpush2.bf16.msra.mxu0 0
  %2652 = vmatprep.subr.bf16.mxu0 0
  %2653 = vmatpush2.bf16.msra.mxu0 0
  %2654 = vmatprep.subr.bf16.mxu0 0
  %2655 = vmatpush2.bf16.msra.mxu0 0
  %2656 = vmatprep.subr.bf16.mxu0 0
  %2657 = vmatpush2.bf16.msra.mxu0 0
  %2658 = vmatprep.subr.bf16.mxu0 0
  %2659 = vmatpush2.bf16.msra.mxu0 0
  %2660 = vmatprep.mubr.bf16.mxu0 0
  %2661 = vmatmul.mubr.bf16.gmra.mxu0 %v2555
  %v2662 = vpop.f32.mrf.mxu0
  %v2663 = vadd.f32 0.0, %v2662
  %v2664 = vpop.f32.mrf.mxu0
  %v2665 = vpop.f32.mrf.mxu0
  %v2666 = vadd.f32 0.0, %v2665
  %v2667 = vpop.f32.mrf.mxu0
  %2668 = vmatprep.mubr.bf16.mxu0 0
  %2669 = vmatmul.mubr.bf16.gmra.mxu0 %v2556
  %v2670 = vpop.f32.mrf.mxu0
  %v2671 = vadd.f32 0.0, %v2670
  %v2672 = vpop.f32.mrf.mxu0
  %v2673 = vpop.f32.mrf.mxu0
  %v2674 = vadd.f32 0.0, %v2673
  %v2675 = vpop.f32.mrf.mxu0
  %2676 = vmatprep.mubr.bf16.mxu0 0
  %2677 = vmatmul.mubr.bf16.gmra.mxu0 %v2557
  %v2678 = vpop.f32.mrf.mxu0
  %v2679 = vadd.f32 0.0, %v2678
  %v2680 = vpop.f32.mrf.mxu0
  %v2681 = vpop.f32.mrf.mxu0
  %v2682 = vadd.f32 0.0, %v2681
  %v2683 = vpop.f32.mrf.mxu0
  %2684 = vmatprep.mubr.bf16.mxu0 0
  %2685 = vmatmul.mubr.bf16.gmra.mxu0 %v2558
  %v2686 = vpop.f32.mrf.mxu0
  %v2687 = vadd.f32 0.0, %v2686
  %v2688 = vpop.f32.mrf.mxu0
  %v2689 = vpop.f32.mrf.mxu0
  %v2690 = vadd.f32 0.0, %v2689
  %v2691 = vpop.f32.mrf.mxu0
  %2692 = vmatprep.mubr.bf16.mxu0 0
  %2693 = vmatmul.mubr.bf16.gmra.mxu0 %v2559
  %v2694 = vpop.f32.mrf.mxu0
  %v2695 = vadd.f32 0.0, %v2694
  %v2696 = vpop.f32.mrf.mxu0
  %v2697 = vpop.f32.mrf.mxu0
  %v2698 = vadd.f32 0.0, %v2697
  %v2699 = vpop.f32.mrf.mxu0
  %2700 = vmatprep.mubr.bf16.mxu0 0
  %2701 = vmatmul.mubr.bf16.gmra.mxu0 %v2560
  %v2702 = vpop.f32.mrf.mxu0
  %v2703 = vadd.f32 0.0, %v2702
  %v2704 = vpop.f32.mrf.mxu0
  %v2705 = vpop.f32.mrf.mxu0
  %v2706 = vadd.f32 0.0, %v2705
  %v2707 = vpop.f32.mrf.mxu0
  %2708 = vmatprep.mubr.bf16.mxu0 0
  %2709 = vmatmul.mubr.bf16.gmra.mxu0 %v2561
  %v2710 = vpop.f32.mrf.mxu0
  %v2711 = vadd.f32 0.0, %v2710
  %v2712 = vpop.f32.mrf.mxu0
  %v2713 = vpop.f32.mrf.mxu0
  %v2714 = vadd.f32 0.0, %v2713
  %v2715 = vpop.f32.mrf.mxu0
  %2716 = vmatprep.mubr.bf16.mxu0 0
  %2717 = vmatmul.mubr.bf16.gmra.mxu0 %v2562
  %v2718 = vpop.f32.mrf.mxu0
  %v2719 = vadd.f32 0.0, %v2718
  %v2720 = vpop.f32.mrf.mxu0
  %v2721 = vpop.f32.mrf.mxu0
  %v2722 = vadd.f32 0.0, %v2721
  %v2723 = vpop.f32.mrf.mxu0
  %2724 = vdwg.mxu0
  %v2725 = vadd.f32 %v2477, %v2663
  %v2726 = vadd.f32 %v2480, %v2666
  %v2727 = vadd.f32 %v2485, %v2671
  %v2728 = vadd.f32 %v2488, %v2674
  %v2729 = vadd.f32 %v2493, %v2679
  %v2730 = vadd.f32 %v2496, %v2682
  %v2731 = vadd.f32 %v2501, %v2687
  %v2732 = vadd.f32 %v2504, %v2690
  %v2733 = vadd.f32 %v2509, %v2695
  %v2734 = vadd.f32 %v2512, %v2698
  %v2735 = vadd.f32 %v2517, %v2703
  %v2736 = vadd.f32 %v2520, %v2706
  %v2737 = vadd.f32 %v2525, %v2711
  %v2738 = vadd.f32 %v2528, %v2714
  %v2739 = vadd.f32 %v2533, %v2719
  %v2740 = vadd.f32 %v2536, %v2722
  %v2741 = vld [vmem:[%s125 + $0x7] sm:$0xff]
  %v2742 = vld [vmem:[%s125 + $0x1f] sm:$0xff]
  %v2743 = vld [vmem:[%s125 + $0x37] sm:$0xff]
  %v2744 = vld [vmem:[%s125 + $0x4f] sm:$0xff]
  %v2745 = vld [vmem:[%s125 + $0x67] sm:$0xff]
  %v2746 = vld [vmem:[%s125 + $0x7f] sm:$0xff]
  %v2747 = vld [vmem:[%s125 + $0x97] sm:$0xff]
  %v2748 = vld [vmem:[%s125 + $0xaf] sm:$0xff]
  %v2749 = vld [vmem:[%s125 + $0xf7] sm:$0xff]
  %v2750 = vld [vmem:[%s125 + $0x10f] sm:$0xff]
  %v2751 = vld [vmem:[%s125 + $0x127] sm:$0xff]
  %v2752 = vld [vmem:[%s125 + $0x13f] sm:$0xff]
  %v2753 = vld [vmem:[%s125 + $0x157] sm:$0xff]
  %v2754 = vld [vmem:[%s125 + $0x16f] sm:$0xff]
  %v2755 = vld [vmem:[%s125 + $0x187] sm:$0xff]
  %v2756 = vld [vmem:[%s125 + $0x19f] sm:$0xff]
  %v2757 = vpack.c.bf16 %v2742, %v2741
  %v2758 = vpack.c.bf16 %v2744, %v2743
  %v2759 = vpack.c.bf16 %v2746, %v2745
  %v2760 = vpack.c.bf16 %v2748, %v2747
  %v2761 = vpack.c.bf16 %v2750, %v2749
  %v2762 = vpack.c.bf16 %v2752, %v2751
  %v2763 = vpack.c.bf16 %v2754, %v2753
  %v2764 = vpack.c.bf16 %v2756, %v2755
  %s2765 = scalar_lea.vmem %s5, 192
  %v2766 = vld [vmem:[%s2765] sm:$0xf]
  %v2767 = vld [vmem:[%s2765 + $0x4] sm:$0xf]
  %v2768 = vld [vmem:[%s2765 + $0x8] sm:$0xf]
  %v2769 = vld [vmem:[%s2765 + $0xc] sm:$0xf]
  %v2770 = vld [vmem:[%s2765 + $0x10] sm:$0xf]
  %v2771 = vld [vmem:[%s2765 + $0x14] sm:$0xf]
  %v2772 = vld [vmem:[%s2765 + $0x18] sm:$0xf]
  %v2773 = vld [vmem:[%s2765 + $0x1c] sm:$0xf]
  %v2774 = vld [vmem:[%s2765 + $0x20] sm:$0xf]
  %v2775 = vld [vmem:[%s2765 + $0x24] sm:$0xf]
  %v2776 = vld [vmem:[%s2765 + $0x28] sm:$0xf]
  %v2777 = vld [vmem:[%s2765 + $0x2c] sm:$0xf]
  %v2778 = vld [vmem:[%s2765 + $0x30] sm:$0xf]
  %v2779 = vld [vmem:[%s2765 + $0x34] sm:$0xf]
  %v2780 = vld [vmem:[%s2765 + $0x38] sm:$0xf]
  %v2781 = vld [vmem:[%s2765 + $0x3c] sm:$0xf]
  %v2798 = vunpack.c.l.b16 %v2766
  %v2799 = vunpack.c.l.b16 %v2767
  %v2800 = vunpack.c.l.b16 %v2768
  %v2801 = vunpack.c.l.b16 %v2769
  %v2802 = vunpack.c.l.b16 %v2770
  %v2803 = vunpack.c.l.b16 %v2771
  %v2804 = vunpack.c.l.b16 %v2772
  %v2805 = vunpack.c.l.b16 %v2773
  %v2806 = vunpack.c.l.b16 %v2774
  %v2807 = vunpack.c.l.b16 %v2775
  %v2808 = vunpack.c.l.b16 %v2776
  %v2809 = vunpack.c.l.b16 %v2777
  %v2810 = vunpack.c.l.b16 %v2778
  %v2811 = vunpack.c.l.b16 %v2779
  %v2812 = vunpack.c.l.b16 %v2780
  %v2813 = vunpack.c.l.b16 %v2781
  %v2814 = vpack.c.b16 %v2799, %v2798
  %v2815 = vpack.c.b16 %v2801, %v2800
  %v2816 = vpack.c.b16 %v2803, %v2802
  %v2817 = vpack.c.b16 %v2805, %v2804
  %v2818 = vpack.c.b16 %v2807, %v2806
  %v2819 = vpack.c.b16 %v2809, %v2808
  %v2820 = vpack.c.b16 %v2811, %v2810
  %v2821 = vpack.c.b16 %v2813, %v2812
  %2830 = vmatprep.subr.bf16.mxu0 0
  %2831 = vmatpush1.bf16.msra.mxu0 %v2821
  %2832 = vmatprep.subr.bf16.mxu0 0
  %2833 = vmatpush1.bf16.msra.mxu0 %v2820
  %2834 = vmatprep.subr.bf16.mxu0 0
  %2835 = vmatpush1.bf16.msra.mxu0 %v2819
  %2836 = vmatprep.subr.bf16.mxu0 0
  %2837 = vmatpush1.bf16.msra.mxu0 %v2818
  %2838 = vmatprep.subr.bf16.mxu0 0
  %2839 = vmatpush1.bf16.msra.mxu0 %v2817
  %2840 = vmatprep.subr.bf16.mxu0 0
  %2841 = vmatpush1.bf16.msra.mxu0 %v2816
  %2842 = vmatprep.subr.bf16.mxu0 0
  %2843 = vmatpush1.bf16.msra.mxu0 %v2815
  %2844 = vmatprep.subr.bf16.mxu0 0
  %2845 = vmatpush1.bf16.msra.mxu0 %v2814
  %2846 = vmatprep.subr.bf16.mxu0 0
  %2847 = vmatpush2.bf16.msra.mxu0 0
  %2848 = vmatprep.subr.bf16.mxu0 0
  %2849 = vmatpush2.bf16.msra.mxu0 0
  %2850 = vmatprep.subr.bf16.mxu0 0
  %2851 = vmatpush2.bf16.msra.mxu0 0
  %2852 = vmatprep.subr.bf16.mxu0 0
  %2853 = vmatpush2.bf16.msra.mxu0 0
  %2854 = vmatprep.subr.bf16.mxu0 0
  %2855 = vmatpush2.bf16.msra.mxu0 0
  %2856 = vmatprep.subr.bf16.mxu0 0
  %2857 = vmatpush2.bf16.msra.mxu0 0
  %2858 = vmatprep.subr.bf16.mxu0 0
  %2859 = vmatpush2.bf16.msra.mxu0 0
  %2860 = vmatprep.subr.bf16.mxu0 0
  %2861 = vmatpush2.bf16.msra.mxu0 0
  %2862 = vmatprep.mubr.bf16.mxu0 0
  %2863 = vmatmul.mubr.bf16.gmra.mxu0 %v2757
  %v2864 = vpop.f32.mrf.mxu0
  %v2865 = vadd.f32 0.0, %v2864
  %v2866 = vpop.f32.mrf.mxu0
  %v2867 = vpop.f32.mrf.mxu0
  %v2868 = vadd.f32 0.0, %v2867
  %v2869 = vpop.f32.mrf.mxu0
  %2870 = vmatprep.mubr.bf16.mxu0 0
  %2871 = vmatmul.mubr.bf16.gmra.mxu0 %v2758
  %v2872 = vpop.f32.mrf.mxu0
  %v2873 = vadd.f32 0.0, %v2872
  %v2874 = vpop.f32.mrf.mxu0
  %v2875 = vpop.f32.mrf.mxu0
  %v2876 = vadd.f32 0.0, %v2875
  %v2877 = vpop.f32.mrf.mxu0
  %2878 = vmatprep.mubr.bf16.mxu0 0
  %2879 = vmatmul.mubr.bf16.gmra.mxu0 %v2759
  %v2880 = vpop.f32.mrf.mxu0
  %v2881 = vadd.f32 0.0, %v2880
  %v2882 = vpop.f32.mrf.mxu0
  %v2883 = vpop.f32.mrf.mxu0
  %v2884 = vadd.f32 0.0, %v2883
  %v2885 = vpop.f32.mrf.mxu0
  %2886 = vmatprep.mubr.bf16.mxu0 0
  %2887 = vmatmul.mubr.bf16.gmra.mxu0 %v2760
  %v2888 = vpop.f32.mrf.mxu0
  %v2889 = vadd.f32 0.0, %v2888
  %v2890 = vpop.f32.mrf.mxu0
  %v2891 = vpop.f32.mrf.mxu0
  %v2892 = vadd.f32 0.0, %v2891
  %v2893 = vpop.f32.mrf.mxu0
  %2894 = vmatprep.mubr.bf16.mxu0 0
  %2895 = vmatmul.mubr.bf16.gmra.mxu0 %v2761
  %v2896 = vpop.f32.mrf.mxu0
  %v2897 = vadd.f32 0.0, %v2896
  %v2898 = vpop.f32.mrf.mxu0
  %v2899 = vpop.f32.mrf.mxu0
  %v2900 = vadd.f32 0.0, %v2899
  %v2901 = vpop.f32.mrf.mxu0
  %2902 = vmatprep.mubr.bf16.mxu0 0
  %2903 = vmatmul.mubr.bf16.gmra.mxu0 %v2762
  %v2904 = vpop.f32.mrf.mxu0
  %v2905 = vadd.f32 0.0, %v2904
  %v2906 = vpop.f32.mrf.mxu0
  %v2907 = vpop.f32.mrf.mxu0
  %v2908 = vadd.f32 0.0, %v2907
  %v2909 = vpop.f32.mrf.mxu0
  %2910 = vmatprep.mubr.bf16.mxu0 0
  %2911 = vmatmul.mubr.bf16.gmra.mxu0 %v2763
  %v2912 = vpop.f32.mrf.mxu0
  %v2913 = vadd.f32 0.0, %v2912
  %v2914 = vpop.f32.mrf.mxu0
  %v2915 = vpop.f32.mrf.mxu0
  %v2916 = vadd.f32 0.0, %v2915
  %v2917 = vpop.f32.mrf.mxu0
  %2918 = vmatprep.mubr.bf16.mxu0 0
  %2919 = vmatmul.mubr.bf16.gmra.mxu0 %v2764
  %v2920 = vpop.f32.mrf.mxu0
  %v2921 = vadd.f32 0.0, %v2920
  %v2922 = vpop.f32.mrf.mxu0
  %v2923 = vpop.f32.mrf.mxu0
  %v2924 = vadd.f32 0.0, %v2923
  %v2925 = vpop.f32.mrf.mxu0
  %2926 = vdwg.mxu0
  %v2927 = vadd.f32 %v2725, %v2865
  %v2928 = vadd.f32 %v2726, %v2868
  %v2929 = vadd.f32 %v2727, %v2873
  %v2930 = vadd.f32 %v2728, %v2876
  %v2931 = vadd.f32 %v2729, %v2881
  %v2932 = vadd.f32 %v2730, %v2884
  %v2933 = vadd.f32 %v2731, %v2889
  %v2934 = vadd.f32 %v2732, %v2892
  %v2935 = vadd.f32 %v2733, %v2897
  %v2936 = vadd.f32 %v2734, %v2900
  %v2937 = vadd.f32 %v2735, %v2905
  %v2938 = vadd.f32 %v2736, %v2908
  %v2939 = vadd.f32 %v2737, %v2913
  %v2940 = vadd.f32 %v2738, %v2916
  %v2941 = vadd.f32 %v2739, %v2921
  %v2942 = vadd.f32 %v2740, %v2924
  %v2943 = vld [vmem:[%s125 + $0x8] sm:$0xff]
  %v2944 = vld [vmem:[%s125 + $0x20] sm:$0xff]
  %v2945 = vld [vmem:[%s125 + $0x38] sm:$0xff]
  %v2946 = vld [vmem:[%s125 + $0x50] sm:$0xff]
  %v2947 = vld [vmem:[%s125 + $0x68] sm:$0xff]
  %v2948 = vld [vmem:[%s125 + $0x80] sm:$0xff]
  %v2949 = vld [vmem:[%s125 + $0x98] sm:$0xff]
  %v2950 = vld [vmem:[%s125 + $0xb0] sm:$0xff]
  %v2951 = vld [vmem:[%s125 + $0xf8] sm:$0xff]
  %v2952 = vld [vmem:[%s125 + $0x110] sm:$0xff]
  %v2953 = vld [vmem:[%s125 + $0x128] sm:$0xff]
  %v2954 = vld [vmem:[%s125 + $0x140] sm:$0xff]
  %v2955 = vld [vmem:[%s125 + $0x158] sm:$0xff]
  %v2956 = vld [vmem:[%s125 + $0x170] sm:$0xff]
  %v2957 = vld [vmem:[%s125 + $0x188] sm:$0xff]
  %v2958 = vld [vmem:[%s125 + $0x1a0] sm:$0xff]
  %v2959 = vpack.c.bf16 %v2944, %v2943
  %v2960 = vpack.c.bf16 %v2946, %v2945
  %v2961 = vpack.c.bf16 %v2948, %v2947
  %v2962 = vpack.c.bf16 %v2950, %v2949
  %v2963 = vpack.c.bf16 %v2952, %v2951
  %v2964 = vpack.c.bf16 %v2954, %v2953
  %v2965 = vpack.c.bf16 %v2956, %v2955
  %v2966 = vpack.c.bf16 %v2958, %v2957
  %s2967 = scalar_lea.vmem %s5, 256
  %v2968 = vld [vmem:[%s2967] sm:$0xf]
  %v2969 = vld [vmem:[%s2967 + $0x4] sm:$0xf]
  %v2970 = vld [vmem:[%s2967 + $0x8] sm:$0xf]
  %v2971 = vld [vmem:[%s2967 + $0xc] sm:$0xf]
  %v2972 = vld [vmem:[%s2967 + $0x10] sm:$0xf]
  %v2973 = vld [vmem:[%s2967 + $0x14] sm:$0xf]
  %v2974 = vld [vmem:[%s2967 + $0x18] sm:$0xf]
  %v2975 = vld [vmem:[%s2967 + $0x1c] sm:$0xf]
  %v2976 = vld [vmem:[%s2967 + $0x20] sm:$0xf]
  %v2977 = vld [vmem:[%s2967 + $0x24] sm:$0xf]
  %v2978 = vld [vmem:[%s2967 + $0x28] sm:$0xf]
  %v2979 = vld [vmem:[%s2967 + $0x2c] sm:$0xf]
  %v2980 = vld [vmem:[%s2967 + $0x30] sm:$0xf]
  %v2981 = vld [vmem:[%s2967 + $0x34] sm:$0xf]
  %v2982 = vld [vmem:[%s2967 + $0x38] sm:$0xf]
  %v2983 = vld [vmem:[%s2967 + $0x3c] sm:$0xf]
  %v3000 = vunpack.c.l.b16 %v2968
  %v3001 = vunpack.c.l.b16 %v2969
  %v3002 = vunpack.c.l.b16 %v2970
  %v3003 = vunpack.c.l.b16 %v2971
  %v3004 = vunpack.c.l.b16 %v2972
  %v3005 = vunpack.c.l.b16 %v2973
  %v3006 = vunpack.c.l.b16 %v2974
  %v3007 = vunpack.c.l.b16 %v2975
  %v3008 = vunpack.c.l.b16 %v2976
  %v3009 = vunpack.c.l.b16 %v2977
  %v3010 = vunpack.c.l.b16 %v2978
  %v3011 = vunpack.c.l.b16 %v2979
  %v3012 = vunpack.c.l.b16 %v2980
  %v3013 = vunpack.c.l.b16 %v2981
  %v3014 = vunpack.c.l.b16 %v2982
  %v3015 = vunpack.c.l.b16 %v2983
  %v3016 = vpack.c.b16 %v3001, %v3000
  %v3017 = vpack.c.b16 %v3003, %v3002
  %v3018 = vpack.c.b16 %v3005, %v3004
  %v3019 = vpack.c.b16 %v3007, %v3006
  %v3020 = vpack.c.b16 %v3009, %v3008
  %v3021 = vpack.c.b16 %v3011, %v3010
  %v3022 = vpack.c.b16 %v3013, %v3012
  %v3023 = vpack.c.b16 %v3015, %v3014
  %3032 = vmatprep.subr.bf16.mxu0 0
  %3033 = vmatpush1.bf16.msra.mxu0 %v3023
  %3034 = vmatprep.subr.bf16.mxu0 0
  %3035 = vmatpush1.bf16.msra.mxu0 %v3022
  %3036 = vmatprep.subr.bf16.mxu0 0
  %3037 = vmatpush1.bf16.msra.mxu0 %v3021
  %3038 = vmatprep.subr.bf16.mxu0 0
  %3039 = vmatpush1.bf16.msra.mxu0 %v3020
  %3040 = vmatprep.subr.bf16.mxu0 0
  %3041 = vmatpush1.bf16.msra.mxu0 %v3019
  %3042 = vmatprep.subr.bf16.mxu0 0
  %3043 = vmatpush1.bf16.msra.mxu0 %v3018
  %3044 = vmatprep.subr.bf16.mxu0 0
  %3045 = vmatpush1.bf16.msra.mxu0 %v3017
  %3046 = vmatprep.subr.bf16.mxu0 0
  %3047 = vmatpush1.bf16.msra.mxu0 %v3016
  %3048 = vmatprep.subr.bf16.mxu0 0
  %3049 = vmatpush2.bf16.msra.mxu0 0
  %3050 = vmatprep.subr.bf16.mxu0 0
  %3051 = vmatpush2.bf16.msra.mxu0 0
  %3052 = vmatprep.subr.bf16.mxu0 0
  %3053 = vmatpush2.bf16.msra.mxu0 0
  %3054 = vmatprep.subr.bf16.mxu0 0
  %3055 = vmatpush2.bf16.msra.mxu0 0
  %3056 = vmatprep.subr.bf16.mxu0 0
  %3057 = vmatpush2.bf16.msra.mxu0 0
  %3058 = vmatprep.subr.bf16.mxu0 0
  %3059 = vmatpush2.bf16.msra.mxu0 0
  %3060 = vmatprep.subr.bf16.mxu0 0
  %3061 = vmatpush2.bf16.msra.mxu0 0
  %3062 = vmatprep.subr.bf16.mxu0 0
  %3063 = vmatpush2.bf16.msra.mxu0 0
  %3064 = vmatprep.mubr.bf16.mxu0 0
  %3065 = vmatmul.mubr.bf16.gmra.mxu0 %v2959
  %v3066 = vpop.f32.mrf.mxu0
  %v3067 = vadd.f32 0.0, %v3066
  %v3068 = vpop.f32.mrf.mxu0
  %v3069 = vpop.f32.mrf.mxu0
  %v3070 = vadd.f32 0.0, %v3069
  %v3071 = vpop.f32.mrf.mxu0
  %3072 = vmatprep.mubr.bf16.mxu0 0
  %3073 = vmatmul.mubr.bf16.gmra.mxu0 %v2960
  %v3074 = vpop.f32.mrf.mxu0
  %v3075 = vadd.f32 0.0, %v3074
  %v3076 = vpop.f32.mrf.mxu0
  %v3077 = vpop.f32.mrf.mxu0
  %v3078 = vadd.f32 0.0, %v3077
  %v3079 = vpop.f32.mrf.mxu0
  %3080 = vmatprep.mubr.bf16.mxu0 0
  %3081 = vmatmul.mubr.bf16.gmra.mxu0 %v2961
  %v3082 = vpop.f32.mrf.mxu0
  %v3083 = vadd.f32 0.0, %v3082
  %v3084 = vpop.f32.mrf.mxu0
  %v3085 = vpop.f32.mrf.mxu0
  %v3086 = vadd.f32 0.0, %v3085
  %v3087 = vpop.f32.mrf.mxu0
  %3088 = vmatprep.mubr.bf16.mxu0 0
  %3089 = vmatmul.mubr.bf16.gmra.mxu0 %v2962
  %v3090 = vpop.f32.mrf.mxu0
  %v3091 = vadd.f32 0.0, %v3090
  %v3092 = vpop.f32.mrf.mxu0
  %v3093 = vpop.f32.mrf.mxu0
  %v3094 = vadd.f32 0.0, %v3093
  %v3095 = vpop.f32.mrf.mxu0
  %3096 = vmatprep.mubr.bf16.mxu0 0
  %3097 = vmatmul.mubr.bf16.gmra.mxu0 %v2963
  %v3098 = vpop.f32.mrf.mxu0
  %v3099 = vadd.f32 0.0, %v3098
  %v3100 = vpop.f32.mrf.mxu0
  %v3101 = vpop.f32.mrf.mxu0
  %v3102 = vadd.f32 0.0, %v3101
  %v3103 = vpop.f32.mrf.mxu0
  %3104 = vmatprep.mubr.bf16.mxu0 0
  %3105 = vmatmul.mubr.bf16.gmra.mxu0 %v2964
  %v3106 = vpop.f32.mrf.mxu0
  %v3107 = vadd.f32 0.0, %v3106
  %v3108 = vpop.f32.mrf.mxu0
  %v3109 = vpop.f32.mrf.mxu0
  %v3110 = vadd.f32 0.0, %v3109
  %v3111 = vpop.f32.mrf.mxu0
  %3112 = vmatprep.mubr.bf16.mxu0 0
  %3113 = vmatmul.mubr.bf16.gmra.mxu0 %v2965
  %v3114 = vpop.f32.mrf.mxu0
  %v3115 = vadd.f32 0.0, %v3114
  %v3116 = vpop.f32.mrf.mxu0
  %v3117 = vpop.f32.mrf.mxu0
  %v3118 = vadd.f32 0.0, %v3117
  %v3119 = vpop.f32.mrf.mxu0
  %3120 = vmatprep.mubr.bf16.mxu0 0
  %3121 = vmatmul.mubr.bf16.gmra.mxu0 %v2966
  %v3122 = vpop.f32.mrf.mxu0
  %v3123 = vadd.f32 0.0, %v3122
  %v3124 = vpop.f32.mrf.mxu0
  %v3125 = vpop.f32.mrf.mxu0
  %v3126 = vadd.f32 0.0, %v3125
  %v3127 = vpop.f32.mrf.mxu0
  %3128 = vdwg.mxu0
  %v3129 = vadd.f32 %v2927, %v3067
  %v3130 = vadd.f32 %v2928, %v3070
  %v3131 = vadd.f32 %v2929, %v3075
  %v3132 = vadd.f32 %v2930, %v3078
  %v3133 = vadd.f32 %v2931, %v3083
  %v3134 = vadd.f32 %v2932, %v3086
  %v3135 = vadd.f32 %v2933, %v3091
  %v3136 = vadd.f32 %v2934, %v3094
  %v3137 = vadd.f32 %v2935, %v3099
  %v3138 = vadd.f32 %v2936, %v3102
  %v3139 = vadd.f32 %v2937, %v3107
  %v3140 = vadd.f32 %v2938, %v3110
  %v3141 = vadd.f32 %v2939, %v3115
  %v3142 = vadd.f32 %v2940, %v3118
  %v3143 = vadd.f32 %v2941, %v3123
  %v3144 = vadd.f32 %v2942, %v3126
  %v3145 = vld [vmem:[%s125 + $0x9] sm:$0xff]
  %v3146 = vld [vmem:[%s125 + $0x21] sm:$0xff]
  %v3147 = vld [vmem:[%s125 + $0x39] sm:$0xff]
  %v3148 = vld [vmem:[%s125 + $0x51] sm:$0xff]
  %v3149 = vld [vmem:[%s125 + $0x69] sm:$0xff]
  %v3150 = vld [vmem:[%s125 + $0x81] sm:$0xff]
  %v3151 = vld [vmem:[%s125 + $0x99] sm:$0xff]
  %v3152 = vld [vmem:[%s125 + $0xb1] sm:$0xff]
  %v3153 = vld [vmem:[%s125 + $0xf9] sm:$0xff]
  %v3154 = vld [vmem:[%s125 + $0x111] sm:$0xff]
  %v3155 = vld [vmem:[%s125 + $0x129] sm:$0xff]
  %v3156 = vld [vmem:[%s125 + $0x141] sm:$0xff]
  %v3157 = vld [vmem:[%s125 + $0x159] sm:$0xff]
  %v3158 = vld [vmem:[%s125 + $0x171] sm:$0xff]
  %v3159 = vld [vmem:[%s125 + $0x189] sm:$0xff]
  %v3160 = vld [vmem:[%s125 + $0x1a1] sm:$0xff]
  %v3161 = vpack.c.bf16 %v3146, %v3145
  %v3162 = vpack.c.bf16 %v3148, %v3147
  %v3163 = vpack.c.bf16 %v3150, %v3149
  %v3164 = vpack.c.bf16 %v3152, %v3151
  %v3165 = vpack.c.bf16 %v3154, %v3153
  %v3166 = vpack.c.bf16 %v3156, %v3155
  %v3167 = vpack.c.bf16 %v3158, %v3157
  %v3168 = vpack.c.bf16 %v3160, %v3159
  %s3169 = scalar_lea.vmem %s5, 320
  %v3170 = vld [vmem:[%s3169] sm:$0xf]
  %v3171 = vld [vmem:[%s3169 + $0x4] sm:$0xf]
  %v3172 = vld [vmem:[%s3169 + $0x8] sm:$0xf]
  %v3173 = vld [vmem:[%s3169 + $0xc] sm:$0xf]
  %v3174 = vld [vmem:[%s3169 + $0x10] sm:$0xf]
  %v3175 = vld [vmem:[%s3169 + $0x14] sm:$0xf]
  %v3176 = vld [vmem:[%s3169 + $0x18] sm:$0xf]
  %v3177 = vld [vmem:[%s3169 + $0x1c] sm:$0xf]
  %v3178 = vld [vmem:[%s3169 + $0x20] sm:$0xf]
  %v3179 = vld [vmem:[%s3169 + $0x24] sm:$0xf]
  %v3180 = vld [vmem:[%s3169 + $0x28] sm:$0xf]
  %v3181 = vld [vmem:[%s3169 + $0x2c] sm:$0xf]
  %v3182 = vld [vmem:[%s3169 + $0x30] sm:$0xf]
  %v3183 = vld [vmem:[%s3169 + $0x34] sm:$0xf]
  %v3184 = vld [vmem:[%s3169 + $0x38] sm:$0xf]
  %v3185 = vld [vmem:[%s3169 + $0x3c] sm:$0xf]
  %v3202 = vunpack.c.l.b16 %v3170
  %v3203 = vunpack.c.l.b16 %v3171
  %v3204 = vunpack.c.l.b16 %v3172
  %v3205 = vunpack.c.l.b16 %v3173
  %v3206 = vunpack.c.l.b16 %v3174
  %v3207 = vunpack.c.l.b16 %v3175
  %v3208 = vunpack.c.l.b16 %v3176
  %v3209 = vunpack.c.l.b16 %v3177
  %v3210 = vunpack.c.l.b16 %v3178
  %v3211 = vunpack.c.l.b16 %v3179
  %v3212 = vunpack.c.l.b16 %v3180
  %v3213 = vunpack.c.l.b16 %v3181
  %v3214 = vunpack.c.l.b16 %v3182
  %v3215 = vunpack.c.l.b16 %v3183
  %v3216 = vunpack.c.l.b16 %v3184
  %v3217 = vunpack.c.l.b16 %v3185
  %v3218 = vpack.c.b16 %v3203, %v3202
  %v3219 = vpack.c.b16 %v3205, %v3204
  %v3220 = vpack.c.b16 %v3207, %v3206
  %v3221 = vpack.c.b16 %v3209, %v3208
  %v3222 = vpack.c.b16 %v3211, %v3210
  %v3223 = vpack.c.b16 %v3213, %v3212
  %v3224 = vpack.c.b16 %v3215, %v3214
  %v3225 = vpack.c.b16 %v3217, %v3216
  %3234 = vmatprep.subr.bf16.mxu0 0
  %3235 = vmatpush1.bf16.msra.mxu0 %v3225
  %3236 = vmatprep.subr.bf16.mxu0 0
  %3237 = vmatpush1.bf16.msra.mxu0 %v3224
  %3238 = vmatprep.subr.bf16.mxu0 0
  %3239 = vmatpush1.bf16.msra.mxu0 %v3223
  %3240 = vmatprep.subr.bf16.mxu0 0
  %3241 = vmatpush1.bf16.msra.mxu0 %v3222
  %3242 = vmatprep.subr.bf16.mxu0 0
  %3243 = vmatpush1.bf16.msra.mxu0 %v3221
  %3244 = vmatprep.subr.bf16.mxu0 0
  %3245 = vmatpush1.bf16.msra.mxu0 %v3220
  %3246 = vmatprep.subr.bf16.mxu0 0
  %3247 = vmatpush1.bf16.msra.mxu0 %v3219
  %3248 = vmatprep.subr.bf16.mxu0 0
  %3249 = vmatpush1.bf16.msra.mxu0 %v3218
  %3250 = vmatprep.subr.bf16.mxu0 0
  %3251 = vmatpush2.bf16.msra.mxu0 0
  %3252 = vmatprep.subr.bf16.mxu0 0
  %3253 = vmatpush2.bf16.msra.mxu0 0
  %3254 = vmatprep.subr.bf16.mxu0 0
  %3255 = vmatpush2.bf16.msra.mxu0 0
  %3256 = vmatprep.subr.bf16.mxu0 0
  %3257 = vmatpush2.bf16.msra.mxu0 0
  %3258 = vmatprep.subr.bf16.mxu0 0
  %3259 = vmatpush2.bf16.msra.mxu0 0
  %3260 = vmatprep.subr.bf16.mxu0 0
  %3261 = vmatpush2.bf16.msra.mxu0 0
  %3262 = vmatprep.subr.bf16.mxu0 0
  %3263 = vmatpush2.bf16.msra.mxu0 0
  %3264 = vmatprep.subr.bf16.mxu0 0
  %3265 = vmatpush2.bf16.msra.mxu0 0
  %3266 = vmatprep.mubr.bf16.mxu0 0
  %3267 = vmatmul.mubr.bf16.gmra.mxu0 %v3161
  %v3268 = vpop.f32.mrf.mxu0
  %v3269 = vadd.f32 0.0, %v3268
  %v3270 = vpop.f32.mrf.mxu0
  %v3271 = vpop.f32.mrf.mxu0
  %v3272 = vadd.f32 0.0, %v3271
  %v3273 = vpop.f32.mrf.mxu0
  %3274 = vmatprep.mubr.bf16.mxu0 0
  %3275 = vmatmul.mubr.bf16.gmra.mxu0 %v3162
  %v3276 = vpop.f32.mrf.mxu0
  %v3277 = vadd.f32 0.0, %v3276
  %v3278 = vpop.f32.mrf.mxu0
  %v3279 = vpop.f32.mrf.mxu0
  %v3280 = vadd.f32 0.0, %v3279
  %v3281 = vpop.f32.mrf.mxu0
  %3282 = vmatprep.mubr.bf16.mxu0 0
  %3283 = vmatmul.mubr.bf16.gmra.mxu0 %v3163
  %v3284 = vpop.f32.mrf.mxu0
  %v3285 = vadd.f32 0.0, %v3284
  %v3286 = vpop.f32.mrf.mxu0
  %v3287 = vpop.f32.mrf.mxu0
  %v3288 = vadd.f32 0.0, %v3287
  %v3289 = vpop.f32.mrf.mxu0
  %3290 = vmatprep.mubr.bf16.mxu0 0
  %3291 = vmatmul.mubr.bf16.gmra.mxu0 %v3164
  %v3292 = vpop.f32.mrf.mxu0
  %v3293 = vadd.f32 0.0, %v3292
  %v3294 = vpop.f32.mrf.mxu0
  %v3295 = vpop.f32.mrf.mxu0
  %v3296 = vadd.f32 0.0, %v3295
  %v3297 = vpop.f32.mrf.mxu0
  %3298 = vmatprep.mubr.bf16.mxu0 0
  %3299 = vmatmul.mubr.bf16.gmra.mxu0 %v3165
  %v3300 = vpop.f32.mrf.mxu0
  %v3301 = vadd.f32 0.0, %v3300
  %v3302 = vpop.f32.mrf.mxu0
  %v3303 = vpop.f32.mrf.mxu0
  %v3304 = vadd.f32 0.0, %v3303
  %v3305 = vpop.f32.mrf.mxu0
  %3306 = vmatprep.mubr.bf16.mxu0 0
  %3307 = vmatmul.mubr.bf16.gmra.mxu0 %v3166
  %v3308 = vpop.f32.mrf.mxu0
  %v3309 = vadd.f32 0.0, %v3308
  %v3310 = vpop.f32.mrf.mxu0
  %v3311 = vpop.f32.mrf.mxu0
  %v3312 = vadd.f32 0.0, %v3311
  %v3313 = vpop.f32.mrf.mxu0
  %3314 = vmatprep.mubr.bf16.mxu0 0
  %3315 = vmatmul.mubr.bf16.gmra.mxu0 %v3167
  %v3316 = vpop.f32.mrf.mxu0
  %v3317 = vadd.f32 0.0, %v3316
  %v3318 = vpop.f32.mrf.mxu0
  %v3319 = vpop.f32.mrf.mxu0
  %v3320 = vadd.f32 0.0, %v3319
  %v3321 = vpop.f32.mrf.mxu0
  %3322 = vmatprep.mubr.bf16.mxu0 0
  %3323 = vmatmul.mubr.bf16.gmra.mxu0 %v3168
  %v3324 = vpop.f32.mrf.mxu0
  %v3325 = vadd.f32 0.0, %v3324
  %v3326 = vpop.f32.mrf.mxu0
  %v3327 = vpop.f32.mrf.mxu0
  %v3328 = vadd.f32 0.0, %v3327
  %v3329 = vpop.f32.mrf.mxu0
  %3330 = vdwg.mxu0
  %v3331 = vadd.f32 %v3129, %v3269
  %v3332 = vadd.f32 %v3130, %v3272
  %v3333 = vadd.f32 %v3131, %v3277
  %v3334 = vadd.f32 %v3132, %v3280
  %v3335 = vadd.f32 %v3133, %v3285
  %v3336 = vadd.f32 %v3134, %v3288
  %v3337 = vadd.f32 %v3135, %v3293
  %v3338 = vadd.f32 %v3136, %v3296
  %v3339 = vadd.f32 %v3137, %v3301
  %v3340 = vadd.f32 %v3138, %v3304
  %v3341 = vadd.f32 %v3139, %v3309
  %v3342 = vadd.f32 %v3140, %v3312
  %v3343 = vadd.f32 %v3141, %v3317
  %v3344 = vadd.f32 %v3142, %v3320
  %v3345 = vadd.f32 %v3143, %v3325
  %v3346 = vadd.f32 %v3144, %v3328
  %v3347 = vld [vmem:[%s1321 + $0x7] sm:$0xff]
  %v3348 = vld [vmem:[%s1321 + $0x1f] sm:$0xff]
  %v3349 = vld [vmem:[%s1321 + $0x37] sm:$0xff]
  %v3350 = vld [vmem:[%s1321 + $0x4f] sm:$0xff]
  %v3351 = vld [vmem:[%s1321 + $0x67] sm:$0xff]
  %v3352 = vld [vmem:[%s1321 + $0x7f] sm:$0xff]
  %v3353 = vld [vmem:[%s1321 + $0x97] sm:$0xff]
  %v3354 = vld [vmem:[%s1321 + $0xaf] sm:$0xff]
  %v3355 = vld [vmem:[%s1321 + $0xf7] sm:$0xff]
  %v3356 = vld [vmem:[%s1321 + $0x10f] sm:$0xff]
  %v3357 = vld [vmem:[%s1321 + $0x127] sm:$0xff]
  %v3358 = vld [vmem:[%s1321 + $0x13f] sm:$0xff]
  %v3359 = vld [vmem:[%s1321 + $0x157] sm:$0xff]
  %v3360 = vld [vmem:[%s1321 + $0x16f] sm:$0xff]
  %v3361 = vld [vmem:[%s1321 + $0x187] sm:$0xff]
  %v3362 = vld [vmem:[%s1321 + $0x19f] sm:$0xff]
  %v3363 = vpack.c.bf16 %v3348, %v3347
  %v3364 = vpack.c.bf16 %v3350, %v3349
  %v3365 = vpack.c.bf16 %v3352, %v3351
  %v3366 = vpack.c.bf16 %v3354, %v3353
  %v3367 = vpack.c.bf16 %v3356, %v3355
  %v3368 = vpack.c.bf16 %v3358, %v3357
  %v3369 = vpack.c.bf16 %v3360, %v3359
  %v3370 = vpack.c.bf16 %v3362, %v3361
  %s3371 = scalar_lea.vmem %s5, 384
  %v3372 = vld [vmem:[%s3371] sm:$0xf]
  %v3373 = vld [vmem:[%s3371 + $0x4] sm:$0xf]
  %v3374 = vld [vmem:[%s3371 + $0x8] sm:$0xf]
  %v3375 = vld [vmem:[%s3371 + $0xc] sm:$0xf]
  %v3376 = vld [vmem:[%s3371 + $0x10] sm:$0xf]
  %v3377 = vld [vmem:[%s3371 + $0x14] sm:$0xf]
  %v3378 = vld [vmem:[%s3371 + $0x18] sm:$0xf]
  %v3379 = vld [vmem:[%s3371 + $0x1c] sm:$0xf]
  %v3380 = vld [vmem:[%s3371 + $0x20] sm:$0xf]
  %v3381 = vld [vmem:[%s3371 + $0x24] sm:$0xf]
  %v3382 = vld [vmem:[%s3371 + $0x28] sm:$0xf]
  %v3383 = vld [vmem:[%s3371 + $0x2c] sm:$0xf]
  %v3384 = vld [vmem:[%s3371 + $0x30] sm:$0xf]
  %v3385 = vld [vmem:[%s3371 + $0x34] sm:$0xf]
  %v3386 = vld [vmem:[%s3371 + $0x38] sm:$0xf]
  %v3387 = vld [vmem:[%s3371 + $0x3c] sm:$0xf]
  %v3404 = vunpack.c.l.b16 %v3372
  %v3405 = vunpack.c.l.b16 %v3373
  %v3406 = vunpack.c.l.b16 %v3374
  %v3407 = vunpack.c.l.b16 %v3375
  %v3408 = vunpack.c.l.b16 %v3376
  %v3409 = vunpack.c.l.b16 %v3377
  %v3410 = vunpack.c.l.b16 %v3378
  %v3411 = vunpack.c.l.b16 %v3379
  %v3412 = vunpack.c.l.b16 %v3380
  %v3413 = vunpack.c.l.b16 %v3381
  %v3414 = vunpack.c.l.b16 %v3382
  %v3415 = vunpack.c.l.b16 %v3383
  %v3416 = vunpack.c.l.b16 %v3384
  %v3417 = vunpack.c.l.b16 %v3385
  %v3418 = vunpack.c.l.b16 %v3386
  %v3419 = vunpack.c.l.b16 %v3387
  %v3420 = vpack.c.b16 %v3405, %v3404
  %v3421 = vpack.c.b16 %v3407, %v3406
  %v3422 = vpack.c.b16 %v3409, %v3408
  %v3423 = vpack.c.b16 %v3411, %v3410
  %v3424 = vpack.c.b16 %v3413, %v3412
  %v3425 = vpack.c.b16 %v3415, %v3414
  %v3426 = vpack.c.b16 %v3417, %v3416
  %v3427 = vpack.c.b16 %v3419, %v3418
  %3436 = vmatprep.subr.bf16.mxu0 0
  %3437 = vmatpush1.bf16.msra.mxu0 %v3427
  %3438 = vmatprep.subr.bf16.mxu0 0
  %3439 = vmatpush1.bf16.msra.mxu0 %v3426
  %3440 = vmatprep.subr.bf16.mxu0 0
  %3441 = vmatpush1.bf16.msra.mxu0 %v3425
  %3442 = vmatprep.subr.bf16.mxu0 0
  %3443 = vmatpush1.bf16.msra.mxu0 %v3424
  %3444 = vmatprep.subr.bf16.mxu0 0
  %3445 = vmatpush1.bf16.msra.mxu0 %v3423
  %3446 = vmatprep.subr.bf16.mxu0 0
  %3447 = vmatpush1.bf16.msra.mxu0 %v3422
  %3448 = vmatprep.subr.bf16.mxu0 0
  %3449 = vmatpush1.bf16.msra.mxu0 %v3421
  %3450 = vmatprep.subr.bf16.mxu0 0
  %3451 = vmatpush1.bf16.msra.mxu0 %v3420
  %3452 = vmatprep.subr.bf16.mxu0 0
  %3453 = vmatpush2.bf16.msra.mxu0 0
  %3454 = vmatprep.subr.bf16.mxu0 0
  %3455 = vmatpush2.bf16.msra.mxu0 0
  %3456 = vmatprep.subr.bf16.mxu0 0
  %3457 = vmatpush2.bf16.msra.mxu0 0
  %3458 = vmatprep.subr.bf16.mxu0 0
  %3459 = vmatpush2.bf16.msra.mxu0 0
  %3460 = vmatprep.subr.bf16.mxu0 0
  %3461 = vmatpush2.bf16.msra.mxu0 0
  %3462 = vmatprep.subr.bf16.mxu0 0
  %3463 = vmatpush2.bf16.msra.mxu0 0
  %3464 = vmatprep.subr.bf16.mxu0 0
  %3465 = vmatpush2.bf16.msra.mxu0 0
  %3466 = vmatprep.subr.bf16.mxu0 0
  %3467 = vmatpush2.bf16.msra.mxu0 0
  %3468 = vmatprep.mubr.bf16.mxu0 0
  %3469 = vmatmul.mubr.bf16.gmra.mxu0 %v3363
  %v3470 = vpop.f32.mrf.mxu0
  %v3471 = vadd.f32 0.0, %v3470
  %v3472 = vpop.f32.mrf.mxu0
  %v3473 = vpop.f32.mrf.mxu0
  %v3474 = vadd.f32 0.0, %v3473
  %v3475 = vpop.f32.mrf.mxu0
  %3476 = vmatprep.mubr.bf16.mxu0 0
  %3477 = vmatmul.mubr.bf16.gmra.mxu0 %v3364
  %v3478 = vpop.f32.mrf.mxu0
  %v3479 = vadd.f32 0.0, %v3478
  %v3480 = vpop.f32.mrf.mxu0
  %v3481 = vpop.f32.mrf.mxu0
  %v3482 = vadd.f32 0.0, %v3481
  %v3483 = vpop.f32.mrf.mxu0
  %3484 = vmatprep.mubr.bf16.mxu0 0
  %3485 = vmatmul.mubr.bf16.gmra.mxu0 %v3365
  %v3486 = vpop.f32.mrf.mxu0
  %v3487 = vadd.f32 0.0, %v3486
  %v3488 = vpop.f32.mrf.mxu0
  %v3489 = vpop.f32.mrf.mxu0
  %v3490 = vadd.f32 0.0, %v3489
  %v3491 = vpop.f32.mrf.mxu0
  %3492 = vmatprep.mubr.bf16.mxu0 0
  %3493 = vmatmul.mubr.bf16.gmra.mxu0 %v3366
  %v3494 = vpop.f32.mrf.mxu0
  %v3495 = vadd.f32 0.0, %v3494
  %v3496 = vpop.f32.mrf.mxu0
  %v3497 = vpop.f32.mrf.mxu0
  %v3498 = vadd.f32 0.0, %v3497
  %v3499 = vpop.f32.mrf.mxu0
  %3500 = vmatprep.mubr.bf16.mxu0 0
  %3501 = vmatmul.mubr.bf16.gmra.mxu0 %v3367
  %v3502 = vpop.f32.mrf.mxu0
  %v3503 = vadd.f32 0.0, %v3502
  %v3504 = vpop.f32.mrf.mxu0
  %v3505 = vpop.f32.mrf.mxu0
  %v3506 = vadd.f32 0.0, %v3505
  %v3507 = vpop.f32.mrf.mxu0
  %3508 = vmatprep.mubr.bf16.mxu0 0
  %3509 = vmatmul.mubr.bf16.gmra.mxu0 %v3368
  %v3510 = vpop.f32.mrf.mxu0
  %v3511 = vadd.f32 0.0, %v3510
  %v3512 = vpop.f32.mrf.mxu0
  %v3513 = vpop.f32.mrf.mxu0
  %v3514 = vadd.f32 0.0, %v3513
  %v3515 = vpop.f32.mrf.mxu0
  %3516 = vmatprep.mubr.bf16.mxu0 0
  %3517 = vmatmul.mubr.bf16.gmra.mxu0 %v3369
  %v3518 = vpop.f32.mrf.mxu0
  %v3519 = vadd.f32 0.0, %v3518
  %v3520 = vpop.f32.mrf.mxu0
  %v3521 = vpop.f32.mrf.mxu0
  %v3522 = vadd.f32 0.0, %v3521
  %v3523 = vpop.f32.mrf.mxu0
  %3524 = vmatprep.mubr.bf16.mxu0 0
  %3525 = vmatmul.mubr.bf16.gmra.mxu0 %v3370
  %v3526 = vpop.f32.mrf.mxu0
  %v3527 = vadd.f32 0.0, %v3526
  %v3528 = vpop.f32.mrf.mxu0
  %v3529 = vpop.f32.mrf.mxu0
  %v3530 = vadd.f32 0.0, %v3529
  %v3531 = vpop.f32.mrf.mxu0
  %3532 = vdwg.mxu0
  %v3533 = vadd.f32 %v3331, %v3471
  %v3534 = vadd.f32 %v3332, %v3474
  %v3535 = vadd.f32 %v3333, %v3479
  %v3536 = vadd.f32 %v3334, %v3482
  %v3537 = vadd.f32 %v3335, %v3487
  %v3538 = vadd.f32 %v3336, %v3490
  %v3539 = vadd.f32 %v3337, %v3495
  %v3540 = vadd.f32 %v3338, %v3498
  %v3541 = vadd.f32 %v3339, %v3503
  %v3542 = vadd.f32 %v3340, %v3506
  %v3543 = vadd.f32 %v3341, %v3511
  %v3544 = vadd.f32 %v3342, %v3514
  %v3545 = vadd.f32 %v3343, %v3519
  %v3546 = vadd.f32 %v3344, %v3522
  %v3547 = vadd.f32 %v3345, %v3527
  %v3548 = vadd.f32 %v3346, %v3530
  %v3549 = vld [vmem:[%s1321 + $0x8] sm:$0xff]
  %v3550 = vld [vmem:[%s1321 + $0x20] sm:$0xff]
  %v3551 = vld [vmem:[%s1321 + $0x38] sm:$0xff]
  %v3552 = vld [vmem:[%s1321 + $0x50] sm:$0xff]
  %v3553 = vld [vmem:[%s1321 + $0x68] sm:$0xff]
  %v3554 = vld [vmem:[%s1321 + $0x80] sm:$0xff]
  %v3555 = vld [vmem:[%s1321 + $0x98] sm:$0xff]
  %v3556 = vld [vmem:[%s1321 + $0xb0] sm:$0xff]
  %v3557 = vld [vmem:[%s1321 + $0xf8] sm:$0xff]
  %v3558 = vld [vmem:[%s1321 + $0x110] sm:$0xff]
  %v3559 = vld [vmem:[%s1321 + $0x128] sm:$0xff]
  %v3560 = vld [vmem:[%s1321 + $0x140] sm:$0xff]
  %v3561 = vld [vmem:[%s1321 + $0x158] sm:$0xff]
  %v3562 = vld [vmem:[%s1321 + $0x170] sm:$0xff]
  %v3563 = vld [vmem:[%s1321 + $0x188] sm:$0xff]
  %v3564 = vld [vmem:[%s1321 + $0x1a0] sm:$0xff]
  %v3565 = vpack.c.bf16 %v3550, %v3549
  %v3566 = vpack.c.bf16 %v3552, %v3551
  %v3567 = vpack.c.bf16 %v3554, %v3553
  %v3568 = vpack.c.bf16 %v3556, %v3555
  %v3569 = vpack.c.bf16 %v3558, %v3557
  %v3570 = vpack.c.bf16 %v3560, %v3559
  %v3571 = vpack.c.bf16 %v3562, %v3561
  %v3572 = vpack.c.bf16 %v3564, %v3563
  %s3573 = scalar_lea.vmem %s5, 448
  %v3574 = vld [vmem:[%s3573] sm:$0xf]
  %v3575 = vld [vmem:[%s3573 + $0x4] sm:$0xf]
  %v3576 = vld [vmem:[%s3573 + $0x8] sm:$0xf]
  %v3577 = vld [vmem:[%s3573 + $0xc] sm:$0xf]
  %v3578 = vld [vmem:[%s3573 + $0x10] sm:$0xf]
  %v3579 = vld [vmem:[%s3573 + $0x14] sm:$0xf]
  %v3580 = vld [vmem:[%s3573 + $0x18] sm:$0xf]
  %v3581 = vld [vmem:[%s3573 + $0x1c] sm:$0xf]
  %v3582 = vld [vmem:[%s3573 + $0x20] sm:$0xf]
  %v3583 = vld [vmem:[%s3573 + $0x24] sm:$0xf]
  %v3584 = vld [vmem:[%s3573 + $0x28] sm:$0xf]
  %v3585 = vld [vmem:[%s3573 + $0x2c] sm:$0xf]
  %v3586 = vld [vmem:[%s3573 + $0x30] sm:$0xf]
  %v3587 = vld [vmem:[%s3573 + $0x34] sm:$0xf]
  %v3588 = vld [vmem:[%s3573 + $0x38] sm:$0xf]
  %v3589 = vld [vmem:[%s3573 + $0x3c] sm:$0xf]
  %v3606 = vunpack.c.l.b16 %v3574
  %v3607 = vunpack.c.l.b16 %v3575
  %v3608 = vunpack.c.l.b16 %v3576
  %v3609 = vunpack.c.l.b16 %v3577
  %v3610 = vunpack.c.l.b16 %v3578
  %v3611 = vunpack.c.l.b16 %v3579
  %v3612 = vunpack.c.l.b16 %v3580
  %v3613 = vunpack.c.l.b16 %v3581
  %v3614 = vunpack.c.l.b16 %v3582
  %v3615 = vunpack.c.l.b16 %v3583
  %v3616 = vunpack.c.l.b16 %v3584
  %v3617 = vunpack.c.l.b16 %v3585
  %v3618 = vunpack.c.l.b16 %v3586
  %v3619 = vunpack.c.l.b16 %v3587
  %v3620 = vunpack.c.l.b16 %v3588
  %v3621 = vunpack.c.l.b16 %v3589
  %v3622 = vpack.c.b16 %v3607, %v3606
  %v3623 = vpack.c.b16 %v3609, %v3608
  %v3624 = vpack.c.b16 %v3611, %v3610
  %v3625 = vpack.c.b16 %v3613, %v3612
  %v3626 = vpack.c.b16 %v3615, %v3614
  %v3627 = vpack.c.b16 %v3617, %v3616
  %v3628 = vpack.c.b16 %v3619, %v3618
  %v3629 = vpack.c.b16 %v3621, %v3620
  %3638 = vmatprep.subr.bf16.mxu0 0
  %3639 = vmatpush1.bf16.msra.mxu0 %v3629
  %3640 = vmatprep.subr.bf16.mxu0 0
  %3641 = vmatpush1.bf16.msra.mxu0 %v3628
  %3642 = vmatprep.subr.bf16.mxu0 0
  %3643 = vmatpush1.bf16.msra.mxu0 %v3627
  %3644 = vmatprep.subr.bf16.mxu0 0
  %3645 = vmatpush1.bf16.msra.mxu0 %v3626
  %3646 = vmatprep.subr.bf16.mxu0 0
  %3647 = vmatpush1.bf16.msra.mxu0 %v3625
  %3648 = vmatprep.subr.bf16.mxu0 0
  %3649 = vmatpush1.bf16.msra.mxu0 %v3624
  %3650 = vmatprep.subr.bf16.mxu0 0
  %3651 = vmatpush1.bf16.msra.mxu0 %v3623
  %3652 = vmatprep.subr.bf16.mxu0 0
  %3653 = vmatpush1.bf16.msra.mxu0 %v3622
  %3654 = vmatprep.subr.bf16.mxu0 0
  %3655 = vmatpush2.bf16.msra.mxu0 0
  %3656 = vmatprep.subr.bf16.mxu0 0
  %3657 = vmatpush2.bf16.msra.mxu0 0
  %3658 = vmatprep.subr.bf16.mxu0 0
  %3659 = vmatpush2.bf16.msra.mxu0 0
  %3660 = vmatprep.subr.bf16.mxu0 0
  %3661 = vmatpush2.bf16.msra.mxu0 0
  %3662 = vmatprep.subr.bf16.mxu0 0
  %3663 = vmatpush2.bf16.msra.mxu0 0
  %3664 = vmatprep.subr.bf16.mxu0 0
  %3665 = vmatpush2.bf16.msra.mxu0 0
  %3666 = vmatprep.subr.bf16.mxu0 0
  %3667 = vmatpush2.bf16.msra.mxu0 0
  %3668 = vmatprep.subr.bf16.mxu0 0
  %3669 = vmatpush2.bf16.msra.mxu0 0
  %3670 = vmatprep.mubr.bf16.mxu0 0
  %3671 = vmatmul.mubr.bf16.gmra.mxu0 %v3565
  %v3672 = vpop.f32.mrf.mxu0
  %v3673 = vadd.f32 0.0, %v3672
  %v3674 = vpop.f32.mrf.mxu0
  %v3675 = vpop.f32.mrf.mxu0
  %v3676 = vadd.f32 0.0, %v3675
  %v3677 = vpop.f32.mrf.mxu0
  %3678 = vmatprep.mubr.bf16.mxu0 0
  %3679 = vmatmul.mubr.bf16.gmra.mxu0 %v3566
  %v3680 = vpop.f32.mrf.mxu0
  %v3681 = vadd.f32 0.0, %v3680
  %v3682 = vpop.f32.mrf.mxu0
  %v3683 = vpop.f32.mrf.mxu0
  %v3684 = vadd.f32 0.0, %v3683
  %v3685 = vpop.f32.mrf.mxu0
  %3686 = vmatprep.mubr.bf16.mxu0 0
  %3687 = vmatmul.mubr.bf16.gmra.mxu0 %v3567
  %v3688 = vpop.f32.mrf.mxu0
  %v3689 = vadd.f32 0.0, %v3688
  %v3690 = vpop.f32.mrf.mxu0
  %v3691 = vpop.f32.mrf.mxu0
  %v3692 = vadd.f32 0.0, %v3691
  %v3693 = vpop.f32.mrf.mxu0
  %3694 = vmatprep.mubr.bf16.mxu0 0
  %3695 = vmatmul.mubr.bf16.gmra.mxu0 %v3568
  %v3696 = vpop.f32.mrf.mxu0
  %v3697 = vadd.f32 0.0, %v3696
  %v3698 = vpop.f32.mrf.mxu0
  %v3699 = vpop.f32.mrf.mxu0
  %v3700 = vadd.f32 0.0, %v3699
  %v3701 = vpop.f32.mrf.mxu0
  %3702 = vmatprep.mubr.bf16.mxu0 0
  %3703 = vmatmul.mubr.bf16.gmra.mxu0 %v3569
  %v3704 = vpop.f32.mrf.mxu0
  %v3705 = vadd.f32 0.0, %v3704
  %v3706 = vpop.f32.mrf.mxu0
  %v3707 = vpop.f32.mrf.mxu0
  %v3708 = vadd.f32 0.0, %v3707
  %v3709 = vpop.f32.mrf.mxu0
  %3710 = vmatprep.mubr.bf16.mxu0 0
  %3711 = vmatmul.mubr.bf16.gmra.mxu0 %v3570
  %v3712 = vpop.f32.mrf.mxu0
  %v3713 = vadd.f32 0.0, %v3712
  %v3714 = vpop.f32.mrf.mxu0
  %v3715 = vpop.f32.mrf.mxu0
  %v3716 = vadd.f32 0.0, %v3715
  %v3717 = vpop.f32.mrf.mxu0
  %3718 = vmatprep.mubr.bf16.mxu0 0
  %3719 = vmatmul.mubr.bf16.gmra.mxu0 %v3571
  %v3720 = vpop.f32.mrf.mxu0
  %v3721 = vadd.f32 0.0, %v3720
  %v3722 = vpop.f32.mrf.mxu0
  %v3723 = vpop.f32.mrf.mxu0
  %v3724 = vadd.f32 0.0, %v3723
  %v3725 = vpop.f32.mrf.mxu0
  %3726 = vmatprep.mubr.bf16.mxu0 0
  %3727 = vmatmul.mubr.bf16.gmra.mxu0 %v3572
  %v3728 = vpop.f32.mrf.mxu0
  %v3729 = vadd.f32 0.0, %v3728
  %v3730 = vpop.f32.mrf.mxu0
  %v3731 = vpop.f32.mrf.mxu0
  %v3732 = vadd.f32 0.0, %v3731
  %v3733 = vpop.f32.mrf.mxu0
  %3734 = vdwg.mxu0
  %v3735 = vadd.f32 %v3533, %v3673
  %v3736 = vadd.f32 %v3534, %v3676
  %v3737 = vadd.f32 %v3535, %v3681
  %v3738 = vadd.f32 %v3536, %v3684
  %v3739 = vadd.f32 %v3537, %v3689
  %v3740 = vadd.f32 %v3538, %v3692
  %v3741 = vadd.f32 %v3539, %v3697
  %v3742 = vadd.f32 %v3540, %v3700
  %v3743 = vadd.f32 %v3541, %v3705
  %v3744 = vadd.f32 %v3542, %v3708
  %v3745 = vadd.f32 %v3543, %v3713
  %v3746 = vadd.f32 %v3544, %v3716
  %v3747 = vadd.f32 %v3545, %v3721
  %v3748 = vadd.f32 %v3546, %v3724
  %v3749 = vadd.f32 %v3547, %v3729
  %v3750 = vadd.f32 %v3548, %v3732
  %v3751 = vld [vmem:[%s1321 + $0x9] sm:$0xff]
  %v3752 = vld [vmem:[%s1321 + $0x21] sm:$0xff]
  %v3753 = vld [vmem:[%s1321 + $0x39] sm:$0xff]
  %v3754 = vld [vmem:[%s1321 + $0x51] sm:$0xff]
  %v3755 = vld [vmem:[%s1321 + $0x69] sm:$0xff]
  %v3756 = vld [vmem:[%s1321 + $0x81] sm:$0xff]
  %v3757 = vld [vmem:[%s1321 + $0x99] sm:$0xff]
  %v3758 = vld [vmem:[%s1321 + $0xb1] sm:$0xff]
  %v3759 = vld [vmem:[%s1321 + $0xf9] sm:$0xff]
  %v3760 = vld [vmem:[%s1321 + $0x111] sm:$0xff]
  %v3761 = vld [vmem:[%s1321 + $0x129] sm:$0xff]
  %v3762 = vld [vmem:[%s1321 + $0x141] sm:$0xff]
  %v3763 = vld [vmem:[%s1321 + $0x159] sm:$0xff]
  %v3764 = vld [vmem:[%s1321 + $0x171] sm:$0xff]
  %v3765 = vld [vmem:[%s1321 + $0x189] sm:$0xff]
  %v3766 = vld [vmem:[%s1321 + $0x1a1] sm:$0xff]
  %v3767 = vpack.c.bf16 %v3752, %v3751
  %v3768 = vpack.c.bf16 %v3754, %v3753
  %v3769 = vpack.c.bf16 %v3756, %v3755
  %v3770 = vpack.c.bf16 %v3758, %v3757
  %v3771 = vpack.c.bf16 %v3760, %v3759
  %v3772 = vpack.c.bf16 %v3762, %v3761
  %v3773 = vpack.c.bf16 %v3764, %v3763
  %v3774 = vpack.c.bf16 %v3766, %v3765
  %s3775 = scalar_lea.vmem %s5, 512
  %v3776 = vld [vmem:[%s3775] sm:$0xf]
  %v3777 = vld [vmem:[%s3775 + $0x4] sm:$0xf]
  %v3778 = vld [vmem:[%s3775 + $0x8] sm:$0xf]
  %v3779 = vld [vmem:[%s3775 + $0xc] sm:$0xf]
  %v3780 = vld [vmem:[%s3775 + $0x10] sm:$0xf]
  %v3781 = vld [vmem:[%s3775 + $0x14] sm:$0xf]
  %v3782 = vld [vmem:[%s3775 + $0x18] sm:$0xf]
  %v3783 = vld [vmem:[%s3775 + $0x1c] sm:$0xf]
  %v3784 = vld [vmem:[%s3775 + $0x20] sm:$0xf]
  %v3785 = vld [vmem:[%s3775 + $0x24] sm:$0xf]
  %v3786 = vld [vmem:[%s3775 + $0x28] sm:$0xf]
  %v3787 = vld [vmem:[%s3775 + $0x2c] sm:$0xf]
  %v3788 = vld [vmem:[%s3775 + $0x30] sm:$0xf]
  %v3789 = vld [vmem:[%s3775 + $0x34] sm:$0xf]
  %v3790 = vld [vmem:[%s3775 + $0x38] sm:$0xf]
  %v3791 = vld [vmem:[%s3775 + $0x3c] sm:$0xf]
  %v3808 = vunpack.c.l.b16 %v3776
  %v3809 = vunpack.c.l.b16 %v3777
  %v3810 = vunpack.c.l.b16 %v3778
  %v3811 = vunpack.c.l.b16 %v3779
  %v3812 = vunpack.c.l.b16 %v3780
  %v3813 = vunpack.c.l.b16 %v3781
  %v3814 = vunpack.c.l.b16 %v3782
  %v3815 = vunpack.c.l.b16 %v3783
  %v3816 = vunpack.c.l.b16 %v3784
  %v3817 = vunpack.c.l.b16 %v3785
  %v3818 = vunpack.c.l.b16 %v3786
  %v3819 = vunpack.c.l.b16 %v3787
  %v3820 = vunpack.c.l.b16 %v3788
  %v3821 = vunpack.c.l.b16 %v3789
  %v3822 = vunpack.c.l.b16 %v3790
  %v3823 = vunpack.c.l.b16 %v3791
  %v3824 = vpack.c.b16 %v3809, %v3808
  %v3825 = vpack.c.b16 %v3811, %v3810
  %v3826 = vpack.c.b16 %v3813, %v3812
  %v3827 = vpack.c.b16 %v3815, %v3814
  %v3828 = vpack.c.b16 %v3817, %v3816
  %v3829 = vpack.c.b16 %v3819, %v3818
  %v3830 = vpack.c.b16 %v3821, %v3820
  %v3831 = vpack.c.b16 %v3823, %v3822
  %3840 = vmatprep.subr.bf16.mxu0 0
  %3841 = vmatpush1.bf16.msra.mxu0 %v3831
  %3842 = vmatprep.subr.bf16.mxu0 0
  %3843 = vmatpush1.bf16.msra.mxu0 %v3830
  %3844 = vmatprep.subr.bf16.mxu0 0
  %3845 = vmatpush1.bf16.msra.mxu0 %v3829
  %3846 = vmatprep.subr.bf16.mxu0 0
  %3847 = vmatpush1.bf16.msra.mxu0 %v3828
  %3848 = vmatprep.subr.bf16.mxu0 0
  %3849 = vmatpush1.bf16.msra.mxu0 %v3827
  %3850 = vmatprep.subr.bf16.mxu0 0
  %3851 = vmatpush1.bf16.msra.mxu0 %v3826
  %3852 = vmatprep.subr.bf16.mxu0 0
  %3853 = vmatpush1.bf16.msra.mxu0 %v3825
  %3854 = vmatprep.subr.bf16.mxu0 0
  %3855 = vmatpush1.bf16.msra.mxu0 %v3824
  %3856 = vmatprep.subr.bf16.mxu0 0
  %3857 = vmatpush2.bf16.msra.mxu0 0
  %3858 = vmatprep.subr.bf16.mxu0 0
  %3859 = vmatpush2.bf16.msra.mxu0 0
  %3860 = vmatprep.subr.bf16.mxu0 0
  %3861 = vmatpush2.bf16.msra.mxu0 0
  %3862 = vmatprep.subr.bf16.mxu0 0
  %3863 = vmatpush2.bf16.msra.mxu0 0
  %3864 = vmatprep.subr.bf16.mxu0 0
  %3865 = vmatpush2.bf16.msra.mxu0 0
  %3866 = vmatprep.subr.bf16.mxu0 0
  %3867 = vmatpush2.bf16.msra.mxu0 0
  %3868 = vmatprep.subr.bf16.mxu0 0
  %3869 = vmatpush2.bf16.msra.mxu0 0
  %3870 = vmatprep.subr.bf16.mxu0 0
  %3871 = vmatpush2.bf16.msra.mxu0 0
  %3872 = vmatprep.mubr.bf16.mxu0 0
  %3873 = vmatmul.mubr.bf16.gmra.mxu0 %v3767
  %v3874 = vpop.f32.mrf.mxu0
  %v3875 = vadd.f32 0.0, %v3874
  %v3876 = vpop.f32.mrf.mxu0
  %v3877 = vpop.f32.mrf.mxu0
  %v3878 = vadd.f32 0.0, %v3877
  %v3879 = vpop.f32.mrf.mxu0
  %3880 = vmatprep.mubr.bf16.mxu0 0
  %3881 = vmatmul.mubr.bf16.gmra.mxu0 %v3768
  %v3882 = vpop.f32.mrf.mxu0
  %v3883 = vadd.f32 0.0, %v3882
  %v3884 = vpop.f32.mrf.mxu0
  %v3885 = vpop.f32.mrf.mxu0
  %v3886 = vadd.f32 0.0, %v3885
  %v3887 = vpop.f32.mrf.mxu0
  %3888 = vmatprep.mubr.bf16.mxu0 0
  %3889 = vmatmul.mubr.bf16.gmra.mxu0 %v3769
  %v3890 = vpop.f32.mrf.mxu0
  %v3891 = vadd.f32 0.0, %v3890
  %v3892 = vpop.f32.mrf.mxu0
  %v3893 = vpop.f32.mrf.mxu0
  %v3894 = vadd.f32 0.0, %v3893
  %v3895 = vpop.f32.mrf.mxu0
  %3896 = vmatprep.mubr.bf16.mxu0 0
  %3897 = vmatmul.mubr.bf16.gmra.mxu0 %v3770
  %v3898 = vpop.f32.mrf.mxu0
  %v3899 = vadd.f32 0.0, %v3898
  %v3900 = vpop.f32.mrf.mxu0
  %v3901 = vpop.f32.mrf.mxu0
  %v3902 = vadd.f32 0.0, %v3901
  %v3903 = vpop.f32.mrf.mxu0
  %3904 = vmatprep.mubr.bf16.mxu0 0
  %3905 = vmatmul.mubr.bf16.gmra.mxu0 %v3771
  %v3906 = vpop.f32.mrf.mxu0
  %v3907 = vadd.f32 0.0, %v3906
  %v3908 = vpop.f32.mrf.mxu0
  %v3909 = vpop.f32.mrf.mxu0
  %v3910 = vadd.f32 0.0, %v3909
  %v3911 = vpop.f32.mrf.mxu0
  %3912 = vmatprep.mubr.bf16.mxu0 0
  %3913 = vmatmul.mubr.bf16.gmra.mxu0 %v3772
  %v3914 = vpop.f32.mrf.mxu0
  %v3915 = vadd.f32 0.0, %v3914
  %v3916 = vpop.f32.mrf.mxu0
  %v3917 = vpop.f32.mrf.mxu0
  %v3918 = vadd.f32 0.0, %v3917
  %v3919 = vpop.f32.mrf.mxu0
  %3920 = vmatprep.mubr.bf16.mxu0 0
  %3921 = vmatmul.mubr.bf16.gmra.mxu0 %v3773
  %v3922 = vpop.f32.mrf.mxu0
  %v3923 = vadd.f32 0.0, %v3922
  %v3924 = vpop.f32.mrf.mxu0
  %v3925 = vpop.f32.mrf.mxu0
  %v3926 = vadd.f32 0.0, %v3925
  %v3927 = vpop.f32.mrf.mxu0
  %3928 = vmatprep.mubr.bf16.mxu0 0
  %3929 = vmatmul.mubr.bf16.gmra.mxu0 %v3774
  %v3930 = vpop.f32.mrf.mxu0
  %v3931 = vadd.f32 0.0, %v3930
  %v3932 = vpop.f32.mrf.mxu0
  %v3933 = vpop.f32.mrf.mxu0
  %v3934 = vadd.f32 0.0, %v3933
  %v3935 = vpop.f32.mrf.mxu0
  %3936 = vdwg.mxu0
  %v3937 = vadd.f32 %v3735, %v3875
  %v3938 = vadd.f32 %v3736, %v3878
  %v3939 = vadd.f32 %v3737, %v3883
  %v3940 = vadd.f32 %v3738, %v3886
  %v3941 = vadd.f32 %v3739, %v3891
  %v3942 = vadd.f32 %v3740, %v3894
  %v3943 = vadd.f32 %v3741, %v3899
  %v3944 = vadd.f32 %v3742, %v3902
  %v3945 = vadd.f32 %v3743, %v3907
  %v3946 = vadd.f32 %v3744, %v3910
  %v3947 = vadd.f32 %v3745, %v3915
  %v3948 = vadd.f32 %v3746, %v3918
  %v3949 = vadd.f32 %v3747, %v3923
  %v3950 = vadd.f32 %v3748, %v3926
  %v3951 = vadd.f32 %v3749, %v3931
  %v3952 = vadd.f32 %v3750, %v3934
  %v3953 = vld [vmem:[%s6] sm:$0x1]
  %v3955 = vlaneseq
  %v3956 = vshrl.u32 %v3955, 7
  %v3957 = vsub.s32 0, %v3956
  %v3958 = vrot.slane %v3953, %v3957
  %v3960 = vadd.f32 %v3937, %v3958
  %v3961 = vadd.f32 %v3938, %v3958
  %v3962 = vadd.f32 %v3939, %v3958
  %v3963 = vadd.f32 %v3940, %v3958
  %v3964 = vadd.f32 %v3941, %v3958
  %v3965 = vadd.f32 %v3942, %v3958
  %v3966 = vadd.f32 %v3943, %v3958
  %v3967 = vadd.f32 %v3944, %v3958
  %v3968 = vadd.f32 %v3945, %v3958
  %v3969 = vadd.f32 %v3946, %v3958
  %v3970 = vadd.f32 %v3947, %v3958
  %v3971 = vadd.f32 %v3948, %v3958
  %v3972 = vadd.f32 %v3949, %v3958
  %v3973 = vadd.f32 %v3950, %v3958
  %v3974 = vadd.f32 %v3951, %v3958
  %v3975 = vadd.f32 %v3952, %v3958
  %v3976 = vmax.f32 %v3960, 0.0
  %v3977 = vmax.f32 %v3961, 0.0
  %v3978 = vmax.f32 %v3962, 0.0
  %v3979 = vmax.f32 %v3963, 0.0
  %v3980 = vmax.f32 %v3964, 0.0
  %v3981 = vmax.f32 %v3965, 0.0
  %v3982 = vmax.f32 %v3966, 0.0
  %v3983 = vmax.f32 %v3967, 0.0
  %v3984 = vmax.f32 %v3968, 0.0
  %v3985 = vmax.f32 %v3969, 0.0
  %v3986 = vmax.f32 %v3970, 0.0
  %v3987 = vmax.f32 %v3971, 0.0
  %v3988 = vmax.f32 %v3972, 0.0
  %v3989 = vmax.f32 %v3973, 0.0
  %v3990 = vmax.f32 %v3974, 0.0
  %v3991 = vmax.f32 %v3975, 0.0
  %v3992 = vpack.c.bf16 %v3977, %v3976
  %v3993 = vpack.c.bf16 %v3979, %v3978
  %v3994 = vpack.c.bf16 %v3981, %v3980
  %v3995 = vpack.c.bf16 %v3983, %v3982
  %v3996 = vpack.c.bf16 %v3985, %v3984
  %v3997 = vpack.c.bf16 %v3987, %v3986
  %v3998 = vpack.c.bf16 %v3989, %v3988
  %v3999 = vpack.c.bf16 %v3991, %v3990
  %v4000 = vld [vmem:[%s7] sm:$0xf]
  %v4001 = vld [vmem:[%s7 + $0x4] sm:$0xf]
  %v4002 = vld [vmem:[%s7 + $0x8] sm:$0xf]
  %v4003 = vld [vmem:[%s7 + $0xc] sm:$0xf]
  %v4004 = vld [vmem:[%s8] sm:$0x1]
  %v4006 = vlaneseq
  %v4007 = vshrl.u32 %v4006, 7
  %v4008 = vsub.s32 0, %v4007
  %v4009 = vrot.slane %v4004, %v4008
  %v4015 = vunpack.c.l.b16 %v4000
  %v4016 = vunpack.c.l.b16 %v4001
  %v4017 = vunpack.c.l.b16 %v4002
  %v4018 = vunpack.c.l.b16 %v4003
  %v4019 = vpack.c.b16 %v4016, %v4015
  %v4020 = vpack.c.b16 %v4018, %v4017
  %v4024 = vsel %vm1998, %v3992, 0
  %v4027 = vsel %vm1998, %v3993, 0
  %v4030 = vsel %vm1998, %v3994, 0
  %v4033 = vsel %vm1998, %v3995, 0
  %v4036 = vsel %vm1998, %v3996, 0
  %v4039 = vsel %vm1998, %v3997, 0
  %v4042 = vsel %vm1998, %v3998, 0
  %v4045 = vsel %vm1998, %v3999, 0
  %4047 = vmatprep.subr.bf16.mxu0 0
  %4048 = vmatpush1.bf16.msra.mxu0 0
  %4049 = vmatprep.subr.bf16.mxu0 0
  %4050 = vmatpush1.bf16.msra.mxu0 0
  %4051 = vmatprep.subr.bf16.mxu0 0
  %4052 = vmatpush1.bf16.msra.mxu0 0
  %4053 = vmatprep.subr.bf16.mxu0 0
  %4054 = vmatpush1.bf16.msra.mxu0 0
  %4055 = vmatprep.subr.bf16.mxu0 0
  %4056 = vmatpush1.bf16.msra.mxu0 0
  %4057 = vmatprep.subr.bf16.mxu0 0
  %4058 = vmatpush1.bf16.msra.mxu0 0
  %4059 = vmatprep.subr.bf16.mxu0 0
  %4060 = vmatpush1.bf16.msra.mxu0 %v4020
  %4061 = vmatprep.subr.bf16.mxu0 0
  %4062 = vmatpush1.bf16.msra.mxu0 %v4019
  %4063 = vmatprep.subr.bf16.mxu0 0
  %4064 = vmatpush2.bf16.msra.mxu0 0
  %4065 = vmatprep.subr.bf16.mxu0 0
  %4066 = vmatpush2.bf16.msra.mxu0 0
  %4067 = vmatprep.subr.bf16.mxu0 0
  %4068 = vmatpush2.bf16.msra.mxu0 0
  %4069 = vmatprep.subr.bf16.mxu0 0
  %4070 = vmatpush2.bf16.msra.mxu0 0
  %4071 = vmatprep.subr.bf16.mxu0 0
  %4072 = vmatpush2.bf16.msra.mxu0 0
  %4073 = vmatprep.subr.bf16.mxu0 0
  %4074 = vmatpush2.bf16.msra.mxu0 0
  %4075 = vmatprep.subr.bf16.mxu0 0
  %4076 = vmatpush2.bf16.msra.mxu0 0
  %4077 = vmatprep.subr.bf16.mxu0 0
  %4078 = vmatpush2.bf16.msra.mxu0 0
  %4079 = vmatprep.mubr.bf16.mxu0 0
  %4080 = vmatmul.mubr.bf16.gmra.mxu0 %v4024
  %v4081 = vpop.f32.mrf.mxu0
  %v4082 = vadd.f32 %v4009, %v4081
  %v4083 = vpop.f32.mrf.mxu0
  %v4084 = vpop.f32.mrf.mxu0
  %v4085 = vadd.f32 %v4009, %v4084
  %v4086 = vpop.f32.mrf.mxu0
  %4087 = vmatprep.mubr.bf16.mxu0 0
  %4088 = vmatmul.mubr.bf16.gmra.mxu0 %v4027
  %v4089 = vpop.f32.mrf.mxu0
  %v4090 = vadd.f32 %v4009, %v4089
  %v4091 = vpop.f32.mrf.mxu0
  %v4092 = vpop.f32.mrf.mxu0
  %v4093 = vadd.f32 %v4009, %v4092
  %v4094 = vpop.f32.mrf.mxu0
  %4095 = vmatprep.mubr.bf16.mxu0 0
  %4096 = vmatmul.mubr.bf16.gmra.mxu0 %v4030
  %v4097 = vpop.f32.mrf.mxu0
  %v4098 = vadd.f32 %v4009, %v4097
  %v4099 = vpop.f32.mrf.mxu0
  %v4100 = vpop.f32.mrf.mxu0
  %v4101 = vadd.f32 %v4009, %v4100
  %v4102 = vpop.f32.mrf.mxu0
  %4103 = vmatprep.mubr.bf16.mxu0 0
  %4104 = vmatmul.mubr.bf16.gmra.mxu0 %v4033
  %v4105 = vpop.f32.mrf.mxu0
  %v4106 = vadd.f32 %v4009, %v4105
  %v4107 = vpop.f32.mrf.mxu0
  %v4108 = vpop.f32.mrf.mxu0
  %v4109 = vadd.f32 %v4009, %v4108
  %v4110 = vpop.f32.mrf.mxu0
  %4111 = vmatprep.mubr.bf16.mxu0 0
  %4112 = vmatmul.mubr.bf16.gmra.mxu0 %v4036
  %v4113 = vpop.f32.mrf.mxu0
  %v4114 = vadd.f32 %v4009, %v4113
  %v4115 = vpop.f32.mrf.mxu0
  %v4116 = vpop.f32.mrf.mxu0
  %v4117 = vadd.f32 %v4009, %v4116
  %v4118 = vpop.f32.mrf.mxu0
  %4119 = vmatprep.mubr.bf16.mxu0 0
  %4120 = vmatmul.mubr.bf16.gmra.mxu0 %v4039
  %v4121 = vpop.f32.mrf.mxu0
  %v4122 = vadd.f32 %v4009, %v4121
  %v4123 = vpop.f32.mrf.mxu0
  %v4124 = vpop.f32.mrf.mxu0
  %v4125 = vadd.f32 %v4009, %v4124
  %v4126 = vpop.f32.mrf.mxu0
  %4127 = vmatprep.mubr.bf16.mxu0 0
  %4128 = vmatmul.mubr.bf16.gmra.mxu0 %v4042
  %v4129 = vpop.f32.mrf.mxu0
  %v4130 = vadd.f32 %v4009, %v4129
  %v4131 = vpop.f32.mrf.mxu0
  %v4132 = vpop.f32.mrf.mxu0
  %v4133 = vadd.f32 %v4009, %v4132
  %v4134 = vpop.f32.mrf.mxu0
  %4135 = vmatprep.mubr.bf16.mxu0 0
  %4136 = vmatmul.mubr.bf16.gmra.mxu0 %v4045
  %v4137 = vpop.f32.mrf.mxu0
  %v4138 = vadd.f32 %v4009, %v4137
  %v4139 = vpop.f32.mrf.mxu0
  %v4140 = vpop.f32.mrf.mxu0
  %v4141 = vadd.f32 %v4009, %v4140
  %v4142 = vpop.f32.mrf.mxu0
  %4143 = vdwg.mxu0
  %v4144 = vadd.f32 %v2120, %v4082
  %v4145 = vadd.f32 %v2121, %v4085
  %v4146 = vadd.f32 %v2122, %v4090
  %v4147 = vadd.f32 %v2123, %v4093
  %v4148 = vadd.f32 %v2124, %v4098
  %v4149 = vadd.f32 %v2125, %v4101
  %v4150 = vadd.f32 %v2126, %v4106
  %v4151 = vadd.f32 %v2127, %v4109
  %v4152 = vadd.f32 %v2128, %v4114
  %v4153 = vadd.f32 %v2129, %v4117
  %v4154 = vadd.f32 %v2130, %v4122
  %v4155 = vadd.f32 %v2131, %v4125
  %v4156 = vadd.f32 %v2132, %v4130
  %v4157 = vadd.f32 %v2133, %v4133
  %v4158 = vadd.f32 %v2134, %v4138
  %v4159 = vadd.f32 %v2135, %v4141
  %4160 = vst [vmem:[%s9] sm:$0xff] %v4144
  %4161 = vst [vmem:[%s9 + $0x8] sm:$0xff] %v4145
  %4162 = vst [vmem:[%s9 + $0x10] sm:$0xff] %v4146
  %4163 = vst [vmem:[%s9 + $0x18] sm:$0xff] %v4147
  %4164 = vst [vmem:[%s9 + $0x20] sm:$0xff] %v4148
  %4165 = vst [vmem:[%s9 + $0x28] sm:$0xff] %v4149
  %4166 = vst [vmem:[%s9 + $0x30] sm:$0xff] %v4150
  %4167 = vst [vmem:[%s9 + $0x38] sm:$0xff] %v4151
  %4168 = vst [vmem:[%s9 + $0x40] sm:$0xff] %v4152
  %4169 = vst [vmem:[%s9 + $0x48] sm:$0xff] %v4153
  %4170 = vst [vmem:[%s9 + $0x50] sm:$0xff] %v4154
  %4171 = vst [vmem:[%s9 + $0x58] sm:$0xff] %v4155
  %4172 = vst [vmem:[%s9 + $0x60] sm:$0xff] %v4156
  %4173 = vst [vmem:[%s9 + $0x68] sm:$0xff] %v4157
  %4174 = vst [vmem:[%s9 + $0x70] sm:$0xff] %v4158
  %4175 = vst [vmem:[%s9 + $0x78] sm:$0xff] %v4159
  // Predicated region
  $region38: #{resnet_classifier_celeba_forward.8} parent=0 // pred_check
    _
  $region39: #{resnet_classifier_celeba_forward.8} parent=0 // pred_check_branch
    %4177 = sbr.rel (0) target = $region41
  $region40: #{resnet_classifier_celeba_forward.8} parent=0 // pred_region
    _
  $region41: #{resnet_classifier_celeba_forward.8} parent=0 // pred_fallthru
    _
  // Predicated region
  $region42: #{resnet_classifier_celeba_forward.8} parent=0 // pred_check
    _
  $region43: #{resnet_classifier_celeba_forward.8} parent=0 // pred_check_branch
    %4179 = sbr.rel (0) target = $region45
  $region44: #{resnet_classifier_celeba_forward.8} parent=0 // pred_region
    _
  $region45: #{resnet_classifier_celeba_forward.8} parent=0 // pred_fallthru
    _

// kernel: resnet_classifier_celeba_forward.9
$region0: #{resnet_classifier_celeba_forward.9}
  #allocation0 [shape = 'u32[]', space=smem, size = 0x4, offset = 0x4, fixed_abs, tag = 'smem constant byte address 0x4 - core index']
  #allocation1 [shape = 'u32[144,128]{1,0:T(1,128)}', space=vmem, size = 0x12000, scoped, tag = 'internal scratch']
  %s0 = inlined_call_operand.vmem [shape: f32[8,8192], index: 0, kind: input, shape index: {}]
  %s1 = inlined_call_operand.vmem [shape: f32[8192,40], index: 1, kind: input, shape index: {}]
  %s2 = inlined_call_operand.vmem [shape: f32[1,40], index: 2, kind: input, shape index: {}]
  %s3 = inlined_call_operand.vmem [shape: f32[8,40], index: 3, kind: output, shape index: {}]
  %s4 = sld [smem:[#allocation0]]
  $region22: #{resnet_classifier_celeba_forward.9} parent=0
    _
  %s6 = ssub.s32 1, %s4
  %s7 = scalar_select 0, %s6, %s4
  // Predicated region
  $region2: #{resnet_classifier_celeba_forward.9} parent=0 // pred_check
    _
  $region3: #{resnet_classifier_celeba_forward.9} parent=0 // pred_check_branch
    %9 = sbr.rel (0) target = $region5
  $region4: #{resnet_classifier_celeba_forward.9} parent=0 // pred_region
    _
  $region5: #{resnet_classifier_celeba_forward.9} parent=0 // pred_fallthru
    _
  // Predicated region
  $region6: #{resnet_classifier_celeba_forward.9} parent=0 // pred_check
    _
  $region7: #{resnet_classifier_celeba_forward.9} parent=0 // pred_check_branch
    %11 = sbr.rel (0) target = $region9
  $region8: #{resnet_classifier_celeba_forward.9} parent=0 // pred_region
    _
  $region9: #{resnet_classifier_celeba_forward.9} parent=0 // pred_fallthru
    _
  // Predicated region
  $region10: #{resnet_classifier_celeba_forward.9} parent=0 // pred_check
    _
  $region11: #{resnet_classifier_celeba_forward.9} parent=0 // pred_check_branch
    %13 = sbr.rel (0) target = $region13
  $region12: #{resnet_classifier_celeba_forward.9} parent=0 // pred_region
    _
  $region13: #{resnet_classifier_celeba_forward.9} parent=0 // pred_fallthru
    _
  %v14 = vld [vmem:[%s0] sm:$0xff]
  %v15 = vld [vmem:[%s0 + $0x8] sm:$0xff]
  %v16 = vld [vmem:[%s0 + $0x10] sm:$0xff]
  %v17 = vld [vmem:[%s0 + $0x18] sm:$0xff]
  %v18 = vld [vmem:[%s0 + $0x20] sm:$0xff]
  %v19 = vld [vmem:[%s0 + $0x28] sm:$0xff]
  %v20 = vld [vmem:[%s0 + $0x30] sm:$0xff]
  %v21 = vld [vmem:[%s0 + $0x38] sm:$0xff]
  %v22 = vld [vmem:[%s0 + $0x40] sm:$0xff]
  %v23 = vld [vmem:[%s0 + $0x48] sm:$0xff]
  %v24 = vld [vmem:[%s0 + $0x50] sm:$0xff]
  %v25 = vld [vmem:[%s0 + $0x58] sm:$0xff]
  %v26 = vld [vmem:[%s0 + $0x60] sm:$0xff]
  %v27 = vld [vmem:[%s0 + $0x68] sm:$0xff]
  %v28 = vld [vmem:[%s0 + $0x70] sm:$0xff]
  %v29 = vld [vmem:[%s0 + $0x78] sm:$0xff]
  %v30 = vld [vmem:[%s0 + $0x80] sm:$0xff]
  %v31 = vld [vmem:[%s0 + $0x88] sm:$0xff]
  %v32 = vld [vmem:[%s0 + $0x90] sm:$0xff]
  %v33 = vld [vmem:[%s0 + $0x98] sm:$0xff]
  %v34 = vld [vmem:[%s0 + $0xa0] sm:$0xff]
  %v35 = vld [vmem:[%s0 + $0xa8] sm:$0xff]
  %v36 = vld [vmem:[%s0 + $0xb0] sm:$0xff]
  %v37 = vld [vmem:[%s0 + $0xb8] sm:$0xff]
  %v38 = vld [vmem:[%s0 + $0xc0] sm:$0xff]
  %v39 = vld [vmem:[%s0 + $0xc8] sm:$0xff]
  %v40 = vld [vmem:[%s0 + $0xd0] sm:$0xff]
  %v41 = vld [vmem:[%s0 + $0xd8] sm:$0xff]
  %v42 = vld [vmem:[%s0 + $0xe0] sm:$0xff]
  %v43 = vld [vmem:[%s0 + $0xe8] sm:$0xff]
  %v44 = vld [vmem:[%s0 + $0xf0] sm:$0xff]
  %v45 = vld [vmem:[%s0 + $0xf8] sm:$0xff]
  %v46 = vld [vmem:[%s0 + $0x100] sm:$0xff]
  %v47 = vld [vmem:[%s0 + $0x108] sm:$0xff]
  %v48 = vld [vmem:[%s0 + $0x110] sm:$0xff]
  %v49 = vld [vmem:[%s0 + $0x118] sm:$0xff]
  %v50 = vld [vmem:[%s0 + $0x120] sm:$0xff]
  %v51 = vld [vmem:[%s0 + $0x128] sm:$0xff]
  %v52 = vld [vmem:[%s0 + $0x130] sm:$0xff]
  %v53 = vld [vmem:[%s0 + $0x138] sm:$0xff]
  %v54 = vld [vmem:[%s0 + $0x140] sm:$0xff]
  %v55 = vld [vmem:[%s0 + $0x148] sm:$0xff]
  %v56 = vld [vmem:[%s0 + $0x150] sm:$0xff]
  %v57 = vld [vmem:[%s0 + $0x158] sm:$0xff]
  %v58 = vld [vmem:[%s0 + $0x160] sm:$0xff]
  %v59 = vld [vmem:[%s0 + $0x168] sm:$0xff]
  %v60 = vld [vmem:[%s0 + $0x170] sm:$0xff]
  %v61 = vld [vmem:[%s0 + $0x178] sm:$0xff]
  %v62 = vld [vmem:[%s0 + $0x180] sm:$0xff]
  %v63 = vld [vmem:[%s0 + $0x188] sm:$0xff]
  %v64 = vld [vmem:[%s0 + $0x190] sm:$0xff]
  %v65 = vld [vmem:[%s0 + $0x198] sm:$0xff]
  %v66 = vld [vmem:[%s0 + $0x1a0] sm:$0xff]
  %v67 = vld [vmem:[%s0 + $0x1a8] sm:$0xff]
  %v68 = vld [vmem:[%s0 + $0x1b0] sm:$0xff]
  %v69 = vld [vmem:[%s0 + $0x1b8] sm:$0xff]
  %v70 = vld [vmem:[%s0 + $0x1c0] sm:$0xff]
  %v71 = vld [vmem:[%s0 + $0x1c8] sm:$0xff]
  %v72 = vld [vmem:[%s0 + $0x1d0] sm:$0xff]
  %v73 = vld [vmem:[%s0 + $0x1d8] sm:$0xff]
  %v74 = vld [vmem:[%s0 + $0x1e0] sm:$0xff]
  %v75 = vld [vmem:[%s0 + $0x1e8] sm:$0xff]
  %v76 = vld [vmem:[%s0 + $0x1f0] sm:$0xff]
  %v77 = vld [vmem:[%s0 + $0x1f8] sm:$0xff]
  %v78 = vld [vmem:[%s1] sm:$0xff]
  %v79 = vld [vmem:[%s1 + $0x8] sm:$0xff]
  %v80 = vld [vmem:[%s1 + $0x10] sm:$0xff]
  %v81 = vld [vmem:[%s1 + $0x18] sm:$0xff]
  %v82 = vld [vmem:[%s1 + $0x20] sm:$0xff]
  %v83 = vld [vmem:[%s1 + $0x28] sm:$0xff]
  %v84 = vld [vmem:[%s1 + $0x30] sm:$0xff]
  %v85 = vld [vmem:[%s1 + $0x38] sm:$0xff]
  %v86 = vld [vmem:[%s1 + $0x40] sm:$0xff]
  %v87 = vld [vmem:[%s1 + $0x48] sm:$0xff]
  %v88 = vld [vmem:[%s1 + $0x50] sm:$0xff]
  %v89 = vld [vmem:[%s1 + $0x58] sm:$0xff]
  %v90 = vld [vmem:[%s1 + $0x60] sm:$0xff]
  %v91 = vld [vmem:[%s1 + $0x68] sm:$0xff]
  %v92 = vld [vmem:[%s1 + $0x70] sm:$0xff]
  %v93 = vld [vmem:[%s1 + $0x78] sm:$0xff]
  %v94 = vld [vmem:[%s1 + $0x80] sm:$0xff]
  %v95 = vld [vmem:[%s1 + $0x88] sm:$0xff]
  %v96 = vld [vmem:[%s1 + $0x90] sm:$0xff]
  %v97 = vld [vmem:[%s1 + $0x98] sm:$0xff]
  %v98 = vld [vmem:[%s1 + $0xa0] sm:$0xff]
  %v99 = vld [vmem:[%s1 + $0xa8] sm:$0xff]
  %v100 = vld [vmem:[%s1 + $0xb0] sm:$0xff]
  %v101 = vld [vmem:[%s1 + $0xb8] sm:$0xff]
  %v102 = vld [vmem:[%s1 + $0xc0] sm:$0xff]
  %v103 = vld [vmem:[%s1 + $0xc8] sm:$0xff]
  %v104 = vld [vmem:[%s1 + $0xd0] sm:$0xff]
  %v105 = vld [vmem:[%s1 + $0xd8] sm:$0xff]
  %v106 = vld [vmem:[%s1 + $0xe0] sm:$0xff]
  %v107 = vld [vmem:[%s1 + $0xe8] sm:$0xff]
  %v108 = vld [vmem:[%s1 + $0xf0] sm:$0xff]
  %v109 = vld [vmem:[%s1 + $0xf8] sm:$0xff]
  %v110 = vld [vmem:[%s1 + $0x100] sm:$0xff]
  %v111 = vld [vmem:[%s1 + $0x108] sm:$0xff]
  %v112 = vld [vmem:[%s1 + $0x110] sm:$0xff]
  %v113 = vld [vmem:[%s1 + $0x118] sm:$0xff]
  %v114 = vld [vmem:[%s1 + $0x120] sm:$0xff]
  %v115 = vld [vmem:[%s1 + $0x128] sm:$0xff]
  %v116 = vld [vmem:[%s1 + $0x130] sm:$0xff]
  %v117 = vld [vmem:[%s1 + $0x138] sm:$0xff]
  %v118 = vld [vmem:[%s1 + $0x140] sm:$0xff]
  %v119 = vld [vmem:[%s1 + $0x148] sm:$0xff]
  %v120 = vld [vmem:[%s1 + $0x150] sm:$0xff]
  %v121 = vld [vmem:[%s1 + $0x158] sm:$0xff]
  %v122 = vld [vmem:[%s1 + $0x160] sm:$0xff]
  %v123 = vld [vmem:[%s1 + $0x168] sm:$0xff]
  %v124 = vld [vmem:[%s1 + $0x170] sm:$0xff]
  %v125 = vld [vmem:[%s1 + $0x178] sm:$0xff]
  %v126 = vld [vmem:[%s1 + $0x180] sm:$0xff]
  %v127 = vld [vmem:[%s1 + $0x188] sm:$0xff]
  %v128 = vld [vmem:[%s1 + $0x190] sm:$0xff]
  %v129 = vld [vmem:[%s1 + $0x198] sm:$0xff]
  %v130 = vld [vmem:[%s1 + $0x1a0] sm:$0xff]
  %v131 = vld [vmem:[%s1 + $0x1a8] sm:$0xff]
  %v132 = vld [vmem:[%s1 + $0x1b0] sm:$0xff]
  %v133 = vld [vmem:[%s1 + $0x1b8] sm:$0xff]
  %v134 = vld [vmem:[%s1 + $0x1c0] sm:$0xff]
  %v135 = vld [vmem:[%s1 + $0x1c8] sm:$0xff]
  %v136 = vld [vmem:[%s1 + $0x1d0] sm:$0xff]
  %v137 = vld [vmem:[%s1 + $0x1d8] sm:$0xff]
  %v138 = vld [vmem:[%s1 + $0x1e0] sm:$0xff]
  %v139 = vld [vmem:[%s1 + $0x1e8] sm:$0xff]
  %v140 = vld [vmem:[%s1 + $0x1f0] sm:$0xff]
  %v141 = vld [vmem:[%s1 + $0x1f8] sm:$0xff]
  %v142 = vld [vmem:[%s1 + $0x200] sm:$0xff]
  %v143 = vld [vmem:[%s1 + $0x208] sm:$0xff]
  %v144 = vld [vmem:[%s1 + $0x210] sm:$0xff]
  %v145 = vld [vmem:[%s1 + $0x218] sm:$0xff]
  %v146 = vld [vmem:[%s1 + $0x220] sm:$0xff]
  %v147 = vld [vmem:[%s1 + $0x228] sm:$0xff]
  %v148 = vld [vmem:[%s1 + $0x230] sm:$0xff]
  %v149 = vld [vmem:[%s1 + $0x238] sm:$0xff]
  %v150 = vld [vmem:[%s1 + $0x240] sm:$0xff]
  %v151 = vld [vmem:[%s1 + $0x248] sm:$0xff]
  %v152 = vld [vmem:[%s1 + $0x250] sm:$0xff]
  %v153 = vld [vmem:[%s1 + $0x258] sm:$0xff]
  %v154 = vld [vmem:[%s1 + $0x260] sm:$0xff]
  %v155 = vld [vmem:[%s1 + $0x268] sm:$0xff]
  %v156 = vld [vmem:[%s1 + $0x270] sm:$0xff]
  %v157 = vld [vmem:[%s1 + $0x278] sm:$0xff]
  %v158 = vld [vmem:[%s1 + $0x280] sm:$0xff]
  %v159 = vld [vmem:[%s1 + $0x288] sm:$0xff]
  %v160 = vld [vmem:[%s1 + $0x290] sm:$0xff]
  %v161 = vld [vmem:[%s1 + $0x298] sm:$0xff]
  %v162 = vld [vmem:[%s1 + $0x2a0] sm:$0xff]
  %v163 = vld [vmem:[%s1 + $0x2a8] sm:$0xff]
  %v164 = vld [vmem:[%s1 + $0x2b0] sm:$0xff]
  %v165 = vld [vmem:[%s1 + $0x2b8] sm:$0xff]
  %v166 = vld [vmem:[%s1 + $0x2c0] sm:$0xff]
  %v167 = vld [vmem:[%s1 + $0x2c8] sm:$0xff]
  %v168 = vld [vmem:[%s1 + $0x2d0] sm:$0xff]
  %v169 = vld [vmem:[%s1 + $0x2d8] sm:$0xff]
  %v170 = vld [vmem:[%s1 + $0x2e0] sm:$0xff]
  %v171 = vld [vmem:[%s1 + $0x2e8] sm:$0xff]
  %v172 = vld [vmem:[%s1 + $0x2f0] sm:$0xff]
  %v173 = vld [vmem:[%s1 + $0x2f8] sm:$0xff]
  %v174 = vld [vmem:[%s1 + $0x300] sm:$0xff]
  %v175 = vld [vmem:[%s1 + $0x308] sm:$0xff]
  %v176 = vld [vmem:[%s1 + $0x310] sm:$0xff]
  %v177 = vld [vmem:[%s1 + $0x318] sm:$0xff]
  %v178 = vld [vmem:[%s1 + $0x320] sm:$0xff]
  %v179 = vld [vmem:[%s1 + $0x328] sm:$0xff]
  %v180 = vld [vmem:[%s1 + $0x330] sm:$0xff]
  %v181 = vld [vmem:[%s1 + $0x338] sm:$0xff]
  %v182 = vld [vmem:[%s1 + $0x340] sm:$0xff]
  %v183 = vld [vmem:[%s1 + $0x348] sm:$0xff]
  %v184 = vld [vmem:[%s1 + $0x350] sm:$0xff]
  %v185 = vld [vmem:[%s1 + $0x358] sm:$0xff]
  %v186 = vld [vmem:[%s1 + $0x360] sm:$0xff]
  %v187 = vld [vmem:[%s1 + $0x368] sm:$0xff]
  %v188 = vld [vmem:[%s1 + $0x370] sm:$0xff]
  %v189 = vld [vmem:[%s1 + $0x378] sm:$0xff]
  %v190 = vld [vmem:[%s1 + $0x380] sm:$0xff]
  %v191 = vld [vmem:[%s1 + $0x388] sm:$0xff]
  %v192 = vld [vmem:[%s1 + $0x390] sm:$0xff]
  %v193 = vld [vmem:[%s1 + $0x398] sm:$0xff]
  %v194 = vld [vmem:[%s1 + $0x3a0] sm:$0xff]
  %v195 = vld [vmem:[%s1 + $0x3a8] sm:$0xff]
  %v196 = vld [vmem:[%s1 + $0x3b0] sm:$0xff]
  %v197 = vld [vmem:[%s1 + $0x3b8] sm:$0xff]
  %v198 = vld [vmem:[%s1 + $0x3c0] sm:$0xff]
  %v199 = vld [vmem:[%s1 + $0x3c8] sm:$0xff]
  %v200 = vld [vmem:[%s1 + $0x3d0] sm:$0xff]
  %v201 = vld [vmem:[%s1 + $0x3d8] sm:$0xff]
  %v202 = vld [vmem:[%s1 + $0x3e0] sm:$0xff]
  %v203 = vld [vmem:[%s1 + $0x3e8] sm:$0xff]
  %v204 = vld [vmem:[%s1 + $0x3f0] sm:$0xff]
  %v205 = vld [vmem:[%s1 + $0x3f8] sm:$0xff]
  %v206 = vld [vmem:[%s1 + $0x400] sm:$0xff]
  %v207 = vld [vmem:[%s1 + $0x408] sm:$0xff]
  %v208 = vld [vmem:[%s1 + $0x410] sm:$0xff]
  %v209 = vld [vmem:[%s1 + $0x418] sm:$0xff]
  %v210 = vld [vmem:[%s1 + $0x420] sm:$0xff]
  %v211 = vld [vmem:[%s1 + $0x428] sm:$0xff]
  %v212 = vld [vmem:[%s1 + $0x430] sm:$0xff]
  %v213 = vld [vmem:[%s1 + $0x438] sm:$0xff]
  %v214 = vld [vmem:[%s1 + $0x440] sm:$0xff]
  %v215 = vld [vmem:[%s1 + $0x448] sm:$0xff]
  %v216 = vld [vmem:[%s1 + $0x450] sm:$0xff]
  %v217 = vld [vmem:[%s1 + $0x458] sm:$0xff]
  %v218 = vld [vmem:[%s1 + $0x460] sm:$0xff]
  %v219 = vld [vmem:[%s1 + $0x468] sm:$0xff]
  %v220 = vld [vmem:[%s1 + $0x470] sm:$0xff]
  %v221 = vld [vmem:[%s1 + $0x478] sm:$0xff]
  %v222 = vld [vmem:[%s1 + $0x480] sm:$0xff]
  %v223 = vld [vmem:[%s1 + $0x488] sm:$0xff]
  %v224 = vld [vmem:[%s1 + $0x490] sm:$0xff]
  %v225 = vld [vmem:[%s1 + $0x498] sm:$0xff]
  %v226 = vld [vmem:[%s1 + $0x4a0] sm:$0xff]
  %v227 = vld [vmem:[%s1 + $0x4a8] sm:$0xff]
  %v228 = vld [vmem:[%s1 + $0x4b0] sm:$0xff]
  %v229 = vld [vmem:[%s1 + $0x4b8] sm:$0xff]
  %v230 = vld [vmem:[%s1 + $0x4c0] sm:$0xff]
  %v231 = vld [vmem:[%s1 + $0x4c8] sm:$0xff]
  %v232 = vld [vmem:[%s1 + $0x4d0] sm:$0xff]
  %v233 = vld [vmem:[%s1 + $0x4d8] sm:$0xff]
  %v234 = vld [vmem:[%s1 + $0x4e0] sm:$0xff]
  %v235 = vld [vmem:[%s1 + $0x4e8] sm:$0xff]
  %v236 = vld [vmem:[%s1 + $0x4f0] sm:$0xff]
  %v237 = vld [vmem:[%s1 + $0x4f8] sm:$0xff]
  %v238 = vld [vmem:[%s1 + $0x500] sm:$0xff]
  %v239 = vld [vmem:[%s1 + $0x508] sm:$0xff]
  %v240 = vld [vmem:[%s1 + $0x510] sm:$0xff]
  %v241 = vld [vmem:[%s1 + $0x518] sm:$0xff]
  %v242 = vld [vmem:[%s1 + $0x520] sm:$0xff]
  %v243 = vld [vmem:[%s1 + $0x528] sm:$0xff]
  %v244 = vld [vmem:[%s1 + $0x530] sm:$0xff]
  %v245 = vld [vmem:[%s1 + $0x538] sm:$0xff]
  %v246 = vld [vmem:[%s1 + $0x540] sm:$0xff]
  %v247 = vld [vmem:[%s1 + $0x548] sm:$0xff]
  %v248 = vld [vmem:[%s1 + $0x550] sm:$0xff]
  %v249 = vld [vmem:[%s1 + $0x558] sm:$0xff]
  %v250 = vld [vmem:[%s1 + $0x560] sm:$0xff]
  %v251 = vld [vmem:[%s1 + $0x568] sm:$0xff]
  %v252 = vld [vmem:[%s1 + $0x570] sm:$0xff]
  %v253 = vld [vmem:[%s1 + $0x578] sm:$0xff]
  %v254 = vld [vmem:[%s1 + $0x580] sm:$0xff]
  %v255 = vld [vmem:[%s1 + $0x588] sm:$0xff]
  %v256 = vld [vmem:[%s1 + $0x590] sm:$0xff]
  %v257 = vld [vmem:[%s1 + $0x598] sm:$0xff]
  %v258 = vld [vmem:[%s1 + $0x5a0] sm:$0xff]
  %v259 = vld [vmem:[%s1 + $0x5a8] sm:$0xff]
  %v260 = vld [vmem:[%s1 + $0x5b0] sm:$0xff]
  %v261 = vld [vmem:[%s1 + $0x5b8] sm:$0xff]
  %v262 = vld [vmem:[%s1 + $0x5c0] sm:$0xff]
  %v263 = vld [vmem:[%s1 + $0x5c8] sm:$0xff]
  %v264 = vld [vmem:[%s1 + $0x5d0] sm:$0xff]
  %v265 = vld [vmem:[%s1 + $0x5d8] sm:$0xff]
  %v266 = vld [vmem:[%s1 + $0x5e0] sm:$0xff]
  %v267 = vld [vmem:[%s1 + $0x5e8] sm:$0xff]
  %v268 = vld [vmem:[%s1 + $0x5f0] sm:$0xff]
  %v269 = vld [vmem:[%s1 + $0x5f8] sm:$0xff]
  %v270 = vld [vmem:[%s1 + $0x600] sm:$0xff]
  %v271 = vld [vmem:[%s1 + $0x608] sm:$0xff]
  %v272 = vld [vmem:[%s1 + $0x610] sm:$0xff]
  %v273 = vld [vmem:[%s1 + $0x618] sm:$0xff]
  %v274 = vld [vmem:[%s1 + $0x620] sm:$0xff]
  %v275 = vld [vmem:[%s1 + $0x628] sm:$0xff]
  %v276 = vld [vmem:[%s1 + $0x630] sm:$0xff]
  %v277 = vld [vmem:[%s1 + $0x638] sm:$0xff]
  %v278 = vld [vmem:[%s1 + $0x640] sm:$0xff]
  %v279 = vld [vmem:[%s1 + $0x648] sm:$0xff]
  %v280 = vld [vmem:[%s1 + $0x650] sm:$0xff]
  %v281 = vld [vmem:[%s1 + $0x658] sm:$0xff]
  %v282 = vld [vmem:[%s1 + $0x660] sm:$0xff]
  %v283 = vld [vmem:[%s1 + $0x668] sm:$0xff]
  %v284 = vld [vmem:[%s1 + $0x670] sm:$0xff]
  %v285 = vld [vmem:[%s1 + $0x678] sm:$0xff]
  %v286 = vld [vmem:[%s1 + $0x680] sm:$0xff]
  %v287 = vld [vmem:[%s1 + $0x688] sm:$0xff]
  %v288 = vld [vmem:[%s1 + $0x690] sm:$0xff]
  %v289 = vld [vmem:[%s1 + $0x698] sm:$0xff]
  %v290 = vld [vmem:[%s1 + $0x6a0] sm:$0xff]
  %v291 = vld [vmem:[%s1 + $0x6a8] sm:$0xff]
  %v292 = vld [vmem:[%s1 + $0x6b0] sm:$0xff]
  %v293 = vld [vmem:[%s1 + $0x6b8] sm:$0xff]
  %v294 = vld [vmem:[%s1 + $0x6c0] sm:$0xff]
  %v295 = vld [vmem:[%s1 + $0x6c8] sm:$0xff]
  %v296 = vld [vmem:[%s1 + $0x6d0] sm:$0xff]
  %v297 = vld [vmem:[%s1 + $0x6d8] sm:$0xff]
  %v298 = vld [vmem:[%s1 + $0x6e0] sm:$0xff]
  %v299 = vld [vmem:[%s1 + $0x6e8] sm:$0xff]
  %v300 = vld [vmem:[%s1 + $0x6f0] sm:$0xff]
  %v301 = vld [vmem:[%s1 + $0x6f8] sm:$0xff]
  %v302 = vld [vmem:[%s1 + $0x700] sm:$0xff]
  %v303 = vld [vmem:[%s1 + $0x708] sm:$0xff]
  %v304 = vld [vmem:[%s1 + $0x710] sm:$0xff]
  %v305 = vld [vmem:[%s1 + $0x718] sm:$0xff]
  %v306 = vld [vmem:[%s1 + $0x720] sm:$0xff]
  %v307 = vld [vmem:[%s1 + $0x728] sm:$0xff]
  %v308 = vld [vmem:[%s1 + $0x730] sm:$0xff]
  %v309 = vld [vmem:[%s1 + $0x738] sm:$0xff]
  %v310 = vld [vmem:[%s1 + $0x740] sm:$0xff]
  %v311 = vld [vmem:[%s1 + $0x748] sm:$0xff]
  %v312 = vld [vmem:[%s1 + $0x750] sm:$0xff]
  %v313 = vld [vmem:[%s1 + $0x758] sm:$0xff]
  %v314 = vld [vmem:[%s1 + $0x760] sm:$0xff]
  %v315 = vld [vmem:[%s1 + $0x768] sm:$0xff]
  %v316 = vld [vmem:[%s1 + $0x770] sm:$0xff]
  %v317 = vld [vmem:[%s1 + $0x778] sm:$0xff]
  %v318 = vld [vmem:[%s1 + $0x780] sm:$0xff]
  %v319 = vld [vmem:[%s1 + $0x788] sm:$0xff]
  %v320 = vld [vmem:[%s1 + $0x790] sm:$0xff]
  %v321 = vld [vmem:[%s1 + $0x798] sm:$0xff]
  %v322 = vld [vmem:[%s1 + $0x7a0] sm:$0xff]
  %v323 = vld [vmem:[%s1 + $0x7a8] sm:$0xff]
  %v324 = vld [vmem:[%s1 + $0x7b0] sm:$0xff]
  %v325 = vld [vmem:[%s1 + $0x7b8] sm:$0xff]
  %v326 = vld [vmem:[%s1 + $0x7c0] sm:$0xff]
  %v327 = vld [vmem:[%s1 + $0x7c8] sm:$0xff]
  %v328 = vld [vmem:[%s1 + $0x7d0] sm:$0xff]
  %v329 = vld [vmem:[%s1 + $0x7d8] sm:$0xff]
  %v330 = vld [vmem:[%s1 + $0x7e0] sm:$0xff]
  %v331 = vld [vmem:[%s1 + $0x7e8] sm:$0xff]
  %v332 = vld [vmem:[%s1 + $0x7f0] sm:$0xff]
  %v333 = vld [vmem:[%s1 + $0x7f8] sm:$0xff]
  %v334 = vld [vmem:[%s1 + $0x800] sm:$0xff]
  %v335 = vld [vmem:[%s1 + $0x808] sm:$0xff]
  %v336 = vld [vmem:[%s1 + $0x810] sm:$0xff]
  %v337 = vld [vmem:[%s1 + $0x818] sm:$0xff]
  %v338 = vld [vmem:[%s1 + $0x820] sm:$0xff]
  %v339 = vld [vmem:[%s1 + $0x828] sm:$0xff]
  %v340 = vld [vmem:[%s1 + $0x830] sm:$0xff]
  %v341 = vld [vmem:[%s1 + $0x838] sm:$0xff]
  %v342 = vld [vmem:[%s1 + $0x840] sm:$0xff]
  %v343 = vld [vmem:[%s1 + $0x848] sm:$0xff]
  %v344 = vld [vmem:[%s1 + $0x850] sm:$0xff]
  %v345 = vld [vmem:[%s1 + $0x858] sm:$0xff]
  %v346 = vld [vmem:[%s1 + $0x860] sm:$0xff]
  %v347 = vld [vmem:[%s1 + $0x868] sm:$0xff]
  %v348 = vld [vmem:[%s1 + $0x870] sm:$0xff]
  %v349 = vld [vmem:[%s1 + $0x878] sm:$0xff]
  %v350 = vld [vmem:[%s1 + $0x880] sm:$0xff]
  %v351 = vld [vmem:[%s1 + $0x888] sm:$0xff]
  %v352 = vld [vmem:[%s1 + $0x890] sm:$0xff]
  %v353 = vld [vmem:[%s1 + $0x898] sm:$0xff]
  %v354 = vld [vmem:[%s1 + $0x8a0] sm:$0xff]
  %v355 = vld [vmem:[%s1 + $0x8a8] sm:$0xff]
  %v356 = vld [vmem:[%s1 + $0x8b0] sm:$0xff]
  %v357 = vld [vmem:[%s1 + $0x8b8] sm:$0xff]
  %v358 = vld [vmem:[%s1 + $0x8c0] sm:$0xff]
  %v359 = vld [vmem:[%s1 + $0x8c8] sm:$0xff]
  %v360 = vld [vmem:[%s1 + $0x8d0] sm:$0xff]
  %v361 = vld [vmem:[%s1 + $0x8d8] sm:$0xff]
  %v362 = vld [vmem:[%s1 + $0x8e0] sm:$0xff]
  %v363 = vld [vmem:[%s1 + $0x8e8] sm:$0xff]
  %v364 = vld [vmem:[%s1 + $0x8f0] sm:$0xff]
  %v365 = vld [vmem:[%s1 + $0x8f8] sm:$0xff]
  %v366 = vld [vmem:[%s1 + $0x900] sm:$0xff]
  %v367 = vld [vmem:[%s1 + $0x908] sm:$0xff]
  %v368 = vld [vmem:[%s1 + $0x910] sm:$0xff]
  %v369 = vld [vmem:[%s1 + $0x918] sm:$0xff]
  %v370 = vld [vmem:[%s1 + $0x920] sm:$0xff]
  %v371 = vld [vmem:[%s1 + $0x928] sm:$0xff]
  %v372 = vld [vmem:[%s1 + $0x930] sm:$0xff]
  %v373 = vld [vmem:[%s1 + $0x938] sm:$0xff]
  %v374 = vld [vmem:[%s1 + $0x940] sm:$0xff]
  %v375 = vld [vmem:[%s1 + $0x948] sm:$0xff]
  %v376 = vld [vmem:[%s1 + $0x950] sm:$0xff]
  %v377 = vld [vmem:[%s1 + $0x958] sm:$0xff]
  %v378 = vld [vmem:[%s1 + $0x960] sm:$0xff]
  %v379 = vld [vmem:[%s1 + $0x968] sm:$0xff]
  %v380 = vld [vmem:[%s1 + $0x970] sm:$0xff]
  %v381 = vld [vmem:[%s1 + $0x978] sm:$0xff]
  %v382 = vld [vmem:[%s1 + $0x980] sm:$0xff]
  %v383 = vld [vmem:[%s1 + $0x988] sm:$0xff]
  %v384 = vld [vmem:[%s1 + $0x990] sm:$0xff]
  %v385 = vld [vmem:[%s1 + $0x998] sm:$0xff]
  %v386 = vld [vmem:[%s1 + $0x9a0] sm:$0xff]
  %v387 = vld [vmem:[%s1 + $0x9a8] sm:$0xff]
  %v388 = vld [vmem:[%s1 + $0x9b0] sm:$0xff]
  %v389 = vld [vmem:[%s1 + $0x9b8] sm:$0xff]
  %v390 = vld [vmem:[%s1 + $0x9c0] sm:$0xff]
  %v391 = vld [vmem:[%s1 + $0x9c8] sm:$0xff]
  %v392 = vld [vmem:[%s1 + $0x9d0] sm:$0xff]
  %v393 = vld [vmem:[%s1 + $0x9d8] sm:$0xff]
  %v394 = vld [vmem:[%s1 + $0x9e0] sm:$0xff]
  %v395 = vld [vmem:[%s1 + $0x9e8] sm:$0xff]
  %v396 = vld [vmem:[%s1 + $0x9f0] sm:$0xff]
  %v397 = vld [vmem:[%s1 + $0x9f8] sm:$0xff]
  %v398 = vld [vmem:[%s1 + $0xa00] sm:$0xff]
  %v399 = vld [vmem:[%s1 + $0xa08] sm:$0xff]
  %v400 = vld [vmem:[%s1 + $0xa10] sm:$0xff]
  %v401 = vld [vmem:[%s1 + $0xa18] sm:$0xff]
  %v402 = vld [vmem:[%s1 + $0xa20] sm:$0xff]
  %v403 = vld [vmem:[%s1 + $0xa28] sm:$0xff]
  %v404 = vld [vmem:[%s1 + $0xa30] sm:$0xff]
  %v405 = vld [vmem:[%s1 + $0xa38] sm:$0xff]
  %v406 = vld [vmem:[%s1 + $0xa40] sm:$0xff]
  %v407 = vld [vmem:[%s1 + $0xa48] sm:$0xff]
  %v408 = vld [vmem:[%s1 + $0xa50] sm:$0xff]
  %v409 = vld [vmem:[%s1 + $0xa58] sm:$0xff]
  %v410 = vld [vmem:[%s1 + $0xa60] sm:$0xff]
  %v411 = vld [vmem:[%s1 + $0xa68] sm:$0xff]
  %v412 = vld [vmem:[%s1 + $0xa70] sm:$0xff]
  %v413 = vld [vmem:[%s1 + $0xa78] sm:$0xff]
  %v414 = vld [vmem:[%s1 + $0xa80] sm:$0xff]
  %v415 = vld [vmem:[%s1 + $0xa88] sm:$0xff]
  %v416 = vld [vmem:[%s1 + $0xa90] sm:$0xff]
  %v417 = vld [vmem:[%s1 + $0xa98] sm:$0xff]
  %v418 = vld [vmem:[%s1 + $0xaa0] sm:$0xff]
  %v419 = vld [vmem:[%s1 + $0xaa8] sm:$0xff]
  %v420 = vld [vmem:[%s1 + $0xab0] sm:$0xff]
  %v421 = vld [vmem:[%s1 + $0xab8] sm:$0xff]
  %v422 = vld [vmem:[%s1 + $0xac0] sm:$0xff]
  %v423 = vld [vmem:[%s1 + $0xac8] sm:$0xff]
  %v424 = vld [vmem:[%s1 + $0xad0] sm:$0xff]
  %v425 = vld [vmem:[%s1 + $0xad8] sm:$0xff]
  %v426 = vld [vmem:[%s1 + $0xae0] sm:$0xff]
  %v427 = vld [vmem:[%s1 + $0xae8] sm:$0xff]
  %v428 = vld [vmem:[%s1 + $0xaf0] sm:$0xff]
  %v429 = vld [vmem:[%s1 + $0xaf8] sm:$0xff]
  %v430 = vld [vmem:[%s1 + $0xb00] sm:$0xff]
  %v431 = vld [vmem:[%s1 + $0xb08] sm:$0xff]
  %v432 = vld [vmem:[%s1 + $0xb10] sm:$0xff]
  %v433 = vld [vmem:[%s1 + $0xb18] sm:$0xff]
  %v434 = vld [vmem:[%s1 + $0xb20] sm:$0xff]
  %v435 = vld [vmem:[%s1 + $0xb28] sm:$0xff]
  %v436 = vld [vmem:[%s1 + $0xb30] sm:$0xff]
  %v437 = vld [vmem:[%s1 + $0xb38] sm:$0xff]
  %v438 = vld [vmem:[%s1 + $0xb40] sm:$0xff]
  %v439 = vld [vmem:[%s1 + $0xb48] sm:$0xff]
  %v440 = vld [vmem:[%s1 + $0xb50] sm:$0xff]
  %v441 = vld [vmem:[%s1 + $0xb58] sm:$0xff]
  %v442 = vld [vmem:[%s1 + $0xb60] sm:$0xff]
  %v443 = vld [vmem:[%s1 + $0xb68] sm:$0xff]
  %v444 = vld [vmem:[%s1 + $0xb70] sm:$0xff]
  %v445 = vld [vmem:[%s1 + $0xb78] sm:$0xff]
  %v446 = vld [vmem:[%s1 + $0xb80] sm:$0xff]
  %v447 = vld [vmem:[%s1 + $0xb88] sm:$0xff]
  %v448 = vld [vmem:[%s1 + $0xb90] sm:$0xff]
  %v449 = vld [vmem:[%s1 + $0xb98] sm:$0xff]
  %v450 = vld [vmem:[%s1 + $0xba0] sm:$0xff]
  %v451 = vld [vmem:[%s1 + $0xba8] sm:$0xff]
  %v452 = vld [vmem:[%s1 + $0xbb0] sm:$0xff]
  %v453 = vld [vmem:[%s1 + $0xbb8] sm:$0xff]
  %v454 = vld [vmem:[%s1 + $0xbc0] sm:$0xff]
  %v455 = vld [vmem:[%s1 + $0xbc8] sm:$0xff]
  %v456 = vld [vmem:[%s1 + $0xbd0] sm:$0xff]
  %v457 = vld [vmem:[%s1 + $0xbd8] sm:$0xff]
  %v458 = vld [vmem:[%s1 + $0xbe0] sm:$0xff]
  %v459 = vld [vmem:[%s1 + $0xbe8] sm:$0xff]
  %v460 = vld [vmem:[%s1 + $0xbf0] sm:$0xff]
  %v461 = vld [vmem:[%s1 + $0xbf8] sm:$0xff]
  %v462 = vld [vmem:[%s1 + $0xc00] sm:$0xff]
  %v463 = vld [vmem:[%s1 + $0xc08] sm:$0xff]
  %v464 = vld [vmem:[%s1 + $0xc10] sm:$0xff]
  %v465 = vld [vmem:[%s1 + $0xc18] sm:$0xff]
  %v466 = vld [vmem:[%s1 + $0xc20] sm:$0xff]
  %v467 = vld [vmem:[%s1 + $0xc28] sm:$0xff]
  %v468 = vld [vmem:[%s1 + $0xc30] sm:$0xff]
  %v469 = vld [vmem:[%s1 + $0xc38] sm:$0xff]
  %v470 = vld [vmem:[%s1 + $0xc40] sm:$0xff]
  %v471 = vld [vmem:[%s1 + $0xc48] sm:$0xff]
  %v472 = vld [vmem:[%s1 + $0xc50] sm:$0xff]
  %v473 = vld [vmem:[%s1 + $0xc58] sm:$0xff]
  %v474 = vld [vmem:[%s1 + $0xc60] sm:$0xff]
  %v475 = vld [vmem:[%s1 + $0xc68] sm:$0xff]
  %v476 = vld [vmem:[%s1 + $0xc70] sm:$0xff]
  %v477 = vld [vmem:[%s1 + $0xc78] sm:$0xff]
  %v478 = vld [vmem:[%s1 + $0xc80] sm:$0xff]
  %v479 = vld [vmem:[%s1 + $0xc88] sm:$0xff]
  %v480 = vld [vmem:[%s1 + $0xc90] sm:$0xff]
  %v481 = vld [vmem:[%s1 + $0xc98] sm:$0xff]
  %v482 = vld [vmem:[%s1 + $0xca0] sm:$0xff]
  %v483 = vld [vmem:[%s1 + $0xca8] sm:$0xff]
  %v484 = vld [vmem:[%s1 + $0xcb0] sm:$0xff]
  %v485 = vld [vmem:[%s1 + $0xcb8] sm:$0xff]
  %v486 = vld [vmem:[%s1 + $0xcc0] sm:$0xff]
  %v487 = vld [vmem:[%s1 + $0xcc8] sm:$0xff]
  %v488 = vld [vmem:[%s1 + $0xcd0] sm:$0xff]
  %v489 = vld [vmem:[%s1 + $0xcd8] sm:$0xff]
  %v490 = vld [vmem:[%s1 + $0xce0] sm:$0xff]
  %v491 = vld [vmem:[%s1 + $0xce8] sm:$0xff]
  %v492 = vld [vmem:[%s1 + $0xcf0] sm:$0xff]
  %v493 = vld [vmem:[%s1 + $0xcf8] sm:$0xff]
  %v494 = vld [vmem:[%s1 + $0xd00] sm:$0xff]
  %v495 = vld [vmem:[%s1 + $0xd08] sm:$0xff]
  %v496 = vld [vmem:[%s1 + $0xd10] sm:$0xff]
  %v497 = vld [vmem:[%s1 + $0xd18] sm:$0xff]
  %v498 = vld [vmem:[%s1 + $0xd20] sm:$0xff]
  %v499 = vld [vmem:[%s1 + $0xd28] sm:$0xff]
  %v500 = vld [vmem:[%s1 + $0xd30] sm:$0xff]
  %v501 = vld [vmem:[%s1 + $0xd38] sm:$0xff]
  %v502 = vld [vmem:[%s1 + $0xd40] sm:$0xff]
  %v503 = vld [vmem:[%s1 + $0xd48] sm:$0xff]
  %v504 = vld [vmem:[%s1 + $0xd50] sm:$0xff]
  %v505 = vld [vmem:[%s1 + $0xd58] sm:$0xff]
  %v506 = vld [vmem:[%s1 + $0xd60] sm:$0xff]
  %v507 = vld [vmem:[%s1 + $0xd68] sm:$0xff]
  %v508 = vld [vmem:[%s1 + $0xd70] sm:$0xff]
  %v509 = vld [vmem:[%s1 + $0xd78] sm:$0xff]
  %v510 = vld [vmem:[%s1 + $0xd80] sm:$0xff]
  %v511 = vld [vmem:[%s1 + $0xd88] sm:$0xff]
  %v512 = vld [vmem:[%s1 + $0xd90] sm:$0xff]
  %v513 = vld [vmem:[%s1 + $0xd98] sm:$0xff]
  %v514 = vld [vmem:[%s1 + $0xda0] sm:$0xff]
  %v515 = vld [vmem:[%s1 + $0xda8] sm:$0xff]
  %v516 = vld [vmem:[%s1 + $0xdb0] sm:$0xff]
  %v517 = vld [vmem:[%s1 + $0xdb8] sm:$0xff]
  %v518 = vld [vmem:[%s1 + $0xdc0] sm:$0xff]
  %v519 = vld [vmem:[%s1 + $0xdc8] sm:$0xff]
  %v520 = vld [vmem:[%s1 + $0xdd0] sm:$0xff]
  %v521 = vld [vmem:[%s1 + $0xdd8] sm:$0xff]
  %v522 = vld [vmem:[%s1 + $0xde0] sm:$0xff]
  %v523 = vld [vmem:[%s1 + $0xde8] sm:$0xff]
  %v524 = vld [vmem:[%s1 + $0xdf0] sm:$0xff]
  %v525 = vld [vmem:[%s1 + $0xdf8] sm:$0xff]
  %v526 = vld [vmem:[%s1 + $0xe00] sm:$0xff]
  %v527 = vld [vmem:[%s1 + $0xe08] sm:$0xff]
  %v528 = vld [vmem:[%s1 + $0xe10] sm:$0xff]
  %v529 = vld [vmem:[%s1 + $0xe18] sm:$0xff]
  %v530 = vld [vmem:[%s1 + $0xe20] sm:$0xff]
  %v531 = vld [vmem:[%s1 + $0xe28] sm:$0xff]
  %v532 = vld [vmem:[%s1 + $0xe30] sm:$0xff]
  %v533 = vld [vmem:[%s1 + $0xe38] sm:$0xff]
  %v534 = vld [vmem:[%s1 + $0xe40] sm:$0xff]
  %v535 = vld [vmem:[%s1 + $0xe48] sm:$0xff]
  %v536 = vld [vmem:[%s1 + $0xe50] sm:$0xff]
  %v537 = vld [vmem:[%s1 + $0xe58] sm:$0xff]
  %v538 = vld [vmem:[%s1 + $0xe60] sm:$0xff]
  %v539 = vld [vmem:[%s1 + $0xe68] sm:$0xff]
  %v540 = vld [vmem:[%s1 + $0xe70] sm:$0xff]
  %v541 = vld [vmem:[%s1 + $0xe78] sm:$0xff]
  %v542 = vld [vmem:[%s1 + $0xe80] sm:$0xff]
  %v543 = vld [vmem:[%s1 + $0xe88] sm:$0xff]
  %v544 = vld [vmem:[%s1 + $0xe90] sm:$0xff]
  %v545 = vld [vmem:[%s1 + $0xe98] sm:$0xff]
  %v546 = vld [vmem:[%s1 + $0xea0] sm:$0xff]
  %v547 = vld [vmem:[%s1 + $0xea8] sm:$0xff]
  %v548 = vld [vmem:[%s1 + $0xeb0] sm:$0xff]
  %v549 = vld [vmem:[%s1 + $0xeb8] sm:$0xff]
  %v550 = vld [vmem:[%s1 + $0xec0] sm:$0xff]
  %v551 = vld [vmem:[%s1 + $0xec8] sm:$0xff]
  %v552 = vld [vmem:[%s1 + $0xed0] sm:$0xff]
  %v553 = vld [vmem:[%s1 + $0xed8] sm:$0xff]
  %v554 = vld [vmem:[%s1 + $0xee0] sm:$0xff]
  %v555 = vld [vmem:[%s1 + $0xee8] sm:$0xff]
  %v556 = vld [vmem:[%s1 + $0xef0] sm:$0xff]
  %v557 = vld [vmem:[%s1 + $0xef8] sm:$0xff]
  %v558 = vld [vmem:[%s1 + $0xf00] sm:$0xff]
  %v559 = vld [vmem:[%s1 + $0xf08] sm:$0xff]
  %v560 = vld [vmem:[%s1 + $0xf10] sm:$0xff]
  %v561 = vld [vmem:[%s1 + $0xf18] sm:$0xff]
  %v562 = vld [vmem:[%s1 + $0xf20] sm:$0xff]
  %v563 = vld [vmem:[%s1 + $0xf28] sm:$0xff]
  %v564 = vld [vmem:[%s1 + $0xf30] sm:$0xff]
  %v565 = vld [vmem:[%s1 + $0xf38] sm:$0xff]
  %v566 = vld [vmem:[%s1 + $0xf40] sm:$0xff]
  %v567 = vld [vmem:[%s1 + $0xf48] sm:$0xff]
  %v568 = vld [vmem:[%s1 + $0xf50] sm:$0xff]
  %v569 = vld [vmem:[%s1 + $0xf58] sm:$0xff]
  %v570 = vld [vmem:[%s1 + $0xf60] sm:$0xff]
  %v571 = vld [vmem:[%s1 + $0xf68] sm:$0xff]
  %v572 = vld [vmem:[%s1 + $0xf70] sm:$0xff]
  %v573 = vld [vmem:[%s1 + $0xf78] sm:$0xff]
  %v574 = vld [vmem:[%s1 + $0xf80] sm:$0xff]
  %v575 = vld [vmem:[%s1 + $0xf88] sm:$0xff]
  %v576 = vld [vmem:[%s1 + $0xf90] sm:$0xff]
  %v577 = vld [vmem:[%s1 + $0xf98] sm:$0xff]
  %v578 = vld [vmem:[%s1 + $0xfa0] sm:$0xff]
  %v579 = vld [vmem:[%s1 + $0xfa8] sm:$0xff]
  %v580 = vld [vmem:[%s1 + $0xfb0] sm:$0xff]
  %v581 = vld [vmem:[%s1 + $0xfb8] sm:$0xff]
  %v582 = vld [vmem:[%s1 + $0xfc0] sm:$0xff]
  %v583 = vld [vmem:[%s1 + $0xfc8] sm:$0xff]
  %v584 = vld [vmem:[%s1 + $0xfd0] sm:$0xff]
  %v585 = vld [vmem:[%s1 + $0xfd8] sm:$0xff]
  %v586 = vld [vmem:[%s1 + $0xfe0] sm:$0xff]
  %v587 = vld [vmem:[%s1 + $0xfe8] sm:$0xff]
  %v588 = vld [vmem:[%s1 + $0xff0] sm:$0xff]
  %v589 = vld [vmem:[%s1 + $0xff8] sm:$0xff]
  %v590 = vld [vmem:[%s1 + $0x1000] sm:$0xff]
  %v591 = vld [vmem:[%s1 + $0x1008] sm:$0xff]
  %v592 = vld [vmem:[%s1 + $0x1010] sm:$0xff]
  %v593 = vld [vmem:[%s1 + $0x1018] sm:$0xff]
  %v594 = vld [vmem:[%s1 + $0x1020] sm:$0xff]
  %v595 = vld [vmem:[%s1 + $0x1028] sm:$0xff]
  %v596 = vld [vmem:[%s1 + $0x1030] sm:$0xff]
  %v597 = vld [vmem:[%s1 + $0x1038] sm:$0xff]
  %v598 = vld [vmem:[%s1 + $0x1040] sm:$0xff]
  %v599 = vld [vmem:[%s1 + $0x1048] sm:$0xff]
  %v600 = vld [vmem:[%s1 + $0x1050] sm:$0xff]
  %v601 = vld [vmem:[%s1 + $0x1058] sm:$0xff]
  %v602 = vld [vmem:[%s1 + $0x1060] sm:$0xff]
  %v603 = vld [vmem:[%s1 + $0x1068] sm:$0xff]
  %v604 = vld [vmem:[%s1 + $0x1070] sm:$0xff]
  %v605 = vld [vmem:[%s1 + $0x1078] sm:$0xff]
  %v606 = vld [vmem:[%s1 + $0x1080] sm:$0xff]
  %v607 = vld [vmem:[%s1 + $0x1088] sm:$0xff]
  %v608 = vld [vmem:[%s1 + $0x1090] sm:$0xff]
  %v609 = vld [vmem:[%s1 + $0x1098] sm:$0xff]
  %v610 = vld [vmem:[%s1 + $0x10a0] sm:$0xff]
  %v611 = vld [vmem:[%s1 + $0x10a8] sm:$0xff]
  %v612 = vld [vmem:[%s1 + $0x10b0] sm:$0xff]
  %v613 = vld [vmem:[%s1 + $0x10b8] sm:$0xff]
  %v614 = vld [vmem:[%s1 + $0x10c0] sm:$0xff]
  %v615 = vld [vmem:[%s1 + $0x10c8] sm:$0xff]
  %v616 = vld [vmem:[%s1 + $0x10d0] sm:$0xff]
  %v617 = vld [vmem:[%s1 + $0x10d8] sm:$0xff]
  %v618 = vld [vmem:[%s1 + $0x10e0] sm:$0xff]
  %v619 = vld [vmem:[%s1 + $0x10e8] sm:$0xff]
  %v620 = vld [vmem:[%s1 + $0x10f0] sm:$0xff]
  %v621 = vld [vmem:[%s1 + $0x10f8] sm:$0xff]
  %v622 = vld [vmem:[%s1 + $0x1100] sm:$0xff]
  %v623 = vld [vmem:[%s1 + $0x1108] sm:$0xff]
  %v624 = vld [vmem:[%s1 + $0x1110] sm:$0xff]
  %v625 = vld [vmem:[%s1 + $0x1118] sm:$0xff]
  %v626 = vld [vmem:[%s1 + $0x1120] sm:$0xff]
  %v627 = vld [vmem:[%s1 + $0x1128] sm:$0xff]
  %v628 = vld [vmem:[%s1 + $0x1130] sm:$0xff]
  %v629 = vld [vmem:[%s1 + $0x1138] sm:$0xff]
  %v630 = vld [vmem:[%s1 + $0x1140] sm:$0xff]
  %v631 = vld [vmem:[%s1 + $0x1148] sm:$0xff]
  %v632 = vld [vmem:[%s1 + $0x1150] sm:$0xff]
  %v633 = vld [vmem:[%s1 + $0x1158] sm:$0xff]
  %v634 = vld [vmem:[%s1 + $0x1160] sm:$0xff]
  %v635 = vld [vmem:[%s1 + $0x1168] sm:$0xff]
  %v636 = vld [vmem:[%s1 + $0x1170] sm:$0xff]
  %v637 = vld [vmem:[%s1 + $0x1178] sm:$0xff]
  %v638 = vld [vmem:[%s1 + $0x1180] sm:$0xff]
  %v639 = vld [vmem:[%s1 + $0x1188] sm:$0xff]
  %v640 = vld [vmem:[%s1 + $0x1190] sm:$0xff]
  %v641 = vld [vmem:[%s1 + $0x1198] sm:$0xff]
  %v642 = vld [vmem:[%s1 + $0x11a0] sm:$0xff]
  %v643 = vld [vmem:[%s1 + $0x11a8] sm:$0xff]
  %v644 = vld [vmem:[%s1 + $0x11b0] sm:$0xff]
  %v645 = vld [vmem:[%s1 + $0x11b8] sm:$0xff]
  %v646 = vld [vmem:[%s1 + $0x11c0] sm:$0xff]
  %v647 = vld [vmem:[%s1 + $0x11c8] sm:$0xff]
  %v648 = vld [vmem:[%s1 + $0x11d0] sm:$0xff]
  %v649 = vld [vmem:[%s1 + $0x11d8] sm:$0xff]
  %v650 = vld [vmem:[%s1 + $0x11e0] sm:$0xff]
  %v651 = vld [vmem:[%s1 + $0x11e8] sm:$0xff]
  %v652 = vld [vmem:[%s1 + $0x11f0] sm:$0xff]
  %v653 = vld [vmem:[%s1 + $0x11f8] sm:$0xff]
  %v654 = vld [vmem:[%s1 + $0x1200] sm:$0xff]
  %v655 = vld [vmem:[%s1 + $0x1208] sm:$0xff]
  %v656 = vld [vmem:[%s1 + $0x1210] sm:$0xff]
  %v657 = vld [vmem:[%s1 + $0x1218] sm:$0xff]
  %v658 = vld [vmem:[%s1 + $0x1220] sm:$0xff]
  %v659 = vld [vmem:[%s1 + $0x1228] sm:$0xff]
  %v660 = vld [vmem:[%s1 + $0x1230] sm:$0xff]
  %v661 = vld [vmem:[%s1 + $0x1238] sm:$0xff]
  %v662 = vld [vmem:[%s1 + $0x1240] sm:$0xff]
  %v663 = vld [vmem:[%s1 + $0x1248] sm:$0xff]
  %v664 = vld [vmem:[%s1 + $0x1250] sm:$0xff]
  %v665 = vld [vmem:[%s1 + $0x1258] sm:$0xff]
  %v666 = vld [vmem:[%s1 + $0x1260] sm:$0xff]
  %v667 = vld [vmem:[%s1 + $0x1268] sm:$0xff]
  %v668 = vld [vmem:[%s1 + $0x1270] sm:$0xff]
  %v669 = vld [vmem:[%s1 + $0x1278] sm:$0xff]
  %v670 = vld [vmem:[%s1 + $0x1280] sm:$0xff]
  %v671 = vld [vmem:[%s1 + $0x1288] sm:$0xff]
  %v672 = vld [vmem:[%s1 + $0x1290] sm:$0xff]
  %v673 = vld [vmem:[%s1 + $0x1298] sm:$0xff]
  %v674 = vld [vmem:[%s1 + $0x12a0] sm:$0xff]
  %v675 = vld [vmem:[%s1 + $0x12a8] sm:$0xff]
  %v676 = vld [vmem:[%s1 + $0x12b0] sm:$0xff]
  %v677 = vld [vmem:[%s1 + $0x12b8] sm:$0xff]
  %v678 = vld [vmem:[%s1 + $0x12c0] sm:$0xff]
  %v679 = vld [vmem:[%s1 + $0x12c8] sm:$0xff]
  %v680 = vld [vmem:[%s1 + $0x12d0] sm:$0xff]
  %v681 = vld [vmem:[%s1 + $0x12d8] sm:$0xff]
  %v682 = vld [vmem:[%s1 + $0x12e0] sm:$0xff]
  %v683 = vld [vmem:[%s1 + $0x12e8] sm:$0xff]
  %v684 = vld [vmem:[%s1 + $0x12f0] sm:$0xff]
  %v685 = vld [vmem:[%s1 + $0x12f8] sm:$0xff]
  %v686 = vld [vmem:[%s1 + $0x1300] sm:$0xff]
  %v687 = vld [vmem:[%s1 + $0x1308] sm:$0xff]
  %v688 = vld [vmem:[%s1 + $0x1310] sm:$0xff]
  %v689 = vld [vmem:[%s1 + $0x1318] sm:$0xff]
  %v690 = vld [vmem:[%s1 + $0x1320] sm:$0xff]
  %v691 = vld [vmem:[%s1 + $0x1328] sm:$0xff]
  %v692 = vld [vmem:[%s1 + $0x1330] sm:$0xff]
  %v693 = vld [vmem:[%s1 + $0x1338] sm:$0xff]
  %v694 = vld [vmem:[%s1 + $0x1340] sm:$0xff]
  %v695 = vld [vmem:[%s1 + $0x1348] sm:$0xff]
  %v696 = vld [vmem:[%s1 + $0x1350] sm:$0xff]
  %v697 = vld [vmem:[%s1 + $0x1358] sm:$0xff]
  %v698 = vld [vmem:[%s1 + $0x1360] sm:$0xff]
  %v699 = vld [vmem:[%s1 + $0x1368] sm:$0xff]
  %v700 = vld [vmem:[%s1 + $0x1370] sm:$0xff]
  %v701 = vld [vmem:[%s1 + $0x1378] sm:$0xff]
  %v702 = vld [vmem:[%s1 + $0x1380] sm:$0xff]
  %v703 = vld [vmem:[%s1 + $0x1388] sm:$0xff]
  %v704 = vld [vmem:[%s1 + $0x1390] sm:$0xff]
  %v705 = vld [vmem:[%s1 + $0x1398] sm:$0xff]
  %v706 = vld [vmem:[%s1 + $0x13a0] sm:$0xff]
  %v707 = vld [vmem:[%s1 + $0x13a8] sm:$0xff]
  %v708 = vld [vmem:[%s1 + $0x13b0] sm:$0xff]
  %v709 = vld [vmem:[%s1 + $0x13b8] sm:$0xff]
  %v710 = vld [vmem:[%s1 + $0x13c0] sm:$0xff]
  %v711 = vld [vmem:[%s1 + $0x13c8] sm:$0xff]
  %v712 = vld [vmem:[%s1 + $0x13d0] sm:$0xff]
  %v713 = vld [vmem:[%s1 + $0x13d8] sm:$0xff]
  %v714 = vld [vmem:[%s1 + $0x13e0] sm:$0xff]
  %v715 = vld [vmem:[%s1 + $0x13e8] sm:$0xff]
  %v716 = vld [vmem:[%s1 + $0x13f0] sm:$0xff]
  %v717 = vld [vmem:[%s1 + $0x13f8] sm:$0xff]
  %v718 = vld [vmem:[%s1 + $0x1400] sm:$0xff]
  %v719 = vld [vmem:[%s1 + $0x1408] sm:$0xff]
  %v720 = vld [vmem:[%s1 + $0x1410] sm:$0xff]
  %v721 = vld [vmem:[%s1 + $0x1418] sm:$0xff]
  %v722 = vld [vmem:[%s1 + $0x1420] sm:$0xff]
  %v723 = vld [vmem:[%s1 + $0x1428] sm:$0xff]
  %v724 = vld [vmem:[%s1 + $0x1430] sm:$0xff]
  %v725 = vld [vmem:[%s1 + $0x1438] sm:$0xff]
  %v726 = vld [vmem:[%s1 + $0x1440] sm:$0xff]
  %v727 = vld [vmem:[%s1 + $0x1448] sm:$0xff]
  %v728 = vld [vmem:[%s1 + $0x1450] sm:$0xff]
  %v729 = vld [vmem:[%s1 + $0x1458] sm:$0xff]
  %v730 = vld [vmem:[%s1 + $0x1460] sm:$0xff]
  %v731 = vld [vmem:[%s1 + $0x1468] sm:$0xff]
  %v732 = vld [vmem:[%s1 + $0x1470] sm:$0xff]
  %v733 = vld [vmem:[%s1 + $0x1478] sm:$0xff]
  %v734 = vld [vmem:[%s1 + $0x1480] sm:$0xff]
  %v735 = vld [vmem:[%s1 + $0x1488] sm:$0xff]
  %v736 = vld [vmem:[%s1 + $0x1490] sm:$0xff]
  %v737 = vld [vmem:[%s1 + $0x1498] sm:$0xff]
  %v738 = vld [vmem:[%s1 + $0x14a0] sm:$0xff]
  %v739 = vld [vmem:[%s1 + $0x14a8] sm:$0xff]
  %v740 = vld [vmem:[%s1 + $0x14b0] sm:$0xff]
  %v741 = vld [vmem:[%s1 + $0x14b8] sm:$0xff]
  %v742 = vld [vmem:[%s1 + $0x14c0] sm:$0xff]
  %v743 = vld [vmem:[%s1 + $0x14c8] sm:$0xff]
  %v744 = vld [vmem:[%s1 + $0x14d0] sm:$0xff]
  %v745 = vld [vmem:[%s1 + $0x14d8] sm:$0xff]
  %v746 = vld [vmem:[%s1 + $0x14e0] sm:$0xff]
  %v747 = vld [vmem:[%s1 + $0x14e8] sm:$0xff]
  %v748 = vld [vmem:[%s1 + $0x14f0] sm:$0xff]
  %v749 = vld [vmem:[%s1 + $0x14f8] sm:$0xff]
  %v750 = vld [vmem:[%s1 + $0x1500] sm:$0xff]
  %v751 = vld [vmem:[%s1 + $0x1508] sm:$0xff]
  %v752 = vld [vmem:[%s1 + $0x1510] sm:$0xff]
  %v753 = vld [vmem:[%s1 + $0x1518] sm:$0xff]
  %v754 = vld [vmem:[%s1 + $0x1520] sm:$0xff]
  %v755 = vld [vmem:[%s1 + $0x1528] sm:$0xff]
  %v756 = vld [vmem:[%s1 + $0x1530] sm:$0xff]
  %v757 = vld [vmem:[%s1 + $0x1538] sm:$0xff]
  %v758 = vld [vmem:[%s1 + $0x1540] sm:$0xff]
  %v759 = vld [vmem:[%s1 + $0x1548] sm:$0xff]
  %v760 = vld [vmem:[%s1 + $0x1550] sm:$0xff]
  %v761 = vld [vmem:[%s1 + $0x1558] sm:$0xff]
  %v762 = vld [vmem:[%s1 + $0x1560] sm:$0xff]
  %v763 = vld [vmem:[%s1 + $0x1568] sm:$0xff]
  %v764 = vld [vmem:[%s1 + $0x1570] sm:$0xff]
  %v765 = vld [vmem:[%s1 + $0x1578] sm:$0xff]
  %v766 = vld [vmem:[%s1 + $0x1580] sm:$0xff]
  %v767 = vld [vmem:[%s1 + $0x1588] sm:$0xff]
  %v768 = vld [vmem:[%s1 + $0x1590] sm:$0xff]
  %v769 = vld [vmem:[%s1 + $0x1598] sm:$0xff]
  %v770 = vld [vmem:[%s1 + $0x15a0] sm:$0xff]
  %v771 = vld [vmem:[%s1 + $0x15a8] sm:$0xff]
  %v772 = vld [vmem:[%s1 + $0x15b0] sm:$0xff]
  %v773 = vld [vmem:[%s1 + $0x15b8] sm:$0xff]
  %v774 = vld [vmem:[%s1 + $0x15c0] sm:$0xff]
  %v775 = vld [vmem:[%s1 + $0x15c8] sm:$0xff]
  %v776 = vld [vmem:[%s1 + $0x15d0] sm:$0xff]
  %v777 = vld [vmem:[%s1 + $0x15d8] sm:$0xff]
  %v778 = vld [vmem:[%s1 + $0x15e0] sm:$0xff]
  %v779 = vld [vmem:[%s1 + $0x15e8] sm:$0xff]
  %v780 = vld [vmem:[%s1 + $0x15f0] sm:$0xff]
  %v781 = vld [vmem:[%s1 + $0x15f8] sm:$0xff]
  %v782 = vld [vmem:[%s1 + $0x1600] sm:$0xff]
  %v783 = vld [vmem:[%s1 + $0x1608] sm:$0xff]
  %v784 = vld [vmem:[%s1 + $0x1610] sm:$0xff]
  %v785 = vld [vmem:[%s1 + $0x1618] sm:$0xff]
  %v786 = vld [vmem:[%s1 + $0x1620] sm:$0xff]
  %v787 = vld [vmem:[%s1 + $0x1628] sm:$0xff]
  %v788 = vld [vmem:[%s1 + $0x1630] sm:$0xff]
  %v789 = vld [vmem:[%s1 + $0x1638] sm:$0xff]
  %v790 = vld [vmem:[%s1 + $0x1640] sm:$0xff]
  %v791 = vld [vmem:[%s1 + $0x1648] sm:$0xff]
  %v792 = vld [vmem:[%s1 + $0x1650] sm:$0xff]
  %v793 = vld [vmem:[%s1 + $0x1658] sm:$0xff]
  %v794 = vld [vmem:[%s1 + $0x1660] sm:$0xff]
  %v795 = vld [vmem:[%s1 + $0x1668] sm:$0xff]
  %v796 = vld [vmem:[%s1 + $0x1670] sm:$0xff]
  %v797 = vld [vmem:[%s1 + $0x1678] sm:$0xff]
  %v798 = vld [vmem:[%s1 + $0x1680] sm:$0xff]
  %v799 = vld [vmem:[%s1 + $0x1688] sm:$0xff]
  %v800 = vld [vmem:[%s1 + $0x1690] sm:$0xff]
  %v801 = vld [vmem:[%s1 + $0x1698] sm:$0xff]
  %v802 = vld [vmem:[%s1 + $0x16a0] sm:$0xff]
  %v803 = vld [vmem:[%s1 + $0x16a8] sm:$0xff]
  %v804 = vld [vmem:[%s1 + $0x16b0] sm:$0xff]
  %v805 = vld [vmem:[%s1 + $0x16b8] sm:$0xff]
  %v806 = vld [vmem:[%s1 + $0x16c0] sm:$0xff]
  %v807 = vld [vmem:[%s1 + $0x16c8] sm:$0xff]
  %v808 = vld [vmem:[%s1 + $0x16d0] sm:$0xff]
  %v809 = vld [vmem:[%s1 + $0x16d8] sm:$0xff]
  %v810 = vld [vmem:[%s1 + $0x16e0] sm:$0xff]
  %v811 = vld [vmem:[%s1 + $0x16e8] sm:$0xff]
  %v812 = vld [vmem:[%s1 + $0x16f0] sm:$0xff]
  %v813 = vld [vmem:[%s1 + $0x16f8] sm:$0xff]
  %v814 = vld [vmem:[%s1 + $0x1700] sm:$0xff]
  %v815 = vld [vmem:[%s1 + $0x1708] sm:$0xff]
  %v816 = vld [vmem:[%s1 + $0x1710] sm:$0xff]
  %v817 = vld [vmem:[%s1 + $0x1718] sm:$0xff]
  %v818 = vld [vmem:[%s1 + $0x1720] sm:$0xff]
  %v819 = vld [vmem:[%s1 + $0x1728] sm:$0xff]
  %v820 = vld [vmem:[%s1 + $0x1730] sm:$0xff]
  %v821 = vld [vmem:[%s1 + $0x1738] sm:$0xff]
  %v822 = vld [vmem:[%s1 + $0x1740] sm:$0xff]
  %v823 = vld [vmem:[%s1 + $0x1748] sm:$0xff]
  %v824 = vld [vmem:[%s1 + $0x1750] sm:$0xff]
  %v825 = vld [vmem:[%s1 + $0x1758] sm:$0xff]
  %v826 = vld [vmem:[%s1 + $0x1760] sm:$0xff]
  %v827 = vld [vmem:[%s1 + $0x1768] sm:$0xff]
  %v828 = vld [vmem:[%s1 + $0x1770] sm:$0xff]
  %v829 = vld [vmem:[%s1 + $0x1778] sm:$0xff]
  %v830 = vld [vmem:[%s1 + $0x1780] sm:$0xff]
  %v831 = vld [vmem:[%s1 + $0x1788] sm:$0xff]
  %v832 = vld [vmem:[%s1 + $0x1790] sm:$0xff]
  %v833 = vld [vmem:[%s1 + $0x1798] sm:$0xff]
  %v834 = vld [vmem:[%s1 + $0x17a0] sm:$0xff]
  %v835 = vld [vmem:[%s1 + $0x17a8] sm:$0xff]
  %v836 = vld [vmem:[%s1 + $0x17b0] sm:$0xff]
  %v837 = vld [vmem:[%s1 + $0x17b8] sm:$0xff]
  %v838 = vld [vmem:[%s1 + $0x17c0] sm:$0xff]
  %v839 = vld [vmem:[%s1 + $0x17c8] sm:$0xff]
  %v840 = vld [vmem:[%s1 + $0x17d0] sm:$0xff]
  %v841 = vld [vmem:[%s1 + $0x17d8] sm:$0xff]
  %v842 = vld [vmem:[%s1 + $0x17e0] sm:$0xff]
  %v843 = vld [vmem:[%s1 + $0x17e8] sm:$0xff]
  %v844 = vld [vmem:[%s1 + $0x17f0] sm:$0xff]
  %v845 = vld [vmem:[%s1 + $0x17f8] sm:$0xff]
  %v846 = vld [vmem:[%s1 + $0x1800] sm:$0xff]
  %v847 = vld [vmem:[%s1 + $0x1808] sm:$0xff]
  %v848 = vld [vmem:[%s1 + $0x1810] sm:$0xff]
  %v849 = vld [vmem:[%s1 + $0x1818] sm:$0xff]
  %v850 = vld [vmem:[%s1 + $0x1820] sm:$0xff]
  %v851 = vld [vmem:[%s1 + $0x1828] sm:$0xff]
  %v852 = vld [vmem:[%s1 + $0x1830] sm:$0xff]
  %v853 = vld [vmem:[%s1 + $0x1838] sm:$0xff]
  %v854 = vld [vmem:[%s1 + $0x1840] sm:$0xff]
  %v855 = vld [vmem:[%s1 + $0x1848] sm:$0xff]
  %v856 = vld [vmem:[%s1 + $0x1850] sm:$0xff]
  %v857 = vld [vmem:[%s1 + $0x1858] sm:$0xff]
  %v858 = vld [vmem:[%s1 + $0x1860] sm:$0xff]
  %v859 = vld [vmem:[%s1 + $0x1868] sm:$0xff]
  %v860 = vld [vmem:[%s1 + $0x1870] sm:$0xff]
  %v861 = vld [vmem:[%s1 + $0x1878] sm:$0xff]
  %v862 = vld [vmem:[%s1 + $0x1880] sm:$0xff]
  %v863 = vld [vmem:[%s1 + $0x1888] sm:$0xff]
  %v864 = vld [vmem:[%s1 + $0x1890] sm:$0xff]
  %v865 = vld [vmem:[%s1 + $0x1898] sm:$0xff]
  %v866 = vld [vmem:[%s1 + $0x18a0] sm:$0xff]
  %v867 = vld [vmem:[%s1 + $0x18a8] sm:$0xff]
  %v868 = vld [vmem:[%s1 + $0x18b0] sm:$0xff]
  %v869 = vld [vmem:[%s1 + $0x18b8] sm:$0xff]
  %v870 = vld [vmem:[%s1 + $0x18c0] sm:$0xff]
  %v871 = vld [vmem:[%s1 + $0x18c8] sm:$0xff]
  %v872 = vld [vmem:[%s1 + $0x18d0] sm:$0xff]
  %v873 = vld [vmem:[%s1 + $0x18d8] sm:$0xff]
  %v874 = vld [vmem:[%s1 + $0x18e0] sm:$0xff]
  %v875 = vld [vmem:[%s1 + $0x18e8] sm:$0xff]
  %v876 = vld [vmem:[%s1 + $0x18f0] sm:$0xff]
  %v877 = vld [vmem:[%s1 + $0x18f8] sm:$0xff]
  %v878 = vld [vmem:[%s1 + $0x1900] sm:$0xff]
  %v879 = vld [vmem:[%s1 + $0x1908] sm:$0xff]
  %v880 = vld [vmem:[%s1 + $0x1910] sm:$0xff]
  %v881 = vld [vmem:[%s1 + $0x1918] sm:$0xff]
  %v882 = vld [vmem:[%s1 + $0x1920] sm:$0xff]
  %v883 = vld [vmem:[%s1 + $0x1928] sm:$0xff]
  %v884 = vld [vmem:[%s1 + $0x1930] sm:$0xff]
  %v885 = vld [vmem:[%s1 + $0x1938] sm:$0xff]
  %v886 = vld [vmem:[%s1 + $0x1940] sm:$0xff]
  %v887 = vld [vmem:[%s1 + $0x1948] sm:$0xff]
  %v888 = vld [vmem:[%s1 + $0x1950] sm:$0xff]
  %v889 = vld [vmem:[%s1 + $0x1958] sm:$0xff]
  %v890 = vld [vmem:[%s1 + $0x1960] sm:$0xff]
  %v891 = vld [vmem:[%s1 + $0x1968] sm:$0xff]
  %v892 = vld [vmem:[%s1 + $0x1970] sm:$0xff]
  %v893 = vld [vmem:[%s1 + $0x1978] sm:$0xff]
  %v894 = vld [vmem:[%s1 + $0x1980] sm:$0xff]
  %v895 = vld [vmem:[%s1 + $0x1988] sm:$0xff]
  %v896 = vld [vmem:[%s1 + $0x1990] sm:$0xff]
  %v897 = vld [vmem:[%s1 + $0x1998] sm:$0xff]
  %v898 = vld [vmem:[%s1 + $0x19a0] sm:$0xff]
  %v899 = vld [vmem:[%s1 + $0x19a8] sm:$0xff]
  %v900 = vld [vmem:[%s1 + $0x19b0] sm:$0xff]
  %v901 = vld [vmem:[%s1 + $0x19b8] sm:$0xff]
  %v902 = vld [vmem:[%s1 + $0x19c0] sm:$0xff]
  %v903 = vld [vmem:[%s1 + $0x19c8] sm:$0xff]
  %v904 = vld [vmem:[%s1 + $0x19d0] sm:$0xff]
  %v905 = vld [vmem:[%s1 + $0x19d8] sm:$0xff]
  %v906 = vld [vmem:[%s1 + $0x19e0] sm:$0xff]
  %v907 = vld [vmem:[%s1 + $0x19e8] sm:$0xff]
  %v908 = vld [vmem:[%s1 + $0x19f0] sm:$0xff]
  %v909 = vld [vmem:[%s1 + $0x19f8] sm:$0xff]
  %v910 = vld [vmem:[%s1 + $0x1a00] sm:$0xff]
  %v911 = vld [vmem:[%s1 + $0x1a08] sm:$0xff]
  %v912 = vld [vmem:[%s1 + $0x1a10] sm:$0xff]
  %v913 = vld [vmem:[%s1 + $0x1a18] sm:$0xff]
  %v914 = vld [vmem:[%s1 + $0x1a20] sm:$0xff]
  %v915 = vld [vmem:[%s1 + $0x1a28] sm:$0xff]
  %v916 = vld [vmem:[%s1 + $0x1a30] sm:$0xff]
  %v917 = vld [vmem:[%s1 + $0x1a38] sm:$0xff]
  %v918 = vld [vmem:[%s1 + $0x1a40] sm:$0xff]
  %v919 = vld [vmem:[%s1 + $0x1a48] sm:$0xff]
  %v920 = vld [vmem:[%s1 + $0x1a50] sm:$0xff]
  %v921 = vld [vmem:[%s1 + $0x1a58] sm:$0xff]
  %v922 = vld [vmem:[%s1 + $0x1a60] sm:$0xff]
  %v923 = vld [vmem:[%s1 + $0x1a68] sm:$0xff]
  %v924 = vld [vmem:[%s1 + $0x1a70] sm:$0xff]
  %v925 = vld [vmem:[%s1 + $0x1a78] sm:$0xff]
  %v926 = vld [vmem:[%s1 + $0x1a80] sm:$0xff]
  %v927 = vld [vmem:[%s1 + $0x1a88] sm:$0xff]
  %v928 = vld [vmem:[%s1 + $0x1a90] sm:$0xff]
  %v929 = vld [vmem:[%s1 + $0x1a98] sm:$0xff]
  %v930 = vld [vmem:[%s1 + $0x1aa0] sm:$0xff]
  %v931 = vld [vmem:[%s1 + $0x1aa8] sm:$0xff]
  %v932 = vld [vmem:[%s1 + $0x1ab0] sm:$0xff]
  %v933 = vld [vmem:[%s1 + $0x1ab8] sm:$0xff]
  %v934 = vld [vmem:[%s1 + $0x1ac0] sm:$0xff]
  %v935 = vld [vmem:[%s1 + $0x1ac8] sm:$0xff]
  %v936 = vld [vmem:[%s1 + $0x1ad0] sm:$0xff]
  %v937 = vld [vmem:[%s1 + $0x1ad8] sm:$0xff]
  %v938 = vld [vmem:[%s1 + $0x1ae0] sm:$0xff]
  %v939 = vld [vmem:[%s1 + $0x1ae8] sm:$0xff]
  %v940 = vld [vmem:[%s1 + $0x1af0] sm:$0xff]
  %v941 = vld [vmem:[%s1 + $0x1af8] sm:$0xff]
  %v942 = vld [vmem:[%s1 + $0x1b00] sm:$0xff]
  %v943 = vld [vmem:[%s1 + $0x1b08] sm:$0xff]
  %v944 = vld [vmem:[%s1 + $0x1b10] sm:$0xff]
  %v945 = vld [vmem:[%s1 + $0x1b18] sm:$0xff]
  %v946 = vld [vmem:[%s1 + $0x1b20] sm:$0xff]
  %v947 = vld [vmem:[%s1 + $0x1b28] sm:$0xff]
  %v948 = vld [vmem:[%s1 + $0x1b30] sm:$0xff]
  %v949 = vld [vmem:[%s1 + $0x1b38] sm:$0xff]
  %v950 = vld [vmem:[%s1 + $0x1b40] sm:$0xff]
  %v951 = vld [vmem:[%s1 + $0x1b48] sm:$0xff]
  %v952 = vld [vmem:[%s1 + $0x1b50] sm:$0xff]
  %v953 = vld [vmem:[%s1 + $0x1b58] sm:$0xff]
  %v954 = vld [vmem:[%s1 + $0x1b60] sm:$0xff]
  %v955 = vld [vmem:[%s1 + $0x1b68] sm:$0xff]
  %v956 = vld [vmem:[%s1 + $0x1b70] sm:$0xff]
  %v957 = vld [vmem:[%s1 + $0x1b78] sm:$0xff]
  %v958 = vld [vmem:[%s1 + $0x1b80] sm:$0xff]
  %v959 = vld [vmem:[%s1 + $0x1b88] sm:$0xff]
  %v960 = vld [vmem:[%s1 + $0x1b90] sm:$0xff]
  %v961 = vld [vmem:[%s1 + $0x1b98] sm:$0xff]
  %v962 = vld [vmem:[%s1 + $0x1ba0] sm:$0xff]
  %v963 = vld [vmem:[%s1 + $0x1ba8] sm:$0xff]
  %v964 = vld [vmem:[%s1 + $0x1bb0] sm:$0xff]
  %v965 = vld [vmem:[%s1 + $0x1bb8] sm:$0xff]
  %v966 = vld [vmem:[%s1 + $0x1bc0] sm:$0xff]
  %v967 = vld [vmem:[%s1 + $0x1bc8] sm:$0xff]
  %v968 = vld [vmem:[%s1 + $0x1bd0] sm:$0xff]
  %v969 = vld [vmem:[%s1 + $0x1bd8] sm:$0xff]
  %v970 = vld [vmem:[%s1 + $0x1be0] sm:$0xff]
  %v971 = vld [vmem:[%s1 + $0x1be8] sm:$0xff]
  %v972 = vld [vmem:[%s1 + $0x1bf0] sm:$0xff]
  %v973 = vld [vmem:[%s1 + $0x1bf8] sm:$0xff]
  %v974 = vld [vmem:[%s1 + $0x1c00] sm:$0xff]
  %v975 = vld [vmem:[%s1 + $0x1c08] sm:$0xff]
  %v976 = vld [vmem:[%s1 + $0x1c10] sm:$0xff]
  %v977 = vld [vmem:[%s1 + $0x1c18] sm:$0xff]
  %v978 = vld [vmem:[%s1 + $0x1c20] sm:$0xff]
  %v979 = vld [vmem:[%s1 + $0x1c28] sm:$0xff]
  %v980 = vld [vmem:[%s1 + $0x1c30] sm:$0xff]
  %v981 = vld [vmem:[%s1 + $0x1c38] sm:$0xff]
  %v982 = vld [vmem:[%s1 + $0x1c40] sm:$0xff]
  %v983 = vld [vmem:[%s1 + $0x1c48] sm:$0xff]
  %v984 = vld [vmem:[%s1 + $0x1c50] sm:$0xff]
  %v985 = vld [vmem:[%s1 + $0x1c58] sm:$0xff]
  %v986 = vld [vmem:[%s1 + $0x1c60] sm:$0xff]
  %v987 = vld [vmem:[%s1 + $0x1c68] sm:$0xff]
  %v988 = vld [vmem:[%s1 + $0x1c70] sm:$0xff]
  %v989 = vld [vmem:[%s1 + $0x1c78] sm:$0xff]
  %v990 = vld [vmem:[%s1 + $0x1c80] sm:$0xff]
  %v991 = vld [vmem:[%s1 + $0x1c88] sm:$0xff]
  %v992 = vld [vmem:[%s1 + $0x1c90] sm:$0xff]
  %v993 = vld [vmem:[%s1 + $0x1c98] sm:$0xff]
  %v994 = vld [vmem:[%s1 + $0x1ca0] sm:$0xff]
  %v995 = vld [vmem:[%s1 + $0x1ca8] sm:$0xff]
  %v996 = vld [vmem:[%s1 + $0x1cb0] sm:$0xff]
  %v997 = vld [vmem:[%s1 + $0x1cb8] sm:$0xff]
  %v998 = vld [vmem:[%s1 + $0x1cc0] sm:$0xff]
  %v999 = vld [vmem:[%s1 + $0x1cc8] sm:$0xff]
  %v1000 = vld [vmem:[%s1 + $0x1cd0] sm:$0xff]
  %v1001 = vld [vmem:[%s1 + $0x1cd8] sm:$0xff]
  %v1002 = vld [vmem:[%s1 + $0x1ce0] sm:$0xff]
  %v1003 = vld [vmem:[%s1 + $0x1ce8] sm:$0xff]
  %v1004 = vld [vmem:[%s1 + $0x1cf0] sm:$0xff]
  %v1005 = vld [vmem:[%s1 + $0x1cf8] sm:$0xff]
  %v1006 = vld [vmem:[%s1 + $0x1d00] sm:$0xff]
  %v1007 = vld [vmem:[%s1 + $0x1d08] sm:$0xff]
  %v1008 = vld [vmem:[%s1 + $0x1d10] sm:$0xff]
  %v1009 = vld [vmem:[%s1 + $0x1d18] sm:$0xff]
  %v1010 = vld [vmem:[%s1 + $0x1d20] sm:$0xff]
  %v1011 = vld [vmem:[%s1 + $0x1d28] sm:$0xff]
  %v1012 = vld [vmem:[%s1 + $0x1d30] sm:$0xff]
  %v1013 = vld [vmem:[%s1 + $0x1d38] sm:$0xff]
  %v1014 = vld [vmem:[%s1 + $0x1d40] sm:$0xff]
  %v1015 = vld [vmem:[%s1 + $0x1d48] sm:$0xff]
  %v1016 = vld [vmem:[%s1 + $0x1d50] sm:$0xff]
  %v1017 = vld [vmem:[%s1 + $0x1d58] sm:$0xff]
  %v1018 = vld [vmem:[%s1 + $0x1d60] sm:$0xff]
  %v1019 = vld [vmem:[%s1 + $0x1d68] sm:$0xff]
  %v1020 = vld [vmem:[%s1 + $0x1d70] sm:$0xff]
  %v1021 = vld [vmem:[%s1 + $0x1d78] sm:$0xff]
  %v1022 = vld [vmem:[%s1 + $0x1d80] sm:$0xff]
  %v1023 = vld [vmem:[%s1 + $0x1d88] sm:$0xff]
  %v1024 = vld [vmem:[%s1 + $0x1d90] sm:$0xff]
  %v1025 = vld [vmem:[%s1 + $0x1d98] sm:$0xff]
  %v1026 = vld [vmem:[%s1 + $0x1da0] sm:$0xff]
  %v1027 = vld [vmem:[%s1 + $0x1da8] sm:$0xff]
  %v1028 = vld [vmem:[%s1 + $0x1db0] sm:$0xff]
  %v1029 = vld [vmem:[%s1 + $0x1db8] sm:$0xff]
  %v1030 = vld [vmem:[%s1 + $0x1dc0] sm:$0xff]
  %v1031 = vld [vmem:[%s1 + $0x1dc8] sm:$0xff]
  %v1032 = vld [vmem:[%s1 + $0x1dd0] sm:$0xff]
  %v1033 = vld [vmem:[%s1 + $0x1dd8] sm:$0xff]
  %v1034 = vld [vmem:[%s1 + $0x1de0] sm:$0xff]
  %v1035 = vld [vmem:[%s1 + $0x1de8] sm:$0xff]
  %v1036 = vld [vmem:[%s1 + $0x1df0] sm:$0xff]
  %v1037 = vld [vmem:[%s1 + $0x1df8] sm:$0xff]
  %v1038 = vld [vmem:[%s1 + $0x1e00] sm:$0xff]
  %v1039 = vld [vmem:[%s1 + $0x1e08] sm:$0xff]
  %v1040 = vld [vmem:[%s1 + $0x1e10] sm:$0xff]
  %v1041 = vld [vmem:[%s1 + $0x1e18] sm:$0xff]
  %v1042 = vld [vmem:[%s1 + $0x1e20] sm:$0xff]
  %v1043 = vld [vmem:[%s1 + $0x1e28] sm:$0xff]
  %v1044 = vld [vmem:[%s1 + $0x1e30] sm:$0xff]
  %v1045 = vld [vmem:[%s1 + $0x1e38] sm:$0xff]
  %v1046 = vld [vmem:[%s1 + $0x1e40] sm:$0xff]
  %v1047 = vld [vmem:[%s1 + $0x1e48] sm:$0xff]
  %v1048 = vld [vmem:[%s1 + $0x1e50] sm:$0xff]
  %v1049 = vld [vmem:[%s1 + $0x1e58] sm:$0xff]
  %v1050 = vld [vmem:[%s1 + $0x1e60] sm:$0xff]
  %v1051 = vld [vmem:[%s1 + $0x1e68] sm:$0xff]
  %v1052 = vld [vmem:[%s1 + $0x1e70] sm:$0xff]
  %v1053 = vld [vmem:[%s1 + $0x1e78] sm:$0xff]
  %v1054 = vld [vmem:[%s1 + $0x1e80] sm:$0xff]
  %v1055 = vld [vmem:[%s1 + $0x1e88] sm:$0xff]
  %v1056 = vld [vmem:[%s1 + $0x1e90] sm:$0xff]
  %v1057 = vld [vmem:[%s1 + $0x1e98] sm:$0xff]
  %v1058 = vld [vmem:[%s1 + $0x1ea0] sm:$0xff]
  %v1059 = vld [vmem:[%s1 + $0x1ea8] sm:$0xff]
  %v1060 = vld [vmem:[%s1 + $0x1eb0] sm:$0xff]
  %v1061 = vld [vmem:[%s1 + $0x1eb8] sm:$0xff]
  %v1062 = vld [vmem:[%s1 + $0x1ec0] sm:$0xff]
  %v1063 = vld [vmem:[%s1 + $0x1ec8] sm:$0xff]
  %v1064 = vld [vmem:[%s1 + $0x1ed0] sm:$0xff]
  %v1065 = vld [vmem:[%s1 + $0x1ed8] sm:$0xff]
  %v1066 = vld [vmem:[%s1 + $0x1ee0] sm:$0xff]
  %v1067 = vld [vmem:[%s1 + $0x1ee8] sm:$0xff]
  %v1068 = vld [vmem:[%s1 + $0x1ef0] sm:$0xff]
  %v1069 = vld [vmem:[%s1 + $0x1ef8] sm:$0xff]
  %v1070 = vld [vmem:[%s1 + $0x1f00] sm:$0xff]
  %v1071 = vld [vmem:[%s1 + $0x1f08] sm:$0xff]
  %v1072 = vld [vmem:[%s1 + $0x1f10] sm:$0xff]
  %v1073 = vld [vmem:[%s1 + $0x1f18] sm:$0xff]
  %v1074 = vld [vmem:[%s1 + $0x1f20] sm:$0xff]
  %v1075 = vld [vmem:[%s1 + $0x1f28] sm:$0xff]
  %v1076 = vld [vmem:[%s1 + $0x1f30] sm:$0xff]
  %v1077 = vld [vmem:[%s1 + $0x1f38] sm:$0xff]
  %v1078 = vld [vmem:[%s1 + $0x1f40] sm:$0xff]
  %v1079 = vld [vmem:[%s1 + $0x1f48] sm:$0xff]
  %v1080 = vld [vmem:[%s1 + $0x1f50] sm:$0xff]
  %v1081 = vld [vmem:[%s1 + $0x1f58] sm:$0xff]
  %v1082 = vld [vmem:[%s1 + $0x1f60] sm:$0xff]
  %v1083 = vld [vmem:[%s1 + $0x1f68] sm:$0xff]
  %v1084 = vld [vmem:[%s1 + $0x1f70] sm:$0xff]
  %v1085 = vld [vmem:[%s1 + $0x1f78] sm:$0xff]
  %v1086 = vld [vmem:[%s1 + $0x1f80] sm:$0xff]
  %v1087 = vld [vmem:[%s1 + $0x1f88] sm:$0xff]
  %v1088 = vld [vmem:[%s1 + $0x1f90] sm:$0xff]
  %v1089 = vld [vmem:[%s1 + $0x1f98] sm:$0xff]
  %v1090 = vld [vmem:[%s1 + $0x1fa0] sm:$0xff]
  %v1091 = vld [vmem:[%s1 + $0x1fa8] sm:$0xff]
  %v1092 = vld [vmem:[%s1 + $0x1fb0] sm:$0xff]
  %v1093 = vld [vmem:[%s1 + $0x1fb8] sm:$0xff]
  %v1094 = vld [vmem:[%s1 + $0x1fc0] sm:$0xff]
  %v1095 = vld [vmem:[%s1 + $0x1fc8] sm:$0xff]
  %v1096 = vld [vmem:[%s1 + $0x1fd0] sm:$0xff]
  %v1097 = vld [vmem:[%s1 + $0x1fd8] sm:$0xff]
  %v1098 = vld [vmem:[%s1 + $0x1fe0] sm:$0xff]
  %v1099 = vld [vmem:[%s1 + $0x1fe8] sm:$0xff]
  %v1100 = vld [vmem:[%s1 + $0x1ff0] sm:$0xff]
  %v1101 = vld [vmem:[%s1 + $0x1ff8] sm:$0xff]
  %v1102 = vld [vmem:[%s2] sm:$0x1]
  %v1104 = vlaneseq
  %v1105 = vshrl.u32 %v1104, 7
  %v1106 = vsub.s32 0, %v1105
  %v1107 = vrot.slane %v1102, %v1106
  %1109 = vmatprep.subr.mxu0 0.0
  %1110 = vmatpush1.msra.mxu0 %v93
  %1111 = vmatprep.subr.mxu0 0.0
  %1112 = vmatpush1.msra.mxu0 %v92
  %1113 = vmatprep.subr.mxu0 0.0
  %1114 = vmatpush1.msra.mxu0 %v91
  %1115 = vmatprep.subr.mxu0 0.0
  %1116 = vmatpush1.msra.mxu0 %v90
  %1117 = vmatprep.subr.mxu0 0.0
  %1118 = vmatpush1.msra.mxu0 %v89
  %1119 = vmatprep.subr.mxu0 0.0
  %1120 = vmatpush1.msra.mxu0 %v88
  %1121 = vmatprep.subr.mxu0 0.0
  %1122 = vmatpush1.msra.mxu0 %v87
  %1123 = vmatprep.subr.mxu0 0.0
  %1124 = vmatpush1.msra.mxu0 %v86
  %1125 = vmatprep.subr.mxu0 0.0
  %1126 = vmatpush1.msra.mxu0 %v85
  %1127 = vmatprep.subr.mxu0 0.0
  %1128 = vmatpush1.msra.mxu0 %v84
  %1129 = vmatprep.subr.mxu0 0.0
  %1130 = vmatpush1.msra.mxu0 %v83
  %1131 = vmatprep.subr.mxu0 0.0
  %1132 = vmatpush1.msra.mxu0 %v82
  %1133 = vmatprep.subr.mxu0 0.0
  %1134 = vmatpush1.msra.mxu0 %v81
  %1135 = vmatprep.subr.mxu0 0.0
  %1136 = vmatpush1.msra.mxu0 %v80
  %1137 = vmatprep.subr.mxu0 0.0
  %1138 = vmatpush1.msra.mxu0 %v79
  %1139 = vmatprep.subr.mxu0 0.0
  %1140 = vmatpush1.msra.mxu0 %v78
  %1141 = vmatprep.subr.mxu0 0.0
  %1142 = vmatpush2.msra.mxu0 %v109
  %1143 = vmatprep.subr.mxu0 0.0
  %1144 = vmatpush2.msra.mxu0 %v108
  %1145 = vmatprep.subr.mxu0 0.0
  %1146 = vmatpush2.msra.mxu0 %v107
  %1147 = vmatprep.subr.mxu0 0.0
  %1148 = vmatpush2.msra.mxu0 %v106
  %1149 = vmatprep.subr.mxu0 0.0
  %1150 = vmatpush2.msra.mxu0 %v105
  %1151 = vmatprep.subr.mxu0 0.0
  %1152 = vmatpush2.msra.mxu0 %v104
  %1153 = vmatprep.subr.mxu0 0.0
  %1154 = vmatpush2.msra.mxu0 %v103
  %1155 = vmatprep.subr.mxu0 0.0
  %1156 = vmatpush2.msra.mxu0 %v102
  %1157 = vmatprep.subr.mxu0 0.0
  %1158 = vmatpush2.msra.mxu0 %v101
  %1159 = vmatprep.subr.mxu0 0.0
  %1160 = vmatpush2.msra.mxu0 %v100
  %1161 = vmatprep.subr.mxu0 0.0
  %1162 = vmatpush2.msra.mxu0 %v99
  %1163 = vmatprep.subr.mxu0 0.0
  %1164 = vmatpush2.msra.mxu0 %v98
  %1165 = vmatprep.subr.mxu0 0.0
  %1166 = vmatpush2.msra.mxu0 %v97
  %1167 = vmatprep.subr.mxu0 0.0
  %1168 = vmatpush2.msra.mxu0 %v96
  %1169 = vmatprep.subr.mxu0 0.0
  %1170 = vmatpush2.msra.mxu0 %v95
  %1171 = vmatprep.subr.mxu0 0.0
  %1172 = vmatpush2.msra.mxu0 %v94
  %1173 = vmatprep.mubr.f32.mxu0 %v15
  %1174 = vmatmul.mubr.f32.gmra.mxu0 %v14
  %v1175 = vpop.f32.mrf.mxu0
  %v1176 = vadd.f32 %v1107, %v1175
  %v1177 = vpop.f32.mrf.mxu0
  %1178 = vdwg.mxu0
  %1179 = vmatprep.subr.mxu0 0.0
  %1180 = vmatpush1.msra.mxu0 %v125
  %1181 = vmatprep.subr.mxu0 0.0
  %1182 = vmatpush1.msra.mxu0 %v124
  %1183 = vmatprep.subr.mxu0 0.0
  %1184 = vmatpush1.msra.mxu0 %v123
  %1185 = vmatprep.subr.mxu0 0.0
  %1186 = vmatpush1.msra.mxu0 %v122
  %1187 = vmatprep.subr.mxu0 0.0
  %1188 = vmatpush1.msra.mxu0 %v121
  %1189 = vmatprep.subr.mxu0 0.0
  %1190 = vmatpush1.msra.mxu0 %v120
  %1191 = vmatprep.subr.mxu0 0.0
  %1192 = vmatpush1.msra.mxu0 %v119
  %1193 = vmatprep.subr.mxu0 0.0
  %1194 = vmatpush1.msra.mxu0 %v118
  %1195 = vmatprep.subr.mxu0 0.0
  %1196 = vmatpush1.msra.mxu0 %v117
  %1197 = vmatprep.subr.mxu0 0.0
  %1198 = vmatpush1.msra.mxu0 %v116
  %1199 = vmatprep.subr.mxu0 0.0
  %1200 = vmatpush1.msra.mxu0 %v115
  %1201 = vmatprep.subr.mxu0 0.0
  %1202 = vmatpush1.msra.mxu0 %v114
  %1203 = vmatprep.subr.mxu0 0.0
  %1204 = vmatpush1.msra.mxu0 %v113
  %1205 = vmatprep.subr.mxu0 0.0
  %1206 = vmatpush1.msra.mxu0 %v112
  %1207 = vmatprep.subr.mxu0 0.0
  %1208 = vmatpush1.msra.mxu0 %v111
  %1209 = vmatprep.subr.mxu0 0.0
  %1210 = vmatpush1.msra.mxu0 %v110
  %1211 = vmatprep.subr.mxu0 0.0
  %1212 = vmatpush2.msra.mxu0 %v141
  %1213 = vmatprep.subr.mxu0 0.0
  %1214 = vmatpush2.msra.mxu0 %v140
  %1215 = vmatprep.subr.mxu0 0.0
  %1216 = vmatpush2.msra.mxu0 %v139
  %1217 = vmatprep.subr.mxu0 0.0
  %1218 = vmatpush2.msra.mxu0 %v138
  %1219 = vmatprep.subr.mxu0 0.0
  %1220 = vmatpush2.msra.mxu0 %v137
  %1221 = vmatprep.subr.mxu0 0.0
  %1222 = vmatpush2.msra.mxu0 %v136
  %1223 = vmatprep.subr.mxu0 0.0
  %1224 = vmatpush2.msra.mxu0 %v135
  %1225 = vmatprep.subr.mxu0 0.0
  %1226 = vmatpush2.msra.mxu0 %v134
  %1227 = vmatprep.subr.mxu0 0.0
  %1228 = vmatpush2.msra.mxu0 %v133
  %1229 = vmatprep.subr.mxu0 0.0
  %1230 = vmatpush2.msra.mxu0 %v132
  %1231 = vmatprep.subr.mxu0 0.0
  %1232 = vmatpush2.msra.mxu0 %v131
  %1233 = vmatprep.subr.mxu0 0.0
  %1234 = vmatpush2.msra.mxu0 %v130
  %1235 = vmatprep.subr.mxu0 0.0
  %1236 = vmatpush2.msra.mxu0 %v129
  %1237 = vmatprep.subr.mxu0 0.0
  %1238 = vmatpush2.msra.mxu0 %v128
  %1239 = vmatprep.subr.mxu0 0.0
  %1240 = vmatpush2.msra.mxu0 %v127
  %1241 = vmatprep.subr.mxu0 0.0
  %1242 = vmatpush2.msra.mxu0 %v126
  %1243 = vmatprep.mubr.f32.mxu0 %v17
  %1244 = vmatmul.mubr.f32.gmra.mxu0 %v16
  %v1245 = vpop.f32.mrf.mxu0
  %v1246 = vadd.f32 %v1176, %v1245
  %v1247 = vpop.f32.mrf.mxu0
  %1248 = vdwg.mxu0
  %1249 = vmatprep.subr.mxu0 0.0
  %1250 = vmatpush1.msra.mxu0 %v157
  %1251 = vmatprep.subr.mxu0 0.0
  %1252 = vmatpush1.msra.mxu0 %v156
  %1253 = vmatprep.subr.mxu0 0.0
  %1254 = vmatpush1.msra.mxu0 %v155
  %1255 = vmatprep.subr.mxu0 0.0
  %1256 = vmatpush1.msra.mxu0 %v154
  %1257 = vmatprep.subr.mxu0 0.0
  %1258 = vmatpush1.msra.mxu0 %v153
  %1259 = vmatprep.subr.mxu0 0.0
  %1260 = vmatpush1.msra.mxu0 %v152
  %1261 = vmatprep.subr.mxu0 0.0
  %1262 = vmatpush1.msra.mxu0 %v151
  %1263 = vmatprep.subr.mxu0 0.0
  %1264 = vmatpush1.msra.mxu0 %v150
  %1265 = vmatprep.subr.mxu0 0.0
  %1266 = vmatpush1.msra.mxu0 %v149
  %1267 = vmatprep.subr.mxu0 0.0
  %1268 = vmatpush1.msra.mxu0 %v148
  %1269 = vmatprep.subr.mxu0 0.0
  %1270 = vmatpush1.msra.mxu0 %v147
  %1271 = vmatprep.subr.mxu0 0.0
  %1272 = vmatpush1.msra.mxu0 %v146
  %1273 = vmatprep.subr.mxu0 0.0
  %1274 = vmatpush1.msra.mxu0 %v145
  %1275 = vmatprep.subr.mxu0 0.0
  %1276 = vmatpush1.msra.mxu0 %v144
  %1277 = vmatprep.subr.mxu0 0.0
  %1278 = vmatpush1.msra.mxu0 %v143
  %1279 = vmatprep.subr.mxu0 0.0
  %1280 = vmatpush1.msra.mxu0 %v142
  %1281 = vmatprep.subr.mxu0 0.0
  %1282 = vmatpush2.msra.mxu0 %v173
  %1283 = vmatprep.subr.mxu0 0.0
  %1284 = vmatpush2.msra.mxu0 %v172
  %1285 = vmatprep.subr.mxu0 0.0
  %1286 = vmatpush2.msra.mxu0 %v171
  %1287 = vmatprep.subr.mxu0 0.0
  %1288 = vmatpush2.msra.mxu0 %v170
  %1289 = vmatprep.subr.mxu0 0.0
  %1290 = vmatpush2.msra.mxu0 %v169
  %1291 = vmatprep.subr.mxu0 0.0
  %1292 = vmatpush2.msra.mxu0 %v168
  %1293 = vmatprep.subr.mxu0 0.0
  %1294 = vmatpush2.msra.mxu0 %v167
  %1295 = vmatprep.subr.mxu0 0.0
  %1296 = vmatpush2.msra.mxu0 %v166
  %1297 = vmatprep.subr.mxu0 0.0
  %1298 = vmatpush2.msra.mxu0 %v165
  %1299 = vmatprep.subr.mxu0 0.0
  %1300 = vmatpush2.msra.mxu0 %v164
  %1301 = vmatprep.subr.mxu0 0.0
  %1302 = vmatpush2.msra.mxu0 %v163
  %1303 = vmatprep.subr.mxu0 0.0
  %1304 = vmatpush2.msra.mxu0 %v162
  %1305 = vmatprep.subr.mxu0 0.0
  %1306 = vmatpush2.msra.mxu0 %v161
  %1307 = vmatprep.subr.mxu0 0.0
  %1308 = vmatpush2.msra.mxu0 %v160
  %1309 = vmatprep.subr.mxu0 0.0
  %1310 = vmatpush2.msra.mxu0 %v159
  %1311 = vmatprep.subr.mxu0 0.0
  %1312 = vmatpush2.msra.mxu0 %v158
  %1313 = vmatprep.mubr.f32.mxu0 %v19
  %1314 = vmatmul.mubr.f32.gmra.mxu0 %v18
  %v1315 = vpop.f32.mrf.mxu0
  %v1316 = vadd.f32 %v1246, %v1315
  %v1317 = vpop.f32.mrf.mxu0
  %1318 = vdwg.mxu0
  %1319 = vmatprep.subr.mxu0 0.0
  %1320 = vmatpush1.msra.mxu0 %v189
  %1321 = vmatprep.subr.mxu0 0.0
  %1322 = vmatpush1.msra.mxu0 %v188
  %1323 = vmatprep.subr.mxu0 0.0
  %1324 = vmatpush1.msra.mxu0 %v187
  %1325 = vmatprep.subr.mxu0 0.0
  %1326 = vmatpush1.msra.mxu0 %v186
  %1327 = vmatprep.subr.mxu0 0.0
  %1328 = vmatpush1.msra.mxu0 %v185
  %1329 = vmatprep.subr.mxu0 0.0
  %1330 = vmatpush1.msra.mxu0 %v184
  %1331 = vmatprep.subr.mxu0 0.0
  %1332 = vmatpush1.msra.mxu0 %v183
  %1333 = vmatprep.subr.mxu0 0.0
  %1334 = vmatpush1.msra.mxu0 %v182
  %1335 = vmatprep.subr.mxu0 0.0
  %1336 = vmatpush1.msra.mxu0 %v181
  %1337 = vmatprep.subr.mxu0 0.0
  %1338 = vmatpush1.msra.mxu0 %v180
  %1339 = vmatprep.subr.mxu0 0.0
  %1340 = vmatpush1.msra.mxu0 %v179
  %1341 = vmatprep.subr.mxu0 0.0
  %1342 = vmatpush1.msra.mxu0 %v178
  %1343 = vmatprep.subr.mxu0 0.0
  %1344 = vmatpush1.msra.mxu0 %v177
  %1345 = vmatprep.subr.mxu0 0.0
  %1346 = vmatpush1.msra.mxu0 %v176
  %1347 = vmatprep.subr.mxu0 0.0
  %1348 = vmatpush1.msra.mxu0 %v175
  %1349 = vmatprep.subr.mxu0 0.0
  %1350 = vmatpush1.msra.mxu0 %v174
  %1351 = vmatprep.subr.mxu0 0.0
  %1352 = vmatpush2.msra.mxu0 %v205
  %1353 = vmatprep.subr.mxu0 0.0
  %1354 = vmatpush2.msra.mxu0 %v204
  %1355 = vmatprep.subr.mxu0 0.0
  %1356 = vmatpush2.msra.mxu0 %v203
  %1357 = vmatprep.subr.mxu0 0.0
  %1358 = vmatpush2.msra.mxu0 %v202
  %1359 = vmatprep.subr.mxu0 0.0
  %1360 = vmatpush2.msra.mxu0 %v201
  %1361 = vmatprep.subr.mxu0 0.0
  %1362 = vmatpush2.msra.mxu0 %v200
  %1363 = vmatprep.subr.mxu0 0.0
  %1364 = vmatpush2.msra.mxu0 %v199
  %1365 = vmatprep.subr.mxu0 0.0
  %1366 = vmatpush2.msra.mxu0 %v198
  %1367 = vmatprep.subr.mxu0 0.0
  %1368 = vmatpush2.msra.mxu0 %v197
  %1369 = vmatprep.subr.mxu0 0.0
  %1370 = vmatpush2.msra.mxu0 %v196
  %1371 = vmatprep.subr.mxu0 0.0
  %1372 = vmatpush2.msra.mxu0 %v195
  %1373 = vmatprep.subr.mxu0 0.0
  %1374 = vmatpush2.msra.mxu0 %v194
  %1375 = vmatprep.subr.mxu0 0.0
  %1376 = vmatpush2.msra.mxu0 %v193
  %1377 = vmatprep.subr.mxu0 0.0
  %1378 = vmatpush2.msra.mxu0 %v192
  %1379 = vmatprep.subr.mxu0 0.0
  %1380 = vmatpush2.msra.mxu0 %v191
  %1381 = vmatprep.subr.mxu0 0.0
  %1382 = vmatpush2.msra.mxu0 %v190
  %1383 = vmatprep.mubr.f32.mxu0 %v21
  %1384 = vmatmul.mubr.f32.gmra.mxu0 %v20
  %v1385 = vpop.f32.mrf.mxu0
  %v1386 = vadd.f32 %v1316, %v1385
  %v1387 = vpop.f32.mrf.mxu0
  %1388 = vdwg.mxu0
  %1389 = vmatprep.subr.mxu0 0.0
  %1390 = vmatpush1.msra.mxu0 %v221
  %1391 = vmatprep.subr.mxu0 0.0
  %1392 = vmatpush1.msra.mxu0 %v220
  %1393 = vmatprep.subr.mxu0 0.0
  %1394 = vmatpush1.msra.mxu0 %v219
  %1395 = vmatprep.subr.mxu0 0.0
  %1396 = vmatpush1.msra.mxu0 %v218
  %1397 = vmatprep.subr.mxu0 0.0
  %1398 = vmatpush1.msra.mxu0 %v217
  %1399 = vmatprep.subr.mxu0 0.0
  %1400 = vmatpush1.msra.mxu0 %v216
  %1401 = vmatprep.subr.mxu0 0.0
  %1402 = vmatpush1.msra.mxu0 %v215
  %1403 = vmatprep.subr.mxu0 0.0
  %1404 = vmatpush1.msra.mxu0 %v214
  %1405 = vmatprep.subr.mxu0 0.0
  %1406 = vmatpush1.msra.mxu0 %v213
  %1407 = vmatprep.subr.mxu0 0.0
  %1408 = vmatpush1.msra.mxu0 %v212
  %1409 = vmatprep.subr.mxu0 0.0
  %1410 = vmatpush1.msra.mxu0 %v211
  %1411 = vmatprep.subr.mxu0 0.0
  %1412 = vmatpush1.msra.mxu0 %v210
  %1413 = vmatprep.subr.mxu0 0.0
  %1414 = vmatpush1.msra.mxu0 %v209
  %1415 = vmatprep.subr.mxu0 0.0
  %1416 = vmatpush1.msra.mxu0 %v208
  %1417 = vmatprep.subr.mxu0 0.0
  %1418 = vmatpush1.msra.mxu0 %v207
  %1419 = vmatprep.subr.mxu0 0.0
  %1420 = vmatpush1.msra.mxu0 %v206
  %1421 = vmatprep.subr.mxu0 0.0
  %1422 = vmatpush2.msra.mxu0 %v237
  %1423 = vmatprep.subr.mxu0 0.0
  %1424 = vmatpush2.msra.mxu0 %v236
  %1425 = vmatprep.subr.mxu0 0.0
  %1426 = vmatpush2.msra.mxu0 %v235
  %1427 = vmatprep.subr.mxu0 0.0
  %1428 = vmatpush2.msra.mxu0 %v234
  %1429 = vmatprep.subr.mxu0 0.0
  %1430 = vmatpush2.msra.mxu0 %v233
  %1431 = vmatprep.subr.mxu0 0.0
  %1432 = vmatpush2.msra.mxu0 %v232
  %1433 = vmatprep.subr.mxu0 0.0
  %1434 = vmatpush2.msra.mxu0 %v231
  %1435 = vmatprep.subr.mxu0 0.0
  %1436 = vmatpush2.msra.mxu0 %v230
  %1437 = vmatprep.subr.mxu0 0.0
  %1438 = vmatpush2.msra.mxu0 %v229
  %1439 = vmatprep.subr.mxu0 0.0
  %1440 = vmatpush2.msra.mxu0 %v228
  %1441 = vmatprep.subr.mxu0 0.0
  %1442 = vmatpush2.msra.mxu0 %v227
  %1443 = vmatprep.subr.mxu0 0.0
  %1444 = vmatpush2.msra.mxu0 %v226
  %1445 = vmatprep.subr.mxu0 0.0
  %1446 = vmatpush2.msra.mxu0 %v225
  %1447 = vmatprep.subr.mxu0 0.0
  %1448 = vmatpush2.msra.mxu0 %v224
  %1449 = vmatprep.subr.mxu0 0.0
  %1450 = vmatpush2.msra.mxu0 %v223
  %1451 = vmatprep.subr.mxu0 0.0
  %1452 = vmatpush2.msra.mxu0 %v222
  %1453 = vmatprep.mubr.f32.mxu0 %v23
  %1454 = vmatmul.mubr.f32.gmra.mxu0 %v22
  %v1455 = vpop.f32.mrf.mxu0
  %v1456 = vadd.f32 %v1386, %v1455
  %v1457 = vpop.f32.mrf.mxu0
  %1458 = vdwg.mxu0
  %1459 = vmatprep.subr.mxu0 0.0
  %1460 = vmatpush1.msra.mxu0 %v253
  %1461 = vmatprep.subr.mxu0 0.0
  %1462 = vmatpush1.msra.mxu0 %v252
  %1463 = vmatprep.subr.mxu0 0.0
  %1464 = vmatpush1.msra.mxu0 %v251
  %1465 = vmatprep.subr.mxu0 0.0
  %1466 = vmatpush1.msra.mxu0 %v250
  %1467 = vmatprep.subr.mxu0 0.0
  %1468 = vmatpush1.msra.mxu0 %v249
  %1469 = vmatprep.subr.mxu0 0.0
  %1470 = vmatpush1.msra.mxu0 %v248
  %1471 = vmatprep.subr.mxu0 0.0
  %1472 = vmatpush1.msra.mxu0 %v247
  %1473 = vmatprep.subr.mxu0 0.0
  %1474 = vmatpush1.msra.mxu0 %v246
  %1475 = vmatprep.subr.mxu0 0.0
  %1476 = vmatpush1.msra.mxu0 %v245
  %1477 = vmatprep.subr.mxu0 0.0
  %1478 = vmatpush1.msra.mxu0 %v244
  %1479 = vmatprep.subr.mxu0 0.0
  %1480 = vmatpush1.msra.mxu0 %v243
  %1481 = vmatprep.subr.mxu0 0.0
  %1482 = vmatpush1.msra.mxu0 %v242
  %1483 = vmatprep.subr.mxu0 0.0
  %1484 = vmatpush1.msra.mxu0 %v241
  %1485 = vmatprep.subr.mxu0 0.0
  %1486 = vmatpush1.msra.mxu0 %v240
  %1487 = vmatprep.subr.mxu0 0.0
  %1488 = vmatpush1.msra.mxu0 %v239
  %1489 = vmatprep.subr.mxu0 0.0
  %1490 = vmatpush1.msra.mxu0 %v238
  %1491 = vmatprep.subr.mxu0 0.0
  %1492 = vmatpush2.msra.mxu0 %v269
  %1493 = vmatprep.subr.mxu0 0.0
  %1494 = vmatpush2.msra.mxu0 %v268
  %1495 = vmatprep.subr.mxu0 0.0
  %1496 = vmatpush2.msra.mxu0 %v267
  %1497 = vmatprep.subr.mxu0 0.0
  %1498 = vmatpush2.msra.mxu0 %v266
  %1499 = vmatprep.subr.mxu0 0.0
  %1500 = vmatpush2.msra.mxu0 %v265
  %1501 = vmatprep.subr.mxu0 0.0
  %1502 = vmatpush2.msra.mxu0 %v264
  %1503 = vmatprep.subr.mxu0 0.0
  %1504 = vmatpush2.msra.mxu0 %v263
  %1505 = vmatprep.subr.mxu0 0.0
  %1506 = vmatpush2.msra.mxu0 %v262
  %1507 = vmatprep.subr.mxu0 0.0
  %1508 = vmatpush2.msra.mxu0 %v261
  %1509 = vmatprep.subr.mxu0 0.0
  %1510 = vmatpush2.msra.mxu0 %v260
  %1511 = vmatprep.subr.mxu0 0.0
  %1512 = vmatpush2.msra.mxu0 %v259
  %1513 = vmatprep.subr.mxu0 0.0
  %1514 = vmatpush2.msra.mxu0 %v258
  %1515 = vmatprep.subr.mxu0 0.0
  %1516 = vmatpush2.msra.mxu0 %v257
  %1517 = vmatprep.subr.mxu0 0.0
  %1518 = vmatpush2.msra.mxu0 %v256
  %1519 = vmatprep.subr.mxu0 0.0
  %1520 = vmatpush2.msra.mxu0 %v255
  %1521 = vmatprep.subr.mxu0 0.0
  %1522 = vmatpush2.msra.mxu0 %v254
  %1523 = vmatprep.mubr.f32.mxu0 %v25
  %1524 = vmatmul.mubr.f32.gmra.mxu0 %v24
  %v1525 = vpop.f32.mrf.mxu0
  %v1526 = vadd.f32 %v1456, %v1525
  %v1527 = vpop.f32.mrf.mxu0
  %1528 = vdwg.mxu0
  %1529 = vmatprep.subr.mxu0 0.0
  %1530 = vmatpush1.msra.mxu0 %v285
  %1531 = vmatprep.subr.mxu0 0.0
  %1532 = vmatpush1.msra.mxu0 %v284
  %1533 = vmatprep.subr.mxu0 0.0
  %1534 = vmatpush1.msra.mxu0 %v283
  %1535 = vmatprep.subr.mxu0 0.0
  %1536 = vmatpush1.msra.mxu0 %v282
  %1537 = vmatprep.subr.mxu0 0.0
  %1538 = vmatpush1.msra.mxu0 %v281
  %1539 = vmatprep.subr.mxu0 0.0
  %1540 = vmatpush1.msra.mxu0 %v280
  %1541 = vmatprep.subr.mxu0 0.0
  %1542 = vmatpush1.msra.mxu0 %v279
  %1543 = vmatprep.subr.mxu0 0.0
  %1544 = vmatpush1.msra.mxu0 %v278
  %1545 = vmatprep.subr.mxu0 0.0
  %1546 = vmatpush1.msra.mxu0 %v277
  %1547 = vmatprep.subr.mxu0 0.0
  %1548 = vmatpush1.msra.mxu0 %v276
  %1549 = vmatprep.subr.mxu0 0.0
  %1550 = vmatpush1.msra.mxu0 %v275
  %1551 = vmatprep.subr.mxu0 0.0
  %1552 = vmatpush1.msra.mxu0 %v274
  %1553 = vmatprep.subr.mxu0 0.0
  %1554 = vmatpush1.msra.mxu0 %v273
  %1555 = vmatprep.subr.mxu0 0.0
  %1556 = vmatpush1.msra.mxu0 %v272
  %1557 = vmatprep.subr.mxu0 0.0
  %1558 = vmatpush1.msra.mxu0 %v271
  %1559 = vmatprep.subr.mxu0 0.0
  %1560 = vmatpush1.msra.mxu0 %v270
  %1561 = vmatprep.subr.mxu0 0.0
  %1562 = vmatpush2.msra.mxu0 %v301
  %1563 = vmatprep.subr.mxu0 0.0
  %1564 = vmatpush2.msra.mxu0 %v300
  %1565 = vmatprep.subr.mxu0 0.0
  %1566 = vmatpush2.msra.mxu0 %v299
  %1567 = vmatprep.subr.mxu0 0.0
  %1568 = vmatpush2.msra.mxu0 %v298
  %1569 = vmatprep.subr.mxu0 0.0
  %1570 = vmatpush2.msra.mxu0 %v297
  %1571 = vmatprep.subr.mxu0 0.0
  %1572 = vmatpush2.msra.mxu0 %v296
  %1573 = vmatprep.subr.mxu0 0.0
  %1574 = vmatpush2.msra.mxu0 %v295
  %1575 = vmatprep.subr.mxu0 0.0
  %1576 = vmatpush2.msra.mxu0 %v294
  %1577 = vmatprep.subr.mxu0 0.0
  %1578 = vmatpush2.msra.mxu0 %v293
  %1579 = vmatprep.subr.mxu0 0.0
  %1580 = vmatpush2.msra.mxu0 %v292
  %1581 = vmatprep.subr.mxu0 0.0
  %1582 = vmatpush2.msra.mxu0 %v291
  %1583 = vmatprep.subr.mxu0 0.0
  %1584 = vmatpush2.msra.mxu0 %v290
  %1585 = vmatprep.subr.mxu0 0.0
  %1586 = vmatpush2.msra.mxu0 %v289
  %1587 = vmatprep.subr.mxu0 0.0
  %1588 = vmatpush2.msra.mxu0 %v288
  %1589 = vmatprep.subr.mxu0 0.0
  %1590 = vmatpush2.msra.mxu0 %v287
  %1591 = vmatprep.subr.mxu0 0.0
  %1592 = vmatpush2.msra.mxu0 %v286
  %1593 = vmatprep.mubr.f32.mxu0 %v27
  %1594 = vmatmul.mubr.f32.gmra.mxu0 %v26
  %v1595 = vpop.f32.mrf.mxu0
  %v1596 = vadd.f32 %v1526, %v1595
  %v1597 = vpop.f32.mrf.mxu0
  %1598 = vdwg.mxu0
  %1599 = vmatprep.subr.mxu0 0.0
  %1600 = vmatpush1.msra.mxu0 %v317
  %1601 = vmatprep.subr.mxu0 0.0
  %1602 = vmatpush1.msra.mxu0 %v316
  %1603 = vmatprep.subr.mxu0 0.0
  %1604 = vmatpush1.msra.mxu0 %v315
  %1605 = vmatprep.subr.mxu0 0.0
  %1606 = vmatpush1.msra.mxu0 %v314
  %1607 = vmatprep.subr.mxu0 0.0
  %1608 = vmatpush1.msra.mxu0 %v313
  %1609 = vmatprep.subr.mxu0 0.0
  %1610 = vmatpush1.msra.mxu0 %v312
  %1611 = vmatprep.subr.mxu0 0.0
  %1612 = vmatpush1.msra.mxu0 %v311
  %1613 = vmatprep.subr.mxu0 0.0
  %1614 = vmatpush1.msra.mxu0 %v310
  %1615 = vmatprep.subr.mxu0 0.0
  %1616 = vmatpush1.msra.mxu0 %v309
  %1617 = vmatprep.subr.mxu0 0.0
  %1618 = vmatpush1.msra.mxu0 %v308
  %1619 = vmatprep.subr.mxu0 0.0
  %1620 = vmatpush1.msra.mxu0 %v307
  %1621 = vmatprep.subr.mxu0 0.0
  %1622 = vmatpush1.msra.mxu0 %v306
  %1623 = vmatprep.subr.mxu0 0.0
  %1624 = vmatpush1.msra.mxu0 %v305
  %1625 = vmatprep.subr.mxu0 0.0
  %1626 = vmatpush1.msra.mxu0 %v304
  %1627 = vmatprep.subr.mxu0 0.0
  %1628 = vmatpush1.msra.mxu0 %v303
  %1629 = vmatprep.subr.mxu0 0.0
  %1630 = vmatpush1.msra.mxu0 %v302
  %1631 = vmatprep.subr.mxu0 0.0
  %1632 = vmatpush2.msra.mxu0 %v333
  %1633 = vmatprep.subr.mxu0 0.0
  %1634 = vmatpush2.msra.mxu0 %v332
  %1635 = vmatprep.subr.mxu0 0.0
  %1636 = vmatpush2.msra.mxu0 %v331
  %1637 = vmatprep.subr.mxu0 0.0
  %1638 = vmatpush2.msra.mxu0 %v330
  %1639 = vmatprep.subr.mxu0 0.0
  %1640 = vmatpush2.msra.mxu0 %v329
  %1641 = vmatprep.subr.mxu0 0.0
  %1642 = vmatpush2.msra.mxu0 %v328
  %1643 = vmatprep.subr.mxu0 0.0
  %1644 = vmatpush2.msra.mxu0 %v327
  %1645 = vmatprep.subr.mxu0 0.0
  %1646 = vmatpush2.msra.mxu0 %v326
  %1647 = vmatprep.subr.mxu0 0.0
  %1648 = vmatpush2.msra.mxu0 %v325
  %1649 = vmatprep.subr.mxu0 0.0
  %1650 = vmatpush2.msra.mxu0 %v324
  %1651 = vmatprep.subr.mxu0 0.0
  %1652 = vmatpush2.msra.mxu0 %v323
  %1653 = vmatprep.subr.mxu0 0.0
  %1654 = vmatpush2.msra.mxu0 %v322
  %1655 = vmatprep.subr.mxu0 0.0
  %1656 = vmatpush2.msra.mxu0 %v321
  %1657 = vmatprep.subr.mxu0 0.0
  %1658 = vmatpush2.msra.mxu0 %v320
  %1659 = vmatprep.subr.mxu0 0.0
  %1660 = vmatpush2.msra.mxu0 %v319
  %1661 = vmatprep.subr.mxu0 0.0
  %1662 = vmatpush2.msra.mxu0 %v318
  %1663 = vmatprep.mubr.f32.mxu0 %v29
  %1664 = vmatmul.mubr.f32.gmra.mxu0 %v28
  %v1665 = vpop.f32.mrf.mxu0
  %v1666 = vadd.f32 %v1596, %v1665
  %v1667 = vpop.f32.mrf.mxu0
  %1668 = vdwg.mxu0
  %1669 = vmatprep.subr.mxu0 0.0
  %1670 = vmatpush1.msra.mxu0 %v349
  %1671 = vmatprep.subr.mxu0 0.0
  %1672 = vmatpush1.msra.mxu0 %v348
  %1673 = vmatprep.subr.mxu0 0.0
  %1674 = vmatpush1.msra.mxu0 %v347
  %1675 = vmatprep.subr.mxu0 0.0
  %1676 = vmatpush1.msra.mxu0 %v346
  %1677 = vmatprep.subr.mxu0 0.0
  %1678 = vmatpush1.msra.mxu0 %v345
  %1679 = vmatprep.subr.mxu0 0.0
  %1680 = vmatpush1.msra.mxu0 %v344
  %1681 = vmatprep.subr.mxu0 0.0
  %1682 = vmatpush1.msra.mxu0 %v343
  %1683 = vmatprep.subr.mxu0 0.0
  %1684 = vmatpush1.msra.mxu0 %v342
  %1685 = vmatprep.subr.mxu0 0.0
  %1686 = vmatpush1.msra.mxu0 %v341
  %1687 = vmatprep.subr.mxu0 0.0
  %1688 = vmatpush1.msra.mxu0 %v340
  %1689 = vmatprep.subr.mxu0 0.0
  %1690 = vmatpush1.msra.mxu0 %v339
  %1691 = vmatprep.subr.mxu0 0.0
  %1692 = vmatpush1.msra.mxu0 %v338
  %1693 = vmatprep.subr.mxu0 0.0
  %1694 = vmatpush1.msra.mxu0 %v337
  %1695 = vmatprep.subr.mxu0 0.0
  %1696 = vmatpush1.msra.mxu0 %v336
  %1697 = vmatprep.subr.mxu0 0.0
  %1698 = vmatpush1.msra.mxu0 %v335
  %1699 = vmatprep.subr.mxu0 0.0
  %1700 = vmatpush1.msra.mxu0 %v334
  %1701 = vmatprep.subr.mxu0 0.0
  %1702 = vmatpush2.msra.mxu0 %v365
  %1703 = vmatprep.subr.mxu0 0.0
  %1704 = vmatpush2.msra.mxu0 %v364
  %1705 = vmatprep.subr.mxu0 0.0
  %1706 = vmatpush2.msra.mxu0 %v363
  %1707 = vmatprep.subr.mxu0 0.0
  %1708 = vmatpush2.msra.mxu0 %v362
  %1709 = vmatprep.subr.mxu0 0.0
  %1710 = vmatpush2.msra.mxu0 %v361
  %1711 = vmatprep.subr.mxu0 0.0
  %1712 = vmatpush2.msra.mxu0 %v360
  %1713 = vmatprep.subr.mxu0 0.0
  %1714 = vmatpush2.msra.mxu0 %v359
  %1715 = vmatprep.subr.mxu0 0.0
  %1716 = vmatpush2.msra.mxu0 %v358
  %1717 = vmatprep.subr.mxu0 0.0
  %1718 = vmatpush2.msra.mxu0 %v357
  %1719 = vmatprep.subr.mxu0 0.0
  %1720 = vmatpush2.msra.mxu0 %v356
  %1721 = vmatprep.subr.mxu0 0.0
  %1722 = vmatpush2.msra.mxu0 %v355
  %1723 = vmatprep.subr.mxu0 0.0
  %1724 = vmatpush2.msra.mxu0 %v354
  %1725 = vmatprep.subr.mxu0 0.0
  %1726 = vmatpush2.msra.mxu0 %v353
  %1727 = vmatprep.subr.mxu0 0.0
  %1728 = vmatpush2.msra.mxu0 %v352
  %1729 = vmatprep.subr.mxu0 0.0
  %1730 = vmatpush2.msra.mxu0 %v351
  %1731 = vmatprep.subr.mxu0 0.0
  %1732 = vmatpush2.msra.mxu0 %v350
  %1733 = vmatprep.mubr.f32.mxu0 %v31
  %1734 = vmatmul.mubr.f32.gmra.mxu0 %v30
  %v1735 = vpop.f32.mrf.mxu0
  %v1736 = vadd.f32 %v1666, %v1735
  %v1737 = vpop.f32.mrf.mxu0
  %1738 = vdwg.mxu0
  %1739 = vmatprep.subr.mxu0 0.0
  %1740 = vmatpush1.msra.mxu0 %v381
  %1741 = vmatprep.subr.mxu0 0.0
  %1742 = vmatpush1.msra.mxu0 %v380
  %1743 = vmatprep.subr.mxu0 0.0
  %1744 = vmatpush1.msra.mxu0 %v379
  %1745 = vmatprep.subr.mxu0 0.0
  %1746 = vmatpush1.msra.mxu0 %v378
  %1747 = vmatprep.subr.mxu0 0.0
  %1748 = vmatpush1.msra.mxu0 %v377
  %1749 = vmatprep.subr.mxu0 0.0
  %1750 = vmatpush1.msra.mxu0 %v376
  %1751 = vmatprep.subr.mxu0 0.0
  %1752 = vmatpush1.msra.mxu0 %v375
  %1753 = vmatprep.subr.mxu0 0.0
  %1754 = vmatpush1.msra.mxu0 %v374
  %1755 = vmatprep.subr.mxu0 0.0
  %1756 = vmatpush1.msra.mxu0 %v373
  %1757 = vmatprep.subr.mxu0 0.0
  %1758 = vmatpush1.msra.mxu0 %v372
  %1759 = vmatprep.subr.mxu0 0.0
  %1760 = vmatpush1.msra.mxu0 %v371
  %1761 = vmatprep.subr.mxu0 0.0
  %1762 = vmatpush1.msra.mxu0 %v370
  %1763 = vmatprep.subr.mxu0 0.0
  %1764 = vmatpush1.msra.mxu0 %v369
  %1765 = vmatprep.subr.mxu0 0.0
  %1766 = vmatpush1.msra.mxu0 %v368
  %1767 = vmatprep.subr.mxu0 0.0
  %1768 = vmatpush1.msra.mxu0 %v367
  %1769 = vmatprep.subr.mxu0 0.0
  %1770 = vmatpush1.msra.mxu0 %v366
  %1771 = vmatprep.subr.mxu0 0.0
  %1772 = vmatpush2.msra.mxu0 %v397
  %1773 = vmatprep.subr.mxu0 0.0
  %1774 = vmatpush2.msra.mxu0 %v396
  %1775 = vmatprep.subr.mxu0 0.0
  %1776 = vmatpush2.msra.mxu0 %v395
  %1777 = vmatprep.subr.mxu0 0.0
  %1778 = vmatpush2.msra.mxu0 %v394
  %1779 = vmatprep.subr.mxu0 0.0
  %1780 = vmatpush2.msra.mxu0 %v393
  %1781 = vmatprep.subr.mxu0 0.0
  %1782 = vmatpush2.msra.mxu0 %v392
  %1783 = vmatprep.subr.mxu0 0.0
  %1784 = vmatpush2.msra.mxu0 %v391
  %1785 = vmatprep.subr.mxu0 0.0
  %1786 = vmatpush2.msra.mxu0 %v390
  %1787 = vmatprep.subr.mxu0 0.0
  %1788 = vmatpush2.msra.mxu0 %v389
  %1789 = vmatprep.subr.mxu0 0.0
  %1790 = vmatpush2.msra.mxu0 %v388
  %1791 = vmatprep.subr.mxu0 0.0
  %1792 = vmatpush2.msra.mxu0 %v387
  %1793 = vmatprep.subr.mxu0 0.0
  %1794 = vmatpush2.msra.mxu0 %v386
  %1795 = vmatprep.subr.mxu0 0.0
  %1796 = vmatpush2.msra.mxu0 %v385
  %1797 = vmatprep.subr.mxu0 0.0
  %1798 = vmatpush2.msra.mxu0 %v384
  %1799 = vmatprep.subr.mxu0 0.0
  %1800 = vmatpush2.msra.mxu0 %v383
  %1801 = vmatprep.subr.mxu0 0.0
  %1802 = vmatpush2.msra.mxu0 %v382
  %1803 = vmatprep.mubr.f32.mxu0 %v33
  %1804 = vmatmul.mubr.f32.gmra.mxu0 %v32
  %v1805 = vpop.f32.mrf.mxu0
  %v1806 = vadd.f32 %v1736, %v1805
  %v1807 = vpop.f32.mrf.mxu0
  %1808 = vdwg.mxu0
  %1809 = vmatprep.subr.mxu0 0.0
  %1810 = vmatpush1.msra.mxu0 %v413
  %1811 = vmatprep.subr.mxu0 0.0
  %1812 = vmatpush1.msra.mxu0 %v412
  %1813 = vmatprep.subr.mxu0 0.0
  %1814 = vmatpush1.msra.mxu0 %v411
  %1815 = vmatprep.subr.mxu0 0.0
  %1816 = vmatpush1.msra.mxu0 %v410
  %1817 = vmatprep.subr.mxu0 0.0
  %1818 = vmatpush1.msra.mxu0 %v409
  %1819 = vmatprep.subr.mxu0 0.0
  %1820 = vmatpush1.msra.mxu0 %v408
  %1821 = vmatprep.subr.mxu0 0.0
  %1822 = vmatpush1.msra.mxu0 %v407
  %1823 = vmatprep.subr.mxu0 0.0
  %1824 = vmatpush1.msra.mxu0 %v406
  %1825 = vmatprep.subr.mxu0 0.0
  %1826 = vmatpush1.msra.mxu0 %v405
  %1827 = vmatprep.subr.mxu0 0.0
  %1828 = vmatpush1.msra.mxu0 %v404
  %1829 = vmatprep.subr.mxu0 0.0
  %1830 = vmatpush1.msra.mxu0 %v403
  %1831 = vmatprep.subr.mxu0 0.0
  %1832 = vmatpush1.msra.mxu0 %v402
  %1833 = vmatprep.subr.mxu0 0.0
  %1834 = vmatpush1.msra.mxu0 %v401
  %1835 = vmatprep.subr.mxu0 0.0
  %1836 = vmatpush1.msra.mxu0 %v400
  %1837 = vmatprep.subr.mxu0 0.0
  %1838 = vmatpush1.msra.mxu0 %v399
  %1839 = vmatprep.subr.mxu0 0.0
  %1840 = vmatpush1.msra.mxu0 %v398
  %1841 = vmatprep.subr.mxu0 0.0
  %1842 = vmatpush2.msra.mxu0 %v429
  %1843 = vmatprep.subr.mxu0 0.0
  %1844 = vmatpush2.msra.mxu0 %v428
  %1845 = vmatprep.subr.mxu0 0.0
  %1846 = vmatpush2.msra.mxu0 %v427
  %1847 = vmatprep.subr.mxu0 0.0
  %1848 = vmatpush2.msra.mxu0 %v426
  %1849 = vmatprep.subr.mxu0 0.0
  %1850 = vmatpush2.msra.mxu0 %v425
  %1851 = vmatprep.subr.mxu0 0.0
  %1852 = vmatpush2.msra.mxu0 %v424
  %1853 = vmatprep.subr.mxu0 0.0
  %1854 = vmatpush2.msra.mxu0 %v423
  %1855 = vmatprep.subr.mxu0 0.0
  %1856 = vmatpush2.msra.mxu0 %v422
  %1857 = vmatprep.subr.mxu0 0.0
  %1858 = vmatpush2.msra.mxu0 %v421
  %1859 = vmatprep.subr.mxu0 0.0
  %1860 = vmatpush2.msra.mxu0 %v420
  %1861 = vmatprep.subr.mxu0 0.0
  %1862 = vmatpush2.msra.mxu0 %v419
  %1863 = vmatprep.subr.mxu0 0.0
  %1864 = vmatpush2.msra.mxu0 %v418
  %1865 = vmatprep.subr.mxu0 0.0
  %1866 = vmatpush2.msra.mxu0 %v417
  %1867 = vmatprep.subr.mxu0 0.0
  %1868 = vmatpush2.msra.mxu0 %v416
  %1869 = vmatprep.subr.mxu0 0.0
  %1870 = vmatpush2.msra.mxu0 %v415
  %1871 = vmatprep.subr.mxu0 0.0
  %1872 = vmatpush2.msra.mxu0 %v414
  %1873 = vmatprep.mubr.f32.mxu0 %v35
  %1874 = vmatmul.mubr.f32.gmra.mxu0 %v34
  %v1875 = vpop.f32.mrf.mxu0
  %v1876 = vadd.f32 %v1806, %v1875
  %v1877 = vpop.f32.mrf.mxu0
  %1878 = vdwg.mxu0
  %1879 = vmatprep.subr.mxu0 0.0
  %1880 = vmatpush1.msra.mxu0 %v445
  %1881 = vmatprep.subr.mxu0 0.0
  %1882 = vmatpush1.msra.mxu0 %v444
  %1883 = vmatprep.subr.mxu0 0.0
  %1884 = vmatpush1.msra.mxu0 %v443
  %1885 = vmatprep.subr.mxu0 0.0
  %1886 = vmatpush1.msra.mxu0 %v442
  %1887 = vmatprep.subr.mxu0 0.0
  %1888 = vmatpush1.msra.mxu0 %v441
  %1889 = vmatprep.subr.mxu0 0.0
  %1890 = vmatpush1.msra.mxu0 %v440
  %1891 = vmatprep.subr.mxu0 0.0
  %1892 = vmatpush1.msra.mxu0 %v439
  %1893 = vmatprep.subr.mxu0 0.0
  %1894 = vmatpush1.msra.mxu0 %v438
  %1895 = vmatprep.subr.mxu0 0.0
  %1896 = vmatpush1.msra.mxu0 %v437
  %1897 = vmatprep.subr.mxu0 0.0
  %1898 = vmatpush1.msra.mxu0 %v436
  %1899 = vmatprep.subr.mxu0 0.0
  %1900 = vmatpush1.msra.mxu0 %v435
  %1901 = vmatprep.subr.mxu0 0.0
  %1902 = vmatpush1.msra.mxu0 %v434
  %1903 = vmatprep.subr.mxu0 0.0
  %1904 = vmatpush1.msra.mxu0 %v433
  %1905 = vmatprep.subr.mxu0 0.0
  %1906 = vmatpush1.msra.mxu0 %v432
  %1907 = vmatprep.subr.mxu0 0.0
  %1908 = vmatpush1.msra.mxu0 %v431
  %1909 = vmatprep.subr.mxu0 0.0
  %1910 = vmatpush1.msra.mxu0 %v430
  %1911 = vmatprep.subr.mxu0 0.0
  %1912 = vmatpush2.msra.mxu0 %v461
  %1913 = vmatprep.subr.mxu0 0.0
  %1914 = vmatpush2.msra.mxu0 %v460
  %1915 = vmatprep.subr.mxu0 0.0
  %1916 = vmatpush2.msra.mxu0 %v459
  %1917 = vmatprep.subr.mxu0 0.0
  %1918 = vmatpush2.msra.mxu0 %v458
  %1919 = vmatprep.subr.mxu0 0.0
  %1920 = vmatpush2.msra.mxu0 %v457
  %1921 = vmatprep.subr.mxu0 0.0
  %1922 = vmatpush2.msra.mxu0 %v456
  %1923 = vmatprep.subr.mxu0 0.0
  %1924 = vmatpush2.msra.mxu0 %v455
  %1925 = vmatprep.subr.mxu0 0.0
  %1926 = vmatpush2.msra.mxu0 %v454
  %1927 = vmatprep.subr.mxu0 0.0
  %1928 = vmatpush2.msra.mxu0 %v453
  %1929 = vmatprep.subr.mxu0 0.0
  %1930 = vmatpush2.msra.mxu0 %v452
  %1931 = vmatprep.subr.mxu0 0.0
  %1932 = vmatpush2.msra.mxu0 %v451
  %1933 = vmatprep.subr.mxu0 0.0
  %1934 = vmatpush2.msra.mxu0 %v450
  %1935 = vmatprep.subr.mxu0 0.0
  %1936 = vmatpush2.msra.mxu0 %v449
  %1937 = vmatprep.subr.mxu0 0.0
  %1938 = vmatpush2.msra.mxu0 %v448
  %1939 = vmatprep.subr.mxu0 0.0
  %1940 = vmatpush2.msra.mxu0 %v447
  %1941 = vmatprep.subr.mxu0 0.0
  %1942 = vmatpush2.msra.mxu0 %v446
  %1943 = vmatprep.mubr.f32.mxu0 %v37
  %1944 = vmatmul.mubr.f32.gmra.mxu0 %v36
  %v1945 = vpop.f32.mrf.mxu0
  %v1946 = vadd.f32 %v1876, %v1945
  %v1947 = vpop.f32.mrf.mxu0
  %1948 = vdwg.mxu0
  %1949 = vmatprep.subr.mxu0 0.0
  %1950 = vmatpush1.msra.mxu0 %v477
  %1951 = vmatprep.subr.mxu0 0.0
  %1952 = vmatpush1.msra.mxu0 %v476
  %1953 = vmatprep.subr.mxu0 0.0
  %1954 = vmatpush1.msra.mxu0 %v475
  %1955 = vmatprep.subr.mxu0 0.0
  %1956 = vmatpush1.msra.mxu0 %v474
  %1957 = vmatprep.subr.mxu0 0.0
  %1958 = vmatpush1.msra.mxu0 %v473
  %1959 = vmatprep.subr.mxu0 0.0
  %1960 = vmatpush1.msra.mxu0 %v472
  %1961 = vmatprep.subr.mxu0 0.0
  %1962 = vmatpush1.msra.mxu0 %v471
  %1963 = vmatprep.subr.mxu0 0.0
  %1964 = vmatpush1.msra.mxu0 %v470
  %1965 = vmatprep.subr.mxu0 0.0
  %1966 = vmatpush1.msra.mxu0 %v469
  %1967 = vmatprep.subr.mxu0 0.0
  %1968 = vmatpush1.msra.mxu0 %v468
  %1969 = vmatprep.subr.mxu0 0.0
  %1970 = vmatpush1.msra.mxu0 %v467
  %1971 = vmatprep.subr.mxu0 0.0
  %1972 = vmatpush1.msra.mxu0 %v466
  %1973 = vmatprep.subr.mxu0 0.0
  %1974 = vmatpush1.msra.mxu0 %v465
  %1975 = vmatprep.subr.mxu0 0.0
  %1976 = vmatpush1.msra.mxu0 %v464
  %1977 = vmatprep.subr.mxu0 0.0
  %1978 = vmatpush1.msra.mxu0 %v463
  %1979 = vmatprep.subr.mxu0 0.0
  %1980 = vmatpush1.msra.mxu0 %v462
  %1981 = vmatprep.subr.mxu0 0.0
  %1982 = vmatpush2.msra.mxu0 %v493
  %1983 = vmatprep.subr.mxu0 0.0
  %1984 = vmatpush2.msra.mxu0 %v492
  %1985 = vmatprep.subr.mxu0 0.0
  %1986 = vmatpush2.msra.mxu0 %v491
  %1987 = vmatprep.subr.mxu0 0.0
  %1988 = vmatpush2.msra.mxu0 %v490
  %1989 = vmatprep.subr.mxu0 0.0
  %1990 = vmatpush2.msra.mxu0 %v489
  %1991 = vmatprep.subr.mxu0 0.0
  %1992 = vmatpush2.msra.mxu0 %v488
  %1993 = vmatprep.subr.mxu0 0.0
  %1994 = vmatpush2.msra.mxu0 %v487
  %1995 = vmatprep.subr.mxu0 0.0
  %1996 = vmatpush2.msra.mxu0 %v486
  %1997 = vmatprep.subr.mxu0 0.0
  %1998 = vmatpush2.msra.mxu0 %v485
  %1999 = vmatprep.subr.mxu0 0.0
  %2000 = vmatpush2.msra.mxu0 %v484
  %2001 = vmatprep.subr.mxu0 0.0
  %2002 = vmatpush2.msra.mxu0 %v483
  %2003 = vmatprep.subr.mxu0 0.0
  %2004 = vmatpush2.msra.mxu0 %v482
  %2005 = vmatprep.subr.mxu0 0.0
  %2006 = vmatpush2.msra.mxu0 %v481
  %2007 = vmatprep.subr.mxu0 0.0
  %2008 = vmatpush2.msra.mxu0 %v480
  %2009 = vmatprep.subr.mxu0 0.0
  %2010 = vmatpush2.msra.mxu0 %v479
  %2011 = vmatprep.subr.mxu0 0.0
  %2012 = vmatpush2.msra.mxu0 %v478
  %2013 = vmatprep.mubr.f32.mxu0 %v39
  %2014 = vmatmul.mubr.f32.gmra.mxu0 %v38
  %v2015 = vpop.f32.mrf.mxu0
  %v2016 = vadd.f32 %v1946, %v2015
  %v2017 = vpop.f32.mrf.mxu0
  %2018 = vdwg.mxu0
  %2019 = vmatprep.subr.mxu0 0.0
  %2020 = vmatpush1.msra.mxu0 %v509
  %2021 = vmatprep.subr.mxu0 0.0
  %2022 = vmatpush1.msra.mxu0 %v508
  %2023 = vmatprep.subr.mxu0 0.0
  %2024 = vmatpush1.msra.mxu0 %v507
  %2025 = vmatprep.subr.mxu0 0.0
  %2026 = vmatpush1.msra.mxu0 %v506
  %2027 = vmatprep.subr.mxu0 0.0
  %2028 = vmatpush1.msra.mxu0 %v505
  %2029 = vmatprep.subr.mxu0 0.0
  %2030 = vmatpush1.msra.mxu0 %v504
  %2031 = vmatprep.subr.mxu0 0.0
  %2032 = vmatpush1.msra.mxu0 %v503
  %2033 = vmatprep.subr.mxu0 0.0
  %2034 = vmatpush1.msra.mxu0 %v502
  %2035 = vmatprep.subr.mxu0 0.0
  %2036 = vmatpush1.msra.mxu0 %v501
  %2037 = vmatprep.subr.mxu0 0.0
  %2038 = vmatpush1.msra.mxu0 %v500
  %2039 = vmatprep.subr.mxu0 0.0
  %2040 = vmatpush1.msra.mxu0 %v499
  %2041 = vmatprep.subr.mxu0 0.0
  %2042 = vmatpush1.msra.mxu0 %v498
  %2043 = vmatprep.subr.mxu0 0.0
  %2044 = vmatpush1.msra.mxu0 %v497
  %2045 = vmatprep.subr.mxu0 0.0
  %2046 = vmatpush1.msra.mxu0 %v496
  %2047 = vmatprep.subr.mxu0 0.0
  %2048 = vmatpush1.msra.mxu0 %v495
  %2049 = vmatprep.subr.mxu0 0.0
  %2050 = vmatpush1.msra.mxu0 %v494
  %2051 = vmatprep.subr.mxu0 0.0
  %2052 = vmatpush2.msra.mxu0 %v525
  %2053 = vmatprep.subr.mxu0 0.0
  %2054 = vmatpush2.msra.mxu0 %v524
  %2055 = vmatprep.subr.mxu0 0.0
  %2056 = vmatpush2.msra.mxu0 %v523
  %2057 = vmatprep.subr.mxu0 0.0
  %2058 = vmatpush2.msra.mxu0 %v522
  %2059 = vmatprep.subr.mxu0 0.0
  %2060 = vmatpush2.msra.mxu0 %v521
  %2061 = vmatprep.subr.mxu0 0.0
  %2062 = vmatpush2.msra.mxu0 %v520
  %2063 = vmatprep.subr.mxu0 0.0
  %2064 = vmatpush2.msra.mxu0 %v519
  %2065 = vmatprep.subr.mxu0 0.0
  %2066 = vmatpush2.msra.mxu0 %v518
  %2067 = vmatprep.subr.mxu0 0.0
  %2068 = vmatpush2.msra.mxu0 %v517
  %2069 = vmatprep.subr.mxu0 0.0
  %2070 = vmatpush2.msra.mxu0 %v516
  %2071 = vmatprep.subr.mxu0 0.0
  %2072 = vmatpush2.msra.mxu0 %v515
  %2073 = vmatprep.subr.mxu0 0.0
  %2074 = vmatpush2.msra.mxu0 %v514
  %2075 = vmatprep.subr.mxu0 0.0
  %2076 = vmatpush2.msra.mxu0 %v513
  %2077 = vmatprep.subr.mxu0 0.0
  %2078 = vmatpush2.msra.mxu0 %v512
  %2079 = vmatprep.subr.mxu0 0.0
  %2080 = vmatpush2.msra.mxu0 %v511
  %2081 = vmatprep.subr.mxu0 0.0
  %2082 = vmatpush2.msra.mxu0 %v510
  %2083 = vmatprep.mubr.f32.mxu0 %v41
  %2084 = vmatmul.mubr.f32.gmra.mxu0 %v40
  %v2085 = vpop.f32.mrf.mxu0
  %v2086 = vadd.f32 %v2016, %v2085
  %v2087 = vpop.f32.mrf.mxu0
  %2088 = vdwg.mxu0
  %2089 = vmatprep.subr.mxu0 0.0
  %2090 = vmatpush1.msra.mxu0 %v541
  %2091 = vmatprep.subr.mxu0 0.0
  %2092 = vmatpush1.msra.mxu0 %v540
  %2093 = vmatprep.subr.mxu0 0.0
  %2094 = vmatpush1.msra.mxu0 %v539
  %2095 = vmatprep.subr.mxu0 0.0
  %2096 = vmatpush1.msra.mxu0 %v538
  %2097 = vmatprep.subr.mxu0 0.0
  %2098 = vmatpush1.msra.mxu0 %v537
  %2099 = vmatprep.subr.mxu0 0.0
  %2100 = vmatpush1.msra.mxu0 %v536
  %2101 = vmatprep.subr.mxu0 0.0
  %2102 = vmatpush1.msra.mxu0 %v535
  %2103 = vmatprep.subr.mxu0 0.0
  %2104 = vmatpush1.msra.mxu0 %v534
  %2105 = vmatprep.subr.mxu0 0.0
  %2106 = vmatpush1.msra.mxu0 %v533
  %2107 = vmatprep.subr.mxu0 0.0
  %2108 = vmatpush1.msra.mxu0 %v532
  %2109 = vmatprep.subr.mxu0 0.0
  %2110 = vmatpush1.msra.mxu0 %v531
  %2111 = vmatprep.subr.mxu0 0.0
  %2112 = vmatpush1.msra.mxu0 %v530
  %2113 = vmatprep.subr.mxu0 0.0
  %2114 = vmatpush1.msra.mxu0 %v529
  %2115 = vmatprep.subr.mxu0 0.0
  %2116 = vmatpush1.msra.mxu0 %v528
  %2117 = vmatprep.subr.mxu0 0.0
  %2118 = vmatpush1.msra.mxu0 %v527
  %2119 = vmatprep.subr.mxu0 0.0
  %2120 = vmatpush1.msra.mxu0 %v526
  %2121 = vmatprep.subr.mxu0 0.0
  %2122 = vmatpush2.msra.mxu0 %v557
  %2123 = vmatprep.subr.mxu0 0.0
  %2124 = vmatpush2.msra.mxu0 %v556
  %2125 = vmatprep.subr.mxu0 0.0
  %2126 = vmatpush2.msra.mxu0 %v555
  %2127 = vmatprep.subr.mxu0 0.0
  %2128 = vmatpush2.msra.mxu0 %v554
  %2129 = vmatprep.subr.mxu0 0.0
  %2130 = vmatpush2.msra.mxu0 %v553
  %2131 = vmatprep.subr.mxu0 0.0
  %2132 = vmatpush2.msra.mxu0 %v552
  %2133 = vmatprep.subr.mxu0 0.0
  %2134 = vmatpush2.msra.mxu0 %v551
  %2135 = vmatprep.subr.mxu0 0.0
  %2136 = vmatpush2.msra.mxu0 %v550
  %2137 = vmatprep.subr.mxu0 0.0
  %2138 = vmatpush2.msra.mxu0 %v549
  %2139 = vmatprep.subr.mxu0 0.0
  %2140 = vmatpush2.msra.mxu0 %v548
  %2141 = vmatprep.subr.mxu0 0.0
  %2142 = vmatpush2.msra.mxu0 %v547
  %2143 = vmatprep.subr.mxu0 0.0
  %2144 = vmatpush2.msra.mxu0 %v546
  %2145 = vmatprep.subr.mxu0 0.0
  %2146 = vmatpush2.msra.mxu0 %v545
  %2147 = vmatprep.subr.mxu0 0.0
  %2148 = vmatpush2.msra.mxu0 %v544
  %2149 = vmatprep.subr.mxu0 0.0
  %2150 = vmatpush2.msra.mxu0 %v543
  %2151 = vmatprep.subr.mxu0 0.0
  %2152 = vmatpush2.msra.mxu0 %v542
  %2153 = vmatprep.mubr.f32.mxu0 %v43
  %2154 = vmatmul.mubr.f32.gmra.mxu0 %v42
  %v2155 = vpop.f32.mrf.mxu0
  %v2156 = vadd.f32 %v2086, %v2155
  %v2157 = vpop.f32.mrf.mxu0
  %2158 = vdwg.mxu0
  %2159 = vmatprep.subr.mxu0 0.0
  %2160 = vmatpush1.msra.mxu0 %v573
  %2161 = vmatprep.subr.mxu0 0.0
  %2162 = vmatpush1.msra.mxu0 %v572
  %2163 = vmatprep.subr.mxu0 0.0
  %2164 = vmatpush1.msra.mxu0 %v571
  %2165 = vmatprep.subr.mxu0 0.0
  %2166 = vmatpush1.msra.mxu0 %v570
  %2167 = vmatprep.subr.mxu0 0.0
  %2168 = vmatpush1.msra.mxu0 %v569
  %2169 = vmatprep.subr.mxu0 0.0
  %2170 = vmatpush1.msra.mxu0 %v568
  %2171 = vmatprep.subr.mxu0 0.0
  %2172 = vmatpush1.msra.mxu0 %v567
  %2173 = vmatprep.subr.mxu0 0.0
  %2174 = vmatpush1.msra.mxu0 %v566
  %2175 = vmatprep.subr.mxu0 0.0
  %2176 = vmatpush1.msra.mxu0 %v565
  %2177 = vmatprep.subr.mxu0 0.0
  %2178 = vmatpush1.msra.mxu0 %v564
  %2179 = vmatprep.subr.mxu0 0.0
  %2180 = vmatpush1.msra.mxu0 %v563
  %2181 = vmatprep.subr.mxu0 0.0
  %2182 = vmatpush1.msra.mxu0 %v562
  %2183 = vmatprep.subr.mxu0 0.0
  %2184 = vmatpush1.msra.mxu0 %v561
  %2185 = vmatprep.subr.mxu0 0.0
  %2186 = vmatpush1.msra.mxu0 %v560
  %2187 = vmatprep.subr.mxu0 0.0
  %2188 = vmatpush1.msra.mxu0 %v559
  %2189 = vmatprep.subr.mxu0 0.0
  %2190 = vmatpush1.msra.mxu0 %v558
  %2191 = vmatprep.subr.mxu0 0.0
  %2192 = vmatpush2.msra.mxu0 %v589
  %2193 = vmatprep.subr.mxu0 0.0
  %2194 = vmatpush2.msra.mxu0 %v588
  %2195 = vmatprep.subr.mxu0 0.0
  %2196 = vmatpush2.msra.mxu0 %v587
  %2197 = vmatprep.subr.mxu0 0.0
  %2198 = vmatpush2.msra.mxu0 %v586
  %2199 = vmatprep.subr.mxu0 0.0
  %2200 = vmatpush2.msra.mxu0 %v585
  %2201 = vmatprep.subr.mxu0 0.0
  %2202 = vmatpush2.msra.mxu0 %v584
  %2203 = vmatprep.subr.mxu0 0.0
  %2204 = vmatpush2.msra.mxu0 %v583
  %2205 = vmatprep.subr.mxu0 0.0
  %2206 = vmatpush2.msra.mxu0 %v582
  %2207 = vmatprep.subr.mxu0 0.0
  %2208 = vmatpush2.msra.mxu0 %v581
  %2209 = vmatprep.subr.mxu0 0.0
  %2210 = vmatpush2.msra.mxu0 %v580
  %2211 = vmatprep.subr.mxu0 0.0
  %2212 = vmatpush2.msra.mxu0 %v579
  %2213 = vmatprep.subr.mxu0 0.0
  %2214 = vmatpush2.msra.mxu0 %v578
  %2215 = vmatprep.subr.mxu0 0.0
  %2216 = vmatpush2.msra.mxu0 %v577
  %2217 = vmatprep.subr.mxu0 0.0
  %2218 = vmatpush2.msra.mxu0 %v576
  %2219 = vmatprep.subr.mxu0 0.0
  %2220 = vmatpush2.msra.mxu0 %v575
  %2221 = vmatprep.subr.mxu0 0.0
  %2222 = vmatpush2.msra.mxu0 %v574
  %2223 = vmatprep.mubr.f32.mxu0 %v45
  %2224 = vmatmul.mubr.f32.gmra.mxu0 %v44
  %v2225 = vpop.f32.mrf.mxu0
  %v2226 = vadd.f32 %v2156, %v2225
  %v2227 = vpop.f32.mrf.mxu0
  %2228 = vdwg.mxu0
  %2229 = vmatprep.subr.mxu0 0.0
  %2230 = vmatpush1.msra.mxu0 %v605
  %2231 = vmatprep.subr.mxu0 0.0
  %2232 = vmatpush1.msra.mxu0 %v604
  %2233 = vmatprep.subr.mxu0 0.0
  %2234 = vmatpush1.msra.mxu0 %v603
  %2235 = vmatprep.subr.mxu0 0.0
  %2236 = vmatpush1.msra.mxu0 %v602
  %2237 = vmatprep.subr.mxu0 0.0
  %2238 = vmatpush1.msra.mxu0 %v601
  %2239 = vmatprep.subr.mxu0 0.0
  %2240 = vmatpush1.msra.mxu0 %v600
  %2241 = vmatprep.subr.mxu0 0.0
  %2242 = vmatpush1.msra.mxu0 %v599
  %2243 = vmatprep.subr.mxu0 0.0
  %2244 = vmatpush1.msra.mxu0 %v598
  %2245 = vmatprep.subr.mxu0 0.0
  %2246 = vmatpush1.msra.mxu0 %v597
  %2247 = vmatprep.subr.mxu0 0.0
  %2248 = vmatpush1.msra.mxu0 %v596
  %2249 = vmatprep.subr.mxu0 0.0
  %2250 = vmatpush1.msra.mxu0 %v595
  %2251 = vmatprep.subr.mxu0 0.0
  %2252 = vmatpush1.msra.mxu0 %v594
  %2253 = vmatprep.subr.mxu0 0.0
  %2254 = vmatpush1.msra.mxu0 %v593
  %2255 = vmatprep.subr.mxu0 0.0
  %2256 = vmatpush1.msra.mxu0 %v592
  %2257 = vmatprep.subr.mxu0 0.0
  %2258 = vmatpush1.msra.mxu0 %v591
  %2259 = vmatprep.subr.mxu0 0.0
  %2260 = vmatpush1.msra.mxu0 %v590
  %2261 = vmatprep.subr.mxu0 0.0
  %2262 = vmatpush2.msra.mxu0 %v621
  %2263 = vmatprep.subr.mxu0 0.0
  %2264 = vmatpush2.msra.mxu0 %v620
  %2265 = vmatprep.subr.mxu0 0.0
  %2266 = vmatpush2.msra.mxu0 %v619
  %2267 = vmatprep.subr.mxu0 0.0
  %2268 = vmatpush2.msra.mxu0 %v618
  %2269 = vmatprep.subr.mxu0 0.0
  %2270 = vmatpush2.msra.mxu0 %v617
  %2271 = vmatprep.subr.mxu0 0.0
  %2272 = vmatpush2.msra.mxu0 %v616
  %2273 = vmatprep.subr.mxu0 0.0
  %2274 = vmatpush2.msra.mxu0 %v615
  %2275 = vmatprep.subr.mxu0 0.0
  %2276 = vmatpush2.msra.mxu0 %v614
  %2277 = vmatprep.subr.mxu0 0.0
  %2278 = vmatpush2.msra.mxu0 %v613
  %2279 = vmatprep.subr.mxu0 0.0
  %2280 = vmatpush2.msra.mxu0 %v612
  %2281 = vmatprep.subr.mxu0 0.0
  %2282 = vmatpush2.msra.mxu0 %v611
  %2283 = vmatprep.subr.mxu0 0.0
  %2284 = vmatpush2.msra.mxu0 %v610
  %2285 = vmatprep.subr.mxu0 0.0
  %2286 = vmatpush2.msra.mxu0 %v609
  %2287 = vmatprep.subr.mxu0 0.0
  %2288 = vmatpush2.msra.mxu0 %v608
  %2289 = vmatprep.subr.mxu0 0.0
  %2290 = vmatpush2.msra.mxu0 %v607
  %2291 = vmatprep.subr.mxu0 0.0
  %2292 = vmatpush2.msra.mxu0 %v606
  %2293 = vmatprep.mubr.f32.mxu0 %v47
  %2294 = vmatmul.mubr.f32.gmra.mxu0 %v46
  %v2295 = vpop.f32.mrf.mxu0
  %v2296 = vadd.f32 %v2226, %v2295
  %v2297 = vpop.f32.mrf.mxu0
  %2298 = vdwg.mxu0
  %2299 = vmatprep.subr.mxu0 0.0
  %2300 = vmatpush1.msra.mxu0 %v637
  %2301 = vmatprep.subr.mxu0 0.0
  %2302 = vmatpush1.msra.mxu0 %v636
  %2303 = vmatprep.subr.mxu0 0.0
  %2304 = vmatpush1.msra.mxu0 %v635
  %2305 = vmatprep.subr.mxu0 0.0
  %2306 = vmatpush1.msra.mxu0 %v634
  %2307 = vmatprep.subr.mxu0 0.0
  %2308 = vmatpush1.msra.mxu0 %v633
  %2309 = vmatprep.subr.mxu0 0.0
  %2310 = vmatpush1.msra.mxu0 %v632
  %2311 = vmatprep.subr.mxu0 0.0
  %2312 = vmatpush1.msra.mxu0 %v631
  %2313 = vmatprep.subr.mxu0 0.0
  %2314 = vmatpush1.msra.mxu0 %v630
  %2315 = vmatprep.subr.mxu0 0.0
  %2316 = vmatpush1.msra.mxu0 %v629
  %2317 = vmatprep.subr.mxu0 0.0
  %2318 = vmatpush1.msra.mxu0 %v628
  %2319 = vmatprep.subr.mxu0 0.0
  %2320 = vmatpush1.msra.mxu0 %v627
  %2321 = vmatprep.subr.mxu0 0.0
  %2322 = vmatpush1.msra.mxu0 %v626
  %2323 = vmatprep.subr.mxu0 0.0
  %2324 = vmatpush1.msra.mxu0 %v625
  %2325 = vmatprep.subr.mxu0 0.0
  %2326 = vmatpush1.msra.mxu0 %v624
  %2327 = vmatprep.subr.mxu0 0.0
  %2328 = vmatpush1.msra.mxu0 %v623
  %2329 = vmatprep.subr.mxu0 0.0
  %2330 = vmatpush1.msra.mxu0 %v622
  %2331 = vmatprep.subr.mxu0 0.0
  %2332 = vmatpush2.msra.mxu0 %v653
  %2333 = vmatprep.subr.mxu0 0.0
  %2334 = vmatpush2.msra.mxu0 %v652
  %2335 = vmatprep.subr.mxu0 0.0
  %2336 = vmatpush2.msra.mxu0 %v651
  %2337 = vmatprep.subr.mxu0 0.0
  %2338 = vmatpush2.msra.mxu0 %v650
  %2339 = vmatprep.subr.mxu0 0.0
  %2340 = vmatpush2.msra.mxu0 %v649
  %2341 = vmatprep.subr.mxu0 0.0
  %2342 = vmatpush2.msra.mxu0 %v648
  %2343 = vmatprep.subr.mxu0 0.0
  %2344 = vmatpush2.msra.mxu0 %v647
  %2345 = vmatprep.subr.mxu0 0.0
  %2346 = vmatpush2.msra.mxu0 %v646
  %2347 = vmatprep.subr.mxu0 0.0
  %2348 = vmatpush2.msra.mxu0 %v645
  %2349 = vmatprep.subr.mxu0 0.0
  %2350 = vmatpush2.msra.mxu0 %v644
  %2351 = vmatprep.subr.mxu0 0.0
  %2352 = vmatpush2.msra.mxu0 %v643
  %2353 = vmatprep.subr.mxu0 0.0
  %2354 = vmatpush2.msra.mxu0 %v642
  %2355 = vmatprep.subr.mxu0 0.0
  %2356 = vmatpush2.msra.mxu0 %v641
  %2357 = vmatprep.subr.mxu0 0.0
  %2358 = vmatpush2.msra.mxu0 %v640
  %2359 = vmatprep.subr.mxu0 0.0
  %2360 = vmatpush2.msra.mxu0 %v639
  %2361 = vmatprep.subr.mxu0 0.0
  %2362 = vmatpush2.msra.mxu0 %v638
  %2363 = vmatprep.mubr.f32.mxu0 %v49
  %2364 = vmatmul.mubr.f32.gmra.mxu0 %v48
  %v2365 = vpop.f32.mrf.mxu0
  %v2366 = vadd.f32 %v2296, %v2365
  %v2367 = vpop.f32.mrf.mxu0
  %2368 = vdwg.mxu0
  %2369 = vmatprep.subr.mxu0 0.0
  %2370 = vmatpush1.msra.mxu0 %v669
  %2371 = vmatprep.subr.mxu0 0.0
  %2372 = vmatpush1.msra.mxu0 %v668
  %2373 = vmatprep.subr.mxu0 0.0
  %2374 = vmatpush1.msra.mxu0 %v667
  %2375 = vmatprep.subr.mxu0 0.0
  %2376 = vmatpush1.msra.mxu0 %v666
  %2377 = vmatprep.subr.mxu0 0.0
  %2378 = vmatpush1.msra.mxu0 %v665
  %2379 = vmatprep.subr.mxu0 0.0
  %2380 = vmatpush1.msra.mxu0 %v664
  %2381 = vmatprep.subr.mxu0 0.0
  %2382 = vmatpush1.msra.mxu0 %v663
  %2383 = vmatprep.subr.mxu0 0.0
  %2384 = vmatpush1.msra.mxu0 %v662
  %2385 = vmatprep.subr.mxu0 0.0
  %2386 = vmatpush1.msra.mxu0 %v661
  %2387 = vmatprep.subr.mxu0 0.0
  %2388 = vmatpush1.msra.mxu0 %v660
  %2389 = vmatprep.subr.mxu0 0.0
  %2390 = vmatpush1.msra.mxu0 %v659
  %2391 = vmatprep.subr.mxu0 0.0
  %2392 = vmatpush1.msra.mxu0 %v658
  %2393 = vmatprep.subr.mxu0 0.0
  %2394 = vmatpush1.msra.mxu0 %v657
  %2395 = vmatprep.subr.mxu0 0.0
  %2396 = vmatpush1.msra.mxu0 %v656
  %2397 = vmatprep.subr.mxu0 0.0
  %2398 = vmatpush1.msra.mxu0 %v655
  %2399 = vmatprep.subr.mxu0 0.0
  %2400 = vmatpush1.msra.mxu0 %v654
  %2401 = vmatprep.subr.mxu0 0.0
  %2402 = vmatpush2.msra.mxu0 %v685
  %2403 = vmatprep.subr.mxu0 0.0
  %2404 = vmatpush2.msra.mxu0 %v684
  %2405 = vmatprep.subr.mxu0 0.0
  %2406 = vmatpush2.msra.mxu0 %v683
  %2407 = vmatprep.subr.mxu0 0.0
  %2408 = vmatpush2.msra.mxu0 %v682
  %2409 = vmatprep.subr.mxu0 0.0
  %2410 = vmatpush2.msra.mxu0 %v681
  %2411 = vmatprep.subr.mxu0 0.0
  %2412 = vmatpush2.msra.mxu0 %v680
  %2413 = vmatprep.subr.mxu0 0.0
  %2414 = vmatpush2.msra.mxu0 %v679
  %2415 = vmatprep.subr.mxu0 0.0
  %2416 = vmatpush2.msra.mxu0 %v678
  %2417 = vmatprep.subr.mxu0 0.0
  %2418 = vmatpush2.msra.mxu0 %v677
  %2419 = vmatprep.subr.mxu0 0.0
  %2420 = vmatpush2.msra.mxu0 %v676
  %2421 = vmatprep.subr.mxu0 0.0
  %2422 = vmatpush2.msra.mxu0 %v675
  %2423 = vmatprep.subr.mxu0 0.0
  %2424 = vmatpush2.msra.mxu0 %v674
  %2425 = vmatprep.subr.mxu0 0.0
  %2426 = vmatpush2.msra.mxu0 %v673
  %2427 = vmatprep.subr.mxu0 0.0
  %2428 = vmatpush2.msra.mxu0 %v672
  %2429 = vmatprep.subr.mxu0 0.0
  %2430 = vmatpush2.msra.mxu0 %v671
  %2431 = vmatprep.subr.mxu0 0.0
  %2432 = vmatpush2.msra.mxu0 %v670
  %2433 = vmatprep.mubr.f32.mxu0 %v51
  %2434 = vmatmul.mubr.f32.gmra.mxu0 %v50
  %v2435 = vpop.f32.mrf.mxu0
  %v2436 = vadd.f32 %v2366, %v2435
  %v2437 = vpop.f32.mrf.mxu0
  %2438 = vdwg.mxu0
  %2439 = vmatprep.subr.mxu0 0.0
  %2440 = vmatpush1.msra.mxu0 %v701
  %2441 = vmatprep.subr.mxu0 0.0
  %2442 = vmatpush1.msra.mxu0 %v700
  %2443 = vmatprep.subr.mxu0 0.0
  %2444 = vmatpush1.msra.mxu0 %v699
  %2445 = vmatprep.subr.mxu0 0.0
  %2446 = vmatpush1.msra.mxu0 %v698
  %2447 = vmatprep.subr.mxu0 0.0
  %2448 = vmatpush1.msra.mxu0 %v697
  %2449 = vmatprep.subr.mxu0 0.0
  %2450 = vmatpush1.msra.mxu0 %v696
  %2451 = vmatprep.subr.mxu0 0.0
  %2452 = vmatpush1.msra.mxu0 %v695
  %2453 = vmatprep.subr.mxu0 0.0
  %2454 = vmatpush1.msra.mxu0 %v694
  %2455 = vmatprep.subr.mxu0 0.0
  %2456 = vmatpush1.msra.mxu0 %v693
  %2457 = vmatprep.subr.mxu0 0.0
  %2458 = vmatpush1.msra.mxu0 %v692
  %2459 = vmatprep.subr.mxu0 0.0
  %2460 = vmatpush1.msra.mxu0 %v691
  %2461 = vmatprep.subr.mxu0 0.0
  %2462 = vmatpush1.msra.mxu0 %v690
  %2463 = vmatprep.subr.mxu0 0.0
  %2464 = vmatpush1.msra.mxu0 %v689
  %2465 = vmatprep.subr.mxu0 0.0
  %2466 = vmatpush1.msra.mxu0 %v688
  %2467 = vmatprep.subr.mxu0 0.0
  %2468 = vmatpush1.msra.mxu0 %v687
  %2469 = vmatprep.subr.mxu0 0.0
  %2470 = vmatpush1.msra.mxu0 %v686
  %2471 = vmatprep.subr.mxu0 0.0
  %2472 = vmatpush2.msra.mxu0 %v717
  %2473 = vmatprep.subr.mxu0 0.0
  %2474 = vmatpush2.msra.mxu0 %v716
  %2475 = vmatprep.subr.mxu0 0.0
  %2476 = vmatpush2.msra.mxu0 %v715
  %2477 = vmatprep.subr.mxu0 0.0
  %2478 = vmatpush2.msra.mxu0 %v714
  %2479 = vmatprep.subr.mxu0 0.0
  %2480 = vmatpush2.msra.mxu0 %v713
  %2481 = vmatprep.subr.mxu0 0.0
  %2482 = vmatpush2.msra.mxu0 %v712
  %2483 = vmatprep.subr.mxu0 0.0
  %2484 = vmatpush2.msra.mxu0 %v711
  %2485 = vmatprep.subr.mxu0 0.0
  %2486 = vmatpush2.msra.mxu0 %v710
  %2487 = vmatprep.subr.mxu0 0.0
  %2488 = vmatpush2.msra.mxu0 %v709
  %2489 = vmatprep.subr.mxu0 0.0
  %2490 = vmatpush2.msra.mxu0 %v708
  %2491 = vmatprep.subr.mxu0 0.0
  %2492 = vmatpush2.msra.mxu0 %v707
  %2493 = vmatprep.subr.mxu0 0.0
  %2494 = vmatpush2.msra.mxu0 %v706
  %2495 = vmatprep.subr.mxu0 0.0
  %2496 = vmatpush2.msra.mxu0 %v705
  %2497 = vmatprep.subr.mxu0 0.0
  %2498 = vmatpush2.msra.mxu0 %v704
  %2499 = vmatprep.subr.mxu0 0.0
  %2500 = vmatpush2.msra.mxu0 %v703
  %2501 = vmatprep.subr.mxu0 0.0
  %2502 = vmatpush2.msra.mxu0 %v702
  %2503 = vmatprep.mubr.f32.mxu0 %v53
  %2504 = vmatmul.mubr.f32.gmra.mxu0 %v52
  %v2505 = vpop.f32.mrf.mxu0
  %v2506 = vadd.f32 %v2436, %v2505
  %v2507 = vpop.f32.mrf.mxu0
  %2508 = vdwg.mxu0
  %2509 = vmatprep.subr.mxu0 0.0
  %2510 = vmatpush1.msra.mxu0 %v733
  %2511 = vmatprep.subr.mxu0 0.0
  %2512 = vmatpush1.msra.mxu0 %v732
  %2513 = vmatprep.subr.mxu0 0.0
  %2514 = vmatpush1.msra.mxu0 %v731
  %2515 = vmatprep.subr.mxu0 0.0
  %2516 = vmatpush1.msra.mxu0 %v730
  %2517 = vmatprep.subr.mxu0 0.0
  %2518 = vmatpush1.msra.mxu0 %v729
  %2519 = vmatprep.subr.mxu0 0.0
  %2520 = vmatpush1.msra.mxu0 %v728
  %2521 = vmatprep.subr.mxu0 0.0
  %2522 = vmatpush1.msra.mxu0 %v727
  %2523 = vmatprep.subr.mxu0 0.0
  %2524 = vmatpush1.msra.mxu0 %v726
  %2525 = vmatprep.subr.mxu0 0.0
  %2526 = vmatpush1.msra.mxu0 %v725
  %2527 = vmatprep.subr.mxu0 0.0
  %2528 = vmatpush1.msra.mxu0 %v724
  %2529 = vmatprep.subr.mxu0 0.0
  %2530 = vmatpush1.msra.mxu0 %v723
  %2531 = vmatprep.subr.mxu0 0.0
  %2532 = vmatpush1.msra.mxu0 %v722
  %2533 = vmatprep.subr.mxu0 0.0
  %2534 = vmatpush1.msra.mxu0 %v721
  %2535 = vmatprep.subr.mxu0 0.0
  %2536 = vmatpush1.msra.mxu0 %v720
  %2537 = vmatprep.subr.mxu0 0.0
  %2538 = vmatpush1.msra.mxu0 %v719
  %2539 = vmatprep.subr.mxu0 0.0
  %2540 = vmatpush1.msra.mxu0 %v718
  %2541 = vmatprep.subr.mxu0 0.0
  %2542 = vmatpush2.msra.mxu0 %v749
  %2543 = vmatprep.subr.mxu0 0.0
  %2544 = vmatpush2.msra.mxu0 %v748
  %2545 = vmatprep.subr.mxu0 0.0
  %2546 = vmatpush2.msra.mxu0 %v747
  %2547 = vmatprep.subr.mxu0 0.0
  %2548 = vmatpush2.msra.mxu0 %v746
  %2549 = vmatprep.subr.mxu0 0.0
  %2550 = vmatpush2.msra.mxu0 %v745
  %2551 = vmatprep.subr.mxu0 0.0
  %2552 = vmatpush2.msra.mxu0 %v744
  %2553 = vmatprep.subr.mxu0 0.0
  %2554 = vmatpush2.msra.mxu0 %v743
  %2555 = vmatprep.subr.mxu0 0.0
  %2556 = vmatpush2.msra.mxu0 %v742
  %2557 = vmatprep.subr.mxu0 0.0
  %2558 = vmatpush2.msra.mxu0 %v741
  %2559 = vmatprep.subr.mxu0 0.0
  %2560 = vmatpush2.msra.mxu0 %v740
  %2561 = vmatprep.subr.mxu0 0.0
  %2562 = vmatpush2.msra.mxu0 %v739
  %2563 = vmatprep.subr.mxu0 0.0
  %2564 = vmatpush2.msra.mxu0 %v738
  %2565 = vmatprep.subr.mxu0 0.0
  %2566 = vmatpush2.msra.mxu0 %v737
  %2567 = vmatprep.subr.mxu0 0.0
  %2568 = vmatpush2.msra.mxu0 %v736
  %2569 = vmatprep.subr.mxu0 0.0
  %2570 = vmatpush2.msra.mxu0 %v735
  %2571 = vmatprep.subr.mxu0 0.0
  %2572 = vmatpush2.msra.mxu0 %v734
  %2573 = vmatprep.mubr.f32.mxu0 %v55
  %2574 = vmatmul.mubr.f32.gmra.mxu0 %v54
  %v2575 = vpop.f32.mrf.mxu0
  %v2576 = vadd.f32 %v2506, %v2575
  %v2577 = vpop.f32.mrf.mxu0
  %2578 = vdwg.mxu0
  %2579 = vmatprep.subr.mxu0 0.0
  %2580 = vmatpush1.msra.mxu0 %v765
  %2581 = vmatprep.subr.mxu0 0.0
  %2582 = vmatpush1.msra.mxu0 %v764
  %2583 = vmatprep.subr.mxu0 0.0
  %2584 = vmatpush1.msra.mxu0 %v763
  %2585 = vmatprep.subr.mxu0 0.0
  %2586 = vmatpush1.msra.mxu0 %v762
  %2587 = vmatprep.subr.mxu0 0.0
  %2588 = vmatpush1.msra.mxu0 %v761
  %2589 = vmatprep.subr.mxu0 0.0
  %2590 = vmatpush1.msra.mxu0 %v760
  %2591 = vmatprep.subr.mxu0 0.0
  %2592 = vmatpush1.msra.mxu0 %v759
  %2593 = vmatprep.subr.mxu0 0.0
  %2594 = vmatpush1.msra.mxu0 %v758
  %2595 = vmatprep.subr.mxu0 0.0
  %2596 = vmatpush1.msra.mxu0 %v757
  %2597 = vmatprep.subr.mxu0 0.0
  %2598 = vmatpush1.msra.mxu0 %v756
  %2599 = vmatprep.subr.mxu0 0.0
  %2600 = vmatpush1.msra.mxu0 %v755
  %2601 = vmatprep.subr.mxu0 0.0
  %2602 = vmatpush1.msra.mxu0 %v754
  %2603 = vmatprep.subr.mxu0 0.0
  %2604 = vmatpush1.msra.mxu0 %v753
  %2605 = vmatprep.subr.mxu0 0.0
  %2606 = vmatpush1.msra.mxu0 %v752
  %2607 = vmatprep.subr.mxu0 0.0
  %2608 = vmatpush1.msra.mxu0 %v751
  %2609 = vmatprep.subr.mxu0 0.0
  %2610 = vmatpush1.msra.mxu0 %v750
  %2611 = vmatprep.subr.mxu0 0.0
  %2612 = vmatpush2.msra.mxu0 %v781
  %2613 = vmatprep.subr.mxu0 0.0
  %2614 = vmatpush2.msra.mxu0 %v780
  %2615 = vmatprep.subr.mxu0 0.0
  %2616 = vmatpush2.msra.mxu0 %v779
  %2617 = vmatprep.subr.mxu0 0.0
  %2618 = vmatpush2.msra.mxu0 %v778
  %2619 = vmatprep.subr.mxu0 0.0
  %2620 = vmatpush2.msra.mxu0 %v777
  %2621 = vmatprep.subr.mxu0 0.0
  %2622 = vmatpush2.msra.mxu0 %v776
  %2623 = vmatprep.subr.mxu0 0.0
  %2624 = vmatpush2.msra.mxu0 %v775
  %2625 = vmatprep.subr.mxu0 0.0
  %2626 = vmatpush2.msra.mxu0 %v774
  %2627 = vmatprep.subr.mxu0 0.0
  %2628 = vmatpush2.msra.mxu0 %v773
  %2629 = vmatprep.subr.mxu0 0.0
  %2630 = vmatpush2.msra.mxu0 %v772
  %2631 = vmatprep.subr.mxu0 0.0
  %2632 = vmatpush2.msra.mxu0 %v771
  %2633 = vmatprep.subr.mxu0 0.0
  %2634 = vmatpush2.msra.mxu0 %v770
  %2635 = vmatprep.subr.mxu0 0.0
  %2636 = vmatpush2.msra.mxu0 %v769
  %2637 = vmatprep.subr.mxu0 0.0
  %2638 = vmatpush2.msra.mxu0 %v768
  %2639 = vmatprep.subr.mxu0 0.0
  %2640 = vmatpush2.msra.mxu0 %v767
  %2641 = vmatprep.subr.mxu0 0.0
  %2642 = vmatpush2.msra.mxu0 %v766
  %2643 = vmatprep.mubr.f32.mxu0 %v57
  %2644 = vmatmul.mubr.f32.gmra.mxu0 %v56
  %v2645 = vpop.f32.mrf.mxu0
  %v2646 = vadd.f32 %v2576, %v2645
  %v2647 = vpop.f32.mrf.mxu0
  %2648 = vdwg.mxu0
  %2649 = vmatprep.subr.mxu0 0.0
  %2650 = vmatpush1.msra.mxu0 %v797
  %2651 = vmatprep.subr.mxu0 0.0
  %2652 = vmatpush1.msra.mxu0 %v796
  %2653 = vmatprep.subr.mxu0 0.0
  %2654 = vmatpush1.msra.mxu0 %v795
  %2655 = vmatprep.subr.mxu0 0.0
  %2656 = vmatpush1.msra.mxu0 %v794
  %2657 = vmatprep.subr.mxu0 0.0
  %2658 = vmatpush1.msra.mxu0 %v793
  %2659 = vmatprep.subr.mxu0 0.0
  %2660 = vmatpush1.msra.mxu0 %v792
  %2661 = vmatprep.subr.mxu0 0.0
  %2662 = vmatpush1.msra.mxu0 %v791
  %2663 = vmatprep.subr.mxu0 0.0
  %2664 = vmatpush1.msra.mxu0 %v790
  %2665 = vmatprep.subr.mxu0 0.0
  %2666 = vmatpush1.msra.mxu0 %v789
  %2667 = vmatprep.subr.mxu0 0.0
  %2668 = vmatpush1.msra.mxu0 %v788
  %2669 = vmatprep.subr.mxu0 0.0
  %2670 = vmatpush1.msra.mxu0 %v787
  %2671 = vmatprep.subr.mxu0 0.0
  %2672 = vmatpush1.msra.mxu0 %v786
  %2673 = vmatprep.subr.mxu0 0.0
  %2674 = vmatpush1.msra.mxu0 %v785
  %2675 = vmatprep.subr.mxu0 0.0
  %2676 = vmatpush1.msra.mxu0 %v784
  %2677 = vmatprep.subr.mxu0 0.0
  %2678 = vmatpush1.msra.mxu0 %v783
  %2679 = vmatprep.subr.mxu0 0.0
  %2680 = vmatpush1.msra.mxu0 %v782
  %2681 = vmatprep.subr.mxu0 0.0
  %2682 = vmatpush2.msra.mxu0 %v813
  %2683 = vmatprep.subr.mxu0 0.0
  %2684 = vmatpush2.msra.mxu0 %v812
  %2685 = vmatprep.subr.mxu0 0.0
  %2686 = vmatpush2.msra.mxu0 %v811
  %2687 = vmatprep.subr.mxu0 0.0
  %2688 = vmatpush2.msra.mxu0 %v810
  %2689 = vmatprep.subr.mxu0 0.0
  %2690 = vmatpush2.msra.mxu0 %v809
  %2691 = vmatprep.subr.mxu0 0.0
  %2692 = vmatpush2.msra.mxu0 %v808
  %2693 = vmatprep.subr.mxu0 0.0
  %2694 = vmatpush2.msra.mxu0 %v807
  %2695 = vmatprep.subr.mxu0 0.0
  %2696 = vmatpush2.msra.mxu0 %v806
  %2697 = vmatprep.subr.mxu0 0.0
  %2698 = vmatpush2.msra.mxu0 %v805
  %2699 = vmatprep.subr.mxu0 0.0
  %2700 = vmatpush2.msra.mxu0 %v804
  %2701 = vmatprep.subr.mxu0 0.0
  %2702 = vmatpush2.msra.mxu0 %v803
  %2703 = vmatprep.subr.mxu0 0.0
  %2704 = vmatpush2.msra.mxu0 %v802
  %2705 = vmatprep.subr.mxu0 0.0
  %2706 = vmatpush2.msra.mxu0 %v801
  %2707 = vmatprep.subr.mxu0 0.0
  %2708 = vmatpush2.msra.mxu0 %v800
  %2709 = vmatprep.subr.mxu0 0.0
  %2710 = vmatpush2.msra.mxu0 %v799
  %2711 = vmatprep.subr.mxu0 0.0
  %2712 = vmatpush2.msra.mxu0 %v798
  %2713 = vmatprep.mubr.f32.mxu0 %v59
  %2714 = vmatmul.mubr.f32.gmra.mxu0 %v58
  %v2715 = vpop.f32.mrf.mxu0
  %v2716 = vadd.f32 %v2646, %v2715
  %v2717 = vpop.f32.mrf.mxu0
  %2718 = vdwg.mxu0
  %2719 = vmatprep.subr.mxu0 0.0
  %2720 = vmatpush1.msra.mxu0 %v829
  %2721 = vmatprep.subr.mxu0 0.0
  %2722 = vmatpush1.msra.mxu0 %v828
  %2723 = vmatprep.subr.mxu0 0.0
  %2724 = vmatpush1.msra.mxu0 %v827
  %2725 = vmatprep.subr.mxu0 0.0
  %2726 = vmatpush1.msra.mxu0 %v826
  %2727 = vmatprep.subr.mxu0 0.0
  %2728 = vmatpush1.msra.mxu0 %v825
  %2729 = vmatprep.subr.mxu0 0.0
  %2730 = vmatpush1.msra.mxu0 %v824
  %2731 = vmatprep.subr.mxu0 0.0
  %2732 = vmatpush1.msra.mxu0 %v823
  %2733 = vmatprep.subr.mxu0 0.0
  %2734 = vmatpush1.msra.mxu0 %v822
  %2735 = vmatprep.subr.mxu0 0.0
  %2736 = vmatpush1.msra.mxu0 %v821
  %2737 = vmatprep.subr.mxu0 0.0
  %2738 = vmatpush1.msra.mxu0 %v820
  %2739 = vmatprep.subr.mxu0 0.0
  %2740 = vmatpush1.msra.mxu0 %v819
  %2741 = vmatprep.subr.mxu0 0.0
  %2742 = vmatpush1.msra.mxu0 %v818
  %2743 = vmatprep.subr.mxu0 0.0
  %2744 = vmatpush1.msra.mxu0 %v817
  %2745 = vmatprep.subr.mxu0 0.0
  %2746 = vmatpush1.msra.mxu0 %v816
  %2747 = vmatprep.subr.mxu0 0.0
  %2748 = vmatpush1.msra.mxu0 %v815
  %2749 = vmatprep.subr.mxu0 0.0
  %2750 = vmatpush1.msra.mxu0 %v814
  %2751 = vmatprep.subr.mxu0 0.0
  %2752 = vmatpush2.msra.mxu0 %v845
  %2753 = vmatprep.subr.mxu0 0.0
  %2754 = vmatpush2.msra.mxu0 %v844
  %2755 = vmatprep.subr.mxu0 0.0
  %2756 = vmatpush2.msra.mxu0 %v843
  %2757 = vmatprep.subr.mxu0 0.0
  %2758 = vmatpush2.msra.mxu0 %v842
  %2759 = vmatprep.subr.mxu0 0.0
  %2760 = vmatpush2.msra.mxu0 %v841
  %2761 = vmatprep.subr.mxu0 0.0
  %2762 = vmatpush2.msra.mxu0 %v840
  %2763 = vmatprep.subr.mxu0 0.0
  %2764 = vmatpush2.msra.mxu0 %v839
  %2765 = vmatprep.subr.mxu0 0.0
  %2766 = vmatpush2.msra.mxu0 %v838
  %2767 = vmatprep.subr.mxu0 0.0
  %2768 = vmatpush2.msra.mxu0 %v837
  %2769 = vmatprep.subr.mxu0 0.0
  %2770 = vmatpush2.msra.mxu0 %v836
  %2771 = vmatprep.subr.mxu0 0.0
  %2772 = vmatpush2.msra.mxu0 %v835
  %2773 = vmatprep.subr.mxu0 0.0
  %2774 = vmatpush2.msra.mxu0 %v834
  %2775 = vmatprep.subr.mxu0 0.0
  %2776 = vmatpush2.msra.mxu0 %v833
  %2777 = vmatprep.subr.mxu0 0.0
  %2778 = vmatpush2.msra.mxu0 %v832
  %2779 = vmatprep.subr.mxu0 0.0
  %2780 = vmatpush2.msra.mxu0 %v831
  %2781 = vmatprep.subr.mxu0 0.0
  %2782 = vmatpush2.msra.mxu0 %v830
  %2783 = vmatprep.mubr.f32.mxu0 %v61
  %2784 = vmatmul.mubr.f32.gmra.mxu0 %v60
  %v2785 = vpop.f32.mrf.mxu0
  %v2786 = vadd.f32 %v2716, %v2785
  %v2787 = vpop.f32.mrf.mxu0
  %2788 = vdwg.mxu0
  %2789 = vmatprep.subr.mxu0 0.0
  %2790 = vmatpush1.msra.mxu0 %v861
  %2791 = vmatprep.subr.mxu0 0.0
  %2792 = vmatpush1.msra.mxu0 %v860
  %2793 = vmatprep.subr.mxu0 0.0
  %2794 = vmatpush1.msra.mxu0 %v859
  %2795 = vmatprep.subr.mxu0 0.0
  %2796 = vmatpush1.msra.mxu0 %v858
  %2797 = vmatprep.subr.mxu0 0.0
  %2798 = vmatpush1.msra.mxu0 %v857
  %2799 = vmatprep.subr.mxu0 0.0
  %2800 = vmatpush1.msra.mxu0 %v856
  %2801 = vmatprep.subr.mxu0 0.0
  %2802 = vmatpush1.msra.mxu0 %v855
  %2803 = vmatprep.subr.mxu0 0.0
  %2804 = vmatpush1.msra.mxu0 %v854
  %2805 = vmatprep.subr.mxu0 0.0
  %2806 = vmatpush1.msra.mxu0 %v853
  %2807 = vmatprep.subr.mxu0 0.0
  %2808 = vmatpush1.msra.mxu0 %v852
  %2809 = vmatprep.subr.mxu0 0.0
  %2810 = vmatpush1.msra.mxu0 %v851
  %2811 = vmatprep.subr.mxu0 0.0
  %2812 = vmatpush1.msra.mxu0 %v850
  %2813 = vmatprep.subr.mxu0 0.0
  %2814 = vmatpush1.msra.mxu0 %v849
  %2815 = vmatprep.subr.mxu0 0.0
  %2816 = vmatpush1.msra.mxu0 %v848
  %2817 = vmatprep.subr.mxu0 0.0
  %2818 = vmatpush1.msra.mxu0 %v847
  %2819 = vmatprep.subr.mxu0 0.0
  %2820 = vmatpush1.msra.mxu0 %v846
  %2821 = vmatprep.subr.mxu0 0.0
  %2822 = vmatpush2.msra.mxu0 %v877
  %2823 = vmatprep.subr.mxu0 0.0
  %2824 = vmatpush2.msra.mxu0 %v876
  %2825 = vmatprep.subr.mxu0 0.0
  %2826 = vmatpush2.msra.mxu0 %v875
  %2827 = vmatprep.subr.mxu0 0.0
  %2828 = vmatpush2.msra.mxu0 %v874
  %2829 = vmatprep.subr.mxu0 0.0
  %2830 = vmatpush2.msra.mxu0 %v873
  %2831 = vmatprep.subr.mxu0 0.0
  %2832 = vmatpush2.msra.mxu0 %v872
  %2833 = vmatprep.subr.mxu0 0.0
  %2834 = vmatpush2.msra.mxu0 %v871
  %2835 = vmatprep.subr.mxu0 0.0
  %2836 = vmatpush2.msra.mxu0 %v870
  %2837 = vmatprep.subr.mxu0 0.0
  %2838 = vmatpush2.msra.mxu0 %v869
  %2839 = vmatprep.subr.mxu0 0.0
  %2840 = vmatpush2.msra.mxu0 %v868
  %2841 = vmatprep.subr.mxu0 0.0
  %2842 = vmatpush2.msra.mxu0 %v867
  %2843 = vmatprep.subr.mxu0 0.0
  %2844 = vmatpush2.msra.mxu0 %v866
  %2845 = vmatprep.subr.mxu0 0.0
  %2846 = vmatpush2.msra.mxu0 %v865
  %2847 = vmatprep.subr.mxu0 0.0
  %2848 = vmatpush2.msra.mxu0 %v864
  %2849 = vmatprep.subr.mxu0 0.0
  %2850 = vmatpush2.msra.mxu0 %v863
  %2851 = vmatprep.subr.mxu0 0.0
  %2852 = vmatpush2.msra.mxu0 %v862
  %2853 = vmatprep.mubr.f32.mxu0 %v63
  %2854 = vmatmul.mubr.f32.gmra.mxu0 %v62
  %v2855 = vpop.f32.mrf.mxu0
  %v2856 = vadd.f32 %v2786, %v2855
  %v2857 = vpop.f32.mrf.mxu0
  %2858 = vdwg.mxu0
  %2859 = vmatprep.subr.mxu0 0.0
  %2860 = vmatpush1.msra.mxu0 %v893
  %2861 = vmatprep.subr.mxu0 0.0
  %2862 = vmatpush1.msra.mxu0 %v892
  %2863 = vmatprep.subr.mxu0 0.0
  %2864 = vmatpush1.msra.mxu0 %v891
  %2865 = vmatprep.subr.mxu0 0.0
  %2866 = vmatpush1.msra.mxu0 %v890
  %2867 = vmatprep.subr.mxu0 0.0
  %2868 = vmatpush1.msra.mxu0 %v889
  %2869 = vmatprep.subr.mxu0 0.0
  %2870 = vmatpush1.msra.mxu0 %v888
  %2871 = vmatprep.subr.mxu0 0.0
  %2872 = vmatpush1.msra.mxu0 %v887
  %2873 = vmatprep.subr.mxu0 0.0
  %2874 = vmatpush1.msra.mxu0 %v886
  %2875 = vmatprep.subr.mxu0 0.0
  %2876 = vmatpush1.msra.mxu0 %v885
  %2877 = vmatprep.subr.mxu0 0.0
  %2878 = vmatpush1.msra.mxu0 %v884
  %2879 = vmatprep.subr.mxu0 0.0
  %2880 = vmatpush1.msra.mxu0 %v883
  %2881 = vmatprep.subr.mxu0 0.0
  %2882 = vmatpush1.msra.mxu0 %v882
  %2883 = vmatprep.subr.mxu0 0.0
  %2884 = vmatpush1.msra.mxu0 %v881
  %2885 = vmatprep.subr.mxu0 0.0
  %2886 = vmatpush1.msra.mxu0 %v880
  %2887 = vmatprep.subr.mxu0 0.0
  %2888 = vmatpush1.msra.mxu0 %v879
  %2889 = vmatprep.subr.mxu0 0.0
  %2890 = vmatpush1.msra.mxu0 %v878
  %2891 = vmatprep.subr.mxu0 0.0
  %2892 = vmatpush2.msra.mxu0 %v909
  %2893 = vmatprep.subr.mxu0 0.0
  %2894 = vmatpush2.msra.mxu0 %v908
  %2895 = vmatprep.subr.mxu0 0.0
  %2896 = vmatpush2.msra.mxu0 %v907
  %2897 = vmatprep.subr.mxu0 0.0
  %2898 = vmatpush2.msra.mxu0 %v906
  %2899 = vmatprep.subr.mxu0 0.0
  %2900 = vmatpush2.msra.mxu0 %v905
  %2901 = vmatprep.subr.mxu0 0.0
  %2902 = vmatpush2.msra.mxu0 %v904
  %2903 = vmatprep.subr.mxu0 0.0
  %2904 = vmatpush2.msra.mxu0 %v903
  %2905 = vmatprep.subr.mxu0 0.0
  %2906 = vmatpush2.msra.mxu0 %v902
  %2907 = vmatprep.subr.mxu0 0.0
  %2908 = vmatpush2.msra.mxu0 %v901
  %2909 = vmatprep.subr.mxu0 0.0
  %2910 = vmatpush2.msra.mxu0 %v900
  %2911 = vmatprep.subr.mxu0 0.0
  %2912 = vmatpush2.msra.mxu0 %v899
  %2913 = vmatprep.subr.mxu0 0.0
  %2914 = vmatpush2.msra.mxu0 %v898
  %2915 = vmatprep.subr.mxu0 0.0
  %2916 = vmatpush2.msra.mxu0 %v897
  %2917 = vmatprep.subr.mxu0 0.0
  %2918 = vmatpush2.msra.mxu0 %v896
  %2919 = vmatprep.subr.mxu0 0.0
  %2920 = vmatpush2.msra.mxu0 %v895
  %2921 = vmatprep.subr.mxu0 0.0
  %2922 = vmatpush2.msra.mxu0 %v894
  %2923 = vmatprep.mubr.f32.mxu0 %v65
  %2924 = vmatmul.mubr.f32.gmra.mxu0 %v64
  %v2925 = vpop.f32.mrf.mxu0
  %v2926 = vadd.f32 %v2856, %v2925
  %v2927 = vpop.f32.mrf.mxu0
  %2928 = vdwg.mxu0
  %2929 = vmatprep.subr.mxu0 0.0
  %2930 = vmatpush1.msra.mxu0 %v925
  %2931 = vmatprep.subr.mxu0 0.0
  %2932 = vmatpush1.msra.mxu0 %v924
  %2933 = vmatprep.subr.mxu0 0.0
  %2934 = vmatpush1.msra.mxu0 %v923
  %2935 = vmatprep.subr.mxu0 0.0
  %2936 = vmatpush1.msra.mxu0 %v922
  %2937 = vmatprep.subr.mxu0 0.0
  %2938 = vmatpush1.msra.mxu0 %v921
  %2939 = vmatprep.subr.mxu0 0.0
  %2940 = vmatpush1.msra.mxu0 %v920
  %2941 = vmatprep.subr.mxu0 0.0
  %2942 = vmatpush1.msra.mxu0 %v919
  %2943 = vmatprep.subr.mxu0 0.0
  %2944 = vmatpush1.msra.mxu0 %v918
  %2945 = vmatprep.subr.mxu0 0.0
  %2946 = vmatpush1.msra.mxu0 %v917
  %2947 = vmatprep.subr.mxu0 0.0
  %2948 = vmatpush1.msra.mxu0 %v916
  %2949 = vmatprep.subr.mxu0 0.0
  %2950 = vmatpush1.msra.mxu0 %v915
  %2951 = vmatprep.subr.mxu0 0.0
  %2952 = vmatpush1.msra.mxu0 %v914
  %2953 = vmatprep.subr.mxu0 0.0
  %2954 = vmatpush1.msra.mxu0 %v913
  %2955 = vmatprep.subr.mxu0 0.0
  %2956 = vmatpush1.msra.mxu0 %v912
  %2957 = vmatprep.subr.mxu0 0.0
  %2958 = vmatpush1.msra.mxu0 %v911
  %2959 = vmatprep.subr.mxu0 0.0
  %2960 = vmatpush1.msra.mxu0 %v910
  %2961 = vmatprep.subr.mxu0 0.0
  %2962 = vmatpush2.msra.mxu0 %v941
  %2963 = vmatprep.subr.mxu0 0.0
  %2964 = vmatpush2.msra.mxu0 %v940
  %2965 = vmatprep.subr.mxu0 0.0
  %2966 = vmatpush2.msra.mxu0 %v939
  %2967 = vmatprep.subr.mxu0 0.0
  %2968 = vmatpush2.msra.mxu0 %v938
  %2969 = vmatprep.subr.mxu0 0.0
  %2970 = vmatpush2.msra.mxu0 %v937
  %2971 = vmatprep.subr.mxu0 0.0
  %2972 = vmatpush2.msra.mxu0 %v936
  %2973 = vmatprep.subr.mxu0 0.0
  %2974 = vmatpush2.msra.mxu0 %v935
  %2975 = vmatprep.subr.mxu0 0.0
  %2976 = vmatpush2.msra.mxu0 %v934
  %2977 = vmatprep.subr.mxu0 0.0
  %2978 = vmatpush2.msra.mxu0 %v933
  %2979 = vmatprep.subr.mxu0 0.0
  %2980 = vmatpush2.msra.mxu0 %v932
  %2981 = vmatprep.subr.mxu0 0.0
  %2982 = vmatpush2.msra.mxu0 %v931
  %2983 = vmatprep.subr.mxu0 0.0
  %2984 = vmatpush2.msra.mxu0 %v930
  %2985 = vmatprep.subr.mxu0 0.0
  %2986 = vmatpush2.msra.mxu0 %v929
  %2987 = vmatprep.subr.mxu0 0.0
  %2988 = vmatpush2.msra.mxu0 %v928
  %2989 = vmatprep.subr.mxu0 0.0
  %2990 = vmatpush2.msra.mxu0 %v927
  %2991 = vmatprep.subr.mxu0 0.0
  %2992 = vmatpush2.msra.mxu0 %v926
  %2993 = vmatprep.mubr.f32.mxu0 %v67
  %2994 = vmatmul.mubr.f32.gmra.mxu0 %v66
  %v2995 = vpop.f32.mrf.mxu0
  %v2996 = vadd.f32 %v2926, %v2995
  %v2997 = vpop.f32.mrf.mxu0
  %2998 = vdwg.mxu0
  %2999 = vmatprep.subr.mxu0 0.0
  %3000 = vmatpush1.msra.mxu0 %v957
  %3001 = vmatprep.subr.mxu0 0.0
  %3002 = vmatpush1.msra.mxu0 %v956
  %3003 = vmatprep.subr.mxu0 0.0
  %3004 = vmatpush1.msra.mxu0 %v955
  %3005 = vmatprep.subr.mxu0 0.0
  %3006 = vmatpush1.msra.mxu0 %v954
  %3007 = vmatprep.subr.mxu0 0.0
  %3008 = vmatpush1.msra.mxu0 %v953
  %3009 = vmatprep.subr.mxu0 0.0
  %3010 = vmatpush1.msra.mxu0 %v952
  %3011 = vmatprep.subr.mxu0 0.0
  %3012 = vmatpush1.msra.mxu0 %v951
  %3013 = vmatprep.subr.mxu0 0.0
  %3014 = vmatpush1.msra.mxu0 %v950
  %3015 = vmatprep.subr.mxu0 0.0
  %3016 = vmatpush1.msra.mxu0 %v949
  %3017 = vmatprep.subr.mxu0 0.0
  %3018 = vmatpush1.msra.mxu0 %v948
  %3019 = vmatprep.subr.mxu0 0.0
  %3020 = vmatpush1.msra.mxu0 %v947
  %3021 = vmatprep.subr.mxu0 0.0
  %3022 = vmatpush1.msra.mxu0 %v946
  %3023 = vmatprep.subr.mxu0 0.0
  %3024 = vmatpush1.msra.mxu0 %v945
  %3025 = vmatprep.subr.mxu0 0.0
  %3026 = vmatpush1.msra.mxu0 %v944
  %3027 = vmatprep.subr.mxu0 0.0
  %3028 = vmatpush1.msra.mxu0 %v943
  %3029 = vmatprep.subr.mxu0 0.0
  %3030 = vmatpush1.msra.mxu0 %v942
  %3031 = vmatprep.subr.mxu0 0.0
  %3032 = vmatpush2.msra.mxu0 %v973
  %3033 = vmatprep.subr.mxu0 0.0
  %3034 = vmatpush2.msra.mxu0 %v972
  %3035 = vmatprep.subr.mxu0 0.0
  %3036 = vmatpush2.msra.mxu0 %v971
  %3037 = vmatprep.subr.mxu0 0.0
  %3038 = vmatpush2.msra.mxu0 %v970
  %3039 = vmatprep.subr.mxu0 0.0
  %3040 = vmatpush2.msra.mxu0 %v969
  %3041 = vmatprep.subr.mxu0 0.0
  %3042 = vmatpush2.msra.mxu0 %v968
  %3043 = vmatprep.subr.mxu0 0.0
  %3044 = vmatpush2.msra.mxu0 %v967
  %3045 = vmatprep.subr.mxu0 0.0
  %3046 = vmatpush2.msra.mxu0 %v966
  %3047 = vmatprep.subr.mxu0 0.0
  %3048 = vmatpush2.msra.mxu0 %v965
  %3049 = vmatprep.subr.mxu0 0.0
  %3050 = vmatpush2.msra.mxu0 %v964
  %3051 = vmatprep.subr.mxu0 0.0
  %3052 = vmatpush2.msra.mxu0 %v963
  %3053 = vmatprep.subr.mxu0 0.0
  %3054 = vmatpush2.msra.mxu0 %v962
  %3055 = vmatprep.subr.mxu0 0.0
  %3056 = vmatpush2.msra.mxu0 %v961
  %3057 = vmatprep.subr.mxu0 0.0
  %3058 = vmatpush2.msra.mxu0 %v960
  %3059 = vmatprep.subr.mxu0 0.0
  %3060 = vmatpush2.msra.mxu0 %v959
  %3061 = vmatprep.subr.mxu0 0.0
  %3062 = vmatpush2.msra.mxu0 %v958
  %3063 = vmatprep.mubr.f32.mxu0 %v69
  %3064 = vmatmul.mubr.f32.gmra.mxu0 %v68
  %v3065 = vpop.f32.mrf.mxu0
  %v3066 = vadd.f32 %v2996, %v3065
  %v3067 = vpop.f32.mrf.mxu0
  %3068 = vdwg.mxu0
  %3069 = vmatprep.subr.mxu0 0.0
  %3070 = vmatpush1.msra.mxu0 %v989
  %3071 = vmatprep.subr.mxu0 0.0
  %3072 = vmatpush1.msra.mxu0 %v988
  %3073 = vmatprep.subr.mxu0 0.0
  %3074 = vmatpush1.msra.mxu0 %v987
  %3075 = vmatprep.subr.mxu0 0.0
  %3076 = vmatpush1.msra.mxu0 %v986
  %3077 = vmatprep.subr.mxu0 0.0
  %3078 = vmatpush1.msra.mxu0 %v985
  %3079 = vmatprep.subr.mxu0 0.0
  %3080 = vmatpush1.msra.mxu0 %v984
  %3081 = vmatprep.subr.mxu0 0.0
  %3082 = vmatpush1.msra.mxu0 %v983
  %3083 = vmatprep.subr.mxu0 0.0
  %3084 = vmatpush1.msra.mxu0 %v982
  %3085 = vmatprep.subr.mxu0 0.0
  %3086 = vmatpush1.msra.mxu0 %v981
  %3087 = vmatprep.subr.mxu0 0.0
  %3088 = vmatpush1.msra.mxu0 %v980
  %3089 = vmatprep.subr.mxu0 0.0
  %3090 = vmatpush1.msra.mxu0 %v979
  %3091 = vmatprep.subr.mxu0 0.0
  %3092 = vmatpush1.msra.mxu0 %v978
  %3093 = vmatprep.subr.mxu0 0.0
  %3094 = vmatpush1.msra.mxu0 %v977
  %3095 = vmatprep.subr.mxu0 0.0
  %3096 = vmatpush1.msra.mxu0 %v976
  %3097 = vmatprep.subr.mxu0 0.0
  %3098 = vmatpush1.msra.mxu0 %v975
  %3099 = vmatprep.subr.mxu0 0.0
  %3100 = vmatpush1.msra.mxu0 %v974
  %3101 = vmatprep.subr.mxu0 0.0
  %3102 = vmatpush2.msra.mxu0 %v1005
  %3103 = vmatprep.subr.mxu0 0.0
  %3104 = vmatpush2.msra.mxu0 %v1004
  %3105 = vmatprep.subr.mxu0 0.0
  %3106 = vmatpush2.msra.mxu0 %v1003
  %3107 = vmatprep.subr.mxu0 0.0
  %3108 = vmatpush2.msra.mxu0 %v1002
  %3109 = vmatprep.subr.mxu0 0.0
  %3110 = vmatpush2.msra.mxu0 %v1001
  %3111 = vmatprep.subr.mxu0 0.0
  %3112 = vmatpush2.msra.mxu0 %v1000
  %3113 = vmatprep.subr.mxu0 0.0
  %3114 = vmatpush2.msra.mxu0 %v999
  %3115 = vmatprep.subr.mxu0 0.0
  %3116 = vmatpush2.msra.mxu0 %v998
  %3117 = vmatprep.subr.mxu0 0.0
  %3118 = vmatpush2.msra.mxu0 %v997
  %3119 = vmatprep.subr.mxu0 0.0
  %3120 = vmatpush2.msra.mxu0 %v996
  %3121 = vmatprep.subr.mxu0 0.0
  %3122 = vmatpush2.msra.mxu0 %v995
  %3123 = vmatprep.subr.mxu0 0.0
  %3124 = vmatpush2.msra.mxu0 %v994
  %3125 = vmatprep.subr.mxu0 0.0
  %3126 = vmatpush2.msra.mxu0 %v993
  %3127 = vmatprep.subr.mxu0 0.0
  %3128 = vmatpush2.msra.mxu0 %v992
  %3129 = vmatprep.subr.mxu0 0.0
  %3130 = vmatpush2.msra.mxu0 %v991
  %3131 = vmatprep.subr.mxu0 0.0
  %3132 = vmatpush2.msra.mxu0 %v990
  %3133 = vmatprep.mubr.f32.mxu0 %v71
  %3134 = vmatmul.mubr.f32.gmra.mxu0 %v70
  %v3135 = vpop.f32.mrf.mxu0
  %v3136 = vadd.f32 %v3066, %v3135
  %v3137 = vpop.f32.mrf.mxu0
  %3138 = vdwg.mxu0
  %3139 = vmatprep.subr.mxu0 0.0
  %3140 = vmatpush1.msra.mxu0 %v1021
  %3141 = vmatprep.subr.mxu0 0.0
  %3142 = vmatpush1.msra.mxu0 %v1020
  %3143 = vmatprep.subr.mxu0 0.0
  %3144 = vmatpush1.msra.mxu0 %v1019
  %3145 = vmatprep.subr.mxu0 0.0
  %3146 = vmatpush1.msra.mxu0 %v1018
  %3147 = vmatprep.subr.mxu0 0.0
  %3148 = vmatpush1.msra.mxu0 %v1017
  %3149 = vmatprep.subr.mxu0 0.0
  %3150 = vmatpush1.msra.mxu0 %v1016
  %3151 = vmatprep.subr.mxu0 0.0
  %3152 = vmatpush1.msra.mxu0 %v1015
  %3153 = vmatprep.subr.mxu0 0.0
  %3154 = vmatpush1.msra.mxu0 %v1014
  %3155 = vmatprep.subr.mxu0 0.0
  %3156 = vmatpush1.msra.mxu0 %v1013
  %3157 = vmatprep.subr.mxu0 0.0
  %3158 = vmatpush1.msra.mxu0 %v1012
  %3159 = vmatprep.subr.mxu0 0.0
  %3160 = vmatpush1.msra.mxu0 %v1011
  %3161 = vmatprep.subr.mxu0 0.0
  %3162 = vmatpush1.msra.mxu0 %v1010
  %3163 = vmatprep.subr.mxu0 0.0
  %3164 = vmatpush1.msra.mxu0 %v1009
  %3165 = vmatprep.subr.mxu0 0.0
  %3166 = vmatpush1.msra.mxu0 %v1008
  %3167 = vmatprep.subr.mxu0 0.0
  %3168 = vmatpush1.msra.mxu0 %v1007
  %3169 = vmatprep.subr.mxu0 0.0
  %3170 = vmatpush1.msra.mxu0 %v1006
  %3171 = vmatprep.subr.mxu0 0.0
  %3172 = vmatpush2.msra.mxu0 %v1037
  %3173 = vmatprep.subr.mxu0 0.0
  %3174 = vmatpush2.msra.mxu0 %v1036
  %3175 = vmatprep.subr.mxu0 0.0
  %3176 = vmatpush2.msra.mxu0 %v1035
  %3177 = vmatprep.subr.mxu0 0.0
  %3178 = vmatpush2.msra.mxu0 %v1034
  %3179 = vmatprep.subr.mxu0 0.0
  %3180 = vmatpush2.msra.mxu0 %v1033
  %3181 = vmatprep.subr.mxu0 0.0
  %3182 = vmatpush2.msra.mxu0 %v1032
  %3183 = vmatprep.subr.mxu0 0.0
  %3184 = vmatpush2.msra.mxu0 %v1031
  %3185 = vmatprep.subr.mxu0 0.0
  %3186 = vmatpush2.msra.mxu0 %v1030
  %3187 = vmatprep.subr.mxu0 0.0
  %3188 = vmatpush2.msra.mxu0 %v1029
  %3189 = vmatprep.subr.mxu0 0.0
  %3190 = vmatpush2.msra.mxu0 %v1028
  %3191 = vmatprep.subr.mxu0 0.0
  %3192 = vmatpush2.msra.mxu0 %v1027
  %3193 = vmatprep.subr.mxu0 0.0
  %3194 = vmatpush2.msra.mxu0 %v1026
  %3195 = vmatprep.subr.mxu0 0.0
  %3196 = vmatpush2.msra.mxu0 %v1025
  %3197 = vmatprep.subr.mxu0 0.0
  %3198 = vmatpush2.msra.mxu0 %v1024
  %3199 = vmatprep.subr.mxu0 0.0
  %3200 = vmatpush2.msra.mxu0 %v1023
  %3201 = vmatprep.subr.mxu0 0.0
  %3202 = vmatpush2.msra.mxu0 %v1022
  %3203 = vmatprep.mubr.f32.mxu0 %v73
  %3204 = vmatmul.mubr.f32.gmra.mxu0 %v72
  %v3205 = vpop.f32.mrf.mxu0
  %v3206 = vadd.f32 %v3136, %v3205
  %v3207 = vpop.f32.mrf.mxu0
  %3208 = vdwg.mxu0
  %3209 = vmatprep.subr.mxu0 0.0
  %3210 = vmatpush1.msra.mxu0 %v1053
  %3211 = vmatprep.subr.mxu0 0.0
  %3212 = vmatpush1.msra.mxu0 %v1052
  %3213 = vmatprep.subr.mxu0 0.0
  %3214 = vmatpush1.msra.mxu0 %v1051
  %3215 = vmatprep.subr.mxu0 0.0
  %3216 = vmatpush1.msra.mxu0 %v1050
  %3217 = vmatprep.subr.mxu0 0.0
  %3218 = vmatpush1.msra.mxu0 %v1049
  %3219 = vmatprep.subr.mxu0 0.0
  %3220 = vmatpush1.msra.mxu0 %v1048
  %3221 = vmatprep.subr.mxu0 0.0
  %3222 = vmatpush1.msra.mxu0 %v1047
  %3223 = vmatprep.subr.mxu0 0.0
  %3224 = vmatpush1.msra.mxu0 %v1046
  %3225 = vmatprep.subr.mxu0 0.0
  %3226 = vmatpush1.msra.mxu0 %v1045
  %3227 = vmatprep.subr.mxu0 0.0
  %3228 = vmatpush1.msra.mxu0 %v1044
  %3229 = vmatprep.subr.mxu0 0.0
  %3230 = vmatpush1.msra.mxu0 %v1043
  %3231 = vmatprep.subr.mxu0 0.0
  %3232 = vmatpush1.msra.mxu0 %v1042
  %3233 = vmatprep.subr.mxu0 0.0
  %3234 = vmatpush1.msra.mxu0 %v1041
  %3235 = vmatprep.subr.mxu0 0.0
  %3236 = vmatpush1.msra.mxu0 %v1040
  %3237 = vmatprep.subr.mxu0 0.0
  %3238 = vmatpush1.msra.mxu0 %v1039
  %3239 = vmatprep.subr.mxu0 0.0
  %3240 = vmatpush1.msra.mxu0 %v1038
  %3241 = vmatprep.subr.mxu0 0.0
  %3242 = vmatpush2.msra.mxu0 %v1069
  %3243 = vmatprep.subr.mxu0 0.0
  %3244 = vmatpush2.msra.mxu0 %v1068
  %3245 = vmatprep.subr.mxu0 0.0
  %3246 = vmatpush2.msra.mxu0 %v1067
  %3247 = vmatprep.subr.mxu0 0.0
  %3248 = vmatpush2.msra.mxu0 %v1066
  %3249 = vmatprep.subr.mxu0 0.0
  %3250 = vmatpush2.msra.mxu0 %v1065
  %3251 = vmatprep.subr.mxu0 0.0
  %3252 = vmatpush2.msra.mxu0 %v1064
  %3253 = vmatprep.subr.mxu0 0.0
  %3254 = vmatpush2.msra.mxu0 %v1063
  %3255 = vmatprep.subr.mxu0 0.0
  %3256 = vmatpush2.msra.mxu0 %v1062
  %3257 = vmatprep.subr.mxu0 0.0
  %3258 = vmatpush2.msra.mxu0 %v1061
  %3259 = vmatprep.subr.mxu0 0.0
  %3260 = vmatpush2.msra.mxu0 %v1060
  %3261 = vmatprep.subr.mxu0 0.0
  %3262 = vmatpush2.msra.mxu0 %v1059
  %3263 = vmatprep.subr.mxu0 0.0
  %3264 = vmatpush2.msra.mxu0 %v1058
  %3265 = vmatprep.subr.mxu0 0.0
  %3266 = vmatpush2.msra.mxu0 %v1057
  %3267 = vmatprep.subr.mxu0 0.0
  %3268 = vmatpush2.msra.mxu0 %v1056
  %3269 = vmatprep.subr.mxu0 0.0
  %3270 = vmatpush2.msra.mxu0 %v1055
  %3271 = vmatprep.subr.mxu0 0.0
  %3272 = vmatpush2.msra.mxu0 %v1054
  %3273 = vmatprep.mubr.f32.mxu0 %v75
  %3274 = vmatmul.mubr.f32.gmra.mxu0 %v74
  %v3275 = vpop.f32.mrf.mxu0
  %v3276 = vadd.f32 %v3206, %v3275
  %v3277 = vpop.f32.mrf.mxu0
  %3278 = vdwg.mxu0
  %3279 = vmatprep.subr.mxu0 0.0
  %3280 = vmatpush1.msra.mxu0 %v1085
  %3281 = vmatprep.subr.mxu0 0.0
  %3282 = vmatpush1.msra.mxu0 %v1084
  %3283 = vmatprep.subr.mxu0 0.0
  %3284 = vmatpush1.msra.mxu0 %v1083
  %3285 = vmatprep.subr.mxu0 0.0
  %3286 = vmatpush1.msra.mxu0 %v1082
  %3287 = vmatprep.subr.mxu0 0.0
  %3288 = vmatpush1.msra.mxu0 %v1081
  %3289 = vmatprep.subr.mxu0 0.0
  %3290 = vmatpush1.msra.mxu0 %v1080
  %3291 = vmatprep.subr.mxu0 0.0
  %3292 = vmatpush1.msra.mxu0 %v1079
  %3293 = vmatprep.subr.mxu0 0.0
  %3294 = vmatpush1.msra.mxu0 %v1078
  %3295 = vmatprep.subr.mxu0 0.0
  %3296 = vmatpush1.msra.mxu0 %v1077
  %3297 = vmatprep.subr.mxu0 0.0
  %3298 = vmatpush1.msra.mxu0 %v1076
  %3299 = vmatprep.subr.mxu0 0.0
  %3300 = vmatpush1.msra.mxu0 %v1075
  %3301 = vmatprep.subr.mxu0 0.0
  %3302 = vmatpush1.msra.mxu0 %v1074
  %3303 = vmatprep.subr.mxu0 0.0
  %3304 = vmatpush1.msra.mxu0 %v1073
  %3305 = vmatprep.subr.mxu0 0.0
  %3306 = vmatpush1.msra.mxu0 %v1072
  %3307 = vmatprep.subr.mxu0 0.0
  %3308 = vmatpush1.msra.mxu0 %v1071
  %3309 = vmatprep.subr.mxu0 0.0
  %3310 = vmatpush1.msra.mxu0 %v1070
  %3311 = vmatprep.subr.mxu0 0.0
  %3312 = vmatpush2.msra.mxu0 %v1101
  %3313 = vmatprep.subr.mxu0 0.0
  %3314 = vmatpush2.msra.mxu0 %v1100
  %3315 = vmatprep.subr.mxu0 0.0
  %3316 = vmatpush2.msra.mxu0 %v1099
  %3317 = vmatprep.subr.mxu0 0.0
  %3318 = vmatpush2.msra.mxu0 %v1098
  %3319 = vmatprep.subr.mxu0 0.0
  %3320 = vmatpush2.msra.mxu0 %v1097
  %3321 = vmatprep.subr.mxu0 0.0
  %3322 = vmatpush2.msra.mxu0 %v1096
  %3323 = vmatprep.subr.mxu0 0.0
  %3324 = vmatpush2.msra.mxu0 %v1095
  %3325 = vmatprep.subr.mxu0 0.0
  %3326 = vmatpush2.msra.mxu0 %v1094
  %3327 = vmatprep.subr.mxu0 0.0
  %3328 = vmatpush2.msra.mxu0 %v1093
  %3329 = vmatprep.subr.mxu0 0.0
  %3330 = vmatpush2.msra.mxu0 %v1092
  %3331 = vmatprep.subr.mxu0 0.0
  %3332 = vmatpush2.msra.mxu0 %v1091
  %3333 = vmatprep.subr.mxu0 0.0
  %3334 = vmatpush2.msra.mxu0 %v1090
  %3335 = vmatprep.subr.mxu0 0.0
  %3336 = vmatpush2.msra.mxu0 %v1089
  %3337 = vmatprep.subr.mxu0 0.0
  %3338 = vmatpush2.msra.mxu0 %v1088
  %3339 = vmatprep.subr.mxu0 0.0
  %3340 = vmatpush2.msra.mxu0 %v1087
  %3341 = vmatprep.subr.mxu0 0.0
  %3342 = vmatpush2.msra.mxu0 %v1086
  %3343 = vmatprep.mubr.f32.mxu0 %v77
  %3344 = vmatmul.mubr.f32.gmra.mxu0 %v76
  %v3345 = vpop.f32.mrf.mxu0
  %v3346 = vadd.f32 %v3276, %v3345
  %v3347 = vpop.f32.mrf.mxu0
  %3348 = vdwg.mxu0
  %vm3349 = vcmask 326656
  %3350 = vst.msk [vmem:[%s3] sm:$0xff] %vm3349, %v3346
  // Predicated region
  $region14: #{resnet_classifier_celeba_forward.9} parent=0 // pred_check
    _
  $region15: #{resnet_classifier_celeba_forward.9} parent=0 // pred_check_branch
    %3352 = sbr.rel (0) target = $region17
  $region16: #{resnet_classifier_celeba_forward.9} parent=0 // pred_region
    _
  $region17: #{resnet_classifier_celeba_forward.9} parent=0 // pred_fallthru
    _
  // Predicated region
  $region18: #{resnet_classifier_celeba_forward.9} parent=0 // pred_check
    _
  $region19: #{resnet_classifier_celeba_forward.9} parent=0 // pred_check_branch
    %3354 = sbr.rel (0) target = $region21
  $region20: #{resnet_classifier_celeba_forward.9} parent=0 // pred_region
    _
  $region21: #{resnet_classifier_celeba_forward.9} parent=0 // pred_fallthru
    _

</llo_original>
